<compile_context>
chip_gen: v7x
topology: tpu7x:2x2x1
jax: 0.10.0
libtpu: 0.0.40
codegen_flags: <defaults>
</compile_context>

<pallas_src>
import functools
import math

import jax
import jax.numpy as jnp
from jax import lax
from jax.experimental import pallas as pl
from jax.experimental.pallas import tpu as pltpu

HEADS = 8
EPS = 1e-5
NEG_FILL = -1e30            # masked_fill value inside attention masked_softmax (f32 scores)
LOG_TINY = math.log(1e-45)  # additive mask term of masked_log_softmax


def _ptr_kernel(x_ref, c_ref, qm_ref, km_ref,
                w_ref, w1_ref, w2_ref, bf1_ref, vec_ref, a_ref,
                o_ref, *, heads, tq, tc, inv_temp):
    f32 = jnp.float32
    bf16 = jnp.bfloat16

    bt = x_ref.shape[0]
    e = x_ref.shape[2]
    hs = e // heads

    # ---- packed small parameters: one (13, E) f32 slab, statically row-sliced ----
    vecs = vec_ref[...]
    bu, qg, qb = vecs[0:1], vecs[1:2], vecs[2:3]
    kg, kb = vecs[3:4], vecs[4:5]
    ckg, ckb = vecs[5:6], vecs[6:7]
    g1, b1 = vecs[7:8], vecs[8:9]
    bf2 = vecs[9:10]
    g2, b2 = vecs[10:11], vecs[11:12]
    wvt = vecs[12:13]

    # Flatten the batch tile: projection / FFN matmuls see M = bt*tq rows.
    x = x_ref[...].reshape(bt * tq, e)            # f32 residual stream
    c = c_ref[...].reshape(bt * tc, e)
    xb = x.astype(bf16)
    cb = c.astype(bf16)

    # ---- Q/K/V (+ context K/V) projections: bf16 MXU operands, f32 accumulation ----
    q = jnp.dot(xb, w_ref[0], preferred_element_type=f32)
    k = jnp.dot(xb, w_ref[1], preferred_element_type=f32)
    v = jnp.dot(xb, w_ref[2], preferred_element_type=f32)
    ck = jnp.dot(cb, w_ref[3], preferred_element_type=f32)
    cv = jnp.dot(cb, w_ref[4], preferred_element_type=f32)

    # ---- per-head LayerNorm (kqnorm): folded block-diagonal averaging matrix A (E, E) ----
    amat = a_ref[...]                             # A[i,j] = 1/hs if head(i)==head(j) else 0

    def headnorm(t, gamma, beta):
        mu = jnp.dot(t, amat, preferred_element_type=f32)      # per-head mean, broadcast back
        d = t - mu
        var = jnp.dot(d * d, amat, preferred_element_type=f32)
        return d * lax.rsqrt(var + EPS) * gamma + beta

    scale = 1.0 / (float(e) ** 0.25)
    q = headnorm(q, qg, qb) * scale
    k = headnorm(k, kg, kb) * scale
    ck = headnorm(ck, ckg, ckb) * scale

    # ---- K/V slabs built once per grid step (single token-axis concat, hoisted) ----
    q3 = q.reshape(bt, tq, e).astype(bf16)                                    # (bt, tq, E)
    k_all = jnp.concatenate([k.reshape(bt, tq, e), ck.reshape(bt, tc, e)],
                            axis=1).astype(bf16)                              # (bt, tt, E)
    v_all = jnp.concatenate([v.reshape(bt, tq, e), cv.reshape(bt, tc, e)],
                            axis=1).astype(bf16)                              # (bt, tt, E)

    km = km_ref[...]                              # (bt, 1, tt)
    valid = (qm_ref[...] > 0) & (km > 0)          # (bt, tq, tt) via broadcast, formed in-kernel

    # ---- per-head attention, batched over the batch tile; outputs kept as values ----
    head_outs = []
    for h in range(heads):
        sl = slice(h * hs, (h + 1) * hs)
        s = jnp.einsum('bqd,bkd->bqk', q3[:, :, sl], k_all[:, :, sl],
                       preferred_element_type=f32)                            # (bt, tq, tt)
        s = jnp.where(valid, s, NEG_FILL)
        s = s - jnp.max(s, axis=-1, keepdims=True)
        p = jnp.exp(s)
        p = p * pl.reciprocal(jnp.sum(p, axis=-1, keepdims=True), approx=True)
        head_outs.append(jnp.einsum('bqk,bkd->bqd', p.astype(bf16), v_all[:, :, sl],
                                    preferred_element_type=f32))              # (bt, tq, hs)
    attn_h = jnp.concatenate(head_outs, axis=-1)                              # (bt, tq, E) lane-dense

    attn = jnp.dot(attn_h.reshape(bt * tq, e).astype(bf16), w_ref[5],
                   preferred_element_type=f32) + bu

    # ---- residual + LayerNorm over embedding dim (f32) ----
    def layernorm(t, gamma, beta):
        mu = jnp.mean(t, axis=-1, keepdims=True)
        var = jnp.mean((t - mu) ** 2, axis=-1, keepdims=True)
        return (t - mu) * lax.rsqrt(var + EPS) * gamma + beta

    y = layernorm(x + attn, g1, b1)

    # ---- feed-forward (Linear -> ReLU -> Linear), bf16 MXU / f32 accumulation ----
    h1 = jnp.maximum(jnp.dot(y.astype(bf16), w1_ref[...],
                             preferred_element_type=f32) + bf1_ref[...], 0.0)
    h2 = jnp.dot(h1.astype(bf16), w2_ref[...], preferred_element_type=f32) + bf2
    upd = layernorm(y + h2, g2, b2).reshape(bt, tq, e)

    # ---- pointer head: vt(tanh(.)) as VPU multiply + lane-sum (no N=1 matmul), then masked
    #      log-softmax over the token axis with Tq on the lane axis (lane-dense stores). ----
    proj = jnp.sum(jnp.tanh(upd) * wvt, axis=-1) * inv_temp                   # (bt, tq)
    logits = proj + jnp.where(km[:, 0, :tq] > 0, 0.0, LOG_TINY)               # query mask, lane layout
    z = logits - jnp.max(logits, axis=-1, keepdims=True)
    lse = jnp.log(jnp.sum(jnp.exp(z), axis=-1, keepdims=True))
    o_ref[...] = (z - lse).reshape(bt, 1, tq)


def _vmem_limit_bytes(Bt, Tq, Tc, E, hid, weight_bufs):
    """Derive the scoped-VMEM budget from actual block / intermediate sizes."""
    Tt = Tq + Tc
    f32, bf16 = 4, 2
    data_blocks = (Bt * Tq * E + Bt * Tc * E + Bt * Tq + Bt * Tt + Bt * Tq) * f32
    weights = (6 * E * E + E * hid + hid * E) * bf16 + (hid + 13 * E + E * E) * f32
    # rough live-intermediate estimate: q/k/v/ck/cv, K/V slabs, per-head scores, FFN, head
    interm = (16 * Bt * Tq * E + 6 * Bt * Tc * E + 4 * Bt * Tq * Tt + Bt * Tq * hid) * f32
    need = 2 * data_blocks + weight_bufs * weights + interm + (4 << 20)
    try:
        cap = int(pltpu.get_tpu_info().vmem_capacity_bytes) * 3 // 4
    except Exception:
        cap = 48 << 20
    return int(min(max(need, 32 << 20), cap))


def pointer_transformer(encoded, decoder_state, mask, params, *, heads=HEADS,
                        temperature=1.0, batch_tile=None):
    B, Tq, E = encoded.shape
    Tc = decoder_state.shape[1]
    hid = params['w1'].shape[1]
    assert E % heads == 0
    hs = E // heads
    if batch_tile is None:
        batch_tile = B // 2 if (B % 2 == 0 and B >= 2) else B   # >= 2 grid steps (v7x megacore)
    Bt = batch_tile
    assert B % Bt == 0
    Tt = Tq + Tc

    # O(B*T) mask glue only (no (B,T,T) materialization); contextMask defaults to ones.
    cmask = jnp.ones((B, Tc), mask.dtype)
    qmask_col = mask[:, :, None]                                    # (B, Tq, 1)
    kmask_row = jnp.concatenate([mask, cmask], axis=1)[:, None, :]  # (B, 1, Tt)

    # Folded per-head averaging matrix A = havg @ hone (block diagonal, 1/hs entries).
    eidx = jnp.arange(E) // hs
    amat = (eidx[:, None] == eidx[None, :]).astype(jnp.float32) / hs          # (E, E)

    # Packed weights: (6, E, E) bf16 stack + (13, E) f32 vector slab.
    w_stack = jnp.stack([params['wq'], params['wk'], params['wv'],
                         params['wck'], params['wcv'], params['wu']],
                        axis=0).astype(jnp.bfloat16)
    vec_stack = jnp.concatenate(
        [params['bu'], params['qg'], params['qb'], params['kg'], params['kb'],
         params['ckg'], params['ckb'], params['g1'], params['b1'],
         params['bf2'], params['g2'], params['b2'], params['wvt'].T],
        axis=0).astype(jnp.float32)                                           # (13, E)
    w1 = params['w1'].astype(jnp.bfloat16)
    w2 = params['w2'].astype(jnp.bfloat16)
    bf1 = params['bf1'].astype(jnp.float32)

    kernel = functools.partial(_ptr_kernel, heads=heads, tq=Tq, tc=Tc,
                               inv_temp=1.0 / float(temperature))

    def weight_spec(shape, single_buffer):
        nd = len(shape)
        idx = lambda b, _nd=nd: (0,) * _nd
        if single_buffer and hasattr(pl, "Buffered"):
            try:   # grid-invariant block: one buffer is enough (VMEM saving, esp. v7x)
                return pl.BlockSpec(shape, idx, pipeline_mode=pl.Buffered(1))
            except TypeError:
                pass
        return pl.BlockSpec(shape, idx)

    def build(single_buffer_weights):
        in_specs = ([pl.BlockSpec((Bt, Tq, E), lambda b: (b, 0, 0)),
                     pl.BlockSpec((Bt, Tc, E), lambda b: (b, 0, 0)),
                     pl.BlockSpec((Bt, Tq, 1), lambda b: (b, 0, 0)),
                     pl.BlockSpec((Bt, 1, Tt), lambda b: (b, 0, 0))]
                    + [weight_spec(a.shape, single_buffer_weights)
                       for a in (w_stack, w1, w2, bf1, vec_stack, amat)])
        return pl.pallas_call(
            kernel,
            out_shape=jax.ShapeDtypeStruct((B, 1, Tq), jnp.float32),
            grid_spec=pltpu.PrefetchScalarGridSpec(
                num_scalar_prefetch=0,
                grid=(B // Bt,),
                in_specs=in_specs,
                out_specs=pl.BlockSpec((Bt, 1, Tq), lambda b: (b, 0, 0))),
            compiler_params=pltpu.CompilerParams(
                dimension_semantics=("parallel",),
                vmem_limit_bytes=_vmem_limit_bytes(
                    Bt, Tq, Tc, E, hid, 1 if single_buffer_weights else 2)))

    args = (encoded, decoder_state, qmask_col, kmask_row,
            w_stack, w1, w2, bf1, vec_stack, amat)
    try:
        out = build(True)(*args)
    except Exception:
        # Fallback if this build rejects pipeline_mode=pl.Buffered(1) on weight specs.
        out = build(False)(*args)
    return out[:, 0, :]   # squeeze the unit dim kept only for the (8,128) block constraint


def init_params(key, emb, heads, expansion=1):
    hs = emb // heads
    hid = emb * expansion
    ks = jax.random.split(key, 28)

    def lin(kw, kb, fan_in, fan_out, bias=True):
        bound = 1.0 / math.sqrt(fan_in)
        w = jax.random.uniform(kw, (fan_in, fan_out), jnp.float32, -bound, bound)
        b = (jax.random.uniform(kb, (1, fan_out), jnp.float32, -bound, bound)
             if bias else None)
        return w, b

    wq, _ = lin(ks[0], ks[1], emb, emb, bias=False)
    wk, _ = lin(ks[2], ks[3], emb, emb, bias=False)
    wv, _ = lin(ks[4], ks[5], emb, emb, bias=False)
    wck, _ = lin(ks[6], ks[7], emb, emb, bias=False)
    wcv, _ = lin(ks[8], ks[9], emb, emb, bias=False)
    wu, bu = lin(ks[10], ks[11], emb, emb)
    w1, bf1 = lin(ks[12], ks[13], emb, hid)
    w2, bf2 = lin(ks[14], ks[15], hid, emb)
    wvt, _ = lin(ks[16], ks[17], emb, 1, bias=False)

    def ln(kg, kb, n):
        g = 1.0 + 0.1 * jax.random.normal(kg, (1, n), jnp.float32)
        b = 0.1 * jax.random.normal(kb, (1, n), jnp.float32)
        return g, b

    qg_h, qb_h = ln(ks[18], ks[19], hs)     # nn.LayerNorm([headsize]) params
    kg_h, kb_h = ln(ks[20], ks[21], hs)
    ckg_h, ckb_h = ln(ks[22], ks[23], hs)
    g1, b1 = ln(ks[24], ks[25], emb)
    g2, b2 = ln(ks[26], ks[27], emb)

    tile = lambda a: jnp.tile(a, (1, heads))  # per-head LN params laid out along lanes
    return dict(wq=wq, wk=wk, wv=wv, wck=wck, wcv=wcv, wu=wu, bu=bu,
                qg=tile(qg_h), qb=tile(qb_h), kg=tile(kg_h), kb=tile(kb_h),
                ckg=tile(ckg_h), ckb=tile(ckb_h),
                g1=g1, b1=b1, w1=w1, bf1=bf1, w2=w2, bf2=bf2, g2=g2, b2=b2,
                wvt=wvt)


def ref_forward(encoded, decoder_state, mask, P, heads=HEADS, temperature=1.0):
    """Pure-JAX f32 reference mirroring the PyTorch PointerTransformer semantics."""
    B, Tq, E = encoded.shape
    Tc = decoder_state.shape[1]
    hs = E // heads
    cmask = jnp.ones((B, Tc), encoded.dtype)

    q = encoded @ P['wq']; k = encoded @ P['wk']; v = encoded @ P['wv']
    ck = decoder_state @ P['wck']; cv = decoder_state @ P['wcv']

    def headnorm(t, g, b):
        Bn, Tn, _ = t.shape
        t4 = t.reshape(Bn, Tn, heads, hs)
        mu = t4.mean(-1, keepdims=True)
        var = ((t4 - mu) ** 2).mean(-1, keepdims=True)
        gn = g.reshape(heads, hs); bn = b.reshape(heads, hs)
        return ((t4 - mu) / jnp.sqrt(var + EPS) * gn + bn).reshape(Bn, Tn, E)

    q = headnorm(q, P['qg'], P['qb'])
    k = headnorm(k, P['kg'], P['kb'])
    ck = headnorm(ck, P['ckg'], P['ckb'])

    keys = jnp.concatenate([k, ck], axis=1)
    values = jnp.concatenate([v, cv], axis=1)
    kmask = jnp.concatenate([mask, cmask], axis=1)
    Tt = Tq + Tc

    scale = float(E) ** 0.25
    qh = (q / scale).reshape(B, Tq, heads, hs).transpose(0, 2, 1, 3)
    kh = (keys / scale).reshape(B, Tt, heads, hs).transpose(0, 2, 1, 3)
    vh = values.reshape(B, Tt, heads, hs).transpose(0, 2, 1, 3)
    s = jnp.einsum('bhqd,bhkd->bhqk', qh, kh)
    dm = mask[:, None, :, None] * kmask[:, None, None, :]
    s = jnp.where(dm > 0, s, NEG_FILL)
    p = jax.nn.softmax(s, axis=-1)
    o = jnp.einsum('bhqk,bhkd->bhqd', p, vh).transpose(0, 2, 1, 3).reshape(B, Tq, E)
    attn = o @ P['wu'] + P['bu']

    def layernorm(t, g, b):
        mu = t.mean(-1, keepdims=True)
        var = ((t - mu) ** 2).mean(-1, keepdims=True)
        return (t - mu) / jnp.sqrt(var + EPS) * g + b

    y = layernorm(encoded + attn, P['g1'], P['b1'])
    h1 = jnp.maximum(y @ P['w1'] + P['bf1'], 0.0)
    h2 = h1 @ P['w2'] + P['bf2']
    upd = layernorm(y + h2, P['g2'], P['b2'])

    proj = (jnp.tanh(upd) @ P['wvt'])[..., 0] / temperature
    logits = proj + jnp.where(mask > 0, 0.0, LOG_TINY)
    return jax.nn.log_softmax(logits, axis=1)


if __name__ == "__main__":
    B, Tq, Tc, E, H = 4, 8, 1, 32, 8
    key = jax.random.PRNGKey(0)
    kx, kc, kp = jax.random.split(key, 3)
    encoded = jax.random.normal(kx, (B, Tq, E), jnp.float32)
    decoder_state = jax.random.normal(kc, (B, Tc, E), jnp.float32)
    mask = jnp.ones((B, Tq), jnp.float32)          # default mask (all ones)
    params = init_params(kp, E, H, expansion=1)

    # default batch_tile -> Bt = B // 2 = 2, grid = 2 "parallel" steps
    out = pointer_transformer(encoded, decoder_state, mask, params,
                              heads=H, temperature=1.0)
    out = jax.block_until_ready(out)

    ref = ref_forward(encoded, decoder_state, mask, params, heads=H, temperature=1.0)
    err = float(jnp.max(jnp.abs(out - ref)))
    assert out.shape == (B, Tq)
    # bf16 MXU operands (f32 accumulation) -> relaxed tolerance vs the f32 reference
    assert jnp.allclose(out, ref, rtol=5e-2, atol=5e-2), f"max abs err {err}"
    print("KERNEL_OK")
</pallas_src>

<mosaic_0001>
module attributes {stable_mosaic.version = 11 : i64} {
  func.func @_ptr_kernel(%arg0: i32, %arg1: memref<2x8x32xf32, #tpu.memory_space<vmem>>, %arg2: memref<2x1x32xf32, #tpu.memory_space<vmem>>, %arg3: memref<2x8x1xf32, #tpu.memory_space<vmem>>, %arg4: memref<2x1x9xf32, #tpu.memory_space<vmem>>, %arg5: memref<6x32x32xbf16, #tpu.memory_space<vmem>>, %arg6: memref<32x32xbf16, #tpu.memory_space<vmem>>, %arg7: memref<32x32xbf16, #tpu.memory_space<vmem>>, %arg8: memref<1x32xf32, #tpu.memory_space<vmem>>, %arg9: memref<13x32xf32, #tpu.memory_space<vmem>>, %arg10: memref<32x32xf32, #tpu.memory_space<vmem>>, %arg11: memref<2x1x8xf32, #tpu.memory_space<vmem>>) attributes {dimension_semantics = [#tpu.dimension_semantics<parallel>], iteration_bounds = array<i64: 2>, scalar_prefetch = 0 : i64, scratch_operands = 0 : i64, tpu.core_type = #tpu.core_type<tc>, window_params = [{transform_indices = @transform_0, window_bounds = array<i64: 2, 8, 32>}, {transform_indices = @transform_1, window_bounds = array<i64: 2, 1, 32>}, {transform_indices = @transform_2, window_bounds = array<i64: 2, 8, 1>}, {transform_indices = @transform_3, window_bounds = array<i64: 2, 1, 9>}, {pipeline_mode = #tpu.pipeline_mode<synchronous>, transform_indices = @transform_4, window_bounds = array<i64: 6, 32, 32>}, {pipeline_mode = #tpu.pipeline_mode<synchronous>, transform_indices = @transform_5, window_bounds = array<i64: 32, 32>}, {pipeline_mode = #tpu.pipeline_mode<synchronous>, transform_indices = @transform_6, window_bounds = array<i64: 32, 32>}, {pipeline_mode = #tpu.pipeline_mode<synchronous>, transform_indices = @transform_7, window_bounds = array<i64: 1, 32>}, {pipeline_mode = #tpu.pipeline_mode<synchronous>, transform_indices = @transform_8, window_bounds = array<i64: 13, 32>}, {pipeline_mode = #tpu.pipeline_mode<synchronous>, transform_indices = @transform_9, window_bounds = array<i64: 32, 32>}, {transform_indices = @transform_10, window_bounds = array<i64: 2, 1, 8>}]} {
    %c0 = arith.constant 0 : index
    %c0_0 = arith.constant 0 : index
    %0 = vector.load %arg9[%c0, %c0_0] : memref<13x32xf32, #tpu.memory_space<vmem>>, vector<13x32xf32>
    %1 = vector.extract_strided_slice %0 {offsets = [0, 0], sizes = [1, 32], strides = [1, 1]} : vector<13x32xf32> to vector<1x32xf32>
    %2 = vector.extract_strided_slice %0 {offsets = [1, 0], sizes = [1, 32], strides = [1, 1]} : vector<13x32xf32> to vector<1x32xf32>
    %3 = vector.extract_strided_slice %0 {offsets = [2, 0], sizes = [1, 32], strides = [1, 1]} : vector<13x32xf32> to vector<1x32xf32>
    %4 = vector.extract_strided_slice %0 {offsets = [3, 0], sizes = [1, 32], strides = [1, 1]} : vector<13x32xf32> to vector<1x32xf32>
    %5 = vector.extract_strided_slice %0 {offsets = [4, 0], sizes = [1, 32], strides = [1, 1]} : vector<13x32xf32> to vector<1x32xf32>
    %6 = vector.extract_strided_slice %0 {offsets = [5, 0], sizes = [1, 32], strides = [1, 1]} : vector<13x32xf32> to vector<1x32xf32>
    %7 = vector.extract_strided_slice %0 {offsets = [6, 0], sizes = [1, 32], strides = [1, 1]} : vector<13x32xf32> to vector<1x32xf32>
    %8 = vector.extract_strided_slice %0 {offsets = [7, 0], sizes = [1, 32], strides = [1, 1]} : vector<13x32xf32> to vector<1x32xf32>
    %9 = vector.extract_strided_slice %0 {offsets = [8, 0], sizes = [1, 32], strides = [1, 1]} : vector<13x32xf32> to vector<1x32xf32>
    %10 = vector.extract_strided_slice %0 {offsets = [9, 0], sizes = [1, 32], strides = [1, 1]} : vector<13x32xf32> to vector<1x32xf32>
    %11 = vector.extract_strided_slice %0 {offsets = [10, 0], sizes = [1, 32], strides = [1, 1]} : vector<13x32xf32> to vector<1x32xf32>
    %12 = vector.extract_strided_slice %0 {offsets = [11, 0], sizes = [1, 32], strides = [1, 1]} : vector<13x32xf32> to vector<1x32xf32>
    %13 = vector.extract_strided_slice %0 {offsets = [12, 0], sizes = [1, 32], strides = [1, 1]} : vector<13x32xf32> to vector<1x32xf32>
    %c0_1 = arith.constant 0 : index
    %c0_2 = arith.constant 0 : index
    %c0_3 = arith.constant 0 : index
    %14 = vector.load %arg1[%c0_1, %c0_2, %c0_3] : memref<2x8x32xf32, #tpu.memory_space<vmem>>, vector<2x8x32xf32>
    %15 = vector.shape_cast %14 : vector<2x8x32xf32> to vector<16x32xf32>
    %c0_4 = arith.constant 0 : index
    %c0_5 = arith.constant 0 : index
    %c0_6 = arith.constant 0 : index
    %16 = vector.load %arg2[%c0_4, %c0_5, %c0_6] : memref<2x1x32xf32, #tpu.memory_space<vmem>>, vector<2x1x32xf32>
    %17 = vector.shape_cast %16 : vector<2x1x32xf32> to vector<2x32xf32>
    %18 = arith.truncf %15 : vector<16x32xf32> to vector<16x32xbf16>
    %19 = arith.truncf %17 : vector<2x32xf32> to vector<2x32xbf16>
    %c0_7 = arith.constant 0 : index
    %c0_8 = arith.constant 0 : index
    %c0_9 = arith.constant 0 : index
    %20 = vector.load %arg5[%c0_7, %c0_8, %c0_9] : memref<6x32x32xbf16, #tpu.memory_space<vmem>>, vector<1x32x32xbf16>
    %21 = vector.shape_cast %20 : vector<1x32x32xbf16> to vector<32x32xbf16>
    %cst = arith.constant dense<0.000000e+00> : vector<16x32xf32>
    %22 = tpu.matmul %18, %21, %cst {dimension_numbers = #tpu.dot_dimension_numbers<[1], [0], [0], [1], [0, 0, 1, 1], [], []>} : vector<16x32xbf16>, vector<32x32xbf16>, vector<16x32xf32> -> vector<16x32xf32>
    %c1 = arith.constant 1 : index
    %c0_10 = arith.constant 0 : index
    %c0_11 = arith.constant 0 : index
    %23 = vector.load %arg5[%c1, %c0_10, %c0_11] : memref<6x32x32xbf16, #tpu.memory_space<vmem>>, vector<1x32x32xbf16>
    %24 = vector.shape_cast %23 : vector<1x32x32xbf16> to vector<32x32xbf16>
    %cst_12 = arith.constant dense<0.000000e+00> : vector<16x32xf32>
    %25 = tpu.matmul %18, %24, %cst_12 {dimension_numbers = #tpu.dot_dimension_numbers<[1], [0], [0], [1], [0, 0, 1, 1], [], []>} : vector<16x32xbf16>, vector<32x32xbf16>, vector<16x32xf32> -> vector<16x32xf32>
    %c2 = arith.constant 2 : index
    %c0_13 = arith.constant 0 : index
    %c0_14 = arith.constant 0 : index
    %26 = vector.load %arg5[%c2, %c0_13, %c0_14] : memref<6x32x32xbf16, #tpu.memory_space<vmem>>, vector<1x32x32xbf16>
    %27 = vector.shape_cast %26 : vector<1x32x32xbf16> to vector<32x32xbf16>
    %cst_15 = arith.constant dense<0.000000e+00> : vector<16x32xf32>
    %28 = tpu.matmul %18, %27, %cst_15 {dimension_numbers = #tpu.dot_dimension_numbers<[1], [0], [0], [1], [0, 0, 1, 1], [], []>} : vector<16x32xbf16>, vector<32x32xbf16>, vector<16x32xf32> -> vector<16x32xf32>
    %c3 = arith.constant 3 : index
    %c0_16 = arith.constant 0 : index
    %c0_17 = arith.constant 0 : index
    %29 = vector.load %arg5[%c3, %c0_16, %c0_17] : memref<6x32x32xbf16, #tpu.memory_space<vmem>>, vector<1x32x32xbf16>
    %30 = vector.shape_cast %29 : vector<1x32x32xbf16> to vector<32x32xbf16>
    %cst_18 = arith.constant dense<0.000000e+00> : vector<2x32xf32>
    %31 = tpu.matmul %19, %30, %cst_18 {dimension_numbers = #tpu.dot_dimension_numbers<[1], [0], [0], [1], [0, 0, 1, 1], [], []>} : vector<2x32xbf16>, vector<32x32xbf16>, vector<2x32xf32> -> vector<2x32xf32>
    %c4 = arith.constant 4 : index
    %c0_19 = arith.constant 0 : index
    %c0_20 = arith.constant 0 : index
    %32 = vector.load %arg5[%c4, %c0_19, %c0_20] : memref<6x32x32xbf16, #tpu.memory_space<vmem>>, vector<1x32x32xbf16>
    %33 = vector.shape_cast %32 : vector<1x32x32xbf16> to vector<32x32xbf16>
    %cst_21 = arith.constant dense<0.000000e+00> : vector<2x32xf32>
    %34 = tpu.matmul %19, %33, %cst_21 {dimension_numbers = #tpu.dot_dimension_numbers<[1], [0], [0], [1], [0, 0, 1, 1], [], []>} : vector<2x32xbf16>, vector<32x32xbf16>, vector<2x32xf32> -> vector<2x32xf32>
    %c0_22 = arith.constant 0 : index
    %c0_23 = arith.constant 0 : index
    %35 = vector.load %arg10[%c0_22, %c0_23] : memref<32x32xf32, #tpu.memory_space<vmem>>, vector<32x32xf32>
    %cst_24 = arith.constant dense<0.000000e+00> : vector<16x32xf32>
    %36 = tpu.matmul %22, %35, %cst_24 {dimension_numbers = #tpu.dot_dimension_numbers<[1], [0], [0], [1], [0, 0, 1, 1], [], []>} : vector<16x32xf32>, vector<32x32xf32>, vector<16x32xf32> -> vector<16x32xf32>
    %37 = arith.subf %22, %36 : vector<16x32xf32>
    %38 = arith.mulf %37, %37 : vector<16x32xf32>
    %cst_25 = arith.constant dense<0.000000e+00> : vector<16x32xf32>
    %39 = tpu.matmul %38, %35, %cst_25 {dimension_numbers = #tpu.dot_dimension_numbers<[1], [0], [0], [1], [0, 0, 1, 1], [], []>} : vector<16x32xf32>, vector<32x32xf32>, vector<16x32xf32> -> vector<16x32xf32>
    %cst_26 = arith.constant 9.99999974E-6 : f32
    %40 = vector.broadcast %cst_26 : f32 to vector<16x32xf32>
    %41 = arith.addf %39, %40 : vector<16x32xf32>
    %42 = math.rsqrt %41 : vector<16x32xf32>
    %43 = arith.mulf %37, %42 : vector<16x32xf32>
    %44 = vector.broadcast %2 : vector<1x32xf32> to vector<16x32xf32>
    %45 = arith.mulf %43, %44 : vector<16x32xf32>
    %46 = vector.broadcast %3 : vector<1x32xf32> to vector<16x32xf32>
    %47 = arith.addf %45, %46 : vector<16x32xf32>
    %cst_27 = arith.constant 0.420448214 : f32
    %48 = vector.broadcast %cst_27 : f32 to vector<16x32xf32>
    %49 = arith.mulf %47, %48 : vector<16x32xf32>
    %cst_28 = arith.constant dense<0.000000e+00> : vector<16x32xf32>
    %50 = tpu.matmul %25, %35, %cst_28 {dimension_numbers = #tpu.dot_dimension_numbers<[1], [0], [0], [1], [0, 0, 1, 1], [], []>} : vector<16x32xf32>, vector<32x32xf32>, vector<16x32xf32> -> vector<16x32xf32>
    %51 = arith.subf %25, %50 : vector<16x32xf32>
    %52 = arith.mulf %51, %51 : vector<16x32xf32>
    %cst_29 = arith.constant dense<0.000000e+00> : vector<16x32xf32>
    %53 = tpu.matmul %52, %35, %cst_29 {dimension_numbers = #tpu.dot_dimension_numbers<[1], [0], [0], [1], [0, 0, 1, 1], [], []>} : vector<16x32xf32>, vector<32x32xf32>, vector<16x32xf32> -> vector<16x32xf32>
    %cst_30 = arith.constant 9.99999974E-6 : f32
    %54 = vector.broadcast %cst_30 : f32 to vector<16x32xf32>
    %55 = arith.addf %53, %54 : vector<16x32xf32>
    %56 = math.rsqrt %55 : vector<16x32xf32>
    %57 = arith.mulf %51, %56 : vector<16x32xf32>
    %58 = vector.broadcast %4 : vector<1x32xf32> to vector<16x32xf32>
    %59 = arith.mulf %57, %58 : vector<16x32xf32>
    %60 = vector.broadcast %5 : vector<1x32xf32> to vector<16x32xf32>
    %61 = arith.addf %59, %60 : vector<16x32xf32>
    %cst_31 = arith.constant 0.420448214 : f32
    %62 = vector.broadcast %cst_31 : f32 to vector<16x32xf32>
    %63 = arith.mulf %61, %62 : vector<16x32xf32>
    %cst_32 = arith.constant dense<0.000000e+00> : vector<2x32xf32>
    %64 = tpu.matmul %31, %35, %cst_32 {dimension_numbers = #tpu.dot_dimension_numbers<[1], [0], [0], [1], [0, 0, 1, 1], [], []>} : vector<2x32xf32>, vector<32x32xf32>, vector<2x32xf32> -> vector<2x32xf32>
    %65 = arith.subf %31, %64 : vector<2x32xf32>
    %66 = arith.mulf %65, %65 : vector<2x32xf32>
    %cst_33 = arith.constant dense<0.000000e+00> : vector<2x32xf32>
    %67 = tpu.matmul %66, %35, %cst_33 {dimension_numbers = #tpu.dot_dimension_numbers<[1], [0], [0], [1], [0, 0, 1, 1], [], []>} : vector<2x32xf32>, vector<32x32xf32>, vector<2x32xf32> -> vector<2x32xf32>
    %cst_34 = arith.constant 9.99999974E-6 : f32
    %68 = vector.broadcast %cst_34 : f32 to vector<2x32xf32>
    %69 = arith.addf %67, %68 : vector<2x32xf32>
    %70 = math.rsqrt %69 : vector<2x32xf32>
    %71 = arith.mulf %65, %70 : vector<2x32xf32>
    %72 = vector.broadcast %6 : vector<1x32xf32> to vector<2x32xf32>
    %73 = arith.mulf %71, %72 : vector<2x32xf32>
    %74 = vector.broadcast %7 : vector<1x32xf32> to vector<2x32xf32>
    %75 = arith.addf %73, %74 : vector<2x32xf32>
    %cst_35 = arith.constant 0.420448214 : f32
    %76 = vector.broadcast %cst_35 : f32 to vector<2x32xf32>
    %77 = arith.mulf %75, %76 : vector<2x32xf32>
    %78 = vector.shape_cast %49 : vector<16x32xf32> to vector<2x8x32xf32>
    %79 = arith.truncf %78 : vector<2x8x32xf32> to vector<2x8x32xbf16>
    %80 = vector.shape_cast %63 : vector<16x32xf32> to vector<2x8x32xf32>
    %81 = vector.shape_cast %77 : vector<2x32xf32> to vector<2x1x32xf32>
    %82 = tpu.concatenate %80, %81 in 1 : vector<2x8x32xf32>, vector<2x1x32xf32> -> vector<2x9x32xf32>
    %83 = arith.truncf %82 : vector<2x9x32xf32> to vector<2x9x32xbf16>
    %84 = vector.shape_cast %28 : vector<16x32xf32> to vector<2x8x32xf32>
    %85 = vector.shape_cast %34 : vector<2x32xf32> to vector<2x1x32xf32>
    %86 = tpu.concatenate %84, %85 in 1 : vector<2x8x32xf32>, vector<2x1x32xf32> -> vector<2x9x32xf32>
    %87 = arith.truncf %86 : vector<2x9x32xf32> to vector<2x9x32xbf16>
    %c0_36 = arith.constant 0 : index
    %c0_37 = arith.constant 0 : index
    %c0_38 = arith.constant 0 : index
    %88 = vector.load %arg4[%c0_36, %c0_37, %c0_38] : memref<2x1x9xf32, #tpu.memory_space<vmem>>, vector<2x1x9xf32>
    %c0_39 = arith.constant 0 : index
    %c0_40 = arith.constant 0 : index
    %c0_41 = arith.constant 0 : index
    %89 = vector.load %arg3[%c0_39, %c0_40, %c0_41] : memref<2x8x1xf32, #tpu.memory_space<vmem>>, vector<2x8x1xf32>
    %cst_42 = arith.constant 0.000000e+00 : f32
    %90 = vector.broadcast %cst_42 : f32 to vector<2x8x1xf32>
    %91 = arith.cmpf ogt, %89, %90 : vector<2x8x1xf32>
    %cst_43 = arith.constant 0.000000e+00 : f32
    %92 = vector.broadcast %cst_43 : f32 to vector<2x1x9xf32>
    %93 = arith.cmpf ogt, %88, %92 : vector<2x1x9xf32>
    %94 = vector.broadcast %91 : vector<2x8x1xi1> to vector<2x8x9xi1>
    %95 = vector.broadcast %93 : vector<2x1x9xi1> to vector<2x8x9xi1>
    %96 = arith.andi %94, %95 : vector<2x8x9xi1>
    %97 = vector.extract_strided_slice %79 {offsets = [0, 0, 0], sizes = [2, 8, 4], strides = [1, 1, 1]} : vector<2x8x32xbf16> to vector<2x8x4xbf16>
    %98 = vector.extract_strided_slice %83 {offsets = [0, 0, 0], sizes = [2, 9, 4], strides = [1, 1, 1]} : vector<2x9x32xbf16> to vector<2x9x4xbf16>
    "tpu.trace_start"() <{level = 10 : i32, message = "bqd,bkd->bqk"}> : () -> ()
    %cst_44 = arith.constant dense<0.000000e+00> : vector<2x8x9xf32>
    %99 = tpu.matmul %97, %98, %cst_44 {dimension_numbers = #tpu.dot_dimension_numbers<[2], [2], [1], [1], [0, 0, 0, 1, 1, 1], [0], [0]>} : vector<2x8x4xbf16>, vector<2x9x4xbf16>, vector<2x8x9xf32> -> vector<2x8x9xf32>
    %cst_45 = arith.constant -1.000000e+30 : f32
    "tpu.trace_stop"() : () -> ()
    %100 = vector.broadcast %cst_45 : f32 to vector<2x8x9xf32>
    %101 = arith.select %96, %99, %100 : vector<2x8x9xi1>, vector<2x8x9xf32>
    %cst_46 = arith.constant dense<0xFF800000> : vector<2x8xf32>
    %102 = vector.multi_reduction <maximumf>, %101, %cst_46 [2] : vector<2x8x9xf32> to vector<2x8xf32>
    %103 = vector.shape_cast %102 : vector<2x8xf32> to vector<2x8x1xf32>
    %104 = vector.broadcast %103 : vector<2x8x1xf32> to vector<2x8x9xf32>
    %105 = arith.subf %101, %104 : vector<2x8x9xf32>
    %106 = math.exp %105 : vector<2x8x9xf32>
    %cst_47 = arith.constant dense<0.000000e+00> : vector<2x8xf32>
    %107 = vector.multi_reduction <add>, %106, %cst_47 [2] : vector<2x8x9xf32> to vector<2x8xf32>
    %108 = vector.shape_cast %107 : vector<2x8xf32> to vector<2x8x1xf32>
    %109 = tpu.reciprocal %108 {approx = true} : vector<2x8x1xf32> -> vector<2x8x1xf32>
    %110 = vector.broadcast %109 : vector<2x8x1xf32> to vector<2x8x9xf32>
    %111 = arith.mulf %106, %110 : vector<2x8x9xf32>
    %112 = arith.truncf %111 : vector<2x8x9xf32> to vector<2x8x9xbf16>
    %113 = vector.extract_strided_slice %87 {offsets = [0, 0, 0], sizes = [2, 9, 4], strides = [1, 1, 1]} : vector<2x9x32xbf16> to vector<2x9x4xbf16>
    "tpu.trace_start"() <{level = 10 : i32, message = "bqk,bkd->bqd"}> : () -> ()
    %cst_48 = arith.constant dense<0.000000e+00> : vector<2x8x4xf32>
    %114 = tpu.matmul %112, %113, %cst_48 {dimension_numbers = #tpu.dot_dimension_numbers<[2], [1], [1], [2], [0, 0, 0, 1, 1, 2], [0], [0]>} : vector<2x8x9xbf16>, vector<2x9x4xbf16>, vector<2x8x4xf32> -> vector<2x8x4xf32>
    "tpu.trace_stop"() : () -> ()
    %115 = vector.extract_strided_slice %79 {offsets = [0, 0, 4], sizes = [2, 8, 4], strides = [1, 1, 1]} : vector<2x8x32xbf16> to vector<2x8x4xbf16>
    %116 = vector.extract_strided_slice %83 {offsets = [0, 0, 4], sizes = [2, 9, 4], strides = [1, 1, 1]} : vector<2x9x32xbf16> to vector<2x9x4xbf16>
    "tpu.trace_start"() <{level = 10 : i32, message = "bqd,bkd->bqk"}> : () -> ()
    %cst_49 = arith.constant dense<0.000000e+00> : vector<2x8x9xf32>
    %117 = tpu.matmul %115, %116, %cst_49 {dimension_numbers = #tpu.dot_dimension_numbers<[2], [2], [1], [1], [0, 0, 0, 1, 1, 1], [0], [0]>} : vector<2x8x4xbf16>, vector<2x9x4xbf16>, vector<2x8x9xf32> -> vector<2x8x9xf32>
    %cst_50 = arith.constant -1.000000e+30 : f32
    "tpu.trace_stop"() : () -> ()
    %118 = vector.broadcast %cst_50 : f32 to vector<2x8x9xf32>
    %119 = arith.select %96, %117, %118 : vector<2x8x9xi1>, vector<2x8x9xf32>
    %cst_51 = arith.constant dense<0xFF800000> : vector<2x8xf32>
    %120 = vector.multi_reduction <maximumf>, %119, %cst_51 [2] : vector<2x8x9xf32> to vector<2x8xf32>
    %121 = vector.shape_cast %120 : vector<2x8xf32> to vector<2x8x1xf32>
    %122 = vector.broadcast %121 : vector<2x8x1xf32> to vector<2x8x9xf32>
    %123 = arith.subf %119, %122 : vector<2x8x9xf32>
    %124 = math.exp %123 : vector<2x8x9xf32>
    %cst_52 = arith.constant dense<0.000000e+00> : vector<2x8xf32>
    %125 = vector.multi_reduction <add>, %124, %cst_52 [2] : vector<2x8x9xf32> to vector<2x8xf32>
    %126 = vector.shape_cast %125 : vector<2x8xf32> to vector<2x8x1xf32>
    %127 = tpu.reciprocal %126 {approx = true} : vector<2x8x1xf32> -> vector<2x8x1xf32>
    %128 = vector.broadcast %127 : vector<2x8x1xf32> to vector<2x8x9xf32>
    %129 = arith.mulf %124, %128 : vector<2x8x9xf32>
    %130 = arith.truncf %129 : vector<2x8x9xf32> to vector<2x8x9xbf16>
    %131 = vector.extract_strided_slice %87 {offsets = [0, 0, 4], sizes = [2, 9, 4], strides = [1, 1, 1]} : vector<2x9x32xbf16> to vector<2x9x4xbf16>
    "tpu.trace_start"() <{level = 10 : i32, message = "bqk,bkd->bqd"}> : () -> ()
    %cst_53 = arith.constant dense<0.000000e+00> : vector<2x8x4xf32>
    %132 = tpu.matmul %130, %131, %cst_53 {dimension_numbers = #tpu.dot_dimension_numbers<[2], [1], [1], [2], [0, 0, 0, 1, 1, 2], [0], [0]>} : vector<2x8x9xbf16>, vector<2x9x4xbf16>, vector<2x8x4xf32> -> vector<2x8x4xf32>
    "tpu.trace_stop"() : () -> ()
    %133 = vector.extract_strided_slice %79 {offsets = [0, 0, 8], sizes = [2, 8, 4], strides = [1, 1, 1]} : vector<2x8x32xbf16> to vector<2x8x4xbf16>
    %134 = vector.extract_strided_slice %83 {offsets = [0, 0, 8], sizes = [2, 9, 4], strides = [1, 1, 1]} : vector<2x9x32xbf16> to vector<2x9x4xbf16>
    "tpu.trace_start"() <{level = 10 : i32, message = "bqd,bkd->bqk"}> : () -> ()
    %cst_54 = arith.constant dense<0.000000e+00> : vector<2x8x9xf32>
    %135 = tpu.matmul %133, %134, %cst_54 {dimension_numbers = #tpu.dot_dimension_numbers<[2], [2], [1], [1], [0, 0, 0, 1, 1, 1], [0], [0]>} : vector<2x8x4xbf16>, vector<2x9x4xbf16>, vector<2x8x9xf32> -> vector<2x8x9xf32>
    %cst_55 = arith.constant -1.000000e+30 : f32
    "tpu.trace_stop"() : () -> ()
    %136 = vector.broadcast %cst_55 : f32 to vector<2x8x9xf32>
    %137 = arith.select %96, %135, %136 : vector<2x8x9xi1>, vector<2x8x9xf32>
    %cst_56 = arith.constant dense<0xFF800000> : vector<2x8xf32>
    %138 = vector.multi_reduction <maximumf>, %137, %cst_56 [2] : vector<2x8x9xf32> to vector<2x8xf32>
    %139 = vector.shape_cast %138 : vector<2x8xf32> to vector<2x8x1xf32>
    %140 = vector.broadcast %139 : vector<2x8x1xf32> to vector<2x8x9xf32>
    %141 = arith.subf %137, %140 : vector<2x8x9xf32>
    %142 = math.exp %141 : vector<2x8x9xf32>
    %cst_57 = arith.constant dense<0.000000e+00> : vector<2x8xf32>
    %143 = vector.multi_reduction <add>, %142, %cst_57 [2] : vector<2x8x9xf32> to vector<2x8xf32>
    %144 = vector.shape_cast %143 : vector<2x8xf32> to vector<2x8x1xf32>
    %145 = tpu.reciprocal %144 {approx = true} : vector<2x8x1xf32> -> vector<2x8x1xf32>
    %146 = vector.broadcast %145 : vector<2x8x1xf32> to vector<2x8x9xf32>
    %147 = arith.mulf %142, %146 : vector<2x8x9xf32>
    %148 = arith.truncf %147 : vector<2x8x9xf32> to vector<2x8x9xbf16>
    %149 = vector.extract_strided_slice %87 {offsets = [0, 0, 8], sizes = [2, 9, 4], strides = [1, 1, 1]} : vector<2x9x32xbf16> to vector<2x9x4xbf16>
    "tpu.trace_start"() <{level = 10 : i32, message = "bqk,bkd->bqd"}> : () -> ()
    %cst_58 = arith.constant dense<0.000000e+00> : vector<2x8x4xf32>
    %150 = tpu.matmul %148, %149, %cst_58 {dimension_numbers = #tpu.dot_dimension_numbers<[2], [1], [1], [2], [0, 0, 0, 1, 1, 2], [0], [0]>} : vector<2x8x9xbf16>, vector<2x9x4xbf16>, vector<2x8x4xf32> -> vector<2x8x4xf32>
    "tpu.trace_stop"() : () -> ()
    %151 = vector.extract_strided_slice %79 {offsets = [0, 0, 12], sizes = [2, 8, 4], strides = [1, 1, 1]} : vector<2x8x32xbf16> to vector<2x8x4xbf16>
    %152 = vector.extract_strided_slice %83 {offsets = [0, 0, 12], sizes = [2, 9, 4], strides = [1, 1, 1]} : vector<2x9x32xbf16> to vector<2x9x4xbf16>
    "tpu.trace_start"() <{level = 10 : i32, message = "bqd,bkd->bqk"}> : () -> ()
    %cst_59 = arith.constant dense<0.000000e+00> : vector<2x8x9xf32>
    %153 = tpu.matmul %151, %152, %cst_59 {dimension_numbers = #tpu.dot_dimension_numbers<[2], [2], [1], [1], [0, 0, 0, 1, 1, 1], [0], [0]>} : vector<2x8x4xbf16>, vector<2x9x4xbf16>, vector<2x8x9xf32> -> vector<2x8x9xf32>
    %cst_60 = arith.constant -1.000000e+30 : f32
    "tpu.trace_stop"() : () -> ()
    %154 = vector.broadcast %cst_60 : f32 to vector<2x8x9xf32>
    %155 = arith.select %96, %153, %154 : vector<2x8x9xi1>, vector<2x8x9xf32>
    %cst_61 = arith.constant dense<0xFF800000> : vector<2x8xf32>
    %156 = vector.multi_reduction <maximumf>, %155, %cst_61 [2] : vector<2x8x9xf32> to vector<2x8xf32>
    %157 = vector.shape_cast %156 : vector<2x8xf32> to vector<2x8x1xf32>
    %158 = vector.broadcast %157 : vector<2x8x1xf32> to vector<2x8x9xf32>
    %159 = arith.subf %155, %158 : vector<2x8x9xf32>
    %160 = math.exp %159 : vector<2x8x9xf32>
    %cst_62 = arith.constant dense<0.000000e+00> : vector<2x8xf32>
    %161 = vector.multi_reduction <add>, %160, %cst_62 [2] : vector<2x8x9xf32> to vector<2x8xf32>
    %162 = vector.shape_cast %161 : vector<2x8xf32> to vector<2x8x1xf32>
    %163 = tpu.reciprocal %162 {approx = true} : vector<2x8x1xf32> -> vector<2x8x1xf32>
    %164 = vector.broadcast %163 : vector<2x8x1xf32> to vector<2x8x9xf32>
    %165 = arith.mulf %160, %164 : vector<2x8x9xf32>
    %166 = arith.truncf %165 : vector<2x8x9xf32> to vector<2x8x9xbf16>
    %167 = vector.extract_strided_slice %87 {offsets = [0, 0, 12], sizes = [2, 9, 4], strides = [1, 1, 1]} : vector<2x9x32xbf16> to vector<2x9x4xbf16>
    "tpu.trace_start"() <{level = 10 : i32, message = "bqk,bkd->bqd"}> : () -> ()
    %cst_63 = arith.constant dense<0.000000e+00> : vector<2x8x4xf32>
    %168 = tpu.matmul %166, %167, %cst_63 {dimension_numbers = #tpu.dot_dimension_numbers<[2], [1], [1], [2], [0, 0, 0, 1, 1, 2], [0], [0]>} : vector<2x8x9xbf16>, vector<2x9x4xbf16>, vector<2x8x4xf32> -> vector<2x8x4xf32>
    "tpu.trace_stop"() : () -> ()
    %169 = vector.extract_strided_slice %79 {offsets = [0, 0, 16], sizes = [2, 8, 4], strides = [1, 1, 1]} : vector<2x8x32xbf16> to vector<2x8x4xbf16>
    %170 = vector.extract_strided_slice %83 {offsets = [0, 0, 16], sizes = [2, 9, 4], strides = [1, 1, 1]} : vector<2x9x32xbf16> to vector<2x9x4xbf16>
    "tpu.trace_start"() <{level = 10 : i32, message = "bqd,bkd->bqk"}> : () -> ()
    %cst_64 = arith.constant dense<0.000000e+00> : vector<2x8x9xf32>
    %171 = tpu.matmul %169, %170, %cst_64 {dimension_numbers = #tpu.dot_dimension_numbers<[2], [2], [1], [1], [0, 0, 0, 1, 1, 1], [0], [0]>} : vector<2x8x4xbf16>, vector<2x9x4xbf16>, vector<2x8x9xf32> -> vector<2x8x9xf32>
    %cst_65 = arith.constant -1.000000e+30 : f32
    "tpu.trace_stop"() : () -> ()
    %172 = vector.broadcast %cst_65 : f32 to vector<2x8x9xf32>
    %173 = arith.select %96, %171, %172 : vector<2x8x9xi1>, vector<2x8x9xf32>
    %cst_66 = arith.constant dense<0xFF800000> : vector<2x8xf32>
    %174 = vector.multi_reduction <maximumf>, %173, %cst_66 [2] : vector<2x8x9xf32> to vector<2x8xf32>
    %175 = vector.shape_cast %174 : vector<2x8xf32> to vector<2x8x1xf32>
    %176 = vector.broadcast %175 : vector<2x8x1xf32> to vector<2x8x9xf32>
    %177 = arith.subf %173, %176 : vector<2x8x9xf32>
    %178 = math.exp %177 : vector<2x8x9xf32>
    %cst_67 = arith.constant dense<0.000000e+00> : vector<2x8xf32>
    %179 = vector.multi_reduction <add>, %178, %cst_67 [2] : vector<2x8x9xf32> to vector<2x8xf32>
    %180 = vector.shape_cast %179 : vector<2x8xf32> to vector<2x8x1xf32>
    %181 = tpu.reciprocal %180 {approx = true} : vector<2x8x1xf32> -> vector<2x8x1xf32>
    %182 = vector.broadcast %181 : vector<2x8x1xf32> to vector<2x8x9xf32>
    %183 = arith.mulf %178, %182 : vector<2x8x9xf32>
    %184 = arith.truncf %183 : vector<2x8x9xf32> to vector<2x8x9xbf16>
    %185 = vector.extract_strided_slice %87 {offsets = [0, 0, 16], sizes = [2, 9, 4], strides = [1, 1, 1]} : vector<2x9x32xbf16> to vector<2x9x4xbf16>
    "tpu.trace_start"() <{level = 10 : i32, message = "bqk,bkd->bqd"}> : () -> ()
    %cst_68 = arith.constant dense<0.000000e+00> : vector<2x8x4xf32>
    %186 = tpu.matmul %184, %185, %cst_68 {dimension_numbers = #tpu.dot_dimension_numbers<[2], [1], [1], [2], [0, 0, 0, 1, 1, 2], [0], [0]>} : vector<2x8x9xbf16>, vector<2x9x4xbf16>, vector<2x8x4xf32> -> vector<2x8x4xf32>
    "tpu.trace_stop"() : () -> ()
    %187 = vector.extract_strided_slice %79 {offsets = [0, 0, 20], sizes = [2, 8, 4], strides = [1, 1, 1]} : vector<2x8x32xbf16> to vector<2x8x4xbf16>
    %188 = vector.extract_strided_slice %83 {offsets = [0, 0, 20], sizes = [2, 9, 4], strides = [1, 1, 1]} : vector<2x9x32xbf16> to vector<2x9x4xbf16>
    "tpu.trace_start"() <{level = 10 : i32, message = "bqd,bkd->bqk"}> : () -> ()
    %cst_69 = arith.constant dense<0.000000e+00> : vector<2x8x9xf32>
    %189 = tpu.matmul %187, %188, %cst_69 {dimension_numbers = #tpu.dot_dimension_numbers<[2], [2], [1], [1], [0, 0, 0, 1, 1, 1], [0], [0]>} : vector<2x8x4xbf16>, vector<2x9x4xbf16>, vector<2x8x9xf32> -> vector<2x8x9xf32>
    %cst_70 = arith.constant -1.000000e+30 : f32
    "tpu.trace_stop"() : () -> ()
    %190 = vector.broadcast %cst_70 : f32 to vector<2x8x9xf32>
    %191 = arith.select %96, %189, %190 : vector<2x8x9xi1>, vector<2x8x9xf32>
    %cst_71 = arith.constant dense<0xFF800000> : vector<2x8xf32>
    %192 = vector.multi_reduction <maximumf>, %191, %cst_71 [2] : vector<2x8x9xf32> to vector<2x8xf32>
    %193 = vector.shape_cast %192 : vector<2x8xf32> to vector<2x8x1xf32>
    %194 = vector.broadcast %193 : vector<2x8x1xf32> to vector<2x8x9xf32>
    %195 = arith.subf %191, %194 : vector<2x8x9xf32>
    %196 = math.exp %195 : vector<2x8x9xf32>
    %cst_72 = arith.constant dense<0.000000e+00> : vector<2x8xf32>
    %197 = vector.multi_reduction <add>, %196, %cst_72 [2] : vector<2x8x9xf32> to vector<2x8xf32>
    %198 = vector.shape_cast %197 : vector<2x8xf32> to vector<2x8x1xf32>
    %199 = tpu.reciprocal %198 {approx = true} : vector<2x8x1xf32> -> vector<2x8x1xf32>
    %200 = vector.broadcast %199 : vector<2x8x1xf32> to vector<2x8x9xf32>
    %201 = arith.mulf %196, %200 : vector<2x8x9xf32>
    %202 = arith.truncf %201 : vector<2x8x9xf32> to vector<2x8x9xbf16>
    %203 = vector.extract_strided_slice %87 {offsets = [0, 0, 20], sizes = [2, 9, 4], strides = [1, 1, 1]} : vector<2x9x32xbf16> to vector<2x9x4xbf16>
    "tpu.trace_start"() <{level = 10 : i32, message = "bqk,bkd->bqd"}> : () -> ()
    %cst_73 = arith.constant dense<0.000000e+00> : vector<2x8x4xf32>
    %204 = tpu.matmul %202, %203, %cst_73 {dimension_numbers = #tpu.dot_dimension_numbers<[2], [1], [1], [2], [0, 0, 0, 1, 1, 2], [0], [0]>} : vector<2x8x9xbf16>, vector<2x9x4xbf16>, vector<2x8x4xf32> -> vector<2x8x4xf32>
    "tpu.trace_stop"() : () -> ()
    %205 = vector.extract_strided_slice %79 {offsets = [0, 0, 24], sizes = [2, 8, 4], strides = [1, 1, 1]} : vector<2x8x32xbf16> to vector<2x8x4xbf16>
    %206 = vector.extract_strided_slice %83 {offsets = [0, 0, 24], sizes = [2, 9, 4], strides = [1, 1, 1]} : vector<2x9x32xbf16> to vector<2x9x4xbf16>
    "tpu.trace_start"() <{level = 10 : i32, message = "bqd,bkd->bqk"}> : () -> ()
    %cst_74 = arith.constant dense<0.000000e+00> : vector<2x8x9xf32>
    %207 = tpu.matmul %205, %206, %cst_74 {dimension_numbers = #tpu.dot_dimension_numbers<[2], [2], [1], [1], [0, 0, 0, 1, 1, 1], [0], [0]>} : vector<2x8x4xbf16>, vector<2x9x4xbf16>, vector<2x8x9xf32> -> vector<2x8x9xf32>
    %cst_75 = arith.constant -1.000000e+30 : f32
    "tpu.trace_stop"() : () -> ()
    %208 = vector.broadcast %cst_75 : f32 to vector<2x8x9xf32>
    %209 = arith.select %96, %207, %208 : vector<2x8x9xi1>, vector<2x8x9xf32>
    %cst_76 = arith.constant dense<0xFF800000> : vector<2x8xf32>
    %210 = vector.multi_reduction <maximumf>, %209, %cst_76 [2] : vector<2x8x9xf32> to vector<2x8xf32>
    %211 = vector.shape_cast %210 : vector<2x8xf32> to vector<2x8x1xf32>
    %212 = vector.broadcast %211 : vector<2x8x1xf32> to vector<2x8x9xf32>
    %213 = arith.subf %209, %212 : vector<2x8x9xf32>
    %214 = math.exp %213 : vector<2x8x9xf32>
    %cst_77 = arith.constant dense<0.000000e+00> : vector<2x8xf32>
    %215 = vector.multi_reduction <add>, %214, %cst_77 [2] : vector<2x8x9xf32> to vector<2x8xf32>
    %216 = vector.shape_cast %215 : vector<2x8xf32> to vector<2x8x1xf32>
    %217 = tpu.reciprocal %216 {approx = true} : vector<2x8x1xf32> -> vector<2x8x1xf32>
    %218 = vector.broadcast %217 : vector<2x8x1xf32> to vector<2x8x9xf32>
    %219 = arith.mulf %214, %218 : vector<2x8x9xf32>
    %220 = arith.truncf %219 : vector<2x8x9xf32> to vector<2x8x9xbf16>
    %221 = vector.extract_strided_slice %87 {offsets = [0, 0, 24], sizes = [2, 9, 4], strides = [1, 1, 1]} : vector<2x9x32xbf16> to vector<2x9x4xbf16>
    "tpu.trace_start"() <{level = 10 : i32, message = "bqk,bkd->bqd"}> : () -> ()
    %cst_78 = arith.constant dense<0.000000e+00> : vector<2x8x4xf32>
    %222 = tpu.matmul %220, %221, %cst_78 {dimension_numbers = #tpu.dot_dimension_numbers<[2], [1], [1], [2], [0, 0, 0, 1, 1, 2], [0], [0]>} : vector<2x8x9xbf16>, vector<2x9x4xbf16>, vector<2x8x4xf32> -> vector<2x8x4xf32>
    "tpu.trace_stop"() : () -> ()
    %223 = vector.extract_strided_slice %79 {offsets = [0, 0, 28], sizes = [2, 8, 4], strides = [1, 1, 1]} : vector<2x8x32xbf16> to vector<2x8x4xbf16>
    %224 = vector.extract_strided_slice %83 {offsets = [0, 0, 28], sizes = [2, 9, 4], strides = [1, 1, 1]} : vector<2x9x32xbf16> to vector<2x9x4xbf16>
    "tpu.trace_start"() <{level = 10 : i32, message = "bqd,bkd->bqk"}> : () -> ()
    %cst_79 = arith.constant dense<0.000000e+00> : vector<2x8x9xf32>
    %225 = tpu.matmul %223, %224, %cst_79 {dimension_numbers = #tpu.dot_dimension_numbers<[2], [2], [1], [1], [0, 0, 0, 1, 1, 1], [0], [0]>} : vector<2x8x4xbf16>, vector<2x9x4xbf16>, vector<2x8x9xf32> -> vector<2x8x9xf32>
    %cst_80 = arith.constant -1.000000e+30 : f32
    "tpu.trace_stop"() : () -> ()
    %226 = vector.broadcast %cst_80 : f32 to vector<2x8x9xf32>
    %227 = arith.select %96, %225, %226 : vector<2x8x9xi1>, vector<2x8x9xf32>
    %cst_81 = arith.constant dense<0xFF800000> : vector<2x8xf32>
    %228 = vector.multi_reduction <maximumf>, %227, %cst_81 [2] : vector<2x8x9xf32> to vector<2x8xf32>
    %229 = vector.shape_cast %228 : vector<2x8xf32> to vector<2x8x1xf32>
    %230 = vector.broadcast %229 : vector<2x8x1xf32> to vector<2x8x9xf32>
    %231 = arith.subf %227, %230 : vector<2x8x9xf32>
    %232 = math.exp %231 : vector<2x8x9xf32>
    %cst_82 = arith.constant dense<0.000000e+00> : vector<2x8xf32>
    %233 = vector.multi_reduction <add>, %232, %cst_82 [2] : vector<2x8x9xf32> to vector<2x8xf32>
    %234 = vector.shape_cast %233 : vector<2x8xf32> to vector<2x8x1xf32>
    %235 = tpu.reciprocal %234 {approx = true} : vector<2x8x1xf32> -> vector<2x8x1xf32>
    %236 = vector.broadcast %235 : vector<2x8x1xf32> to vector<2x8x9xf32>
    %237 = arith.mulf %232, %236 : vector<2x8x9xf32>
    %238 = arith.truncf %237 : vector<2x8x9xf32> to vector<2x8x9xbf16>
    %239 = vector.extract_strided_slice %87 {offsets = [0, 0, 28], sizes = [2, 9, 4], strides = [1, 1, 1]} : vector<2x9x32xbf16> to vector<2x9x4xbf16>
    "tpu.trace_start"() <{level = 10 : i32, message = "bqk,bkd->bqd"}> : () -> ()
    %cst_83 = arith.constant dense<0.000000e+00> : vector<2x8x4xf32>
    %240 = tpu.matmul %238, %239, %cst_83 {dimension_numbers = #tpu.dot_dimension_numbers<[2], [1], [1], [2], [0, 0, 0, 1, 1, 2], [0], [0]>} : vector<2x8x9xbf16>, vector<2x9x4xbf16>, vector<2x8x4xf32> -> vector<2x8x4xf32>
    "tpu.trace_stop"() : () -> ()
    %241 = tpu.concatenate %114, %132, %150, %168, %186, %204, %222, %240 in 2 : vector<2x8x4xf32>, vector<2x8x4xf32>, vector<2x8x4xf32>, vector<2x8x4xf32>, vector<2x8x4xf32>, vector<2x8x4xf32>, vector<2x8x4xf32>, vector<2x8x4xf32> -> vector<2x8x32xf32>
    %242 = vector.shape_cast %241 : vector<2x8x32xf32> to vector<16x32xf32>
    %243 = arith.truncf %242 : vector<16x32xf32> to vector<16x32xbf16>
    %c5 = arith.constant 5 : index
    %c0_84 = arith.constant 0 : index
    %c0_85 = arith.constant 0 : index
    %244 = vector.load %arg5[%c5, %c0_84, %c0_85] : memref<6x32x32xbf16, #tpu.memory_space<vmem>>, vector<1x32x32xbf16>
    %245 = vector.shape_cast %244 : vector<1x32x32xbf16> to vector<32x32xbf16>
    %cst_86 = arith.constant dense<0.000000e+00> : vector<16x32xf32>
    %246 = tpu.matmul %243, %245, %cst_86 {dimension_numbers = #tpu.dot_dimension_numbers<[1], [0], [0], [1], [0, 0, 1, 1], [], []>} : vector<16x32xbf16>, vector<32x32xbf16>, vector<16x32xf32> -> vector<16x32xf32>
    %247 = vector.broadcast %1 : vector<1x32xf32> to vector<16x32xf32>
    %248 = arith.addf %246, %247 : vector<16x32xf32>
    %249 = arith.addf %15, %248 : vector<16x32xf32>
    %cst_87 = arith.constant dense<0.000000e+00> : vector<16xf32>
    %250 = vector.multi_reduction <add>, %249, %cst_87 [1] : vector<16x32xf32> to vector<16xf32>
    %251 = vector.shape_cast %250 : vector<16xf32> to vector<16x1xf32>
    %cst_88 = arith.constant 3.200000e+01 : f32
    %252 = vector.broadcast %cst_88 : f32 to vector<16x1xf32>
    %253 = arith.divf %251, %252 : vector<16x1xf32>
    %254 = vector.broadcast %253 : vector<16x1xf32> to vector<16x32xf32>
    %255 = arith.subf %249, %254 : vector<16x32xf32>
    %256 = arith.mulf %255, %255 : vector<16x32xf32>
    %cst_89 = arith.constant dense<0.000000e+00> : vector<16xf32>
    %257 = vector.multi_reduction <add>, %256, %cst_89 [1] : vector<16x32xf32> to vector<16xf32>
    %258 = vector.shape_cast %257 : vector<16xf32> to vector<16x1xf32>
    %cst_90 = arith.constant 3.200000e+01 : f32
    %259 = vector.broadcast %cst_90 : f32 to vector<16x1xf32>
    %260 = arith.divf %258, %259 : vector<16x1xf32>
    %261 = vector.broadcast %253 : vector<16x1xf32> to vector<16x32xf32>
    %262 = arith.subf %249, %261 : vector<16x32xf32>
    %cst_91 = arith.constant 9.99999974E-6 : f32
    %263 = vector.broadcast %cst_91 : f32 to vector<16x1xf32>
    %264 = arith.addf %260, %263 : vector<16x1xf32>
    %265 = math.rsqrt %264 : vector<16x1xf32>
    %266 = vector.broadcast %265 : vector<16x1xf32> to vector<16x32xf32>
    %267 = arith.mulf %262, %266 : vector<16x32xf32>
    %268 = vector.broadcast %8 : vector<1x32xf32> to vector<16x32xf32>
    %269 = arith.mulf %267, %268 : vector<16x32xf32>
    %270 = vector.broadcast %9 : vector<1x32xf32> to vector<16x32xf32>
    %271 = arith.addf %269, %270 : vector<16x32xf32>
    %272 = arith.truncf %271 : vector<16x32xf32> to vector<16x32xbf16>
    %c0_92 = arith.constant 0 : index
    %c0_93 = arith.constant 0 : index
    %273 = vector.load %arg6[%c0_92, %c0_93] : memref<32x32xbf16, #tpu.memory_space<vmem>>, vector<32x32xbf16>
    %cst_94 = arith.constant dense<0.000000e+00> : vector<16x32xf32>
    %274 = tpu.matmul %272, %273, %cst_94 {dimension_numbers = #tpu.dot_dimension_numbers<[1], [0], [0], [1], [0, 0, 1, 1], [], []>} : vector<16x32xbf16>, vector<32x32xbf16>, vector<16x32xf32> -> vector<16x32xf32>
    %c0_95 = arith.constant 0 : index
    %c0_96 = arith.constant 0 : index
    %275 = vector.load %arg8[%c0_95, %c0_96] : memref<1x32xf32, #tpu.memory_space<vmem>>, vector<1x32xf32>
    %276 = vector.broadcast %275 : vector<1x32xf32> to vector<16x32xf32>
    %277 = arith.addf %274, %276 : vector<16x32xf32>
    %cst_97 = arith.constant 0.000000e+00 : f32
    %278 = vector.broadcast %cst_97 : f32 to vector<16x32xf32>
    %279 = arith.maximumf %277, %278 : vector<16x32xf32>
    %280 = arith.truncf %279 : vector<16x32xf32> to vector<16x32xbf16>
    %c0_98 = arith.constant 0 : index
    %c0_99 = arith.constant 0 : index
    %281 = vector.load %arg7[%c0_98, %c0_99] : memref<32x32xbf16, #tpu.memory_space<vmem>>, vector<32x32xbf16>
    %cst_100 = arith.constant dense<0.000000e+00> : vector<16x32xf32>
    %282 = tpu.matmul %280, %281, %cst_100 {dimension_numbers = #tpu.dot_dimension_numbers<[1], [0], [0], [1], [0, 0, 1, 1], [], []>} : vector<16x32xbf16>, vector<32x32xbf16>, vector<16x32xf32> -> vector<16x32xf32>
    %283 = vector.broadcast %10 : vector<1x32xf32> to vector<16x32xf32>
    %284 = arith.addf %282, %283 : vector<16x32xf32>
    %285 = arith.addf %271, %284 : vector<16x32xf32>
    %cst_101 = arith.constant dense<0.000000e+00> : vector<16xf32>
    %286 = vector.multi_reduction <add>, %285, %cst_101 [1] : vector<16x32xf32> to vector<16xf32>
    %287 = vector.shape_cast %286 : vector<16xf32> to vector<16x1xf32>
    %cst_102 = arith.constant 3.200000e+01 : f32
    %288 = vector.broadcast %cst_102 : f32 to vector<16x1xf32>
    %289 = arith.divf %287, %288 : vector<16x1xf32>
    %290 = vector.broadcast %289 : vector<16x1xf32> to vector<16x32xf32>
    %291 = arith.subf %285, %290 : vector<16x32xf32>
    %292 = arith.mulf %291, %291 : vector<16x32xf32>
    %cst_103 = arith.constant dense<0.000000e+00> : vector<16xf32>
    %293 = vector.multi_reduction <add>, %292, %cst_103 [1] : vector<16x32xf32> to vector<16xf32>
    %294 = vector.shape_cast %293 : vector<16xf32> to vector<16x1xf32>
    %cst_104 = arith.constant 3.200000e+01 : f32
    %295 = vector.broadcast %cst_104 : f32 to vector<16x1xf32>
    %296 = arith.divf %294, %295 : vector<16x1xf32>
    %297 = vector.broadcast %289 : vector<16x1xf32> to vector<16x32xf32>
    %298 = arith.subf %285, %297 : vector<16x32xf32>
    %cst_105 = arith.constant 9.99999974E-6 : f32
    %299 = vector.broadcast %cst_105 : f32 to vector<16x1xf32>
    %300 = arith.addf %296, %299 : vector<16x1xf32>
    %301 = math.rsqrt %300 : vector<16x1xf32>
    %302 = vector.broadcast %301 : vector<16x1xf32> to vector<16x32xf32>
    %303 = arith.mulf %298, %302 : vector<16x32xf32>
    %304 = vector.broadcast %11 : vector<1x32xf32> to vector<16x32xf32>
    %305 = arith.mulf %303, %304 : vector<16x32xf32>
    %306 = vector.broadcast %12 : vector<1x32xf32> to vector<16x32xf32>
    %307 = arith.addf %305, %306 : vector<16x32xf32>
    %308 = vector.shape_cast %307 : vector<16x32xf32> to vector<2x8x32xf32>
    %309 = math.tanh %308 : vector<2x8x32xf32>
    %310 = vector.shape_cast %13 : vector<1x32xf32> to vector<1x1x32xf32>
    %311 = vector.broadcast %310 : vector<1x1x32xf32> to vector<2x8x32xf32>
    %312 = arith.mulf %309, %311 : vector<2x8x32xf32>
    %cst_106 = arith.constant dense<0.000000e+00> : vector<2x8xf32>
    %313 = vector.multi_reduction <add>, %312, %cst_106 [2] : vector<2x8x32xf32> to vector<2x8xf32>
    %cst_107 = arith.constant 1.000000e+00 : f32
    %314 = vector.broadcast %cst_107 : f32 to vector<2x8xf32>
    %315 = arith.mulf %313, %314 : vector<2x8xf32>
    %316 = vector.extract_strided_slice %88 {offsets = [0, 0, 0], sizes = [2, 1, 8], strides = [1, 1, 1]} : vector<2x1x9xf32> to vector<2x1x8xf32>
    %317 = vector.shape_cast %316 : vector<2x1x8xf32> to vector<2x8xf32>
    %cst_108 = arith.constant 0.000000e+00 : f32
    %318 = vector.broadcast %cst_108 : f32 to vector<2x8xf32>
    %319 = arith.cmpf ogt, %317, %318 : vector<2x8xf32>
    %cst_109 = arith.constant 0.000000e+00 : f32
    %cst_110 = arith.constant -103.616325 : f32
    %320 = vector.broadcast %cst_109 : f32 to vector<2x8xf32>
    %321 = vector.broadcast %cst_110 : f32 to vector<2x8xf32>
    %322 = arith.select %319, %320, %321 : vector<2x8xi1>, vector<2x8xf32>
    %323 = arith.addf %315, %322 : vector<2x8xf32>
    %cst_111 = arith.constant dense<0xFF800000> : vector<2xf32>
    %324 = vector.multi_reduction <maximumf>, %323, %cst_111 [1] : vector<2x8xf32> to vector<2xf32>
    %325 = vector.shape_cast %324 : vector<2xf32> to vector<2x1xf32>
    %326 = vector.broadcast %325 : vector<2x1xf32> to vector<2x8xf32>
    %327 = arith.subf %323, %326 : vector<2x8xf32>
    %328 = math.exp %327 : vector<2x8xf32>
    %cst_112 = arith.constant dense<0.000000e+00> : vector<2xf32>
    %329 = vector.multi_reduction <add>, %328, %cst_112 [1] : vector<2x8xf32> to vector<2xf32>
    %330 = vector.shape_cast %329 : vector<2xf32> to vector<2x1xf32>
    %331 = math.log %330 : vector<2x1xf32>
    %332 = vector.broadcast %331 : vector<2x1xf32> to vector<2x8xf32>
    %333 = arith.subf %327, %332 : vector<2x8xf32>
    %334 = vector.shape_cast %333 : vector<2x8xf32> to vector<2x1x8xf32>
    %c0_113 = arith.constant 0 : index
    %c0_114 = arith.constant 0 : index
    %c0_115 = arith.constant 0 : index
    %335 = vector.load %arg11[%c0_113, %c0_114, %c0_115] : memref<2x1x8xf32, #tpu.memory_space<vmem>>, vector<2x1x8xf32>
    tpu.vector_store %arg11[%c0_113, %c0_114, %c0_115], %334 {strides = array<i32>} : memref<2x1x8xf32, #tpu.memory_space<vmem>>, vector<2x1x8xf32>,
    return
  }
  func.func @transform_0(%arg0: i32) -> (i32, i32, i32) {
    %c0_i32 = arith.constant 0 : i32
    %c0_i32_0 = arith.constant 0 : i32
    %c0_i32_1 = arith.constant 0 : i32
    return %arg0, %c0_i32, %c0_i32_0 : i32, i32, i32
  }
  func.func @transform_1(%arg0: i32) -> (i32, i32, i32) {
    %c0_i32 = arith.constant 0 : i32
    %c0_i32_0 = arith.constant 0 : i32
    %c0_i32_1 = arith.constant 0 : i32
    return %arg0, %c0_i32, %c0_i32_0 : i32, i32, i32
  }
  func.func @transform_2(%arg0: i32) -> (i32, i32, i32) {
    %c0_i32 = arith.constant 0 : i32
    %c0_i32_0 = arith.constant 0 : i32
    %c0_i32_1 = arith.constant 0 : i32
    return %arg0, %c0_i32, %c0_i32_0 : i32, i32, i32
  }
  func.func @transform_3(%arg0: i32) -> (i32, i32, i32) {
    %c0_i32 = arith.constant 0 : i32
    %c0_i32_0 = arith.constant 0 : i32
    %c0_i32_1 = arith.constant 0 : i32
    return %arg0, %c0_i32, %c0_i32_0 : i32, i32, i32
  }
  func.func @transform_4(%arg0: i32) -> (i32, i32, i32) {
    %c0_i32 = arith.constant 0 : i32
    %c0_i32_0 = arith.constant 0 : i32
    %c0_i32_1 = arith.constant 0 : i32
    %c0_i32_2 = arith.constant 0 : i32
    return %c0_i32, %c0_i32_0, %c0_i32_1 : i32, i32, i32
  }
  func.func @transform_5(%arg0: i32) -> (i32, i32) {
    %c0_i32 = arith.constant 0 : i32
    %c0_i32_0 = arith.constant 0 : i32
    %c0_i32_1 = arith.constant 0 : i32
    return %c0_i32, %c0_i32_0 : i32, i32
  }
  func.func @transform_6(%arg0: i32) -> (i32, i32) {
    %c0_i32 = arith.constant 0 : i32
    %c0_i32_0 = arith.constant 0 : i32
    %c0_i32_1 = arith.constant 0 : i32
    return %c0_i32, %c0_i32_0 : i32, i32
  }
  func.func @transform_7(%arg0: i32) -> (i32, i32) {
    %c0_i32 = arith.constant 0 : i32
    %c0_i32_0 = arith.constant 0 : i32
    %c0_i32_1 = arith.constant 0 : i32
    return %c0_i32, %c0_i32_0 : i32, i32
  }
  func.func @transform_8(%arg0: i32) -> (i32, i32) {
    %c0_i32 = arith.constant 0 : i32
    %c0_i32_0 = arith.constant 0 : i32
    %c0_i32_1 = arith.constant 0 : i32
    return %c0_i32, %c0_i32_0 : i32, i32
  }
  func.func @transform_9(%arg0: i32) -> (i32, i32) {
    %c0_i32 = arith.constant 0 : i32
    %c0_i32_0 = arith.constant 0 : i32
    %c0_i32_1 = arith.constant 0 : i32
    return %c0_i32, %c0_i32_0 : i32, i32
  }
  func.func @transform_10(%arg0: i32) -> (i32, i32, i32) {
    %c0_i32 = arith.constant 0 : i32
    %c0_i32_0 = arith.constant 0 : i32
    %c0_i32_1 = arith.constant 0 : i32
    return %arg0, %c0_i32, %c0_i32_0 : i32, i32, i32
  }
}

module attributes {stable_mosaic.version = 11 : i64} {
  func.func @_ptr_kernel(%arg0: i32, %arg1: memref<2x8x32xf32, #tpu.memory_space<vmem>>, %arg2: memref<2x1x32xf32, #tpu.memory_space<vmem>>, %arg3: memref<2x8x1xf32, #tpu.memory_space<vmem>>, %arg4: memref<2x1x9xf32, #tpu.memory_space<vmem>>, %arg5: memref<6x32x32xbf16, #tpu.memory_space<vmem>>, %arg6: memref<32x32xbf16, #tpu.memory_space<vmem>>, %arg7: memref<32x32xbf16, #tpu.memory_space<vmem>>, %arg8: memref<1x32xf32, #tpu.memory_space<vmem>>, %arg9: memref<13x32xf32, #tpu.memory_space<vmem>>, %arg10: memref<32x32xf32, #tpu.memory_space<vmem>>, %arg11: memref<2x1x8xf32, #tpu.memory_space<vmem>>) attributes {dimension_semantics = [#tpu.dimension_semantics<parallel>], iteration_bounds = array<i64: 2>, scalar_prefetch = 0 : i64, scratch_operands = 0 : i64, tpu.core_type = #tpu.core_type<tc>, window_params = [{transform_indices = @transform_0, window_bounds = array<i64: 2, 8, 32>}, {transform_indices = @transform_1, window_bounds = array<i64: 2, 1, 32>}, {transform_indices = @transform_2, window_bounds = array<i64: 2, 8, 1>}, {transform_indices = @transform_3, window_bounds = array<i64: 2, 1, 9>}, {pipeline_mode = #tpu.pipeline_mode<synchronous>, transform_indices = @transform_4, window_bounds = array<i64: 6, 32, 32>}, {pipeline_mode = #tpu.pipeline_mode<synchronous>, transform_indices = @transform_5, window_bounds = array<i64: 32, 32>}, {pipeline_mode = #tpu.pipeline_mode<synchronous>, transform_indices = @transform_6, window_bounds = array<i64: 32, 32>}, {pipeline_mode = #tpu.pipeline_mode<synchronous>, transform_indices = @transform_7, window_bounds = array<i64: 1, 32>}, {pipeline_mode = #tpu.pipeline_mode<synchronous>, transform_indices = @transform_8, window_bounds = array<i64: 13, 32>}, {pipeline_mode = #tpu.pipeline_mode<synchronous>, transform_indices = @transform_9, window_bounds = array<i64: 32, 32>}, {transform_indices = @transform_10, window_bounds = array<i64: 2, 1, 8>}]} {
    %c0 = arith.constant 0 : index
    %c0_0 = arith.constant 0 : index
    %0 = vector.load %arg9[%c0, %c0_0] : memref<13x32xf32, #tpu.memory_space<vmem>>, vector<13x32xf32>
    %1 = vector.extract_strided_slice %0 {offsets = [0, 0], sizes = [1, 32], strides = [1, 1]} : vector<13x32xf32> to vector<1x32xf32>
    %2 = vector.extract_strided_slice %0 {offsets = [1, 0], sizes = [1, 32], strides = [1, 1]} : vector<13x32xf32> to vector<1x32xf32>
    %3 = vector.extract_strided_slice %0 {offsets = [2, 0], sizes = [1, 32], strides = [1, 1]} : vector<13x32xf32> to vector<1x32xf32>
    %4 = vector.extract_strided_slice %0 {offsets = [3, 0], sizes = [1, 32], strides = [1, 1]} : vector<13x32xf32> to vector<1x32xf32>
    %5 = vector.extract_strided_slice %0 {offsets = [4, 0], sizes = [1, 32], strides = [1, 1]} : vector<13x32xf32> to vector<1x32xf32>
    %6 = vector.extract_strided_slice %0 {offsets = [5, 0], sizes = [1, 32], strides = [1, 1]} : vector<13x32xf32> to vector<1x32xf32>
    %7 = vector.extract_strided_slice %0 {offsets = [6, 0], sizes = [1, 32], strides = [1, 1]} : vector<13x32xf32> to vector<1x32xf32>
    %8 = vector.extract_strided_slice %0 {offsets = [7, 0], sizes = [1, 32], strides = [1, 1]} : vector<13x32xf32> to vector<1x32xf32>
    %9 = vector.extract_strided_slice %0 {offsets = [8, 0], sizes = [1, 32], strides = [1, 1]} : vector<13x32xf32> to vector<1x32xf32>
    %10 = vector.extract_strided_slice %0 {offsets = [9, 0], sizes = [1, 32], strides = [1, 1]} : vector<13x32xf32> to vector<1x32xf32>
    %11 = vector.extract_strided_slice %0 {offsets = [10, 0], sizes = [1, 32], strides = [1, 1]} : vector<13x32xf32> to vector<1x32xf32>
    %12 = vector.extract_strided_slice %0 {offsets = [11, 0], sizes = [1, 32], strides = [1, 1]} : vector<13x32xf32> to vector<1x32xf32>
    %13 = vector.extract_strided_slice %0 {offsets = [12, 0], sizes = [1, 32], strides = [1, 1]} : vector<13x32xf32> to vector<1x32xf32>
    %c0_1 = arith.constant 0 : index
    %c0_2 = arith.constant 0 : index
    %c0_3 = arith.constant 0 : index
    %14 = vector.load %arg1[%c0_1, %c0_2, %c0_3] : memref<2x8x32xf32, #tpu.memory_space<vmem>>, vector<2x8x32xf32>
    %15 = vector.shape_cast %14 : vector<2x8x32xf32> to vector<16x32xf32>
    %c0_4 = arith.constant 0 : index
    %c0_5 = arith.constant 0 : index
    %c0_6 = arith.constant 0 : index
    %16 = vector.load %arg2[%c0_4, %c0_5, %c0_6] : memref<2x1x32xf32, #tpu.memory_space<vmem>>, vector<2x1x32xf32>
    %17 = vector.shape_cast %16 : vector<2x1x32xf32> to vector<2x32xf32>
    %18 = arith.truncf %15 : vector<16x32xf32> to vector<16x32xbf16>
    %19 = arith.truncf %17 : vector<2x32xf32> to vector<2x32xbf16>
    %c0_7 = arith.constant 0 : index
    %c0_8 = arith.constant 0 : index
    %c0_9 = arith.constant 0 : index
    %20 = vector.load %arg5[%c0_7, %c0_8, %c0_9] : memref<6x32x32xbf16, #tpu.memory_space<vmem>>, vector<1x32x32xbf16>
    %21 = vector.shape_cast %20 : vector<1x32x32xbf16> to vector<32x32xbf16>
    %cst = arith.constant dense<0.000000e+00> : vector<16x32xf32>
    %22 = tpu.matmul %18, %21, %cst {dimension_numbers = #tpu.dot_dimension_numbers<[1], [0], [0], [1], [0, 0, 1, 1], [], []>} : vector<16x32xbf16>, vector<32x32xbf16>, vector<16x32xf32> -> vector<16x32xf32>
    %c1 = arith.constant 1 : index
    %c0_10 = arith.constant 0 : index
    %c0_11 = arith.constant 0 : index
    %23 = vector.load %arg5[%c1, %c0_10, %c0_11] : memref<6x32x32xbf16, #tpu.memory_space<vmem>>, vector<1x32x32xbf16>
    %24 = vector.shape_cast %23 : vector<1x32x32xbf16> to vector<32x32xbf16>
    %cst_12 = arith.constant dense<0.000000e+00> : vector<16x32xf32>
    %25 = tpu.matmul %18, %24, %cst_12 {dimension_numbers = #tpu.dot_dimension_numbers<[1], [0], [0], [1], [0, 0, 1, 1], [], []>} : vector<16x32xbf16>, vector<32x32xbf16>, vector<16x32xf32> -> vector<16x32xf32>
    %c2 = arith.constant 2 : index
    %c0_13 = arith.constant 0 : index
    %c0_14 = arith.constant 0 : index
    %26 = vector.load %arg5[%c2, %c0_13, %c0_14] : memref<6x32x32xbf16, #tpu.memory_space<vmem>>, vector<1x32x32xbf16>
    %27 = vector.shape_cast %26 : vector<1x32x32xbf16> to vector<32x32xbf16>
    %cst_15 = arith.constant dense<0.000000e+00> : vector<16x32xf32>
    %28 = tpu.matmul %18, %27, %cst_15 {dimension_numbers = #tpu.dot_dimension_numbers<[1], [0], [0], [1], [0, 0, 1, 1], [], []>} : vector<16x32xbf16>, vector<32x32xbf16>, vector<16x32xf32> -> vector<16x32xf32>
    %c3 = arith.constant 3 : index
    %c0_16 = arith.constant 0 : index
    %c0_17 = arith.constant 0 : index
    %29 = vector.load %arg5[%c3, %c0_16, %c0_17] : memref<6x32x32xbf16, #tpu.memory_space<vmem>>, vector<1x32x32xbf16>
    %30 = vector.shape_cast %29 : vector<1x32x32xbf16> to vector<32x32xbf16>
    %cst_18 = arith.constant dense<0.000000e+00> : vector<2x32xf32>
    %31 = tpu.matmul %19, %30, %cst_18 {dimension_numbers = #tpu.dot_dimension_numbers<[1], [0], [0], [1], [0, 0, 1, 1], [], []>} : vector<2x32xbf16>, vector<32x32xbf16>, vector<2x32xf32> -> vector<2x32xf32>
    %c4 = arith.constant 4 : index
    %c0_19 = arith.constant 0 : index
    %c0_20 = arith.constant 0 : index
    %32 = vector.load %arg5[%c4, %c0_19, %c0_20] : memref<6x32x32xbf16, #tpu.memory_space<vmem>>, vector<1x32x32xbf16>
    %33 = vector.shape_cast %32 : vector<1x32x32xbf16> to vector<32x32xbf16>
    %cst_21 = arith.constant dense<0.000000e+00> : vector<2x32xf32>
    %34 = tpu.matmul %19, %33, %cst_21 {dimension_numbers = #tpu.dot_dimension_numbers<[1], [0], [0], [1], [0, 0, 1, 1], [], []>} : vector<2x32xbf16>, vector<32x32xbf16>, vector<2x32xf32> -> vector<2x32xf32>
    %c0_22 = arith.constant 0 : index
    %c0_23 = arith.constant 0 : index
    %35 = vector.load %arg10[%c0_22, %c0_23] : memref<32x32xf32, #tpu.memory_space<vmem>>, vector<32x32xf32>
    %cst_24 = arith.constant dense<0.000000e+00> : vector<16x32xf32>
    %36 = tpu.matmul %22, %35, %cst_24 {dimension_numbers = #tpu.dot_dimension_numbers<[1], [0], [0], [1], [0, 0, 1, 1], [], []>} : vector<16x32xf32>, vector<32x32xf32>, vector<16x32xf32> -> vector<16x32xf32>
    %37 = arith.subf %22, %36 : vector<16x32xf32>
    %38 = arith.mulf %37, %37 : vector<16x32xf32>
    %cst_25 = arith.constant dense<0.000000e+00> : vector<16x32xf32>
    %39 = tpu.matmul %38, %35, %cst_25 {dimension_numbers = #tpu.dot_dimension_numbers<[1], [0], [0], [1], [0, 0, 1, 1], [], []>} : vector<16x32xf32>, vector<32x32xf32>, vector<16x32xf32> -> vector<16x32xf32>
    %cst_26 = arith.constant 9.99999974E-6 : f32
    %40 = vector.broadcast %cst_26 : f32 to vector<16x32xf32>
    %41 = arith.addf %39, %40 : vector<16x32xf32>
    %42 = math.rsqrt %41 : vector<16x32xf32>
    %43 = arith.mulf %37, %42 : vector<16x32xf32>
    %44 = vector.broadcast %2 : vector<1x32xf32> to vector<16x32xf32>
    %45 = arith.mulf %43, %44 : vector<16x32xf32>
    %46 = vector.broadcast %3 : vector<1x32xf32> to vector<16x32xf32>
    %47 = arith.addf %45, %46 : vector<16x32xf32>
    %cst_27 = arith.constant 0.420448214 : f32
    %48 = vector.broadcast %cst_27 : f32 to vector<16x32xf32>
    %49 = arith.mulf %47, %48 : vector<16x32xf32>
    %cst_28 = arith.constant dense<0.000000e+00> : vector<16x32xf32>
    %50 = tpu.matmul %25, %35, %cst_28 {dimension_numbers = #tpu.dot_dimension_numbers<[1], [0], [0], [1], [0, 0, 1, 1], [], []>} : vector<16x32xf32>, vector<32x32xf32>, vector<16x32xf32> -> vector<16x32xf32>
    %51 = arith.subf %25, %50 : vector<16x32xf32>
    %52 = arith.mulf %51, %51 : vector<16x32xf32>
    %cst_29 = arith.constant dense<0.000000e+00> : vector<16x32xf32>
    %53 = tpu.matmul %52, %35, %cst_29 {dimension_numbers = #tpu.dot_dimension_numbers<[1], [0], [0], [1], [0, 0, 1, 1], [], []>} : vector<16x32xf32>, vector<32x32xf32>, vector<16x32xf32> -> vector<16x32xf32>
    %cst_30 = arith.constant 9.99999974E-6 : f32
    %54 = vector.broadcast %cst_30 : f32 to vector<16x32xf32>
    %55 = arith.addf %53, %54 : vector<16x32xf32>
    %56 = math.rsqrt %55 : vector<16x32xf32>
    %57 = arith.mulf %51, %56 : vector<16x32xf32>
    %58 = vector.broadcast %4 : vector<1x32xf32> to vector<16x32xf32>
    %59 = arith.mulf %57, %58 : vector<16x32xf32>
    %60 = vector.broadcast %5 : vector<1x32xf32> to vector<16x32xf32>
    %61 = arith.addf %59, %60 : vector<16x32xf32>
    %cst_31 = arith.constant 0.420448214 : f32
    %62 = vector.broadcast %cst_31 : f32 to vector<16x32xf32>
    %63 = arith.mulf %61, %62 : vector<16x32xf32>
    %cst_32 = arith.constant dense<0.000000e+00> : vector<2x32xf32>
    %64 = tpu.matmul %31, %35, %cst_32 {dimension_numbers = #tpu.dot_dimension_numbers<[1], [0], [0], [1], [0, 0, 1, 1], [], []>} : vector<2x32xf32>, vector<32x32xf32>, vector<2x32xf32> -> vector<2x32xf32>
    %65 = arith.subf %31, %64 : vector<2x32xf32>
    %66 = arith.mulf %65, %65 : vector<2x32xf32>
    %cst_33 = arith.constant dense<0.000000e+00> : vector<2x32xf32>
    %67 = tpu.matmul %66, %35, %cst_33 {dimension_numbers = #tpu.dot_dimension_numbers<[1], [0], [0], [1], [0, 0, 1, 1], [], []>} : vector<2x32xf32>, vector<32x32xf32>, vector<2x32xf32> -> vector<2x32xf32>
    %cst_34 = arith.constant 9.99999974E-6 : f32
    %68 = vector.broadcast %cst_34 : f32 to vector<2x32xf32>
    %69 = arith.addf %67, %68 : vector<2x32xf32>
    %70 = math.rsqrt %69 : vector<2x32xf32>
    %71 = arith.mulf %65, %70 : vector<2x32xf32>
    %72 = vector.broadcast %6 : vector<1x32xf32> to vector<2x32xf32>
    %73 = arith.mulf %71, %72 : vector<2x32xf32>
    %74 = vector.broadcast %7 : vector<1x32xf32> to vector<2x32xf32>
    %75 = arith.addf %73, %74 : vector<2x32xf32>
    %cst_35 = arith.constant 0.420448214 : f32
    %76 = vector.broadcast %cst_35 : f32 to vector<2x32xf32>
    %77 = arith.mulf %75, %76 : vector<2x32xf32>
    %78 = vector.shape_cast %49 : vector<16x32xf32> to vector<2x8x32xf32>
    %79 = arith.truncf %78 : vector<2x8x32xf32> to vector<2x8x32xbf16>
    %80 = vector.shape_cast %63 : vector<16x32xf32> to vector<2x8x32xf32>
    %81 = vector.shape_cast %77 : vector<2x32xf32> to vector<2x1x32xf32>
    %82 = tpu.concatenate %80, %81 in 1 : vector<2x8x32xf32>, vector<2x1x32xf32> -> vector<2x9x32xf32>
    %83 = arith.truncf %82 : vector<2x9x32xf32> to vector<2x9x32xbf16>
    %84 = vector.shape_cast %28 : vector<16x32xf32> to vector<2x8x32xf32>
    %85 = vector.shape_cast %34 : vector<2x32xf32> to vector<2x1x32xf32>
    %86 = tpu.concatenate %84, %85 in 1 : vector<2x8x32xf32>, vector<2x1x32xf32> -> vector<2x9x32xf32>
    %87 = arith.truncf %86 : vector<2x9x32xf32> to vector<2x9x32xbf16>
    %c0_36 = arith.constant 0 : index
    %c0_37 = arith.constant 0 : index
    %c0_38 = arith.constant 0 : index
    %88 = vector.load %arg4[%c0_36, %c0_37, %c0_38] : memref<2x1x9xf32, #tpu.memory_space<vmem>>, vector<2x1x9xf32>
    %c0_39 = arith.constant 0 : index
    %c0_40 = arith.constant 0 : index
    %c0_41 = arith.constant 0 : index
    %89 = vector.load %arg3[%c0_39, %c0_40, %c0_41] : memref<2x8x1xf32, #tpu.memory_space<vmem>>, vector<2x8x1xf32>
    %cst_42 = arith.constant 0.000000e+00 : f32
    %90 = vector.broadcast %cst_42 : f32 to vector<2x8x1xf32>
    %91 = arith.cmpf ogt, %89, %90 : vector<2x8x1xf32>
    %cst_43 = arith.constant 0.000000e+00 : f32
    %92 = vector.broadcast %cst_43 : f32 to vector<2x1x9xf32>
    %93 = arith.cmpf ogt, %88, %92 : vector<2x1x9xf32>
    %94 = vector.broadcast %91 : vector<2x8x1xi1> to vector<2x8x9xi1>
    %95 = vector.broadcast %93 : vector<2x1x9xi1> to vector<2x8x9xi1>
    %96 = arith.andi %94, %95 : vector<2x8x9xi1>
    %97 = vector.extract_strided_slice %79 {offsets = [0, 0, 0], sizes = [2, 8, 4], strides = [1, 1, 1]} : vector<2x8x32xbf16> to vector<2x8x4xbf16>
    %98 = vector.extract_strided_slice %83 {offsets = [0, 0, 0], sizes = [2, 9, 4], strides = [1, 1, 1]} : vector<2x9x32xbf16> to vector<2x9x4xbf16>
    "tpu.trace_start"() <{level = 10 : i32, message = "bqd,bkd->bqk"}> : () -> ()
    %cst_44 = arith.constant dense<0.000000e+00> : vector<2x8x9xf32>
    %99 = tpu.matmul %97, %98, %cst_44 {dimension_numbers = #tpu.dot_dimension_numbers<[2], [2], [1], [1], [0, 0, 0, 1, 1, 1], [0], [0]>} : vector<2x8x4xbf16>, vector<2x9x4xbf16>, vector<2x8x9xf32> -> vector<2x8x9xf32>
    %cst_45 = arith.constant -1.000000e+30 : f32
    "tpu.trace_stop"() : () -> ()
    %100 = vector.broadcast %cst_45 : f32 to vector<2x8x9xf32>
    %101 = arith.select %96, %99, %100 : vector<2x8x9xi1>, vector<2x8x9xf32>
    %cst_46 = arith.constant dense<0xFF800000> : vector<2x8xf32>
    %102 = vector.multi_reduction <maximumf>, %101, %cst_46 [2] : vector<2x8x9xf32> to vector<2x8xf32>
    %103 = vector.shape_cast %102 : vector<2x8xf32> to vector<2x8x1xf32>
    %104 = vector.broadcast %103 : vector<2x8x1xf32> to vector<2x8x9xf32>
    %105 = arith.subf %101, %104 : vector<2x8x9xf32>
    %106 = math.exp %105 : vector<2x8x9xf32>
    %cst_47 = arith.constant dense<0.000000e+00> : vector<2x8xf32>
    %107 = vector.multi_reduction <add>, %106, %cst_47 [2] : vector<2x8x9xf32> to vector<2x8xf32>
    %108 = vector.shape_cast %107 : vector<2x8xf32> to vector<2x8x1xf32>
    %109 = tpu.reciprocal %108 {approx = true} : vector<2x8x1xf32> -> vector<2x8x1xf32>
    %110 = vector.broadcast %109 : vector<2x8x1xf32> to vector<2x8x9xf32>
    %111 = arith.mulf %106, %110 : vector<2x8x9xf32>
    %112 = arith.truncf %111 : vector<2x8x9xf32> to vector<2x8x9xbf16>
    %113 = vector.extract_strided_slice %87 {offsets = [0, 0, 0], sizes = [2, 9, 4], strides = [1, 1, 1]} : vector<2x9x32xbf16> to vector<2x9x4xbf16>
    "tpu.trace_start"() <{level = 10 : i32, message = "bqk,bkd->bqd"}> : () -> ()
    %cst_48 = arith.constant dense<0.000000e+00> : vector<2x8x4xf32>
    %114 = tpu.matmul %112, %113, %cst_48 {dimension_numbers = #tpu.dot_dimension_numbers<[2], [1], [1], [2], [0, 0, 0, 1, 1, 2], [0], [0]>} : vector<2x8x9xbf16>, vector<2x9x4xbf16>, vector<2x8x4xf32> -> vector<2x8x4xf32>
    "tpu.trace_stop"() : () -> ()
    %115 = vector.extract_strided_slice %79 {offsets = [0, 0, 4], sizes = [2, 8, 4], strides = [1, 1, 1]} : vector<2x8x32xbf16> to vector<2x8x4xbf16>
    %116 = vector.extract_strided_slice %83 {offsets = [0, 0, 4], sizes = [2, 9, 4], strides = [1, 1, 1]} : vector<2x9x32xbf16> to vector<2x9x4xbf16>
    "tpu.trace_start"() <{level = 10 : i32, message = "bqd,bkd->bqk"}> : () -> ()
    %cst_49 = arith.constant dense<0.000000e+00> : vector<2x8x9xf32>
    %117 = tpu.matmul %115, %116, %cst_49 {dimension_numbers = #tpu.dot_dimension_numbers<[2], [2], [1], [1], [0, 0, 0, 1, 1, 1], [0], [0]>} : vector<2x8x4xbf16>, vector<2x9x4xbf16>, vector<2x8x9xf32> -> vector<2x8x9xf32>
    %cst_50 = arith.constant -1.000000e+30 : f32
    "tpu.trace_stop"() : () -> ()
    %118 = vector.broadcast %cst_50 : f32 to vector<2x8x9xf32>
    %119 = arith.select %96, %117, %118 : vector<2x8x9xi1>, vector<2x8x9xf32>
    %cst_51 = arith.constant dense<0xFF800000> : vector<2x8xf32>
    %120 = vector.multi_reduction <maximumf>, %119, %cst_51 [2] : vector<2x8x9xf32> to vector<2x8xf32>
    %121 = vector.shape_cast %120 : vector<2x8xf32> to vector<2x8x1xf32>
    %122 = vector.broadcast %121 : vector<2x8x1xf32> to vector<2x8x9xf32>
    %123 = arith.subf %119, %122 : vector<2x8x9xf32>
    %124 = math.exp %123 : vector<2x8x9xf32>
    %cst_52 = arith.constant dense<0.000000e+00> : vector<2x8xf32>
    %125 = vector.multi_reduction <add>, %124, %cst_52 [2] : vector<2x8x9xf32> to vector<2x8xf32>
    %126 = vector.shape_cast %125 : vector<2x8xf32> to vector<2x8x1xf32>
    %127 = tpu.reciprocal %126 {approx = true} : vector<2x8x1xf32> -> vector<2x8x1xf32>
    %128 = vector.broadcast %127 : vector<2x8x1xf32> to vector<2x8x9xf32>
    %129 = arith.mulf %124, %128 : vector<2x8x9xf32>
    %130 = arith.truncf %129 : vector<2x8x9xf32> to vector<2x8x9xbf16>
    %131 = vector.extract_strided_slice %87 {offsets = [0, 0, 4], sizes = [2, 9, 4], strides = [1, 1, 1]} : vector<2x9x32xbf16> to vector<2x9x4xbf16>
    "tpu.trace_start"() <{level = 10 : i32, message = "bqk,bkd->bqd"}> : () -> ()
    %cst_53 = arith.constant dense<0.000000e+00> : vector<2x8x4xf32>
    %132 = tpu.matmul %130, %131, %cst_53 {dimension_numbers = #tpu.dot_dimension_numbers<[2], [1], [1], [2], [0, 0, 0, 1, 1, 2], [0], [0]>} : vector<2x8x9xbf16>, vector<2x9x4xbf16>, vector<2x8x4xf32> -> vector<2x8x4xf32>
    "tpu.trace_stop"() : () -> ()
    %133 = vector.extract_strided_slice %79 {offsets = [0, 0, 8], sizes = [2, 8, 4], strides = [1, 1, 1]} : vector<2x8x32xbf16> to vector<2x8x4xbf16>
    %134 = vector.extract_strided_slice %83 {offsets = [0, 0, 8], sizes = [2, 9, 4], strides = [1, 1, 1]} : vector<2x9x32xbf16> to vector<2x9x4xbf16>
    "tpu.trace_start"() <{level = 10 : i32, message = "bqd,bkd->bqk"}> : () -> ()
    %cst_54 = arith.constant dense<0.000000e+00> : vector<2x8x9xf32>
    %135 = tpu.matmul %133, %134, %cst_54 {dimension_numbers = #tpu.dot_dimension_numbers<[2], [2], [1], [1], [0, 0, 0, 1, 1, 1], [0], [0]>} : vector<2x8x4xbf16>, vector<2x9x4xbf16>, vector<2x8x9xf32> -> vector<2x8x9xf32>
    %cst_55 = arith.constant -1.000000e+30 : f32
    "tpu.trace_stop"() : () -> ()
    %136 = vector.broadcast %cst_55 : f32 to vector<2x8x9xf32>
    %137 = arith.select %96, %135, %136 : vector<2x8x9xi1>, vector<2x8x9xf32>
    %cst_56 = arith.constant dense<0xFF800000> : vector<2x8xf32>
    %138 = vector.multi_reduction <maximumf>, %137, %cst_56 [2] : vector<2x8x9xf32> to vector<2x8xf32>
    %139 = vector.shape_cast %138 : vector<2x8xf32> to vector<2x8x1xf32>
    %140 = vector.broadcast %139 : vector<2x8x1xf32> to vector<2x8x9xf32>
    %141 = arith.subf %137, %140 : vector<2x8x9xf32>
    %142 = math.exp %141 : vector<2x8x9xf32>
    %cst_57 = arith.constant dense<0.000000e+00> : vector<2x8xf32>
    %143 = vector.multi_reduction <add>, %142, %cst_57 [2] : vector<2x8x9xf32> to vector<2x8xf32>
    %144 = vector.shape_cast %143 : vector<2x8xf32> to vector<2x8x1xf32>
    %145 = tpu.reciprocal %144 {approx = true} : vector<2x8x1xf32> -> vector<2x8x1xf32>
    %146 = vector.broadcast %145 : vector<2x8x1xf32> to vector<2x8x9xf32>
    %147 = arith.mulf %142, %146 : vector<2x8x9xf32>
    %148 = arith.truncf %147 : vector<2x8x9xf32> to vector<2x8x9xbf16>
    %149 = vector.extract_strided_slice %87 {offsets = [0, 0, 8], sizes = [2, 9, 4], strides = [1, 1, 1]} : vector<2x9x32xbf16> to vector<2x9x4xbf16>
    "tpu.trace_start"() <{level = 10 : i32, message = "bqk,bkd->bqd"}> : () -> ()
    %cst_58 = arith.constant dense<0.000000e+00> : vector<2x8x4xf32>
    %150 = tpu.matmul %148, %149, %cst_58 {dimension_numbers = #tpu.dot_dimension_numbers<[2], [1], [1], [2], [0, 0, 0, 1, 1, 2], [0], [0]>} : vector<2x8x9xbf16>, vector<2x9x4xbf16>, vector<2x8x4xf32> -> vector<2x8x4xf32>
    "tpu.trace_stop"() : () -> ()
    %151 = vector.extract_strided_slice %79 {offsets = [0, 0, 12], sizes = [2, 8, 4], strides = [1, 1, 1]} : vector<2x8x32xbf16> to vector<2x8x4xbf16>
    %152 = vector.extract_strided_slice %83 {offsets = [0, 0, 12], sizes = [2, 9, 4], strides = [1, 1, 1]} : vector<2x9x32xbf16> to vector<2x9x4xbf16>
    "tpu.trace_start"() <{level = 10 : i32, message = "bqd,bkd->bqk"}> : () -> ()
    %cst_59 = arith.constant dense<0.000000e+00> : vector<2x8x9xf32>
    %153 = tpu.matmul %151, %152, %cst_59 {dimension_numbers = #tpu.dot_dimension_numbers<[2], [2], [1], [1], [0, 0, 0, 1, 1, 1], [0], [0]>} : vector<2x8x4xbf16>, vector<2x9x4xbf16>, vector<2x8x9xf32> -> vector<2x8x9xf32>
    %cst_60 = arith.constant -1.000000e+30 : f32
    "tpu.trace_stop"() : () -> ()
    %154 = vector.broadcast %cst_60 : f32 to vector<2x8x9xf32>
    %155 = arith.select %96, %153, %154 : vector<2x8x9xi1>, vector<2x8x9xf32>
    %cst_61 = arith.constant dense<0xFF800000> : vector<2x8xf32>
    %156 = vector.multi_reduction <maximumf>, %155, %cst_61 [2] : vector<2x8x9xf32> to vector<2x8xf32>
    %157 = vector.shape_cast %156 : vector<2x8xf32> to vector<2x8x1xf32>
    %158 = vector.broadcast %157 : vector<2x8x1xf32> to vector<2x8x9xf32>
    %159 = arith.subf %155, %158 : vector<2x8x9xf32>
    %160 = math.exp %159 : vector<2x8x9xf32>
    %cst_62 = arith.constant dense<0.000000e+00> : vector<2x8xf32>
    %161 = vector.multi_reduction <add>, %160, %cst_62 [2] : vector<2x8x9xf32> to vector<2x8xf32>
    %162 = vector.shape_cast %161 : vector<2x8xf32> to vector<2x8x1xf32>
    %163 = tpu.reciprocal %162 {approx = true} : vector<2x8x1xf32> -> vector<2x8x1xf32>
    %164 = vector.broadcast %163 : vector<2x8x1xf32> to vector<2x8x9xf32>
    %165 = arith.mulf %160, %164 : vector<2x8x9xf32>
    %166 = arith.truncf %165 : vector<2x8x9xf32> to vector<2x8x9xbf16>
    %167 = vector.extract_strided_slice %87 {offsets = [0, 0, 12], sizes = [2, 9, 4], strides = [1, 1, 1]} : vector<2x9x32xbf16> to vector<2x9x4xbf16>
    "tpu.trace_start"() <{level = 10 : i32, message = "bqk,bkd->bqd"}> : () -> ()
    %cst_63 = arith.constant dense<0.000000e+00> : vector<2x8x4xf32>
    %168 = tpu.matmul %166, %167, %cst_63 {dimension_numbers = #tpu.dot_dimension_numbers<[2], [1], [1], [2], [0, 0, 0, 1, 1, 2], [0], [0]>} : vector<2x8x9xbf16>, vector<2x9x4xbf16>, vector<2x8x4xf32> -> vector<2x8x4xf32>
    "tpu.trace_stop"() : () -> ()
    %169 = vector.extract_strided_slice %79 {offsets = [0, 0, 16], sizes = [2, 8, 4], strides = [1, 1, 1]} : vector<2x8x32xbf16> to vector<2x8x4xbf16>
    %170 = vector.extract_strided_slice %83 {offsets = [0, 0, 16], sizes = [2, 9, 4], strides = [1, 1, 1]} : vector<2x9x32xbf16> to vector<2x9x4xbf16>
    "tpu.trace_start"() <{level = 10 : i32, message = "bqd,bkd->bqk"}> : () -> ()
    %cst_64 = arith.constant dense<0.000000e+00> : vector<2x8x9xf32>
    %171 = tpu.matmul %169, %170, %cst_64 {dimension_numbers = #tpu.dot_dimension_numbers<[2], [2], [1], [1], [0, 0, 0, 1, 1, 1], [0], [0]>} : vector<2x8x4xbf16>, vector<2x9x4xbf16>, vector<2x8x9xf32> -> vector<2x8x9xf32>
    %cst_65 = arith.constant -1.000000e+30 : f32
    "tpu.trace_stop"() : () -> ()
    %172 = vector.broadcast %cst_65 : f32 to vector<2x8x9xf32>
    %173 = arith.select %96, %171, %172 : vector<2x8x9xi1>, vector<2x8x9xf32>
    %cst_66 = arith.constant dense<0xFF800000> : vector<2x8xf32>
    %174 = vector.multi_reduction <maximumf>, %173, %cst_66 [2] : vector<2x8x9xf32> to vector<2x8xf32>
    %175 = vector.shape_cast %174 : vector<2x8xf32> to vector<2x8x1xf32>
    %176 = vector.broadcast %175 : vector<2x8x1xf32> to vector<2x8x9xf32>
    %177 = arith.subf %173, %176 : vector<2x8x9xf32>
    %178 = math.exp %177 : vector<2x8x9xf32>
    %cst_67 = arith.constant dense<0.000000e+00> : vector<2x8xf32>
    %179 = vector.multi_reduction <add>, %178, %cst_67 [2] : vector<2x8x9xf32> to vector<2x8xf32>
    %180 = vector.shape_cast %179 : vector<2x8xf32> to vector<2x8x1xf32>
    %181 = tpu.reciprocal %180 {approx = true} : vector<2x8x1xf32> -> vector<2x8x1xf32>
    %182 = vector.broadcast %181 : vector<2x8x1xf32> to vector<2x8x9xf32>
    %183 = arith.mulf %178, %182 : vector<2x8x9xf32>
    %184 = arith.truncf %183 : vector<2x8x9xf32> to vector<2x8x9xbf16>
    %185 = vector.extract_strided_slice %87 {offsets = [0, 0, 16], sizes = [2, 9, 4], strides = [1, 1, 1]} : vector<2x9x32xbf16> to vector<2x9x4xbf16>
    "tpu.trace_start"() <{level = 10 : i32, message = "bqk,bkd->bqd"}> : () -> ()
    %cst_68 = arith.constant dense<0.000000e+00> : vector<2x8x4xf32>
    %186 = tpu.matmul %184, %185, %cst_68 {dimension_numbers = #tpu.dot_dimension_numbers<[2], [1], [1], [2], [0, 0, 0, 1, 1, 2], [0], [0]>} : vector<2x8x9xbf16>, vector<2x9x4xbf16>, vector<2x8x4xf32> -> vector<2x8x4xf32>
    "tpu.trace_stop"() : () -> ()
    %187 = vector.extract_strided_slice %79 {offsets = [0, 0, 20], sizes = [2, 8, 4], strides = [1, 1, 1]} : vector<2x8x32xbf16> to vector<2x8x4xbf16>
    %188 = vector.extract_strided_slice %83 {offsets = [0, 0, 20], sizes = [2, 9, 4], strides = [1, 1, 1]} : vector<2x9x32xbf16> to vector<2x9x4xbf16>
    "tpu.trace_start"() <{level = 10 : i32, message = "bqd,bkd->bqk"}> : () -> ()
    %cst_69 = arith.constant dense<0.000000e+00> : vector<2x8x9xf32>
    %189 = tpu.matmul %187, %188, %cst_69 {dimension_numbers = #tpu.dot_dimension_numbers<[2], [2], [1], [1], [0, 0, 0, 1, 1, 1], [0], [0]>} : vector<2x8x4xbf16>, vector<2x9x4xbf16>, vector<2x8x9xf32> -> vector<2x8x9xf32>
    %cst_70 = arith.constant -1.000000e+30 : f32
    "tpu.trace_stop"() : () -> ()
    %190 = vector.broadcast %cst_70 : f32 to vector<2x8x9xf32>
    %191 = arith.select %96, %189, %190 : vector<2x8x9xi1>, vector<2x8x9xf32>
    %cst_71 = arith.constant dense<0xFF800000> : vector<2x8xf32>
    %192 = vector.multi_reduction <maximumf>, %191, %cst_71 [2] : vector<2x8x9xf32> to vector<2x8xf32>
    %193 = vector.shape_cast %192 : vector<2x8xf32> to vector<2x8x1xf32>
    %194 = vector.broadcast %193 : vector<2x8x1xf32> to vector<2x8x9xf32>
    %195 = arith.subf %191, %194 : vector<2x8x9xf32>
    %196 = math.exp %195 : vector<2x8x9xf32>
    %cst_72 = arith.constant dense<0.000000e+00> : vector<2x8xf32>
    %197 = vector.multi_reduction <add>, %196, %cst_72 [2] : vector<2x8x9xf32> to vector<2x8xf32>
    %198 = vector.shape_cast %197 : vector<2x8xf32> to vector<2x8x1xf32>
    %199 = tpu.reciprocal %198 {approx = true} : vector<2x8x1xf32> -> vector<2x8x1xf32>
    %200 = vector.broadcast %199 : vector<2x8x1xf32> to vector<2x8x9xf32>
    %201 = arith.mulf %196, %200 : vector<2x8x9xf32>
    %202 = arith.truncf %201 : vector<2x8x9xf32> to vector<2x8x9xbf16>
    %203 = vector.extract_strided_slice %87 {offsets = [0, 0, 20], sizes = [2, 9, 4], strides = [1, 1, 1]} : vector<2x9x32xbf16> to vector<2x9x4xbf16>
    "tpu.trace_start"() <{level = 10 : i32, message = "bqk,bkd->bqd"}> : () -> ()
    %cst_73 = arith.constant dense<0.000000e+00> : vector<2x8x4xf32>
    %204 = tpu.matmul %202, %203, %cst_73 {dimension_numbers = #tpu.dot_dimension_numbers<[2], [1], [1], [2], [0, 0, 0, 1, 1, 2], [0], [0]>} : vector<2x8x9xbf16>, vector<2x9x4xbf16>, vector<2x8x4xf32> -> vector<2x8x4xf32>
    "tpu.trace_stop"() : () -> ()
    %205 = vector.extract_strided_slice %79 {offsets = [0, 0, 24], sizes = [2, 8, 4], strides = [1, 1, 1]} : vector<2x8x32xbf16> to vector<2x8x4xbf16>
    %206 = vector.extract_strided_slice %83 {offsets = [0, 0, 24], sizes = [2, 9, 4], strides = [1, 1, 1]} : vector<2x9x32xbf16> to vector<2x9x4xbf16>
    "tpu.trace_start"() <{level = 10 : i32, message = "bqd,bkd->bqk"}> : () -> ()
    %cst_74 = arith.constant dense<0.000000e+00> : vector<2x8x9xf32>
    %207 = tpu.matmul %205, %206, %cst_74 {dimension_numbers = #tpu.dot_dimension_numbers<[2], [2], [1], [1], [0, 0, 0, 1, 1, 1], [0], [0]>} : vector<2x8x4xbf16>, vector<2x9x4xbf16>, vector<2x8x9xf32> -> vector<2x8x9xf32>
    %cst_75 = arith.constant -1.000000e+30 : f32
    "tpu.trace_stop"() : () -> ()
    %208 = vector.broadcast %cst_75 : f32 to vector<2x8x9xf32>
    %209 = arith.select %96, %207, %208 : vector<2x8x9xi1>, vector<2x8x9xf32>
    %cst_76 = arith.constant dense<0xFF800000> : vector<2x8xf32>
    %210 = vector.multi_reduction <maximumf>, %209, %cst_76 [2] : vector<2x8x9xf32> to vector<2x8xf32>
    %211 = vector.shape_cast %210 : vector<2x8xf32> to vector<2x8x1xf32>
    %212 = vector.broadcast %211 : vector<2x8x1xf32> to vector<2x8x9xf32>
    %213 = arith.subf %209, %212 : vector<2x8x9xf32>
    %214 = math.exp %213 : vector<2x8x9xf32>
    %cst_77 = arith.constant dense<0.000000e+00> : vector<2x8xf32>
    %215 = vector.multi_reduction <add>, %214, %cst_77 [2] : vector<2x8x9xf32> to vector<2x8xf32>
    %216 = vector.shape_cast %215 : vector<2x8xf32> to vector<2x8x1xf32>
    %217 = tpu.reciprocal %216 {approx = true} : vector<2x8x1xf32> -> vector<2x8x1xf32>
    %218 = vector.broadcast %217 : vector<2x8x1xf32> to vector<2x8x9xf32>
    %219 = arith.mulf %214, %218 : vector<2x8x9xf32>
    %220 = arith.truncf %219 : vector<2x8x9xf32> to vector<2x8x9xbf16>
    %221 = vector.extract_strided_slice %87 {offsets = [0, 0, 24], sizes = [2, 9, 4], strides = [1, 1, 1]} : vector<2x9x32xbf16> to vector<2x9x4xbf16>
    "tpu.trace_start"() <{level = 10 : i32, message = "bqk,bkd->bqd"}> : () -> ()
    %cst_78 = arith.constant dense<0.000000e+00> : vector<2x8x4xf32>
    %222 = tpu.matmul %220, %221, %cst_78 {dimension_numbers = #tpu.dot_dimension_numbers<[2], [1], [1], [2], [0, 0, 0, 1, 1, 2], [0], [0]>} : vector<2x8x9xbf16>, vector<2x9x4xbf16>, vector<2x8x4xf32> -> vector<2x8x4xf32>
    "tpu.trace_stop"() : () -> ()
    %223 = vector.extract_strided_slice %79 {offsets = [0, 0, 28], sizes = [2, 8, 4], strides = [1, 1, 1]} : vector<2x8x32xbf16> to vector<2x8x4xbf16>
    %224 = vector.extract_strided_slice %83 {offsets = [0, 0, 28], sizes = [2, 9, 4], strides = [1, 1, 1]} : vector<2x9x32xbf16> to vector<2x9x4xbf16>
    "tpu.trace_start"() <{level = 10 : i32, message = "bqd,bkd->bqk"}> : () -> ()
    %cst_79 = arith.constant dense<0.000000e+00> : vector<2x8x9xf32>
    %225 = tpu.matmul %223, %224, %cst_79 {dimension_numbers = #tpu.dot_dimension_numbers<[2], [2], [1], [1], [0, 0, 0, 1, 1, 1], [0], [0]>} : vector<2x8x4xbf16>, vector<2x9x4xbf16>, vector<2x8x9xf32> -> vector<2x8x9xf32>
    %cst_80 = arith.constant -1.000000e+30 : f32
    "tpu.trace_stop"() : () -> ()
    %226 = vector.broadcast %cst_80 : f32 to vector<2x8x9xf32>
    %227 = arith.select %96, %225, %226 : vector<2x8x9xi1>, vector<2x8x9xf32>
    %cst_81 = arith.constant dense<0xFF800000> : vector<2x8xf32>
    %228 = vector.multi_reduction <maximumf>, %227, %cst_81 [2] : vector<2x8x9xf32> to vector<2x8xf32>
    %229 = vector.shape_cast %228 : vector<2x8xf32> to vector<2x8x1xf32>
    %230 = vector.broadcast %229 : vector<2x8x1xf32> to vector<2x8x9xf32>
    %231 = arith.subf %227, %230 : vector<2x8x9xf32>
    %232 = math.exp %231 : vector<2x8x9xf32>
    %cst_82 = arith.constant dense<0.000000e+00> : vector<2x8xf32>
    %233 = vector.multi_reduction <add>, %232, %cst_82 [2] : vector<2x8x9xf32> to vector<2x8xf32>
    %234 = vector.shape_cast %233 : vector<2x8xf32> to vector<2x8x1xf32>
    %235 = tpu.reciprocal %234 {approx = true} : vector<2x8x1xf32> -> vector<2x8x1xf32>
    %236 = vector.broadcast %235 : vector<2x8x1xf32> to vector<2x8x9xf32>
    %237 = arith.mulf %232, %236 : vector<2x8x9xf32>
    %238 = arith.truncf %237 : vector<2x8x9xf32> to vector<2x8x9xbf16>
    %239 = vector.extract_strided_slice %87 {offsets = [0, 0, 28], sizes = [2, 9, 4], strides = [1, 1, 1]} : vector<2x9x32xbf16> to vector<2x9x4xbf16>
    "tpu.trace_start"() <{level = 10 : i32, message = "bqk,bkd->bqd"}> : () -> ()
    %cst_83 = arith.constant dense<0.000000e+00> : vector<2x8x4xf32>
    %240 = tpu.matmul %238, %239, %cst_83 {dimension_numbers = #tpu.dot_dimension_numbers<[2], [1], [1], [2], [0, 0, 0, 1, 1, 2], [0], [0]>} : vector<2x8x9xbf16>, vector<2x9x4xbf16>, vector<2x8x4xf32> -> vector<2x8x4xf32>
    "tpu.trace_stop"() : () -> ()
    %241 = tpu.concatenate %114, %132, %150, %168, %186, %204, %222, %240 in 2 : vector<2x8x4xf32>, vector<2x8x4xf32>, vector<2x8x4xf32>, vector<2x8x4xf32>, vector<2x8x4xf32>, vector<2x8x4xf32>, vector<2x8x4xf32>, vector<2x8x4xf32> -> vector<2x8x32xf32>
    %242 = vector.shape_cast %241 : vector<2x8x32xf32> to vector<16x32xf32>
    %243 = arith.truncf %242 : vector<16x32xf32> to vector<16x32xbf16>
    %c5 = arith.constant 5 : index
    %c0_84 = arith.constant 0 : index
    %c0_85 = arith.constant 0 : index
    %244 = vector.load %arg5[%c5, %c0_84, %c0_85] : memref<6x32x32xbf16, #tpu.memory_space<vmem>>, vector<1x32x32xbf16>
    %245 = vector.shape_cast %244 : vector<1x32x32xbf16> to vector<32x32xbf16>
    %cst_86 = arith.constant dense<0.000000e+00> : vector<16x32xf32>
    %246 = tpu.matmul %243, %245, %cst_86 {dimension_numbers = #tpu.dot_dimension_numbers<[1], [0], [0], [1], [0, 0, 1, 1], [], []>} : vector<16x32xbf16>, vector<32x32xbf16>, vector<16x32xf32> -> vector<16x32xf32>
    %247 = vector.broadcast %1 : vector<1x32xf32> to vector<16x32xf32>
    %248 = arith.addf %246, %247 : vector<16x32xf32>
    %249 = arith.addf %15, %248 : vector<16x32xf32>
    %cst_87 = arith.constant dense<0.000000e+00> : vector<16xf32>
    %250 = vector.multi_reduction <add>, %249, %cst_87 [1] : vector<16x32xf32> to vector<16xf32>
    %251 = vector.shape_cast %250 : vector<16xf32> to vector<16x1xf32>
    %cst_88 = arith.constant 3.200000e+01 : f32
    %252 = vector.broadcast %cst_88 : f32 to vector<16x1xf32>
    %253 = arith.divf %251, %252 : vector<16x1xf32>
    %254 = vector.broadcast %253 : vector<16x1xf32> to vector<16x32xf32>
    %255 = arith.subf %249, %254 : vector<16x32xf32>
    %256 = arith.mulf %255, %255 : vector<16x32xf32>
    %cst_89 = arith.constant dense<0.000000e+00> : vector<16xf32>
    %257 = vector.multi_reduction <add>, %256, %cst_89 [1] : vector<16x32xf32> to vector<16xf32>
    %258 = vector.shape_cast %257 : vector<16xf32> to vector<16x1xf32>
    %cst_90 = arith.constant 3.200000e+01 : f32
    %259 = vector.broadcast %cst_90 : f32 to vector<16x1xf32>
    %260 = arith.divf %258, %259 : vector<16x1xf32>
    %261 = vector.broadcast %253 : vector<16x1xf32> to vector<16x32xf32>
    %262 = arith.subf %249, %261 : vector<16x32xf32>
    %cst_91 = arith.constant 9.99999974E-6 : f32
    %263 = vector.broadcast %cst_91 : f32 to vector<16x1xf32>
    %264 = arith.addf %260, %263 : vector<16x1xf32>
    %265 = math.rsqrt %264 : vector<16x1xf32>
    %266 = vector.broadcast %265 : vector<16x1xf32> to vector<16x32xf32>
    %267 = arith.mulf %262, %266 : vector<16x32xf32>
    %268 = vector.broadcast %8 : vector<1x32xf32> to vector<16x32xf32>
    %269 = arith.mulf %267, %268 : vector<16x32xf32>
    %270 = vector.broadcast %9 : vector<1x32xf32> to vector<16x32xf32>
    %271 = arith.addf %269, %270 : vector<16x32xf32>
    %272 = arith.truncf %271 : vector<16x32xf32> to vector<16x32xbf16>
    %c0_92 = arith.constant 0 : index
    %c0_93 = arith.constant 0 : index
    %273 = vector.load %arg6[%c0_92, %c0_93] : memref<32x32xbf16, #tpu.memory_space<vmem>>, vector<32x32xbf16>
    %cst_94 = arith.constant dense<0.000000e+00> : vector<16x32xf32>
    %274 = tpu.matmul %272, %273, %cst_94 {dimension_numbers = #tpu.dot_dimension_numbers<[1], [0], [0], [1], [0, 0, 1, 1], [], []>} : vector<16x32xbf16>, vector<32x32xbf16>, vector<16x32xf32> -> vector<16x32xf32>
    %c0_95 = arith.constant 0 : index
    %c0_96 = arith.constant 0 : index
    %275 = vector.load %arg8[%c0_95, %c0_96] : memref<1x32xf32, #tpu.memory_space<vmem>>, vector<1x32xf32>
    %276 = vector.broadcast %275 : vector<1x32xf32> to vector<16x32xf32>
    %277 = arith.addf %274, %276 : vector<16x32xf32>
    %cst_97 = arith.constant 0.000000e+00 : f32
    %278 = vector.broadcast %cst_97 : f32 to vector<16x32xf32>
    %279 = arith.maximumf %277, %278 : vector<16x32xf32>
    %280 = arith.truncf %279 : vector<16x32xf32> to vector<16x32xbf16>
    %c0_98 = arith.constant 0 : index
    %c0_99 = arith.constant 0 : index
    %281 = vector.load %arg7[%c0_98, %c0_99] : memref<32x32xbf16, #tpu.memory_space<vmem>>, vector<32x32xbf16>
    %cst_100 = arith.constant dense<0.000000e+00> : vector<16x32xf32>
    %282 = tpu.matmul %280, %281, %cst_100 {dimension_numbers = #tpu.dot_dimension_numbers<[1], [0], [0], [1], [0, 0, 1, 1], [], []>} : vector<16x32xbf16>, vector<32x32xbf16>, vector<16x32xf32> -> vector<16x32xf32>
    %283 = vector.broadcast %10 : vector<1x32xf32> to vector<16x32xf32>
    %284 = arith.addf %282, %283 : vector<16x32xf32>
    %285 = arith.addf %271, %284 : vector<16x32xf32>
    %cst_101 = arith.constant dense<0.000000e+00> : vector<16xf32>
    %286 = vector.multi_reduction <add>, %285, %cst_101 [1] : vector<16x32xf32> to vector<16xf32>
    %287 = vector.shape_cast %286 : vector<16xf32> to vector<16x1xf32>
    %cst_102 = arith.constant 3.200000e+01 : f32
    %288 = vector.broadcast %cst_102 : f32 to vector<16x1xf32>
    %289 = arith.divf %287, %288 : vector<16x1xf32>
    %290 = vector.broadcast %289 : vector<16x1xf32> to vector<16x32xf32>
    %291 = arith.subf %285, %290 : vector<16x32xf32>
    %292 = arith.mulf %291, %291 : vector<16x32xf32>
    %cst_103 = arith.constant dense<0.000000e+00> : vector<16xf32>
    %293 = vector.multi_reduction <add>, %292, %cst_103 [1] : vector<16x32xf32> to vector<16xf32>
    %294 = vector.shape_cast %293 : vector<16xf32> to vector<16x1xf32>
    %cst_104 = arith.constant 3.200000e+01 : f32
    %295 = vector.broadcast %cst_104 : f32 to vector<16x1xf32>
    %296 = arith.divf %294, %295 : vector<16x1xf32>
    %297 = vector.broadcast %289 : vector<16x1xf32> to vector<16x32xf32>
    %298 = arith.subf %285, %297 : vector<16x32xf32>
    %cst_105 = arith.constant 9.99999974E-6 : f32
    %299 = vector.broadcast %cst_105 : f32 to vector<16x1xf32>
    %300 = arith.addf %296, %299 : vector<16x1xf32>
    %301 = math.rsqrt %300 : vector<16x1xf32>
    %302 = vector.broadcast %301 : vector<16x1xf32> to vector<16x32xf32>
    %303 = arith.mulf %298, %302 : vector<16x32xf32>
    %304 = vector.broadcast %11 : vector<1x32xf32> to vector<16x32xf32>
    %305 = arith.mulf %303, %304 : vector<16x32xf32>
    %306 = vector.broadcast %12 : vector<1x32xf32> to vector<16x32xf32>
    %307 = arith.addf %305, %306 : vector<16x32xf32>
    %308 = vector.shape_cast %307 : vector<16x32xf32> to vector<2x8x32xf32>
    %309 = math.tanh %308 : vector<2x8x32xf32>
    %310 = vector.shape_cast %13 : vector<1x32xf32> to vector<1x1x32xf32>
    %311 = vector.broadcast %310 : vector<1x1x32xf32> to vector<2x8x32xf32>
    %312 = arith.mulf %309, %311 : vector<2x8x32xf32>
    %cst_106 = arith.constant dense<0.000000e+00> : vector<2x8xf32>
    %313 = vector.multi_reduction <add>, %312, %cst_106 [2] : vector<2x8x32xf32> to vector<2x8xf32>
    %cst_107 = arith.constant 1.000000e+00 : f32
    %314 = vector.broadcast %cst_107 : f32 to vector<2x8xf32>
    %315 = arith.mulf %313, %314 : vector<2x8xf32>
    %316 = vector.extract_strided_slice %88 {offsets = [0, 0, 0], sizes = [2, 1, 8], strides = [1, 1, 1]} : vector<2x1x9xf32> to vector<2x1x8xf32>
    %317 = vector.shape_cast %316 : vector<2x1x8xf32> to vector<2x8xf32>
    %cst_108 = arith.constant 0.000000e+00 : f32
    %318 = vector.broadcast %cst_108 : f32 to vector<2x8xf32>
    %319 = arith.cmpf ogt, %317, %318 : vector<2x8xf32>
    %cst_109 = arith.constant 0.000000e+00 : f32
    %cst_110 = arith.constant -103.616325 : f32
    %320 = vector.broadcast %cst_109 : f32 to vector<2x8xf32>
    %321 = vector.broadcast %cst_110 : f32 to vector<2x8xf32>
    %322 = arith.select %319, %320, %321 : vector<2x8xi1>, vector<2x8xf32>
    %323 = arith.addf %315, %322 : vector<2x8xf32>
    %cst_111 = arith.constant dense<0xFF800000> : vector<2xf32>
    %324 = vector.multi_reduction <maximumf>, %323, %cst_111 [1] : vector<2x8xf32> to vector<2xf32>
    %325 = vector.shape_cast %324 : vector<2xf32> to vector<2x1xf32>
    %326 = vector.broadcast %325 : vector<2x1xf32> to vector<2x8xf32>
    %327 = arith.subf %323, %326 : vector<2x8xf32>
    %328 = math.exp %327 : vector<2x8xf32>
    %cst_112 = arith.constant dense<0.000000e+00> : vector<2xf32>
    %329 = vector.multi_reduction <add>, %328, %cst_112 [1] : vector<2x8xf32> to vector<2xf32>
    %330 = vector.shape_cast %329 : vector<2xf32> to vector<2x1xf32>
    %331 = math.log %330 : vector<2x1xf32>
    %332 = vector.broadcast %331 : vector<2x1xf32> to vector<2x8xf32>
    %333 = arith.subf %327, %332 : vector<2x8xf32>
    %334 = vector.shape_cast %333 : vector<2x8xf32> to vector<2x1x8xf32>
    %c0_113 = arith.constant 0 : index
    %c0_114 = arith.constant 0 : index
    %c0_115 = arith.constant 0 : index
    %335 = vector.load %arg11[%c0_113, %c0_114, %c0_115] : memref<2x1x8xf32, #tpu.memory_space<vmem>>, vector<2x1x8xf32>
    tpu.vector_store %arg11[%c0_113, %c0_114, %c0_115], %334 {strides = array<i32>} : memref<2x1x8xf32, #tpu.memory_space<vmem>>, vector<2x1x8xf32>,
    return
  }
  func.func @transform_0(%arg0: i32) -> (i32, i32, i32) {
    %c0_i32 = arith.constant 0 : i32
    %c0_i32_0 = arith.constant 0 : i32
    %c0_i32_1 = arith.constant 0 : i32
    return %arg0, %c0_i32, %c0_i32_0 : i32, i32, i32
  }
  func.func @transform_1(%arg0: i32) -> (i32, i32, i32) {
    %c0_i32 = arith.constant 0 : i32
    %c0_i32_0 = arith.constant 0 : i32
    %c0_i32_1 = arith.constant 0 : i32
    return %arg0, %c0_i32, %c0_i32_0 : i32, i32, i32
  }
  func.func @transform_2(%arg0: i32) -> (i32, i32, i32) {
    %c0_i32 = arith.constant 0 : i32
    %c0_i32_0 = arith.constant 0 : i32
    %c0_i32_1 = arith.constant 0 : i32
    return %arg0, %c0_i32, %c0_i32_0 : i32, i32, i32
  }
  func.func @transform_3(%arg0: i32) -> (i32, i32, i32) {
    %c0_i32 = arith.constant 0 : i32
    %c0_i32_0 = arith.constant 0 : i32
    %c0_i32_1 = arith.constant 0 : i32
    return %arg0, %c0_i32, %c0_i32_0 : i32, i32, i32
  }
  func.func @transform_4(%arg0: i32) -> (i32, i32, i32) {
    %c0_i32 = arith.constant 0 : i32
    %c0_i32_0 = arith.constant 0 : i32
    %c0_i32_1 = arith.constant 0 : i32
    %c0_i32_2 = arith.constant 0 : i32
    return %c0_i32, %c0_i32_0, %c0_i32_1 : i32, i32, i32
  }
  func.func @transform_5(%arg0: i32) -> (i32, i32) {
    %c0_i32 = arith.constant 0 : i32
    %c0_i32_0 = arith.constant 0 : i32
    %c0_i32_1 = arith.constant 0 : i32
    return %c0_i32, %c0_i32_0 : i32, i32
  }
  func.func @transform_6(%arg0: i32) -> (i32, i32) {
    %c0_i32 = arith.constant 0 : i32
    %c0_i32_0 = arith.constant 0 : i32
    %c0_i32_1 = arith.constant 0 : i32
    return %c0_i32, %c0_i32_0 : i32, i32
  }
  func.func @transform_7(%arg0: i32) -> (i32, i32) {
    %c0_i32 = arith.constant 0 : i32
    %c0_i32_0 = arith.constant 0 : i32
    %c0_i32_1 = arith.constant 0 : i32
    return %c0_i32, %c0_i32_0 : i32, i32
  }
  func.func @transform_8(%arg0: i32) -> (i32, i32) {
    %c0_i32 = arith.constant 0 : i32
    %c0_i32_0 = arith.constant 0 : i32
    %c0_i32_1 = arith.constant 0 : i32
    return %c0_i32, %c0_i32_0 : i32, i32
  }
  func.func @transform_9(%arg0: i32) -> (i32, i32) {
    %c0_i32 = arith.constant 0 : i32
    %c0_i32_0 = arith.constant 0 : i32
    %c0_i32_1 = arith.constant 0 : i32
    return %c0_i32, %c0_i32_0 : i32, i32
  }
  func.func @transform_10(%arg0: i32) -> (i32, i32, i32) {
    %c0_i32 = arith.constant 0 : i32
    %c0_i32_0 = arith.constant 0 : i32
    %c0_i32_1 = arith.constant 0 : i32
    return %arg0, %c0_i32, %c0_i32_0 : i32, i32, i32
  }
}

</mosaic_0001>

<llo_original>
// kernel: tpu_custom_call.1
$region0: #{tpu_custom_call.1}
  #allocation0 [shape = 'u32[]', space=smem, size = 0x4, offset = 0x4, fixed_abs, tag = 'smem constant byte address 0x4 - core index']
  #allocation1 [shape = 'u32[144,128]{1,0:T(1,128)}', space=vmem, size = 0x12000, scoped, tag = 'internal scratch']
  %s0 = inlined_call_operand.vmem [shape: f32[4,8,32], index: 0, kind: input, shape index: {}]
  %s1 = inlined_call_operand.hbm [shape: f32[4,1,32], index: 1, kind: input, shape index: {}]
  %s2 = inlined_call_operand.vmem [shape: f32[4,8,1], index: 2, kind: input, shape index: {}]
  %s3 = inlined_call_operand.hbm [shape: f32[4,1,9], index: 3, kind: input, shape index: {}]
  %s4 = inlined_call_operand.hbm [shape: bf16[6,32,32], index: 4, kind: input, shape index: {}]
  %s5 = inlined_call_operand.hbm [shape: bf16[32,32], index: 5, kind: input, shape index: {}]
  %s6 = inlined_call_operand.hbm [shape: bf16[32,32], index: 6, kind: input, shape index: {}]
  %s7 = inlined_call_operand.vmem [shape: f32[1,32], index: 7, kind: input, shape index: {}]
  %s8 = inlined_call_operand.hbm [shape: f32[13,32], index: 8, kind: input, shape index: {}]
  %s9 = inlined_call_operand.vmem [shape: f32[32,32], index: 9, kind: input, shape index: {}]
  %s10 = inlined_call_operand.hbm [shape: f32[4,1,8], index: 10, kind: output, shape index: {}]
  %s11 = sld [smem:[#allocation0]]
  $region97: #{tpu_custom_call.1} parent=0
    _
  %s13 = ssub.s32 1, %s11
  %s14 = scalar_select 0, %s13, %s11
  $region1: #{tpu_custom_call.1} parent=0
    #allocation2 [shape = 'u8[2048]{0}', space=vmem, size = 0x800, scoped, tag = 'input window, operand 1']
    #allocation3 [shape = 's32[2]{0}', space=sflag, size = 0x8, scoped, tag = 'scoped memory for tpu_custom_call.1']
    #allocation4 [shape = 's32[2]{0}', space=sflag, size = 0x8, scoped, tag = 'scoped memory for tpu_custom_call.1']
    #allocation5 [shape = 'u8[2048]{0}', space=vmem, size = 0x800, scoped, tag = 'input window, operand 3']
    #allocation6 [shape = 's32[2]{0}', space=sflag, size = 0x8, scoped, tag = 'scoped memory for tpu_custom_call.1']
    #allocation7 [shape = 'u8[49152]{0}', space=vmem, size = 0xc000, scoped, tag = 'input window, operand 4, single buffered']
    #allocation8 [shape = 'u8[8192]{0}', space=vmem, size = 0x2000, scoped, tag = 'input window, operand 5, single buffered']
    #allocation9 [shape = 's32[1]{0}', space=sflag, size = 0x4, scoped, tag = 'scoped memory for tpu_custom_call.1']
    #allocation10 [shape = 'u8[8192]{0}', space=vmem, size = 0x2000, scoped, tag = 'input window, operand 6, single buffered']
    #allocation11 [shape = 'u8[8192]{0}', space=vmem, size = 0x2000, scoped, tag = 'input window, operand 8, single buffered']
    #allocation12 [shape = 's32[1]{0}', space=sflag, size = 0x4, scoped, tag = 'scoped memory for tpu_custom_call.1']
    #allocation13 [shape = 'u8[2048]{0}', space=vmem, size = 0x800, scoped, tag = 'output window, operand 0']
    %15 = vsyncpa [#allocation3], 0
    %s16 = scalar_lea.sflag [#allocation3], 1
    %17 = vsyncpa %s16, 0
    %18 = vsyncpa [#allocation6], 0
    %s19 = scalar_lea.sflag [#allocation6], 1
    %20 = vsyncpa %s19, 0
    %21 = vsyncpa [#allocation9], 0
    %22 = vsyncpa [#allocation12], 0
    %23 = vsyncpa [#allocation4], 0
    %s24 = scalar_lea.sflag [#allocation4], 1
    %25 = vsyncpa %s24, 0
    loop: start=0, step=1, limit=4
    $region2: #{tpu_custom_call.1} parent=1 // loop_pre_header
      _
    $region3: #{tpu_custom_call.1} parent=1 // loop_header
      %s27 = sphi 0, %s31
      %p28 = scmp.ge.s32.totalorder %s27, 4
      %s37 = sphi 0, %s39
      %s40 = sphi 0, %s37
      %s41 = sphi 0, %s40
      %s57 = sphi 0, %s41
      %s63 = sphi 0, %s65
      %s66 = sphi 0, %s63
      %s67 = sphi 0, %s66
      %s83 = sphi 0, %s67
      %s89 = sphi 0, %s91
      %s92 = sphi 0, %s89
      %s93 = sphi 0, %s92
      %s109 = sphi 0, %s93
      %s115 = sphi 0, %s117
      %s118 = sphi 0, %s115
      %s119 = sphi 0, %s118
      %s135 = sphi 0, %s119
      %s139 = sphi 0, %s139
      %s141 = sphi 0, %s139
      %s142 = sphi 0, %s141
      %s156 = sphi 0, %s142
      %s160 = sphi 0, %s160
      %s162 = sphi 0, %s160
      %s163 = sphi 0, %s162
      %s177 = sphi 0, %s163
      %s181 = sphi 0, %s181
      %s183 = sphi 0, %s181
      %s184 = sphi 0, %s183
      %s198 = sphi 0, %s184
      %s202 = sphi 0, %s202
      %s204 = sphi 0, %s202
      %s205 = sphi 0, %s204
      %s219 = sphi 0, %s205
      %s223 = sphi 0, %s223
      %s225 = sphi 0, %s223
      %s226 = sphi 0, %s225
      %s240 = sphi 0, %s226
      %s244 = sphi 0, %s244
      %s246 = sphi 0, %s244
      %s247 = sphi 0, %s246
      %s261 = sphi 0, %s247
      %s267 = sphi 0, %s269
      %s270 = sphi 0, %s267
      %s271 = sphi 0, %s270
      %s287 = sphi 0, %s271
    $region4: #{tpu_custom_call.1} parent=1 // loop_header_branch
      %30 = sbr.rel (%p28) target = $region8
    $region5: #{tpu_custom_call.1} parent=1 // loop_body
      %s32 = ssub.s32 %s27, 1
      %s33 = ssub.s32 %s27, 2
      %s34 = sadd.s32 %s27, 1
      %s35 = ssub.s32 %s27, %s34
      %p36 = scmp.eq.s32.totalorder %s35, 0
      %s38 = sadd.s32 %s37, 1
      %s39 = scalar_select %p36, %s37, %s38
      %p42 = pneg %p36
      %p43 = scmp.eq.s32.totalorder %s27, 1
      %p44 = por %p42, %p43
      %p45 = scmp.ne.s32.totalorder %s37, %s40
      %p46 = scmp.eq.s32.totalorder %s27, 0
      %p47 = por %p45, %p46
      %p48 = scmp.ne.s32.totalorder %s37, %s40
      %p49 = scmp.eq.s32.totalorder %s32, 1
      %p50 = por %p48, %p49
      %p51 = scmp.ne.s32.totalorder %s40, %s41
      %p52 = scmp.eq.s32.totalorder %s32, 0
      %p53 = por %p51, %p52
      %p54 = scmp.ne.s32.totalorder %s40, %s41
      %p55 = scmp.eq.s32.totalorder %s33, 1
      %p56 = por %p54, %p55
      %p58 = scmp.ne.s32.totalorder %s41, %s57
      %p59 = scmp.eq.s32.totalorder %s33, 0
      %p60 = por %p58, %p59
      %s61 = ssub.s32 %s27, %s34
      %p62 = scmp.eq.s32.totalorder %s61, 0
      %s64 = sadd.s32 %s63, 1
      %s65 = scalar_select %p62, %s63, %s64
      %p68 = pneg %p62
      %p69 = scmp.eq.s32.totalorder %s27, 1
      %p70 = por %p68, %p69
      %p71 = scmp.ne.s32.totalorder %s63, %s66
      %p72 = scmp.eq.s32.totalorder %s27, 0
      %p73 = por %p71, %p72
      %p74 = scmp.ne.s32.totalorder %s63, %s66
      %p75 = scmp.eq.s32.totalorder %s32, 1
      %p76 = por %p74, %p75
      %p77 = scmp.ne.s32.totalorder %s66, %s67
      %p78 = scmp.eq.s32.totalorder %s32, 0
      %p79 = por %p77, %p78
      %p80 = scmp.ne.s32.totalorder %s66, %s67
      %p81 = scmp.eq.s32.totalorder %s33, 1
      %p82 = por %p80, %p81
      %p84 = scmp.ne.s32.totalorder %s67, %s83
      %p85 = scmp.eq.s32.totalorder %s33, 0
      %p86 = por %p84, %p85
      %s87 = ssub.s32 %s27, %s34
      %p88 = scmp.eq.s32.totalorder %s87, 0
      %s90 = sadd.s32 %s89, 1
      %s91 = scalar_select %p88, %s89, %s90
      %p94 = pneg %p88
      %p95 = scmp.eq.s32.totalorder %s27, 1
      %p96 = por %p94, %p95
      %p97 = scmp.ne.s32.totalorder %s89, %s92
      %p98 = scmp.eq.s32.totalorder %s27, 0
      %p99 = por %p97, %p98
      %p100 = scmp.ne.s32.totalorder %s89, %s92
      %p101 = scmp.eq.s32.totalorder %s32, 1
      %p102 = por %p100, %p101
      %p103 = scmp.ne.s32.totalorder %s92, %s93
      %p104 = scmp.eq.s32.totalorder %s32, 0
      %p105 = por %p103, %p104
      %p106 = scmp.ne.s32.totalorder %s92, %s93
      %p107 = scmp.eq.s32.totalorder %s33, 1
      %p108 = por %p106, %p107
      %p110 = scmp.ne.s32.totalorder %s93, %s109
      %p111 = scmp.eq.s32.totalorder %s33, 0
      %p112 = por %p110, %p111
      %s113 = ssub.s32 %s27, %s34
      %p114 = scmp.eq.s32.totalorder %s113, 0
      %s116 = sadd.s32 %s115, 1
      %s117 = scalar_select %p114, %s115, %s116
      %p120 = pneg %p114
      %p121 = scmp.eq.s32.totalorder %s27, 1
      %p122 = por %p120, %p121
      %p123 = scmp.ne.s32.totalorder %s115, %s118
      %p124 = scmp.eq.s32.totalorder %s27, 0
      %p125 = por %p123, %p124
      %p126 = scmp.ne.s32.totalorder %s115, %s118
      %p127 = scmp.eq.s32.totalorder %s32, 1
      %p128 = por %p126, %p127
      %p129 = scmp.ne.s32.totalorder %s118, %s119
      %p130 = scmp.eq.s32.totalorder %s32, 0
      %p131 = por %p129, %p130
      %p132 = scmp.ne.s32.totalorder %s118, %s119
      %p133 = scmp.eq.s32.totalorder %s33, 1
      %p134 = por %p132, %p133
      %p136 = scmp.ne.s32.totalorder %s119, %s135
      %p137 = scmp.eq.s32.totalorder %s33, 0
      %p138 = por %p136, %p137
      %s140 = sadd.s32 %s139, 1
      %p143 = scmp.eq.s32.totalorder %s27, 1
      %p144 = scmp.ne.s32.totalorder %s139, %s141
      %p145 = scmp.eq.s32.totalorder %s27, 0
      %p146 = por %p144, %p145
      %p147 = scmp.ne.s32.totalorder %s139, %s141
      %p148 = scmp.eq.s32.totalorder %s32, 1
      %p149 = por %p147, %p148
      %p150 = scmp.ne.s32.totalorder %s141, %s142
      %p151 = scmp.eq.s32.totalorder %s32, 0
      %p152 = por %p150, %p151
      %p153 = scmp.ne.s32.totalorder %s141, %s142
      %p154 = scmp.eq.s32.totalorder %s33, 1
      %p155 = por %p153, %p154
      %p157 = scmp.ne.s32.totalorder %s142, %s156
      %p158 = scmp.eq.s32.totalorder %s33, 0
      %p159 = por %p157, %p158
      %s161 = sadd.s32 %s160, 1
      %p164 = scmp.eq.s32.totalorder %s27, 1
      %p165 = scmp.ne.s32.totalorder %s160, %s162
      %p166 = scmp.eq.s32.totalorder %s27, 0
      %p167 = por %p165, %p166
      %p168 = scmp.ne.s32.totalorder %s160, %s162
      %p169 = scmp.eq.s32.totalorder %s32, 1
      %p170 = por %p168, %p169
      %p171 = scmp.ne.s32.totalorder %s162, %s163
      %p172 = scmp.eq.s32.totalorder %s32, 0
      %p173 = por %p171, %p172
      %p174 = scmp.ne.s32.totalorder %s162, %s163
      %p175 = scmp.eq.s32.totalorder %s33, 1
      %p176 = por %p174, %p175
      %p178 = scmp.ne.s32.totalorder %s163, %s177
      %p179 = scmp.eq.s32.totalorder %s33, 0
      %p180 = por %p178, %p179
      %s182 = sadd.s32 %s181, 1
      %p185 = scmp.eq.s32.totalorder %s27, 1
      %p186 = scmp.ne.s32.totalorder %s181, %s183
      %p187 = scmp.eq.s32.totalorder %s27, 0
      %p188 = por %p186, %p187
      %p189 = scmp.ne.s32.totalorder %s181, %s183
      %p190 = scmp.eq.s32.totalorder %s32, 1
      %p191 = por %p189, %p190
      %p192 = scmp.ne.s32.totalorder %s183, %s184
      %p193 = scmp.eq.s32.totalorder %s32, 0
      %p194 = por %p192, %p193
      %p195 = scmp.ne.s32.totalorder %s183, %s184
      %p196 = scmp.eq.s32.totalorder %s33, 1
      %p197 = por %p195, %p196
      %p199 = scmp.ne.s32.totalorder %s184, %s198
      %p200 = scmp.eq.s32.totalorder %s33, 0
      %p201 = por %p199, %p200
      %s203 = sadd.s32 %s202, 1
      %p206 = scmp.eq.s32.totalorder %s27, 1
      %p207 = scmp.ne.s32.totalorder %s202, %s204
      %p208 = scmp.eq.s32.totalorder %s27, 0
      %p209 = por %p207, %p208
      %p210 = scmp.ne.s32.totalorder %s202, %s204
      %p211 = scmp.eq.s32.totalorder %s32, 1
      %p212 = por %p210, %p211
      %p213 = scmp.ne.s32.totalorder %s204, %s205
      %p214 = scmp.eq.s32.totalorder %s32, 0
      %p215 = por %p213, %p214
      %p216 = scmp.ne.s32.totalorder %s204, %s205
      %p217 = scmp.eq.s32.totalorder %s33, 1
      %p218 = por %p216, %p217
      %p220 = scmp.ne.s32.totalorder %s205, %s219
      %p221 = scmp.eq.s32.totalorder %s33, 0
      %p222 = por %p220, %p221
      %s224 = sadd.s32 %s223, 1
      %p227 = scmp.eq.s32.totalorder %s27, 1
      %p228 = scmp.ne.s32.totalorder %s223, %s225
      %p229 = scmp.eq.s32.totalorder %s27, 0
      %p230 = por %p228, %p229
      %p231 = scmp.ne.s32.totalorder %s223, %s225
      %p232 = scmp.eq.s32.totalorder %s32, 1
      %p233 = por %p231, %p232
      %p234 = scmp.ne.s32.totalorder %s225, %s226
      %p235 = scmp.eq.s32.totalorder %s32, 0
      %p236 = por %p234, %p235
      %p237 = scmp.ne.s32.totalorder %s225, %s226
      %p238 = scmp.eq.s32.totalorder %s33, 1
      %p239 = por %p237, %p238
      %p241 = scmp.ne.s32.totalorder %s226, %s240
      %p242 = scmp.eq.s32.totalorder %s33, 0
      %p243 = por %p241, %p242
      %s245 = sadd.s32 %s244, 1
      %p248 = scmp.eq.s32.totalorder %s27, 1
      %p249 = scmp.ne.s32.totalorder %s244, %s246
      %p250 = scmp.eq.s32.totalorder %s27, 0
      %p251 = por %p249, %p250
      %p252 = scmp.ne.s32.totalorder %s244, %s246
      %p253 = scmp.eq.s32.totalorder %s32, 1
      %p254 = por %p252, %p253
      %p255 = scmp.ne.s32.totalorder %s246, %s247
      %p256 = scmp.eq.s32.totalorder %s32, 0
      %p257 = por %p255, %p256
      %p258 = scmp.ne.s32.totalorder %s246, %s247
      %p259 = scmp.eq.s32.totalorder %s33, 1
      %p260 = por %p258, %p259
      %p262 = scmp.ne.s32.totalorder %s247, %s261
      %p263 = scmp.eq.s32.totalorder %s33, 0
      %p264 = por %p262, %p263
      %s265 = ssub.s32 %s27, %s34
      %p266 = scmp.eq.s32.totalorder %s265, 0
      %s268 = sadd.s32 %s267, 1
      %s269 = scalar_select %p266, %s267, %s268
      %p272 = pneg %p266
      %p273 = scmp.eq.s32.totalorder %s27, 1
      %p274 = por %p272, %p273
      %p275 = scmp.ne.s32.totalorder %s267, %s270
      %p276 = scmp.eq.s32.totalorder %s27, 0
      %p277 = por %p275, %p276
      %p278 = scmp.ne.s32.totalorder %s267, %s270
      %p279 = scmp.eq.s32.totalorder %s32, 1
      %p280 = por %p278, %p279
      %p281 = scmp.ne.s32.totalorder %s270, %s271
      %p282 = scmp.eq.s32.totalorder %s32, 0
      %p283 = por %p281, %p282
      %p284 = scmp.ne.s32.totalorder %s270, %s271
      %p285 = scmp.eq.s32.totalorder %s33, 1
      %p286 = por %p284, %p285
      %p288 = scmp.ne.s32.totalorder %s271, %s287
      %p289 = scmp.eq.s32.totalorder %s33, 0
      %p290 = por %p288, %p289
      %p291 = scmp.le.s32.totalorder 1, %s27
      %p292 = scmp.lt.s32.totalorder %s27, 3
      %p293 = pnand %p291, %p292
      %p294 = pneg %p293
      // Predicated region
      $region9: #{tpu_custom_call.1} parent=5 // pred_check
        _
      $region10: #{tpu_custom_call.1} parent=5 // pred_check_branch
        %296 = sbr.rel (%p293) target = $region12
      $region11: #{tpu_custom_call.1} parent=5 // pred_region
        %s297 = ssub.s32 %s27, 1
        // Predicated region
        $region13: #{tpu_custom_call.1} parent=11 // pred_check
          %p298 = pneg %p152
        $region14: #{tpu_custom_call.1} parent=11 // pred_check_branch
          %300 = sbr.rel (%p298) target = $region16
        $region15: #{tpu_custom_call.1} parent=11 // pred_region
          %s302 = ssub.s32 1536, 1536
          %303 = vsyncadd [#allocation6], %s302
          %s304 = sshll.u32 [#allocation7], 4
          %s305 = int_to_ptr.vmem [resolvable:$true] %s304
          %310 = dma.hbm_to_vmem [thread:$0]  %s4, 1536, %s305, [#allocation6], 64, 64, 4
        $region16: #{tpu_custom_call.1} parent=11 // pred_fallthru
          _
        // Predicated region
        $region17: #{tpu_custom_call.1} parent=11 // pred_check
          %p311 = pneg %p173
        $region18: #{tpu_custom_call.1} parent=11 // pred_check_branch
          %313 = sbr.rel (%p311) target = $region20
        $region19: #{tpu_custom_call.1} parent=11 // pred_region
          %s315 = ssub.s32 256, 256
          %316 = vsyncadd [#allocation9], %s315
          %s317 = sshll.u32 [#allocation8], 4
          %s318 = int_to_ptr.vmem [resolvable:$true] %s317
          %323 = dma.hbm_to_vmem [thread:$0]  %s5, 256, %s318, [#allocation9], 64, 64, 4
        $region20: #{tpu_custom_call.1} parent=11 // pred_fallthru
          _
        // Predicated region
        $region21: #{tpu_custom_call.1} parent=11 // pred_check
          %p324 = pneg %p194
        $region22: #{tpu_custom_call.1} parent=11 // pred_check_branch
          %326 = sbr.rel (%p324) target = $region24
        $region23: #{tpu_custom_call.1} parent=11 // pred_region
          %s328 = ssub.s32 256, 256
          %329 = vsyncadd [#allocation9], %s328
          %s330 = sshll.u32 [#allocation10], 4
          %s331 = int_to_ptr.vmem [resolvable:$true] %s330
          %336 = dma.hbm_to_vmem [thread:$0]  %s6, 256, %s331, [#allocation9], 64, 64, 4
        $region24: #{tpu_custom_call.1} parent=11 // pred_fallthru
          _
        // Predicated region
        $region25: #{tpu_custom_call.1} parent=11 // pred_check
          %p337 = pneg %p215
        $region26: #{tpu_custom_call.1} parent=11 // pred_check_branch
          %339 = sbr.rel (%p337) target = $region28
        $region27: #{tpu_custom_call.1} parent=11 // pred_region
          _
        $region28: #{tpu_custom_call.1} parent=11 // pred_fallthru
          _
        // Predicated region
        $region29: #{tpu_custom_call.1} parent=11 // pred_check
          %p340 = pneg %p236
        $region30: #{tpu_custom_call.1} parent=11 // pred_check_branch
          %342 = sbr.rel (%p340) target = $region32
        $region31: #{tpu_custom_call.1} parent=11 // pred_region
          %s344 = ssub.s32 256, 256
          %345 = vsyncadd [#allocation12], %s344
          %s346 = sshll.u32 [#allocation11], 4
          %s347 = int_to_ptr.vmem [resolvable:$true] %s346
          %352 = dma.hbm_to_vmem [thread:$0]  %s8, 256, %s347, [#allocation12], 128, 128, 8
        $region32: #{tpu_custom_call.1} parent=11 // pred_fallthru
          _
        // Predicated region
        $region33: #{tpu_custom_call.1} parent=11 // pred_check
          %p353 = pneg %p257
        $region34: #{tpu_custom_call.1} parent=11 // pred_check_branch
          %355 = sbr.rel (%p353) target = $region36
        $region35: #{tpu_custom_call.1} parent=11 // pred_region
          _
        $region36: #{tpu_custom_call.1} parent=11 // pred_fallthru
          _
      $region12: #{tpu_custom_call.1} parent=5 // pred_fallthru
        _
      %p356 = scmp.lt.s32.totalorder %s27, 2
      // Predicated region
      $region37: #{tpu_custom_call.1} parent=5 // pred_check
        %p357 = pneg %p356
      $region38: #{tpu_custom_call.1} parent=5 // pred_check_branch
        %359 = sbr.rel (%p357) target = $region40
      $region39: #{tpu_custom_call.1} parent=5 // pred_region
        // Predicated region
        $region41: #{tpu_custom_call.1} parent=39 // pred_check
          %p360 = pneg %p47
        $region42: #{tpu_custom_call.1} parent=39 // pred_check_branch
          %362 = sbr.rel (%p360) target = $region44
        $region43: #{tpu_custom_call.1} parent=39 // pred_region
          %s363 = smul.u32 2, %s27
          %p364 = scmp.lt.s32.totalorder %s363, 3
          %s365 = scalar_select %p364, %s363, 3
          %s366 = smul.addr %s365, 8
          %s367 = scalar_lea.vmem %s0, %s366
          %s368 = smul.u32 2, %s27
        $region44: #{tpu_custom_call.1} parent=39 // pred_fallthru
          _
        // Predicated region
        $region45: #{tpu_custom_call.1} parent=39 // pred_check
          %p369 = pneg %p73
        $region46: #{tpu_custom_call.1} parent=39 // pred_check_branch
          %371 = sbr.rel (%p369) target = $region48
        $region47: #{tpu_custom_call.1} parent=39 // pred_region
          %s372 = sand.u32 %s63, 1
          %s373 = scalar_lea.sflag [#allocation3], %s372
          %s374 = sand.u32 %s63, 1
          %s375 = smul.addr %s374, 2
          %s376 = scalar_lea.vmem [#allocation2], %s375
          %s377 = smul.u32 2, %s27
          %s379 = ssub.s32 32, 32
          %380 = vsyncadd %s373, %s379
          %s381 = smul.addr %s377, 16
          %s382 = scalar_lea.hbm %s1, %s381
          %s383 = sshll.u32 %s376, 4
          %s384 = int_to_ptr.vmem [resolvable:$true] %s383
          %389 = dma.hbm_to_vmem [thread:$0]  %s382, 32, %s384, %s373, 16, 16, 1
        $region48: #{tpu_custom_call.1} parent=39 // pred_fallthru
          _
        // Predicated region
        $region49: #{tpu_custom_call.1} parent=39 // pred_check
          %p390 = pneg %p99
        $region50: #{tpu_custom_call.1} parent=39 // pred_check_branch
          %392 = sbr.rel (%p390) target = $region52
        $region51: #{tpu_custom_call.1} parent=39 // pred_region
          %s393 = smul.u32 2, %s27
          %p394 = scmp.lt.s32.totalorder %s393, 3
          %s395 = scalar_select %p394, %s393, 3
          %s396 = smul.addr %s395, 8
          %s397 = scalar_lea.vmem %s2, %s396
          %s398 = smul.u32 2, %s27
        $region52: #{tpu_custom_call.1} parent=39 // pred_fallthru
          _
        // Predicated region
        $region53: #{tpu_custom_call.1} parent=39 // pred_check
          %p399 = pneg %p125
        $region54: #{tpu_custom_call.1} parent=39 // pred_check_branch
          %401 = sbr.rel (%p399) target = $region56
        $region55: #{tpu_custom_call.1} parent=39 // pred_region
          %s402 = sand.u32 %s27, 1
          %s403 = scalar_lea.sflag [#allocation6], %s402
          %s404 = sand.u32 %s115, 1
          %s405 = smul.addr %s404, 2
          %s406 = scalar_lea.vmem [#allocation5], %s405
          %s407 = smul.u32 2, %s27
          %s409 = ssub.s32 32, 32
          %410 = vsyncadd %s403, %s409
          %s411 = smul.addr %s407, 16
          %s412 = scalar_lea.hbm %s3, %s411
          %s413 = sshll.u32 %s406, 4
          %s414 = int_to_ptr.vmem [resolvable:$true] %s413
          %419 = dma.hbm_to_vmem [thread:$0]  %s412, 32, %s414, %s403, 16, 16, 1
        $region56: #{tpu_custom_call.1} parent=39 // pred_fallthru
          _
      $region40: #{tpu_custom_call.1} parent=5 // pred_fallthru
        _
      %p420 = scmp.le.s32.totalorder 1, %s27
      %p421 = scmp.lt.s32.totalorder %s27, 3
      %p422 = pnand %p420, %p421
      %p423 = pneg %p422
      // Predicated region
      $region57: #{tpu_custom_call.1} parent=5 // pred_check
        _
      $region58: #{tpu_custom_call.1} parent=5 // pred_check_branch
        %425 = sbr.rel (%p422) target = $region60
      $region59: #{tpu_custom_call.1} parent=5 // pred_region
        %s426 = ssub.s32 %s27, 1
        %s427 = sand.u32 %s66, 1
        %s428 = scalar_lea.sflag [#allocation3], %s427
        %s429 = sand.u32 %s66, 1
        %s430 = smul.addr %s429, 2
        %s431 = scalar_lea.vmem [#allocation2], %s430
        // Predicated region
        $region61: #{tpu_custom_call.1} parent=59 // pred_check
          %p432 = pneg %p79
        $region62: #{tpu_custom_call.1} parent=59 // pred_check_branch
          %434 = sbr.rel (%p432) target = $region64
        $region63: #{tpu_custom_call.1} parent=59 // pred_region
          %435 = dma.done %s428, 32
        $region64: #{tpu_custom_call.1} parent=59 // pred_fallthru
          _
        %s436 = sand.u32 %s32, 1
        %s437 = scalar_lea.sflag [#allocation6], %s436
        %s438 = sand.u32 %s118, 1
        %s439 = smul.addr %s438, 2
        %s440 = scalar_lea.vmem [#allocation5], %s439
        // Predicated region
        $region65: #{tpu_custom_call.1} parent=59 // pred_check
          %p441 = pneg %p131
        $region66: #{tpu_custom_call.1} parent=59 // pred_check_branch
          %443 = sbr.rel (%p441) target = $region68
        $region67: #{tpu_custom_call.1} parent=59 // pred_region
          %444 = dma.done %s437, 32
        $region68: #{tpu_custom_call.1} parent=59 // pred_fallthru
          _
        // Predicated region
        $region69: #{tpu_custom_call.1} parent=59 // pred_check
          %p445 = pneg %p152
        $region70: #{tpu_custom_call.1} parent=59 // pred_check_branch
          %447 = sbr.rel (%p445) target = $region72
        $region71: #{tpu_custom_call.1} parent=59 // pred_region
          %448 = dma.done [#allocation6], 1536
        $region72: #{tpu_custom_call.1} parent=59 // pred_fallthru
          _
        // Predicated region
        $region73: #{tpu_custom_call.1} parent=59 // pred_check
          %p449 = pneg %p173
        $region74: #{tpu_custom_call.1} parent=59 // pred_check_branch
          %451 = sbr.rel (%p449) target = $region76
        $region75: #{tpu_custom_call.1} parent=59 // pred_region
          %452 = dma.done [#allocation9], 256
        $region76: #{tpu_custom_call.1} parent=59 // pred_fallthru
          _
        // Predicated region
        $region77: #{tpu_custom_call.1} parent=59 // pred_check
          %p453 = pneg %p194
        $region78: #{tpu_custom_call.1} parent=59 // pred_check_branch
          %455 = sbr.rel (%p453) target = $region80
        $region79: #{tpu_custom_call.1} parent=59 // pred_region
          %456 = dma.done [#allocation9], 256
        $region80: #{tpu_custom_call.1} parent=59 // pred_fallthru
          _
        // Predicated region
        $region81: #{tpu_custom_call.1} parent=59 // pred_check
          %p457 = pneg %p236
        $region82: #{tpu_custom_call.1} parent=59 // pred_check_branch
          %459 = sbr.rel (%p457) target = $region84
        $region83: #{tpu_custom_call.1} parent=59 // pred_region
          %460 = dma.done [#allocation12], 256
        $region84: #{tpu_custom_call.1} parent=59 // pred_fallthru
          _
        %s461 = smul.u32 2, %s32
        %p462 = scmp.lt.s32.totalorder %s461, 3
        %s463 = scalar_select %p462, %s461, 3
        %s464 = smul.addr %s463, 8
        %s465 = scalar_lea.vmem %s0, %s464
        %p466 = pneg %p53
        %p467 = pneg %p50
        %s468 = sand.u32 %s66, 1
        %s469 = scalar_lea.sflag [#allocation3], %s468
        %s470 = sand.u32 %s66, 1
        %s471 = smul.addr %s470, 2
        %s472 = scalar_lea.vmem [#allocation2], %s471
        %p473 = pneg %p79
        %p474 = pneg %p76
        %s475 = smul.u32 2, %s32
        %p476 = scmp.lt.s32.totalorder %s475, 3
        %s477 = scalar_select %p476, %s475, 3
        %s478 = smul.addr %s477, 8
        %s479 = scalar_lea.vmem %s2, %s478
        %p480 = pneg %p105
        %p481 = pneg %p102
        %s482 = sand.u32 %s32, 1
        %s483 = scalar_lea.sflag [#allocation6], %s482
        %s484 = sand.u32 %s118, 1
        %s485 = smul.addr %s484, 2
        %s486 = scalar_lea.vmem [#allocation5], %s485
        %p487 = pneg %p131
        %p488 = pneg %p128
        %p489 = pneg %p152
        %p490 = pneg %p149
        %p491 = pneg %p173
        %p492 = pneg %p170
        %p493 = pneg %p194
        %p494 = pneg %p191
        %p495 = pneg %p215
        %p496 = pneg %p212
        %p497 = pneg %p236
        %p498 = pneg %p233
        %p499 = pneg %p257
        %p500 = pneg %p254
        %p501 = pneg %p283
        %p502 = pneg %p280
        %s503 = sand.u32 %s270, 1
        %s504 = scalar_lea.sflag [#allocation4], %s503
        %s505 = sand.u32 %s270, 1
        %s506 = smul.addr %s505, 2
        %s507 = scalar_lea.vmem [#allocation13], %s506
        %s508 = smul.u32 2, %s32
        %p509 = scmp.lt.s32.totalorder %s508, 3
        %s510 = scalar_select %p509, %s508, 3
        %s511 = smul.addr %s510, 8
        %s512 = scalar_lea.vmem %s0, %s511
        %s513 = smul.u32 2, %s32
        %s514 = smul.u32 2, %s32
        %s515 = smul.u32 2, %s32
        %p516 = scmp.lt.s32.totalorder %s515, 3
        %s517 = scalar_select %p516, %s515, 3
        %s518 = smul.addr %s517, 8
        %s519 = scalar_lea.vmem %s2, %s518
        %s520 = smul.u32 2, %s32
        %s521 = smul.u32 2, %s32
        %s522 = smul.u32 2, %s32
        %v524 = vld [vmem:[#allocation11] sm:$0xff]
        %v525 = vld [vmem:[#allocation11 + $0x8] sm:$0x1f]
        %v526 = vld [vmem:[%s512] sm:$0xff]
        %v527 = vld [vmem:[%s512 + $0x8] sm:$0xff]
        %v528 = vld [vmem:[%s431] sm:$0x1]
        %v529 = vld [vmem:[%s431 + $0x1] sm:$0x1]
        %v530 = vpack.c.bf16 %v527, %v526
        %v531 = vpack.c.bf16 %v528, %v528
        %v532 = vpack.c.bf16 %v529, %v529
        %v533 = vld [vmem:[#allocation7] sm:$0xf]
        %v534 = vld [vmem:[#allocation7 + $0x4] sm:$0xf]
        %v535 = vld [vmem:[#allocation7 + $0x8] sm:$0xf]
        %v536 = vld [vmem:[#allocation7 + $0xc] sm:$0xf]
        %v541 = vunpack.c.l.b16 %v533
        %v542 = vunpack.c.l.b16 %v534
        %v543 = vunpack.c.l.b16 %v535
        %v544 = vunpack.c.l.b16 %v536
        %v545 = vpack.c.b16 %v542, %v541
        %v546 = vpack.c.b16 %v544, %v543
        %vm549 = vcmask 261120
        %v551 = vsel %vm549, %v530, 0
        %553 = vmatprep.subr.bf16.mxu0 0
        %554 = vmatpush1.bf16.msra.mxu0 %v545
        %555 = vmatprep.subr.bf16.mxu0 0
        %556 = vmatpush1.bf16.msra.mxu0 %v546
        %557 = vmatprep.subr.bf16.mxu0 0
        %558 = vmatpush1.bf16.msra.mxu0 0
        %559 = vmatprep.subr.bf16.mxu0 0
        %560 = vmatpush1.bf16.msra.mxu0 0
        %561 = vmatprep.subr.bf16.mxu0 0
        %562 = vmatpush1.bf16.msra.mxu0 0
        %563 = vmatprep.subr.bf16.mxu0 0
        %564 = vmatpush1.bf16.msra.mxu0 0
        %565 = vmatprep.subr.bf16.mxu0 0
        %566 = vmatpush1.bf16.msra.mxu0 0
        %567 = vmatprep.subr.bf16.mxu0 0
        %568 = vmatpush1.bf16.msra.mxu0 0
        %569 = vmatprep.subr.bf16.mxu0 0
        %570 = vmatpush1.bf16.msra.mxu0 0
        %571 = vmatprep.subr.bf16.mxu0 0
        %572 = vmatpush1.bf16.msra.mxu0 0
        %573 = vmatprep.subr.bf16.mxu0 0
        %574 = vmatpush1.bf16.msra.mxu0 0
        %575 = vmatprep.subr.bf16.mxu0 0
        %576 = vmatpush1.bf16.msra.mxu0 0
        %577 = vmatprep.subr.bf16.mxu0 0
        %578 = vmatpush1.bf16.msra.mxu0 0
        %579 = vmatprep.subr.bf16.mxu0 0
        %580 = vmatpush1.bf16.msra.mxu0 0
        %581 = vmatprep.subr.bf16.mxu0 0
        %582 = vmatpush1.bf16.msra.mxu0 0
        %583 = vmatprep.subr.bf16.mxu0 0
        %584 = vmatpush1.bf16.msra.mxu0 0
        %585 = vmatprep.mubr.bf16.mxu0 0
        %586 = vmatmul.mubr.bf16.gmra.mrb[0].mxu0 %v551
        %v587 = vpop.f32.mrb[0].mxu0
        %v588 = vadd.f32 0.0, %v587
        %v589 = vpop.f32.mrb[0].mxu0
        %v590 = vpop.f32.mrb[0].mxu0
        %v591 = vadd.f32 0.0, %v590
        %v592 = vpop.f32.mrb[0].mxu0
        %593 = vdwg.mxu0
        %s594 = scalar_lea.vmem [#allocation7], 16
        %v595 = vld [vmem:[%s594] sm:$0xf]
        %v596 = vld [vmem:[%s594 + $0x4] sm:$0xf]
        %v597 = vld [vmem:[%s594 + $0x8] sm:$0xf]
        %v598 = vld [vmem:[%s594 + $0xc] sm:$0xf]
        %v603 = vunpack.c.l.b16 %v595
        %v604 = vunpack.c.l.b16 %v596
        %v605 = vunpack.c.l.b16 %v597
        %v606 = vunpack.c.l.b16 %v598
        %v607 = vpack.c.b16 %v604, %v603
        %v608 = vpack.c.b16 %v606, %v605
        %611 = vmatprep.subr.bf16.mxu0 0
        %612 = vmatpush1.bf16.msra.mxu0 %v607
        %613 = vmatprep.subr.bf16.mxu0 0
        %614 = vmatpush1.bf16.msra.mxu0 %v608
        %615 = vmatprep.subr.bf16.mxu0 0
        %616 = vmatpush1.bf16.msra.mxu0 0
        %617 = vmatprep.subr.bf16.mxu0 0
        %618 = vmatpush1.bf16.msra.mxu0 0
        %619 = vmatprep.subr.bf16.mxu0 0
        %620 = vmatpush1.bf16.msra.mxu0 0
        %621 = vmatprep.subr.bf16.mxu0 0
        %622 = vmatpush1.bf16.msra.mxu0 0
        %623 = vmatprep.subr.bf16.mxu0 0
        %624 = vmatpush1.bf16.msra.mxu0 0
        %625 = vmatprep.subr.bf16.mxu0 0
        %626 = vmatpush1.bf16.msra.mxu0 0
        %627 = vmatprep.subr.bf16.mxu0 0
        %628 = vmatpush1.bf16.msra.mxu0 0
        %629 = vmatprep.subr.bf16.mxu0 0
        %630 = vmatpush1.bf16.msra.mxu0 0
        %631 = vmatprep.subr.bf16.mxu0 0
        %632 = vmatpush1.bf16.msra.mxu0 0
        %633 = vmatprep.subr.bf16.mxu0 0
        %634 = vmatpush1.bf16.msra.mxu0 0
        %635 = vmatprep.subr.bf16.mxu0 0
        %636 = vmatpush1.bf16.msra.mxu0 0
        %637 = vmatprep.subr.bf16.mxu0 0
        %638 = vmatpush1.bf16.msra.mxu0 0
        %639 = vmatprep.subr.bf16.mxu0 0
        %640 = vmatpush1.bf16.msra.mxu0 0
        %641 = vmatprep.subr.bf16.mxu0 0
        %642 = vmatpush1.bf16.msra.mxu0 0
        %643 = vmatprep.mubr.bf16.mxu0 0
        %644 = vmatmul.mubr.bf16.gmra.mrb[0].mxu0 %v551
        %v645 = vpop.f32.mrb[0].mxu0
        %v646 = vadd.f32 0.0, %v645
        %v647 = vpop.f32.mrb[0].mxu0
        %v648 = vpop.f32.mrb[0].mxu0
        %v649 = vadd.f32 0.0, %v648
        %v650 = vpop.f32.mrb[0].mxu0
        %651 = vdwg.mxu0
        %s652 = scalar_lea.vmem [#allocation7], 32
        %v653 = vld [vmem:[%s652] sm:$0xf]
        %v654 = vld [vmem:[%s652 + $0x4] sm:$0xf]
        %v655 = vld [vmem:[%s652 + $0x8] sm:$0xf]
        %v656 = vld [vmem:[%s652 + $0xc] sm:$0xf]
        %v661 = vunpack.c.l.b16 %v653
        %v662 = vunpack.c.l.b16 %v654
        %v663 = vunpack.c.l.b16 %v655
        %v664 = vunpack.c.l.b16 %v656
        %v665 = vpack.c.b16 %v662, %v661
        %v666 = vpack.c.b16 %v664, %v663
        %669 = vmatprep.subr.bf16.mxu0 0
        %670 = vmatpush1.bf16.msra.mxu0 %v665
        %671 = vmatprep.subr.bf16.mxu0 0
        %672 = vmatpush1.bf16.msra.mxu0 %v666
        %673 = vmatprep.subr.bf16.mxu0 0
        %674 = vmatpush1.bf16.msra.mxu0 0
        %675 = vmatprep.subr.bf16.mxu0 0
        %676 = vmatpush1.bf16.msra.mxu0 0
        %677 = vmatprep.subr.bf16.mxu0 0
        %678 = vmatpush1.bf16.msra.mxu0 0
        %679 = vmatprep.subr.bf16.mxu0 0
        %680 = vmatpush1.bf16.msra.mxu0 0
        %681 = vmatprep.subr.bf16.mxu0 0
        %682 = vmatpush1.bf16.msra.mxu0 0
        %683 = vmatprep.subr.bf16.mxu0 0
        %684 = vmatpush1.bf16.msra.mxu0 0
        %685 = vmatprep.subr.bf16.mxu0 0
        %686 = vmatpush1.bf16.msra.mxu0 0
        %687 = vmatprep.subr.bf16.mxu0 0
        %688 = vmatpush1.bf16.msra.mxu0 0
        %689 = vmatprep.subr.bf16.mxu0 0
        %690 = vmatpush1.bf16.msra.mxu0 0
        %691 = vmatprep.subr.bf16.mxu0 0
        %692 = vmatpush1.bf16.msra.mxu0 0
        %693 = vmatprep.subr.bf16.mxu0 0
        %694 = vmatpush1.bf16.msra.mxu0 0
        %695 = vmatprep.subr.bf16.mxu0 0
        %696 = vmatpush1.bf16.msra.mxu0 0
        %697 = vmatprep.subr.bf16.mxu0 0
        %698 = vmatpush1.bf16.msra.mxu0 0
        %699 = vmatprep.subr.bf16.mxu0 0
        %700 = vmatpush1.bf16.msra.mxu0 0
        %701 = vmatprep.mubr.bf16.mxu0 0
        %702 = vmatmul.mubr.bf16.gmra.mrb[0].mxu0 %v551
        %v703 = vpop.f32.mrb[0].mxu0
        %v704 = vadd.f32 0.0, %v703
        %v705 = vpop.f32.mrb[0].mxu0
        %v706 = vpop.f32.mrb[0].mxu0
        %v707 = vadd.f32 0.0, %v706
        %v708 = vpop.f32.mrb[0].mxu0
        %709 = vdwg.mxu0
        %s710 = scalar_lea.vmem [#allocation7], 48
        %v711 = vld [vmem:[%s710] sm:$0xf]
        %v712 = vld [vmem:[%s710 + $0x4] sm:$0xf]
        %v713 = vld [vmem:[%s710 + $0x8] sm:$0xf]
        %v714 = vld [vmem:[%s710 + $0xc] sm:$0xf]
        %v717 = vunpack.c.l.b16 %v531
        %v718 = vunpack.c.l.b16 %v532
        %v719 = vrot.slane %v718, 7
        %vm720 = vcmask 1041409
        %v721 = vsel %vm720, %v719, %v717
        %v722 = vpack.c.b16 %v721, %v721
        %v727 = vunpack.c.l.b16 %v711
        %v728 = vunpack.c.l.b16 %v712
        %v729 = vunpack.c.l.b16 %v713
        %v730 = vunpack.c.l.b16 %v714
        %v731 = vpack.c.b16 %v728, %v727
        %v732 = vpack.c.b16 %v730, %v729
        %v736 = vsel %vm549, %v722, 0
        %738 = vmatprep.subr.bf16.mxu0 0
        %739 = vmatpush1.bf16.msra.mxu0 %v731
        %740 = vmatprep.subr.bf16.mxu0 0
        %741 = vmatpush1.bf16.msra.mxu0 %v732
        %742 = vmatprep.subr.bf16.mxu0 0
        %743 = vmatpush1.bf16.msra.mxu0 0
        %744 = vmatprep.subr.bf16.mxu0 0
        %745 = vmatpush1.bf16.msra.mxu0 0
        %746 = vmatprep.subr.bf16.mxu0 0
        %747 = vmatpush1.bf16.msra.mxu0 0
        %748 = vmatprep.subr.bf16.mxu0 0
        %749 = vmatpush1.bf16.msra.mxu0 0
        %750 = vmatprep.subr.bf16.mxu0 0
        %751 = vmatpush1.bf16.msra.mxu0 0
        %752 = vmatprep.subr.bf16.mxu0 0
        %753 = vmatpush1.bf16.msra.mxu0 0
        %754 = vmatprep.subr.bf16.mxu0 0
        %755 = vmatpush1.bf16.msra.mxu0 0
        %756 = vmatprep.subr.bf16.mxu0 0
        %757 = vmatpush1.bf16.msra.mxu0 0
        %758 = vmatprep.subr.bf16.mxu0 0
        %759 = vmatpush1.bf16.msra.mxu0 0
        %760 = vmatprep.subr.bf16.mxu0 0
        %761 = vmatpush1.bf16.msra.mxu0 0
        %762 = vmatprep.subr.bf16.mxu0 0
        %763 = vmatpush1.bf16.msra.mxu0 0
        %764 = vmatprep.subr.bf16.mxu0 0
        %765 = vmatpush1.bf16.msra.mxu0 0
        %766 = vmatprep.subr.bf16.mxu0 0
        %767 = vmatpush1.bf16.msra.mxu0 0
        %768 = vmatprep.subr.bf16.mxu0 0
        %769 = vmatpush1.bf16.msra.mxu0 0
        %770 = vmatprep.mubr.bf16.mxu0 0
        %771 = vmatmul.mubr.bf16.gmra.mrb[0].mxu0 %v736
        %v772 = vpop.f32.mrb[0].mxu0
        %v773 = vadd.f32 0.0, %v772
        %v774 = vpop.f32.mrb[0].mxu0
        %v775 = vpop.f32.mrb[0].mxu0
        %v776 = vpop.f32.mrb[0].mxu0
        %777 = vdwg.mxu0
        %s778 = scalar_lea.vmem [#allocation7], 64
        %v779 = vld [vmem:[%s778] sm:$0xf]
        %v780 = vld [vmem:[%s778 + $0x4] sm:$0xf]
        %v781 = vld [vmem:[%s778 + $0x8] sm:$0xf]
        %v782 = vld [vmem:[%s778 + $0xc] sm:$0xf]
        %v787 = vunpack.c.l.b16 %v779
        %v788 = vunpack.c.l.b16 %v780
        %v789 = vunpack.c.l.b16 %v781
        %v790 = vunpack.c.l.b16 %v782
        %v791 = vpack.c.b16 %v788, %v787
        %v792 = vpack.c.b16 %v790, %v789
        %795 = vmatprep.subr.bf16.mxu0 0
        %796 = vmatpush1.bf16.msra.mxu0 %v791
        %797 = vmatprep.subr.bf16.mxu0 0
        %798 = vmatpush1.bf16.msra.mxu0 %v792
        %799 = vmatprep.subr.bf16.mxu0 0
        %800 = vmatpush1.bf16.msra.mxu0 0
        %801 = vmatprep.subr.bf16.mxu0 0
        %802 = vmatpush1.bf16.msra.mxu0 0
        %803 = vmatprep.subr.bf16.mxu0 0
        %804 = vmatpush1.bf16.msra.mxu0 0
        %805 = vmatprep.subr.bf16.mxu0 0
        %806 = vmatpush1.bf16.msra.mxu0 0
        %807 = vmatprep.subr.bf16.mxu0 0
        %808 = vmatpush1.bf16.msra.mxu0 0
        %809 = vmatprep.subr.bf16.mxu0 0
        %810 = vmatpush1.bf16.msra.mxu0 0
        %811 = vmatprep.subr.bf16.mxu0 0
        %812 = vmatpush1.bf16.msra.mxu0 0
        %813 = vmatprep.subr.bf16.mxu0 0
        %814 = vmatpush1.bf16.msra.mxu0 0
        %815 = vmatprep.subr.bf16.mxu0 0
        %816 = vmatpush1.bf16.msra.mxu0 0
        %817 = vmatprep.subr.bf16.mxu0 0
        %818 = vmatpush1.bf16.msra.mxu0 0
        %819 = vmatprep.subr.bf16.mxu0 0
        %820 = vmatpush1.bf16.msra.mxu0 0
        %821 = vmatprep.subr.bf16.mxu0 0
        %822 = vmatpush1.bf16.msra.mxu0 0
        %823 = vmatprep.subr.bf16.mxu0 0
        %824 = vmatpush1.bf16.msra.mxu0 0
        %825 = vmatprep.subr.bf16.mxu0 0
        %826 = vmatpush1.bf16.msra.mxu0 0
        %827 = vmatprep.mubr.bf16.mxu0 0
        %828 = vmatmul.mubr.bf16.gmra.mrb[0].mxu0 %v736
        %v829 = vpop.f32.mrb[0].mxu0
        %v830 = vadd.f32 0.0, %v829
        %v831 = vpop.f32.mrb[0].mxu0
        %v832 = vpop.f32.mrb[0].mxu0
        %v833 = vpop.f32.mrb[0].mxu0
        %834 = vdwg.mxu0
        %v835 = vld [vmem:[%s9] sm:$0xff]
        %v836 = vld [vmem:[%s9 + $0x8] sm:$0xff]
        %v837 = vld [vmem:[%s9 + $0x10] sm:$0xff]
        %v838 = vld [vmem:[%s9 + $0x18] sm:$0xff]
        %v840 = vsel %vm549, %v588, 0
        %v843 = vsel %vm549, %v591, 0
        %845 = vmatprep.subr.mxu0 0.0
        %846 = vmatpush1.msra.mxu0 %v835
        %847 = vmatprep.subr.mxu0 0.0
        %848 = vmatpush1.msra.mxu0 %v836
        %849 = vmatprep.subr.mxu0 0.0
        %850 = vmatpush1.msra.mxu0 %v837
        %851 = vmatprep.subr.mxu0 0.0
        %852 = vmatpush1.msra.mxu0 %v838
        %853 = vmatprep.subr.mxu0 0.0
        %854 = vmatpush1.msra.mxu0 0.0
        %855 = vmatprep.subr.mxu0 0.0
        %856 = vmatpush1.msra.mxu0 0.0
        %857 = vmatprep.subr.mxu0 0.0
        %858 = vmatpush1.msra.mxu0 0.0
        %859 = vmatprep.subr.mxu0 0.0
        %860 = vmatpush1.msra.mxu0 0.0
        %861 = vmatprep.subr.mxu0 0.0
        %862 = vmatpush1.msra.mxu0 0.0
        %863 = vmatprep.subr.mxu0 0.0
        %864 = vmatpush1.msra.mxu0 0.0
        %865 = vmatprep.subr.mxu0 0.0
        %866 = vmatpush1.msra.mxu0 0.0
        %867 = vmatprep.subr.mxu0 0.0
        %868 = vmatpush1.msra.mxu0 0.0
        %869 = vmatprep.subr.mxu0 0.0
        %870 = vmatpush1.msra.mxu0 0.0
        %871 = vmatprep.subr.mxu0 0.0
        %872 = vmatpush1.msra.mxu0 0.0
        %873 = vmatprep.subr.mxu0 0.0
        %874 = vmatpush1.msra.mxu0 0.0
        %875 = vmatprep.subr.mxu0 0.0
        %876 = vmatpush1.msra.mxu0 0.0
        %877 = vmatprep.subr.mxu0 0.0
        %878 = vmatpush1.msra.mxu0 0.0
        %879 = vmatprep.subr.mxu0 0.0
        %880 = vmatpush1.msra.mxu0 0.0
        %881 = vmatprep.subr.mxu0 0.0
        %882 = vmatpush1.msra.mxu0 0.0
        %883 = vmatprep.subr.mxu0 0.0
        %884 = vmatpush1.msra.mxu0 0.0
        %885 = vmatprep.subr.mxu0 0.0
        %886 = vmatpush1.msra.mxu0 0.0
        %887 = vmatprep.subr.mxu0 0.0
        %888 = vmatpush1.msra.mxu0 0.0
        %889 = vmatprep.subr.mxu0 0.0
        %890 = vmatpush1.msra.mxu0 0.0
        %891 = vmatprep.subr.mxu0 0.0
        %892 = vmatpush1.msra.mxu0 0.0
        %893 = vmatprep.subr.mxu0 0.0
        %894 = vmatpush1.msra.mxu0 0.0
        %895 = vmatprep.subr.mxu0 0.0
        %896 = vmatpush1.msra.mxu0 0.0
        %897 = vmatprep.subr.mxu0 0.0
        %898 = vmatpush1.msra.mxu0 0.0
        %899 = vmatprep.subr.mxu0 0.0
        %900 = vmatpush1.msra.mxu0 0.0
        %901 = vmatprep.subr.mxu0 0.0
        %902 = vmatpush1.msra.mxu0 0.0
        %903 = vmatprep.subr.mxu0 0.0
        %904 = vmatpush1.msra.mxu0 0.0
        %905 = vmatprep.subr.mxu0 0.0
        %906 = vmatpush1.msra.mxu0 0.0
        %907 = vmatprep.subr.mxu0 0.0
        %908 = vmatpush1.msra.mxu0 0.0
        %909 = vmatprep.mubr.f32.mxu0 0.0
        %910 = vmatmul.mubr.f32.gmra.mrb[0].mxu0 %v840
        %v911 = vpop.f32.mrb[0].mxu0
        %v912 = vadd.f32 0.0, %v911
        %v913 = vpop.f32.mrb[0].mxu0
        %914 = vmatprep.mubr.f32.mxu0 0.0
        %915 = vmatmul.mubr.f32.gmra.mrb[0].mxu0 %v843
        %v916 = vpop.f32.mrb[0].mxu0
        %v917 = vadd.f32 0.0, %v916
        %v918 = vpop.f32.mrb[0].mxu0
        %919 = vdwg.mxu0
        %v920 = vsub.f32 %v588, %v912
        %v921 = vsub.f32 %v591, %v917
        %v922 = vmul.f32 %v920, %v920
        %v923 = vmul.f32 %v921, %v921
        %v925 = vsel %vm549, %v922, 0
        %v928 = vsel %vm549, %v923, 0
        %930 = vmatprep.subr.mxu0 0.0
        %931 = vmatpush1.msra.mxu0 %v835
        %932 = vmatprep.subr.mxu0 0.0
        %933 = vmatpush1.msra.mxu0 %v836
        %934 = vmatprep.subr.mxu0 0.0
        %935 = vmatpush1.msra.mxu0 %v837
        %936 = vmatprep.subr.mxu0 0.0
        %937 = vmatpush1.msra.mxu0 %v838
        %938 = vmatprep.subr.mxu0 0.0
        %939 = vmatpush1.msra.mxu0 0.0
        %940 = vmatprep.subr.mxu0 0.0
        %941 = vmatpush1.msra.mxu0 0.0
        %942 = vmatprep.subr.mxu0 0.0
        %943 = vmatpush1.msra.mxu0 0.0
        %944 = vmatprep.subr.mxu0 0.0
        %945 = vmatpush1.msra.mxu0 0.0
        %946 = vmatprep.subr.mxu0 0.0
        %947 = vmatpush1.msra.mxu0 0.0
        %948 = vmatprep.subr.mxu0 0.0
        %949 = vmatpush1.msra.mxu0 0.0
        %950 = vmatprep.subr.mxu0 0.0
        %951 = vmatpush1.msra.mxu0 0.0
        %952 = vmatprep.subr.mxu0 0.0
        %953 = vmatpush1.msra.mxu0 0.0
        %954 = vmatprep.subr.mxu0 0.0
        %955 = vmatpush1.msra.mxu0 0.0
        %956 = vmatprep.subr.mxu0 0.0
        %957 = vmatpush1.msra.mxu0 0.0
        %958 = vmatprep.subr.mxu0 0.0
        %959 = vmatpush1.msra.mxu0 0.0
        %960 = vmatprep.subr.mxu0 0.0
        %961 = vmatpush1.msra.mxu0 0.0
        %962 = vmatprep.subr.mxu0 0.0
        %963 = vmatpush1.msra.mxu0 0.0
        %964 = vmatprep.subr.mxu0 0.0
        %965 = vmatpush1.msra.mxu0 0.0
        %966 = vmatprep.subr.mxu0 0.0
        %967 = vmatpush1.msra.mxu0 0.0
        %968 = vmatprep.subr.mxu0 0.0
        %969 = vmatpush1.msra.mxu0 0.0
        %970 = vmatprep.subr.mxu0 0.0
        %971 = vmatpush1.msra.mxu0 0.0
        %972 = vmatprep.subr.mxu0 0.0
        %973 = vmatpush1.msra.mxu0 0.0
        %974 = vmatprep.subr.mxu0 0.0
        %975 = vmatpush1.msra.mxu0 0.0
        %976 = vmatprep.subr.mxu0 0.0
        %977 = vmatpush1.msra.mxu0 0.0
        %978 = vmatprep.subr.mxu0 0.0
        %979 = vmatpush1.msra.mxu0 0.0
        %980 = vmatprep.subr.mxu0 0.0
        %981 = vmatpush1.msra.mxu0 0.0
        %982 = vmatprep.subr.mxu0 0.0
        %983 = vmatpush1.msra.mxu0 0.0
        %984 = vmatprep.subr.mxu0 0.0
        %985 = vmatpush1.msra.mxu0 0.0
        %986 = vmatprep.subr.mxu0 0.0
        %987 = vmatpush1.msra.mxu0 0.0
        %988 = vmatprep.subr.mxu0 0.0
        %989 = vmatpush1.msra.mxu0 0.0
        %990 = vmatprep.subr.mxu0 0.0
        %991 = vmatpush1.msra.mxu0 0.0
        %992 = vmatprep.subr.mxu0 0.0
        %993 = vmatpush1.msra.mxu0 0.0
        %994 = vmatprep.mubr.f32.mxu0 0.0
        %995 = vmatmul.mubr.f32.gmra.mrb[0].mxu0 %v925
        %v996 = vpop.f32.mrb[0].mxu0
        %v997 = vadd.f32 1e-05, %v996
        %v998 = vpop.f32.mrb[0].mxu0
        %999 = vmatprep.mubr.f32.mxu0 0.0
        %1000 = vmatmul.mubr.f32.gmra.mrb[0].mxu0 %v928
        %v1001 = vpop.f32.mrb[0].mxu0
        %v1002 = vadd.f32 1e-05, %v1001
        %v1003 = vpop.f32.mrb[0].mxu0
        %1004 = vdwg.mxu0
        %v1005 = vrsqrt.pop %v997
        %v1006 = vrsqrt.pop %v1002
        %v1007 = vmul.f32 %v920, %v1005
        %v1008 = vmul.f32 %v921, %v1006
        %v1009 = vlaneseq
        %v1010 = vshrl.u32 %v1009, 7
        %v1011 = vsub.s32 1, %v1010
        %v1012 = vrot.slane %v524, %v1011
        %v1013 = vmul.f32 %v1007, %v1012
        %v1014 = vmul.f32 %v1008, %v1012
        %v1015 = vlaneseq
        %v1016 = vshrl.u32 %v1015, 7
        %v1017 = vsub.s32 2, %v1016
        %v1018 = vrot.slane %v524, %v1017
        %v1019 = vadd.f32 %v1013, %v1018
        %v1020 = vadd.f32 %v1014, %v1018
        %v1021 = vmul.f32 %v1019, 0.4204482
        %v1022 = vmul.f32 %v1020, 0.4204482
        %v1024 = vsel %vm549, %v646, 0
        %v1027 = vsel %vm549, %v649, 0
        %1029 = vmatprep.subr.mxu0 0.0
        %1030 = vmatpush1.msra.mxu0 %v835
        %1031 = vmatprep.subr.mxu0 0.0
        %1032 = vmatpush1.msra.mxu0 %v836
        %1033 = vmatprep.subr.mxu0 0.0
        %1034 = vmatpush1.msra.mxu0 %v837
        %1035 = vmatprep.subr.mxu0 0.0
        %1036 = vmatpush1.msra.mxu0 %v838
        %1037 = vmatprep.subr.mxu0 0.0
        %1038 = vmatpush1.msra.mxu0 0.0
        %1039 = vmatprep.subr.mxu0 0.0
        %1040 = vmatpush1.msra.mxu0 0.0
        %1041 = vmatprep.subr.mxu0 0.0
        %1042 = vmatpush1.msra.mxu0 0.0
        %1043 = vmatprep.subr.mxu0 0.0
        %1044 = vmatpush1.msra.mxu0 0.0
        %1045 = vmatprep.subr.mxu0 0.0
        %1046 = vmatpush1.msra.mxu0 0.0
        %1047 = vmatprep.subr.mxu0 0.0
        %1048 = vmatpush1.msra.mxu0 0.0
        %1049 = vmatprep.subr.mxu0 0.0
        %1050 = vmatpush1.msra.mxu0 0.0
        %1051 = vmatprep.subr.mxu0 0.0
        %1052 = vmatpush1.msra.mxu0 0.0
        %1053 = vmatprep.subr.mxu0 0.0
        %1054 = vmatpush1.msra.mxu0 0.0
        %1055 = vmatprep.subr.mxu0 0.0
        %1056 = vmatpush1.msra.mxu0 0.0
        %1057 = vmatprep.subr.mxu0 0.0
        %1058 = vmatpush1.msra.mxu0 0.0
        %1059 = vmatprep.subr.mxu0 0.0
        %1060 = vmatpush1.msra.mxu0 0.0
        %1061 = vmatprep.subr.mxu0 0.0
        %1062 = vmatpush1.msra.mxu0 0.0
        %1063 = vmatprep.subr.mxu0 0.0
        %1064 = vmatpush1.msra.mxu0 0.0
        %1065 = vmatprep.subr.mxu0 0.0
        %1066 = vmatpush1.msra.mxu0 0.0
        %1067 = vmatprep.subr.mxu0 0.0
        %1068 = vmatpush1.msra.mxu0 0.0
        %1069 = vmatprep.subr.mxu0 0.0
        %1070 = vmatpush1.msra.mxu0 0.0
        %1071 = vmatprep.subr.mxu0 0.0
        %1072 = vmatpush1.msra.mxu0 0.0
        %1073 = vmatprep.subr.mxu0 0.0
        %1074 = vmatpush1.msra.mxu0 0.0
        %1075 = vmatprep.subr.mxu0 0.0
        %1076 = vmatpush1.msra.mxu0 0.0
        %1077 = vmatprep.subr.mxu0 0.0
        %1078 = vmatpush1.msra.mxu0 0.0
        %1079 = vmatprep.subr.mxu0 0.0
        %1080 = vmatpush1.msra.mxu0 0.0
        %1081 = vmatprep.subr.mxu0 0.0
        %1082 = vmatpush1.msra.mxu0 0.0
        %1083 = vmatprep.subr.mxu0 0.0
        %1084 = vmatpush1.msra.mxu0 0.0
        %1085 = vmatprep.subr.mxu0 0.0
        %1086 = vmatpush1.msra.mxu0 0.0
        %1087 = vmatprep.subr.mxu0 0.0
        %1088 = vmatpush1.msra.mxu0 0.0
        %1089 = vmatprep.subr.mxu0 0.0
        %1090 = vmatpush1.msra.mxu0 0.0
        %1091 = vmatprep.subr.mxu0 0.0
        %1092 = vmatpush1.msra.mxu0 0.0
        %1093 = vmatprep.mubr.f32.mxu0 0.0
        %1094 = vmatmul.mubr.f32.gmra.mrb[0].mxu0 %v1024
        %v1095 = vpop.f32.mrb[0].mxu0
        %v1096 = vadd.f32 0.0, %v1095
        %v1097 = vpop.f32.mrb[0].mxu0
        %1098 = vmatprep.mubr.f32.mxu0 0.0
        %1099 = vmatmul.mubr.f32.gmra.mrb[0].mxu0 %v1027
        %v1100 = vpop.f32.mrb[0].mxu0
        %v1101 = vadd.f32 0.0, %v1100
        %v1102 = vpop.f32.mrb[0].mxu0
        %1103 = vdwg.mxu0
        %v1104 = vsub.f32 %v646, %v1096
        %v1105 = vsub.f32 %v649, %v1101
        %v1106 = vmul.f32 %v1104, %v1104
        %v1107 = vmul.f32 %v1105, %v1105
        %v1109 = vsel %vm549, %v1106, 0
        %v1112 = vsel %vm549, %v1107, 0
        %1114 = vmatprep.subr.mxu0 0.0
        %1115 = vmatpush1.msra.mxu0 %v835
        %1116 = vmatprep.subr.mxu0 0.0
        %1117 = vmatpush1.msra.mxu0 %v836
        %1118 = vmatprep.subr.mxu0 0.0
        %1119 = vmatpush1.msra.mxu0 %v837
        %1120 = vmatprep.subr.mxu0 0.0
        %1121 = vmatpush1.msra.mxu0 %v838
        %1122 = vmatprep.subr.mxu0 0.0
        %1123 = vmatpush1.msra.mxu0 0.0
        %1124 = vmatprep.subr.mxu0 0.0
        %1125 = vmatpush1.msra.mxu0 0.0
        %1126 = vmatprep.subr.mxu0 0.0
        %1127 = vmatpush1.msra.mxu0 0.0
        %1128 = vmatprep.subr.mxu0 0.0
        %1129 = vmatpush1.msra.mxu0 0.0
        %1130 = vmatprep.subr.mxu0 0.0
        %1131 = vmatpush1.msra.mxu0 0.0
        %1132 = vmatprep.subr.mxu0 0.0
        %1133 = vmatpush1.msra.mxu0 0.0
        %1134 = vmatprep.subr.mxu0 0.0
        %1135 = vmatpush1.msra.mxu0 0.0
        %1136 = vmatprep.subr.mxu0 0.0
        %1137 = vmatpush1.msra.mxu0 0.0
        %1138 = vmatprep.subr.mxu0 0.0
        %1139 = vmatpush1.msra.mxu0 0.0
        %1140 = vmatprep.subr.mxu0 0.0
        %1141 = vmatpush1.msra.mxu0 0.0
        %1142 = vmatprep.subr.mxu0 0.0
        %1143 = vmatpush1.msra.mxu0 0.0
        %1144 = vmatprep.subr.mxu0 0.0
        %1145 = vmatpush1.msra.mxu0 0.0
        %1146 = vmatprep.subr.mxu0 0.0
        %1147 = vmatpush1.msra.mxu0 0.0
        %1148 = vmatprep.subr.mxu0 0.0
        %1149 = vmatpush1.msra.mxu0 0.0
        %1150 = vmatprep.subr.mxu0 0.0
        %1151 = vmatpush1.msra.mxu0 0.0
        %1152 = vmatprep.subr.mxu0 0.0
        %1153 = vmatpush1.msra.mxu0 0.0
        %1154 = vmatprep.subr.mxu0 0.0
        %1155 = vmatpush1.msra.mxu0 0.0
        %1156 = vmatprep.subr.mxu0 0.0
        %1157 = vmatpush1.msra.mxu0 0.0
        %1158 = vmatprep.subr.mxu0 0.0
        %1159 = vmatpush1.msra.mxu0 0.0
        %1160 = vmatprep.subr.mxu0 0.0
        %1161 = vmatpush1.msra.mxu0 0.0
        %1162 = vmatprep.subr.mxu0 0.0
        %1163 = vmatpush1.msra.mxu0 0.0
        %1164 = vmatprep.subr.mxu0 0.0
        %1165 = vmatpush1.msra.mxu0 0.0
        %1166 = vmatprep.subr.mxu0 0.0
        %1167 = vmatpush1.msra.mxu0 0.0
        %1168 = vmatprep.subr.mxu0 0.0
        %1169 = vmatpush1.msra.mxu0 0.0
        %1170 = vmatprep.subr.mxu0 0.0
        %1171 = vmatpush1.msra.mxu0 0.0
        %1172 = vmatprep.subr.mxu0 0.0
        %1173 = vmatpush1.msra.mxu0 0.0
        %1174 = vmatprep.subr.mxu0 0.0
        %1175 = vmatpush1.msra.mxu0 0.0
        %1176 = vmatprep.subr.mxu0 0.0
        %1177 = vmatpush1.msra.mxu0 0.0
        %1178 = vmatprep.mubr.f32.mxu0 0.0
        %1179 = vmatmul.mubr.f32.gmra.mrb[0].mxu0 %v1109
        %v1180 = vpop.f32.mrb[0].mxu0
        %v1181 = vadd.f32 1e-05, %v1180
        %v1182 = vpop.f32.mrb[0].mxu0
        %1183 = vmatprep.mubr.f32.mxu0 0.0
        %1184 = vmatmul.mubr.f32.gmra.mrb[0].mxu0 %v1112
        %v1185 = vpop.f32.mrb[0].mxu0
        %v1186 = vadd.f32 1e-05, %v1185
        %v1187 = vpop.f32.mrb[0].mxu0
        %1188 = vdwg.mxu0
        %v1189 = vrsqrt.pop %v1181
        %v1190 = vrsqrt.pop %v1186
        %v1191 = vmul.f32 %v1104, %v1189
        %v1192 = vmul.f32 %v1105, %v1190
        %v1193 = vlaneseq
        %v1194 = vshrl.u32 %v1193, 7
        %v1195 = vsub.s32 3, %v1194
        %v1196 = vrot.slane %v524, %v1195
        %v1197 = vmul.f32 %v1191, %v1196
        %v1198 = vmul.f32 %v1192, %v1196
        %v1199 = vlaneseq
        %v1200 = vshrl.u32 %v1199, 7
        %v1201 = vsub.s32 4, %v1200
        %v1202 = vrot.slane %v524, %v1201
        %v1203 = vadd.f32 %v1197, %v1202
        %v1204 = vadd.f32 %v1198, %v1202
        %v1205 = vmul.f32 %v1203, 0.4204482
        %v1206 = vmul.f32 %v1204, 0.4204482
        %v1208 = vsel %vm549, %v773, 0
        %1210 = vmatprep.subr.mxu0 0.0
        %1211 = vmatpush1.msra.mxu0 %v835
        %1212 = vmatprep.subr.mxu0 0.0
        %1213 = vmatpush1.msra.mxu0 %v836
        %1214 = vmatprep.subr.mxu0 0.0
        %1215 = vmatpush1.msra.mxu0 %v837
        %1216 = vmatprep.subr.mxu0 0.0
        %1217 = vmatpush1.msra.mxu0 %v838
        %1218 = vmatprep.subr.mxu0 0.0
        %1219 = vmatpush1.msra.mxu0 0.0
        %1220 = vmatprep.subr.mxu0 0.0
        %1221 = vmatpush1.msra.mxu0 0.0
        %1222 = vmatprep.subr.mxu0 0.0
        %1223 = vmatpush1.msra.mxu0 0.0
        %1224 = vmatprep.subr.mxu0 0.0
        %1225 = vmatpush1.msra.mxu0 0.0
        %1226 = vmatprep.subr.mxu0 0.0
        %1227 = vmatpush1.msra.mxu0 0.0
        %1228 = vmatprep.subr.mxu0 0.0
        %1229 = vmatpush1.msra.mxu0 0.0
        %1230 = vmatprep.subr.mxu0 0.0
        %1231 = vmatpush1.msra.mxu0 0.0
        %1232 = vmatprep.subr.mxu0 0.0
        %1233 = vmatpush1.msra.mxu0 0.0
        %1234 = vmatprep.subr.mxu0 0.0
        %1235 = vmatpush1.msra.mxu0 0.0
        %1236 = vmatprep.subr.mxu0 0.0
        %1237 = vmatpush1.msra.mxu0 0.0
        %1238 = vmatprep.subr.mxu0 0.0
        %1239 = vmatpush1.msra.mxu0 0.0
        %1240 = vmatprep.subr.mxu0 0.0
        %1241 = vmatpush1.msra.mxu0 0.0
        %1242 = vmatprep.subr.mxu0 0.0
        %1243 = vmatpush1.msra.mxu0 0.0
        %1244 = vmatprep.subr.mxu0 0.0
        %1245 = vmatpush1.msra.mxu0 0.0
        %1246 = vmatprep.subr.mxu0 0.0
        %1247 = vmatpush1.msra.mxu0 0.0
        %1248 = vmatprep.subr.mxu0 0.0
        %1249 = vmatpush1.msra.mxu0 0.0
        %1250 = vmatprep.subr.mxu0 0.0
        %1251 = vmatpush1.msra.mxu0 0.0
        %1252 = vmatprep.subr.mxu0 0.0
        %1253 = vmatpush1.msra.mxu0 0.0
        %1254 = vmatprep.subr.mxu0 0.0
        %1255 = vmatpush1.msra.mxu0 0.0
        %1256 = vmatprep.subr.mxu0 0.0
        %1257 = vmatpush1.msra.mxu0 0.0
        %1258 = vmatprep.subr.mxu0 0.0
        %1259 = vmatpush1.msra.mxu0 0.0
        %1260 = vmatprep.subr.mxu0 0.0
        %1261 = vmatpush1.msra.mxu0 0.0
        %1262 = vmatprep.subr.mxu0 0.0
        %1263 = vmatpush1.msra.mxu0 0.0
        %1264 = vmatprep.subr.mxu0 0.0
        %1265 = vmatpush1.msra.mxu0 0.0
        %1266 = vmatprep.subr.mxu0 0.0
        %1267 = vmatpush1.msra.mxu0 0.0
        %1268 = vmatprep.subr.mxu0 0.0
        %1269 = vmatpush1.msra.mxu0 0.0
        %1270 = vmatprep.subr.mxu0 0.0
        %1271 = vmatpush1.msra.mxu0 0.0
        %1272 = vmatprep.subr.mxu0 0.0
        %1273 = vmatpush1.msra.mxu0 0.0
        %1274 = vmatprep.mubr.f32.mxu0 0.0
        %1275 = vmatmul.mubr.f32.gmra.mrb[0].mxu0 %v1208
        %v1276 = vpop.f32.mrb[0].mxu0
        %v1277 = vadd.f32 0.0, %v1276
        %v1278 = vpop.f32.mrb[0].mxu0
        %1279 = vdwg.mxu0
        %v1280 = vsub.f32 %v773, %v1277
        %v1281 = vmul.f32 %v1280, %v1280
        %v1283 = vsel %vm549, %v1281, 0
        %1285 = vmatprep.subr.mxu0 0.0
        %1286 = vmatpush1.msra.mxu0 %v835
        %1287 = vmatprep.subr.mxu0 0.0
        %1288 = vmatpush1.msra.mxu0 %v836
        %1289 = vmatprep.subr.mxu0 0.0
        %1290 = vmatpush1.msra.mxu0 %v837
        %1291 = vmatprep.subr.mxu0 0.0
        %1292 = vmatpush1.msra.mxu0 %v838
        %1293 = vmatprep.subr.mxu0 0.0
        %1294 = vmatpush1.msra.mxu0 0.0
        %1295 = vmatprep.subr.mxu0 0.0
        %1296 = vmatpush1.msra.mxu0 0.0
        %1297 = vmatprep.subr.mxu0 0.0
        %1298 = vmatpush1.msra.mxu0 0.0
        %1299 = vmatprep.subr.mxu0 0.0
        %1300 = vmatpush1.msra.mxu0 0.0
        %1301 = vmatprep.subr.mxu0 0.0
        %1302 = vmatpush1.msra.mxu0 0.0
        %1303 = vmatprep.subr.mxu0 0.0
        %1304 = vmatpush1.msra.mxu0 0.0
        %1305 = vmatprep.subr.mxu0 0.0
        %1306 = vmatpush1.msra.mxu0 0.0
        %1307 = vmatprep.subr.mxu0 0.0
        %1308 = vmatpush1.msra.mxu0 0.0
        %1309 = vmatprep.subr.mxu0 0.0
        %1310 = vmatpush1.msra.mxu0 0.0
        %1311 = vmatprep.subr.mxu0 0.0
        %1312 = vmatpush1.msra.mxu0 0.0
        %1313 = vmatprep.subr.mxu0 0.0
        %1314 = vmatpush1.msra.mxu0 0.0
        %1315 = vmatprep.subr.mxu0 0.0
        %1316 = vmatpush1.msra.mxu0 0.0
        %1317 = vmatprep.subr.mxu0 0.0
        %1318 = vmatpush1.msra.mxu0 0.0
        %1319 = vmatprep.subr.mxu0 0.0
        %1320 = vmatpush1.msra.mxu0 0.0
        %1321 = vmatprep.subr.mxu0 0.0
        %1322 = vmatpush1.msra.mxu0 0.0
        %1323 = vmatprep.subr.mxu0 0.0
        %1324 = vmatpush1.msra.mxu0 0.0
        %1325 = vmatprep.subr.mxu0 0.0
        %1326 = vmatpush1.msra.mxu0 0.0
        %1327 = vmatprep.subr.mxu0 0.0
        %1328 = vmatpush1.msra.mxu0 0.0
        %1329 = vmatprep.subr.mxu0 0.0
        %1330 = vmatpush1.msra.mxu0 0.0
        %1331 = vmatprep.subr.mxu0 0.0
        %1332 = vmatpush1.msra.mxu0 0.0
        %1333 = vmatprep.subr.mxu0 0.0
        %1334 = vmatpush1.msra.mxu0 0.0
        %1335 = vmatprep.subr.mxu0 0.0
        %1336 = vmatpush1.msra.mxu0 0.0
        %1337 = vmatprep.subr.mxu0 0.0
        %1338 = vmatpush1.msra.mxu0 0.0
        %1339 = vmatprep.subr.mxu0 0.0
        %1340 = vmatpush1.msra.mxu0 0.0
        %1341 = vmatprep.subr.mxu0 0.0
        %1342 = vmatpush1.msra.mxu0 0.0
        %1343 = vmatprep.subr.mxu0 0.0
        %1344 = vmatpush1.msra.mxu0 0.0
        %1345 = vmatprep.subr.mxu0 0.0
        %1346 = vmatpush1.msra.mxu0 0.0
        %1347 = vmatprep.subr.mxu0 0.0
        %1348 = vmatpush1.msra.mxu0 0.0
        %1349 = vmatprep.mubr.f32.mxu0 0.0
        %1350 = vmatmul.mubr.f32.gmra.mrb[0].mxu0 %v1283
        %v1351 = vpop.f32.mrb[0].mxu0
        %v1352 = vadd.f32 1e-05, %v1351
        %v1353 = vpop.f32.mrb[0].mxu0
        %1354 = vdwg.mxu0
        %v1355 = vrsqrt.pop %v1352
        %v1356 = vmul.f32 %v1280, %v1355
        %v1357 = vlaneseq
        %v1358 = vshrl.u32 %v1357, 7
        %v1359 = vsub.s32 5, %v1358
        %v1360 = vrot.slane %v524, %v1359
        %v1361 = vmul.f32 %v1356, %v1360
        %v1362 = vlaneseq
        %v1363 = vshrl.u32 %v1362, 7
        %v1364 = vsub.s32 6, %v1363
        %v1365 = vrot.slane %v524, %v1364
        %v1366 = vadd.f32 %v1361, %v1365
        %v1367 = vmul.f32 %v1366, 0.4204482
        %v1368 = vpack.c.bf16 %v1021, %v1021
        %v1369 = vpack.c.bf16 %v1022, %v1022
        %v1372 = vunpack.c.l.s4 1966171168
        %v1373 = vunpack.c.0.s8 %v1372
        %v1374 = vlaneseq
        %v1375 = vshrl.u32 %v1374, 7
        %v1376 = vsub.s32 %v1373, %v1375
        %v1377 = vrot.slane %v1367, %v1376
        %v1378 = vcombine.high %v1377, %v1377
        %v1380 = vunpack.c.l.s4 1966171168
        %v1381 = vunpack.c.0.s8 %v1380
        %v1382 = vlaneseq
        %v1383 = vshrl.u32 %v1382, 7
        %v1384 = vsub.s32 %v1381, %v1383
        %v1385 = vrot.slane %v1377, %v1384
        %v1387 = vunpack.c.l.s4 1966171168
        %v1388 = vunpack.c.0.s8 %v1387
        %v1389 = vlaneseq
        %v1390 = vshrl.u32 %v1389, 7
        %v1391 = vsub.s32 %v1388, %v1390
        %v1392 = vrot.slane %v1378, %v1391
        %v1395 = vpack.c.bf16 %v1385, %v1205
        %v1396 = vpack.c.bf16 %v1392, %v1206
        %v1399 = vunpack.c.l.s4 1966171168
        %v1400 = vunpack.c.0.s8 %v1399
        %v1401 = vlaneseq
        %v1402 = vshrl.u32 %v1401, 7
        %v1403 = vsub.s32 %v1400, %v1402
        %v1404 = vrot.slane %v830, %v1403
        %v1405 = vcombine.high %v1404, %v1404
        %v1407 = vunpack.c.l.s4 1966171168
        %v1408 = vunpack.c.0.s8 %v1407
        %v1409 = vlaneseq
        %v1410 = vshrl.u32 %v1409, 7
        %v1411 = vsub.s32 %v1408, %v1410
        %v1412 = vrot.slane %v1404, %v1411
        %v1414 = vunpack.c.l.s4 1966171168
        %v1415 = vunpack.c.0.s8 %v1414
        %v1416 = vlaneseq
        %v1417 = vshrl.u32 %v1416, 7
        %v1418 = vsub.s32 %v1415, %v1417
        %v1419 = vrot.slane %v1405, %v1418
        %v1422 = vpack.c.bf16 %v1412, %v704
        %v1423 = vpack.c.bf16 %v1419, %v707
        %v1424 = vld [vmem:[%s440] sm:$0x1]
        %v1425 = vld [vmem:[%s440 + $0x1] sm:$0x1]
        %v1426 = vld [vmem:[%s519] sm:$0xff]
        %v1427 = vld [vmem:[%s519 + $0x8] sm:$0xff]
        %vm1428 = vcmp.gt.f32.partialorder %v1426, 0.0
        %vm1429 = vcmp.gt.f32.partialorder %v1427, 0.0
        %vm1430 = vcmp.gt.f32.partialorder %v1424, 0.0
        %vm1431 = vcmp.gt.f32.partialorder %v1425, 0.0
        %v1432 = vsel %vm1428, 1, 0
        %v1433 = vsel %vm1429, 1, 0
        %1434 = vset.pattern.permute.xlu0 0
        %1435 = vperm.xlu0 %1434, %v1432
        %v1436 = vpop.permute.xlu0 %1435
        %1437 = vset.pattern.permute.xlu0 0
        %1438 = vperm.xlu0 %1437, %v1433
        %v1439 = vpop.permute.xlu0 %1438
        %vm1440 = vcmp.eq.s32.totalorder %v1436, 1
        %vm1441 = vcmp.eq.s32.totalorder %v1439, 1
        %v1442 = vsel %vm1430, 1, 0
        %v1443 = vsel %vm1431, 1, 0
        %v1444 = vlaneseq
        %v1445 = vshrl.u32 %v1444, 7
        %v1446 = vsub.s32 0, %v1445
        %v1447 = vrot.slane %v1442, %v1446
        %v1448 = vlaneseq
        %v1449 = vshrl.u32 %v1448, 7
        %v1450 = vsub.s32 0, %v1449
        %v1451 = vrot.slane %v1443, %v1450
        %vm1452 = vcmp.eq.s32.totalorder %v1447, 1
        %vm1453 = vcmp.eq.s32.totalorder %v1451, 1
        %vm1454 = vmand %vm1440, %vm1452
        %vm1455 = vmand %vm1441, %vm1453
        %vm1456 = vcmask 31744
        %v1458 = vsel %vm1456, %v1368, 0
        %v1461 = vsel %vm1456, %v1395, 0
        %1463 = vmatprep.subr.bf16.mxu0 0
        %1464 = vmatpush1.bf16.xpose.msra.mxu0 %v1461
        %1465 = vmatprep.subr.bf16.mxu0 0
        %1466 = vmatpush1.bf16.xpose.msra.mxu0 0
        %1467 = vmatprep.subr.bf16.mxu0 0
        %1468 = vmatpush1.bf16.xpose.msra.mxu0 0
        %1469 = vmatprep.subr.bf16.mxu0 0
        %1470 = vmatpush1.bf16.xpose.msra.mxu0 0
        %1471 = vmatprep.subr.bf16.mxu0 0
        %1472 = vmatpush1.bf16.xpose.msra.mxu0 0
        %1473 = vmatprep.subr.bf16.mxu0 0
        %1474 = vmatpush1.bf16.xpose.msra.mxu0 0
        %1475 = vmatprep.subr.bf16.mxu0 0
        %1476 = vmatpush1.bf16.xpose.msra.mxu0 0
        %1477 = vmatprep.subr.bf16.mxu0 0
        %1478 = vmatpush1.bf16.xpose.msra.mxu0 0
        %1479 = vmatprep.subr.bf16.mxu0 0
        %1480 = vmatpush1.bf16.xpose.msra.mxu0 0
        %1481 = vmatprep.subr.bf16.mxu0 0
        %1482 = vmatpush1.bf16.xpose.msra.mxu0 0
        %1483 = vmatprep.subr.bf16.mxu0 0
        %1484 = vmatpush1.bf16.xpose.msra.mxu0 0
        %1485 = vmatprep.subr.bf16.mxu0 0
        %1486 = vmatpush1.bf16.xpose.msra.mxu0 0
        %1487 = vmatprep.subr.bf16.mxu0 0
        %1488 = vmatpush1.bf16.xpose.msra.mxu0 0
        %1489 = vmatprep.subr.bf16.mxu0 0
        %1490 = vmatpush1.bf16.xpose.msra.mxu0 0
        %1491 = vmatprep.subr.bf16.mxu0 0
        %1492 = vmatpush1.bf16.xpose.msra.mxu0 0
        %1493 = vmatprep.subr.bf16.mxu0 0
        %1494 = vmatpush1.bf16.xpose.msra.mxu0 0
        %1495 = vmatprep.mubr.bf16.mxu0 0
        %1496 = vmatmul.mubr.bf16.gmra.mrb[0].mxu0 %v1458
        %v1497 = vpop.f32.mrb[0].mxu0
        %v1498 = vadd.f32 0.0, %v1497
        %v1499 = vpop.f32.mrb[0].mxu0
        %v1500 = vpop.f32.mrb[0].mxu0
        %v1501 = vpop.f32.mrb[0].mxu0
        %1502 = vdwg.mxu0
        %v1504 = vsel %vm1456, %v1369, 0
        %v1507 = vsel %vm1456, %v1396, 0
        %1509 = vmatprep.subr.bf16.mxu0 0
        %1510 = vmatpush1.bf16.xpose.msra.mxu0 %v1507
        %1511 = vmatprep.subr.bf16.mxu0 0
        %1512 = vmatpush1.bf16.xpose.msra.mxu0 0
        %1513 = vmatprep.subr.bf16.mxu0 0
        %1514 = vmatpush1.bf16.xpose.msra.mxu0 0
        %1515 = vmatprep.subr.bf16.mxu0 0
        %1516 = vmatpush1.bf16.xpose.msra.mxu0 0
        %1517 = vmatprep.subr.bf16.mxu0 0
        %1518 = vmatpush1.bf16.xpose.msra.mxu0 0
        %1519 = vmatprep.subr.bf16.mxu0 0
        %1520 = vmatpush1.bf16.xpose.msra.mxu0 0
        %1521 = vmatprep.subr.bf16.mxu0 0
        %1522 = vmatpush1.bf16.xpose.msra.mxu0 0
        %1523 = vmatprep.subr.bf16.mxu0 0
        %1524 = vmatpush1.bf16.xpose.msra.mxu0 0
        %1525 = vmatprep.subr.bf16.mxu0 0
        %1526 = vmatpush1.bf16.xpose.msra.mxu0 0
        %1527 = vmatprep.subr.bf16.mxu0 0
        %1528 = vmatpush1.bf16.xpose.msra.mxu0 0
        %1529 = vmatprep.subr.bf16.mxu0 0
        %1530 = vmatpush1.bf16.xpose.msra.mxu0 0
        %1531 = vmatprep.subr.bf16.mxu0 0
        %1532 = vmatpush1.bf16.xpose.msra.mxu0 0
        %1533 = vmatprep.subr.bf16.mxu0 0
        %1534 = vmatpush1.bf16.xpose.msra.mxu0 0
        %1535 = vmatprep.subr.bf16.mxu0 0
        %1536 = vmatpush1.bf16.xpose.msra.mxu0 0
        %1537 = vmatprep.subr.bf16.mxu0 0
        %1538 = vmatpush1.bf16.xpose.msra.mxu0 0
        %1539 = vmatprep.subr.bf16.mxu0 0
        %1540 = vmatpush1.bf16.xpose.msra.mxu0 0
        %1541 = vmatprep.mubr.bf16.mxu0 0
        %1542 = vmatmul.mubr.bf16.gmra.mrb[0].mxu0 %v1504
        %v1543 = vpop.f32.mrb[0].mxu0
        %v1544 = vadd.f32 0.0, %v1543
        %v1545 = vpop.f32.mrb[0].mxu0
        %v1546 = vpop.f32.mrb[0].mxu0
        %v1547 = vpop.f32.mrb[0].mxu0
        %1548 = vdwg.mxu0
        %v1549 = vsel %vm1454, %v1498, -1e+30
        %v1550 = vsel %vm1455, %v1544, -1e+30
        %vm1551 = vcmask 72704
        %v1552 = vsel %vm1551, %v1549, -inf
        %1553 = vmax.xlane.f32.xlu0 %v1552
        %v1554 = vpop.xlane.xlu0 %1553
        %v1555 = vsel %vm1551, %v1550, -inf
        %1556 = vmax.xlane.f32.xlu0 %v1555
        %v1557 = vpop.xlane.xlu0 %1556
        %v1558 = vsub.f32 %v1549, %v1554
        %v1559 = vsub.f32 %v1550, %v1557
        %v1560 = vmul.f32 %v1558, 1.442695
        %v1561 = vpow.pop %v1560
        %v1562 = vmul.f32 %v1559, 1.442695
        %v1563 = vpow.pop %v1562
        %v1564 = vsel %vm1551, %v1561, 0.0
        %1565 = vadd.xlane.f32.xlu0 %v1564
        %v1566 = vpop.xlane.xlu0 %1565
        %v1567 = vsel %vm1551, %v1563, 0.0
        %1568 = vadd.xlane.f32.xlu0 %v1567
        %v1569 = vpop.xlane.xlu0 %1568
        %v1570 = vrcp.pop %v1566
        %v1571 = vrcp.pop %v1569
        %v1572 = vmul.f32 %v1561, %v1570
        %v1573 = vmul.f32 %v1563, %v1571
        %v1574 = vpack.c.bf16 %v1572, %v1572
        %v1575 = vpack.c.bf16 %v1573, %v1573
        %v1577 = vsel %vm1551, %v1574, 0
        %vm1579 = vcmask 1043456
        %vm1580 = vcmask 1044480
        %v1581 = vsel %vm1579, 4294967295, 65535
        %v1582 = vsel %vm1580, %v1581, 0
        %v1584 = vand.u32 %v1422, %v1582
        %1586 = vmatprep.subr.bf16.mxu0 0
        %1587 = vmatpush1.bf16.msra.mxu0 %v1584
        %1588 = vmatprep.subr.bf16.mxu0 0
        %1589 = vmatpush1.bf16.msra.mxu0 0
        %1590 = vmatprep.subr.bf16.mxu0 0
        %1591 = vmatpush1.bf16.msra.mxu0 0
        %1592 = vmatprep.subr.bf16.mxu0 0
        %1593 = vmatpush1.bf16.msra.mxu0 0
        %1594 = vmatprep.subr.bf16.mxu0 0
        %1595 = vmatpush1.bf16.msra.mxu0 0
        %1596 = vmatprep.subr.bf16.mxu0 0
        %1597 = vmatpush1.bf16.msra.mxu0 0
        %1598 = vmatprep.subr.bf16.mxu0 0
        %1599 = vmatpush1.bf16.msra.mxu0 0
        %1600 = vmatprep.subr.bf16.mxu0 0
        %1601 = vmatpush1.bf16.msra.mxu0 0
        %1602 = vmatprep.subr.bf16.mxu0 0
        %1603 = vmatpush1.bf16.msra.mxu0 0
        %1604 = vmatprep.subr.bf16.mxu0 0
        %1605 = vmatpush1.bf16.msra.mxu0 0
        %1606 = vmatprep.subr.bf16.mxu0 0
        %1607 = vmatpush1.bf16.msra.mxu0 0
        %1608 = vmatprep.subr.bf16.mxu0 0
        %1609 = vmatpush1.bf16.msra.mxu0 0
        %1610 = vmatprep.subr.bf16.mxu0 0
        %1611 = vmatpush1.bf16.msra.mxu0 0
        %1612 = vmatprep.subr.bf16.mxu0 0
        %1613 = vmatpush1.bf16.msra.mxu0 0
        %1614 = vmatprep.subr.bf16.mxu0 0
        %1615 = vmatpush1.bf16.msra.mxu0 0
        %1616 = vmatprep.subr.bf16.mxu0 0
        %1617 = vmatpush1.bf16.msra.mxu0 0
        %1618 = vmatprep.mubr.bf16.mxu0 0
        %1619 = vmatmul.mubr.bf16.gmra.mrb[0].mxu0 %v1577
        %v1620 = vpop.f32.mrb[0].mxu0
        %v1621 = vadd.f32 0.0, %v1620
        %v1622 = vpop.f32.mrb[0].mxu0
        %v1623 = vpop.f32.mrb[0].mxu0
        %v1624 = vpop.f32.mrb[0].mxu0
        %1625 = vdwg.mxu0
        %v1627 = vsel %vm1551, %v1575, 0
        %v1630 = vand.u32 %v1423, %v1582
        %1632 = vmatprep.subr.bf16.mxu0 0
        %1633 = vmatpush1.bf16.msra.mxu0 %v1630
        %1634 = vmatprep.subr.bf16.mxu0 0
        %1635 = vmatpush1.bf16.msra.mxu0 0
        %1636 = vmatprep.subr.bf16.mxu0 0
        %1637 = vmatpush1.bf16.msra.mxu0 0
        %1638 = vmatprep.subr.bf16.mxu0 0
        %1639 = vmatpush1.bf16.msra.mxu0 0
        %1640 = vmatprep.subr.bf16.mxu0 0
        %1641 = vmatpush1.bf16.msra.mxu0 0
        %1642 = vmatprep.subr.bf16.mxu0 0
        %1643 = vmatpush1.bf16.msra.mxu0 0
        %1644 = vmatprep.subr.bf16.mxu0 0
        %1645 = vmatpush1.bf16.msra.mxu0 0
        %1646 = vmatprep.subr.bf16.mxu0 0
        %1647 = vmatpush1.bf16.msra.mxu0 0
        %1648 = vmatprep.subr.bf16.mxu0 0
        %1649 = vmatpush1.bf16.msra.mxu0 0
        %1650 = vmatprep.subr.bf16.mxu0 0
        %1651 = vmatpush1.bf16.msra.mxu0 0
        %1652 = vmatprep.subr.bf16.mxu0 0
        %1653 = vmatpush1.bf16.msra.mxu0 0
        %1654 = vmatprep.subr.bf16.mxu0 0
        %1655 = vmatpush1.bf16.msra.mxu0 0
        %1656 = vmatprep.subr.bf16.mxu0 0
        %1657 = vmatpush1.bf16.msra.mxu0 0
        %1658 = vmatprep.subr.bf16.mxu0 0
        %1659 = vmatpush1.bf16.msra.mxu0 0
        %1660 = vmatprep.subr.bf16.mxu0 0
        %1661 = vmatpush1.bf16.msra.mxu0 0
        %1662 = vmatprep.subr.bf16.mxu0 0
        %1663 = vmatpush1.bf16.msra.mxu0 0
        %1664 = vmatprep.mubr.bf16.mxu0 0
        %1665 = vmatmul.mubr.bf16.gmra.mrb[0].mxu0 %v1627
        %v1666 = vpop.f32.mrb[0].mxu0
        %v1667 = vadd.f32 0.0, %v1666
        %v1668 = vpop.f32.mrb[0].mxu0
        %v1669 = vpop.f32.mrb[0].mxu0
        %v1670 = vpop.f32.mrb[0].mxu0
        %1671 = vdwg.mxu0
        %1673 = vrot.lane.b32.xlu0 %v1368, 124
        %v1674 = vpop.permute.xlu0 %1673
        %1676 = vrot.lane.b32.xlu0 %v1395, 124
        %v1677 = vpop.permute.xlu0 %1676
        %v1679 = vsel %vm1456, %v1674, 0
        %v1682 = vsel %vm1456, %v1677, 0
        %1684 = vmatprep.subr.bf16.mxu0 0
        %1685 = vmatpush1.bf16.xpose.msra.mxu0 %v1682
        %1686 = vmatprep.subr.bf16.mxu0 0
        %1687 = vmatpush1.bf16.xpose.msra.mxu0 0
        %1688 = vmatprep.subr.bf16.mxu0 0
        %1689 = vmatpush1.bf16.xpose.msra.mxu0 0
        %1690 = vmatprep.subr.bf16.mxu0 0
        %1691 = vmatpush1.bf16.xpose.msra.mxu0 0
        %1692 = vmatprep.subr.bf16.mxu0 0
        %1693 = vmatpush1.bf16.xpose.msra.mxu0 0
        %1694 = vmatprep.subr.bf16.mxu0 0
        %1695 = vmatpush1.bf16.xpose.msra.mxu0 0
        %1696 = vmatprep.subr.bf16.mxu0 0
        %1697 = vmatpush1.bf16.xpose.msra.mxu0 0
        %1698 = vmatprep.subr.bf16.mxu0 0
        %1699 = vmatpush1.bf16.xpose.msra.mxu0 0
        %1700 = vmatprep.subr.bf16.mxu0 0
        %1701 = vmatpush1.bf16.xpose.msra.mxu0 0
        %1702 = vmatprep.subr.bf16.mxu0 0
        %1703 = vmatpush1.bf16.xpose.msra.mxu0 0
        %1704 = vmatprep.subr.bf16.mxu0 0
        %1705 = vmatpush1.bf16.xpose.msra.mxu0 0
        %1706 = vmatprep.subr.bf16.mxu0 0
        %1707 = vmatpush1.bf16.xpose.msra.mxu0 0
        %1708 = vmatprep.subr.bf16.mxu0 0
        %1709 = vmatpush1.bf16.xpose.msra.mxu0 0
        %1710 = vmatprep.subr.bf16.mxu0 0
        %1711 = vmatpush1.bf16.xpose.msra.mxu0 0
        %1712 = vmatprep.subr.bf16.mxu0 0
        %1713 = vmatpush1.bf16.xpose.msra.mxu0 0
        %1714 = vmatprep.subr.bf16.mxu0 0
        %1715 = vmatpush1.bf16.xpose.msra.mxu0 0
        %1716 = vmatprep.mubr.bf16.mxu0 0
        %1717 = vmatmul.mubr.bf16.gmra.mrb[0].mxu0 %v1679
        %v1718 = vpop.f32.mrb[0].mxu0
        %v1719 = vadd.f32 0.0, %v1718
        %v1720 = vpop.f32.mrb[0].mxu0
        %v1721 = vpop.f32.mrb[0].mxu0
        %v1722 = vpop.f32.mrb[0].mxu0
        %1723 = vdwg.mxu0
        %1725 = vrot.lane.b32.xlu0 %v1369, 124
        %v1726 = vpop.permute.xlu0 %1725
        %1728 = vrot.lane.b32.xlu0 %v1396, 124
        %v1729 = vpop.permute.xlu0 %1728
        %v1731 = vsel %vm1456, %v1726, 0
        %v1734 = vsel %vm1456, %v1729, 0
        %1736 = vmatprep.subr.bf16.mxu0 0
        %1737 = vmatpush1.bf16.xpose.msra.mxu0 %v1734
        %1738 = vmatprep.subr.bf16.mxu0 0
        %1739 = vmatpush1.bf16.xpose.msra.mxu0 0
        %1740 = vmatprep.subr.bf16.mxu0 0
        %1741 = vmatpush1.bf16.xpose.msra.mxu0 0
        %1742 = vmatprep.subr.bf16.mxu0 0
        %1743 = vmatpush1.bf16.xpose.msra.mxu0 0
        %1744 = vmatprep.subr.bf16.mxu0 0
        %1745 = vmatpush1.bf16.xpose.msra.mxu0 0
        %1746 = vmatprep.subr.bf16.mxu0 0
        %1747 = vmatpush1.bf16.xpose.msra.mxu0 0
        %1748 = vmatprep.subr.bf16.mxu0 0
        %1749 = vmatpush1.bf16.xpose.msra.mxu0 0
        %1750 = vmatprep.subr.bf16.mxu0 0
        %1751 = vmatpush1.bf16.xpose.msra.mxu0 0
        %1752 = vmatprep.subr.bf16.mxu0 0
        %1753 = vmatpush1.bf16.xpose.msra.mxu0 0
        %1754 = vmatprep.subr.bf16.mxu0 0
        %1755 = vmatpush1.bf16.xpose.msra.mxu0 0
        %1756 = vmatprep.subr.bf16.mxu0 0
        %1757 = vmatpush1.bf16.xpose.msra.mxu0 0
        %1758 = vmatprep.subr.bf16.mxu0 0
        %1759 = vmatpush1.bf16.xpose.msra.mxu0 0
        %1760 = vmatprep.subr.bf16.mxu0 0
        %1761 = vmatpush1.bf16.xpose.msra.mxu0 0
        %1762 = vmatprep.subr.bf16.mxu0 0
        %1763 = vmatpush1.bf16.xpose.msra.mxu0 0
        %1764 = vmatprep.subr.bf16.mxu0 0
        %1765 = vmatpush1.bf16.xpose.msra.mxu0 0
        %1766 = vmatprep.subr.bf16.mxu0 0
        %1767 = vmatpush1.bf16.xpose.msra.mxu0 0
        %1768 = vmatprep.mubr.bf16.mxu0 0
        %1769 = vmatmul.mubr.bf16.gmra.mrb[0].mxu0 %v1731
        %v1770 = vpop.f32.mrb[0].mxu0
        %v1771 = vadd.f32 0.0, %v1770
        %v1772 = vpop.f32.mrb[0].mxu0
        %v1773 = vpop.f32.mrb[0].mxu0
        %v1774 = vpop.f32.mrb[0].mxu0
        %1775 = vdwg.mxu0
        %v1776 = vsel %vm1454, %v1719, -1e+30
        %v1777 = vsel %vm1455, %v1771, -1e+30
        %v1778 = vsel %vm1551, %v1776, -inf
        %1779 = vmax.xlane.f32.xlu0 %v1778
        %v1780 = vpop.xlane.xlu0 %1779
        %v1781 = vsel %vm1551, %v1777, -inf
        %1782 = vmax.xlane.f32.xlu0 %v1781
        %v1783 = vpop.xlane.xlu0 %1782
        %v1784 = vsub.f32 %v1776, %v1780
        %v1785 = vsub.f32 %v1777, %v1783
        %v1786 = vmul.f32 %v1784, 1.442695
        %v1787 = vpow.pop %v1786
        %v1788 = vmul.f32 %v1785, 1.442695
        %v1789 = vpow.pop %v1788
        %v1790 = vsel %vm1551, %v1787, 0.0
        %1791 = vadd.xlane.f32.xlu0 %v1790
        %v1792 = vpop.xlane.xlu0 %1791
        %v1793 = vsel %vm1551, %v1789, 0.0
        %1794 = vadd.xlane.f32.xlu0 %v1793
        %v1795 = vpop.xlane.xlu0 %1794
        %v1796 = vrcp.pop %v1792
        %v1797 = vrcp.pop %v1795
        %v1798 = vmul.f32 %v1787, %v1796
        %v1799 = vmul.f32 %v1789, %v1797
        %v1800 = vpack.c.bf16 %v1798, %v1798
        %v1801 = vpack.c.bf16 %v1799, %v1799
        %1803 = vrot.lane.b32.xlu0 %v1422, 124
        %v1804 = vpop.permute.xlu0 %1803
        %v1806 = vsel %vm1551, %v1800, 0
        %v1809 = vand.u32 %v1804, %v1582
        %1811 = vmatprep.subr.bf16.mxu0 0
        %1812 = vmatpush1.bf16.msra.mxu0 %v1809
        %1813 = vmatprep.subr.bf16.mxu0 0
        %1814 = vmatpush1.bf16.msra.mxu0 0
        %1815 = vmatprep.subr.bf16.mxu0 0
        %1816 = vmatpush1.bf16.msra.mxu0 0
        %1817 = vmatprep.subr.bf16.mxu0 0
        %1818 = vmatpush1.bf16.msra.mxu0 0
        %1819 = vmatprep.subr.bf16.mxu0 0
        %1820 = vmatpush1.bf16.msra.mxu0 0
        %1821 = vmatprep.subr.bf16.mxu0 0
        %1822 = vmatpush1.bf16.msra.mxu0 0
        %1823 = vmatprep.subr.bf16.mxu0 0
        %1824 = vmatpush1.bf16.msra.mxu0 0
        %1825 = vmatprep.subr.bf16.mxu0 0
        %1826 = vmatpush1.bf16.msra.mxu0 0
        %1827 = vmatprep.subr.bf16.mxu0 0
        %1828 = vmatpush1.bf16.msra.mxu0 0
        %1829 = vmatprep.subr.bf16.mxu0 0
        %1830 = vmatpush1.bf16.msra.mxu0 0
        %1831 = vmatprep.subr.bf16.mxu0 0
        %1832 = vmatpush1.bf16.msra.mxu0 0
        %1833 = vmatprep.subr.bf16.mxu0 0
        %1834 = vmatpush1.bf16.msra.mxu0 0
        %1835 = vmatprep.subr.bf16.mxu0 0
        %1836 = vmatpush1.bf16.msra.mxu0 0
        %1837 = vmatprep.subr.bf16.mxu0 0
        %1838 = vmatpush1.bf16.msra.mxu0 0
        %1839 = vmatprep.subr.bf16.mxu0 0
        %1840 = vmatpush1.bf16.msra.mxu0 0
        %1841 = vmatprep.subr.bf16.mxu0 0
        %1842 = vmatpush1.bf16.msra.mxu0 0
        %1843 = vmatprep.mubr.bf16.mxu0 0
        %1844 = vmatmul.mubr.bf16.gmra.mrb[0].mxu0 %v1806
        %v1845 = vpop.f32.mrb[0].mxu0
        %v1846 = vadd.f32 0.0, %v1845
        %v1847 = vpop.f32.mrb[0].mxu0
        %v1848 = vpop.f32.mrb[0].mxu0
        %v1849 = vpop.f32.mrb[0].mxu0
        %1850 = vdwg.mxu0
        %1852 = vrot.lane.b32.xlu0 %v1423, 124
        %v1853 = vpop.permute.xlu0 %1852
        %v1855 = vsel %vm1551, %v1801, 0
        %v1858 = vand.u32 %v1853, %v1582
        %1860 = vmatprep.subr.bf16.mxu0 0
        %1861 = vmatpush1.bf16.msra.mxu0 %v1858
        %1862 = vmatprep.subr.bf16.mxu0 0
        %1863 = vmatpush1.bf16.msra.mxu0 0
        %1864 = vmatprep.subr.bf16.mxu0 0
        %1865 = vmatpush1.bf16.msra.mxu0 0
        %1866 = vmatprep.subr.bf16.mxu0 0
        %1867 = vmatpush1.bf16.msra.mxu0 0
        %1868 = vmatprep.subr.bf16.mxu0 0
        %1869 = vmatpush1.bf16.msra.mxu0 0
        %1870 = vmatprep.subr.bf16.mxu0 0
        %1871 = vmatpush1.bf16.msra.mxu0 0
        %1872 = vmatprep.subr.bf16.mxu0 0
        %1873 = vmatpush1.bf16.msra.mxu0 0
        %1874 = vmatprep.subr.bf16.mxu0 0
        %1875 = vmatpush1.bf16.msra.mxu0 0
        %1876 = vmatprep.subr.bf16.mxu0 0
        %1877 = vmatpush1.bf16.msra.mxu0 0
        %1878 = vmatprep.subr.bf16.mxu0 0
        %1879 = vmatpush1.bf16.msra.mxu0 0
        %1880 = vmatprep.subr.bf16.mxu0 0
        %1881 = vmatpush1.bf16.msra.mxu0 0
        %1882 = vmatprep.subr.bf16.mxu0 0
        %1883 = vmatpush1.bf16.msra.mxu0 0
        %1884 = vmatprep.subr.bf16.mxu0 0
        %1885 = vmatpush1.bf16.msra.mxu0 0
        %1886 = vmatprep.subr.bf16.mxu0 0
        %1887 = vmatpush1.bf16.msra.mxu0 0
        %1888 = vmatprep.subr.bf16.mxu0 0
        %1889 = vmatpush1.bf16.msra.mxu0 0
        %1890 = vmatprep.subr.bf16.mxu0 0
        %1891 = vmatpush1.bf16.msra.mxu0 0
        %1892 = vmatprep.mubr.bf16.mxu0 0
        %1893 = vmatmul.mubr.bf16.gmra.mrb[0].mxu0 %v1855
        %v1894 = vpop.f32.mrb[0].mxu0
        %v1895 = vadd.f32 0.0, %v1894
        %v1896 = vpop.f32.mrb[0].mxu0
        %v1897 = vpop.f32.mrb[0].mxu0
        %v1898 = vpop.f32.mrb[0].mxu0
        %1899 = vdwg.mxu0
        %1900 = vrot.lane.b32.xlu0 %v1368, 120
        %v1901 = vpop.permute.xlu0 %1900
        %1902 = vrot.lane.b32.xlu0 %v1395, 120
        %v1903 = vpop.permute.xlu0 %1902
        %v1905 = vsel %vm1456, %v1901, 0
        %v1908 = vsel %vm1456, %v1903, 0
        %1910 = vmatprep.subr.bf16.mxu0 0
        %1911 = vmatpush1.bf16.xpose.msra.mxu0 %v1908
        %1912 = vmatprep.subr.bf16.mxu0 0
        %1913 = vmatpush1.bf16.xpose.msra.mxu0 0
        %1914 = vmatprep.subr.bf16.mxu0 0
        %1915 = vmatpush1.bf16.xpose.msra.mxu0 0
        %1916 = vmatprep.subr.bf16.mxu0 0
        %1917 = vmatpush1.bf16.xpose.msra.mxu0 0
        %1918 = vmatprep.subr.bf16.mxu0 0
        %1919 = vmatpush1.bf16.xpose.msra.mxu0 0
        %1920 = vmatprep.subr.bf16.mxu0 0
        %1921 = vmatpush1.bf16.xpose.msra.mxu0 0
        %1922 = vmatprep.subr.bf16.mxu0 0
        %1923 = vmatpush1.bf16.xpose.msra.mxu0 0
        %1924 = vmatprep.subr.bf16.mxu0 0
        %1925 = vmatpush1.bf16.xpose.msra.mxu0 0
        %1926 = vmatprep.subr.bf16.mxu0 0
        %1927 = vmatpush1.bf16.xpose.msra.mxu0 0
        %1928 = vmatprep.subr.bf16.mxu0 0
        %1929 = vmatpush1.bf16.xpose.msra.mxu0 0
        %1930 = vmatprep.subr.bf16.mxu0 0
        %1931 = vmatpush1.bf16.xpose.msra.mxu0 0
        %1932 = vmatprep.subr.bf16.mxu0 0
        %1933 = vmatpush1.bf16.xpose.msra.mxu0 0
        %1934 = vmatprep.subr.bf16.mxu0 0
        %1935 = vmatpush1.bf16.xpose.msra.mxu0 0
        %1936 = vmatprep.subr.bf16.mxu0 0
        %1937 = vmatpush1.bf16.xpose.msra.mxu0 0
        %1938 = vmatprep.subr.bf16.mxu0 0
        %1939 = vmatpush1.bf16.xpose.msra.mxu0 0
        %1940 = vmatprep.subr.bf16.mxu0 0
        %1941 = vmatpush1.bf16.xpose.msra.mxu0 0
        %1942 = vmatprep.mubr.bf16.mxu0 0
        %1943 = vmatmul.mubr.bf16.gmra.mrb[0].mxu0 %v1905
        %v1944 = vpop.f32.mrb[0].mxu0
        %v1945 = vadd.f32 0.0, %v1944
        %v1946 = vpop.f32.mrb[0].mxu0
        %v1947 = vpop.f32.mrb[0].mxu0
        %v1948 = vpop.f32.mrb[0].mxu0
        %1949 = vdwg.mxu0
        %1950 = vrot.lane.b32.xlu0 %v1369, 120
        %v1951 = vpop.permute.xlu0 %1950
        %1952 = vrot.lane.b32.xlu0 %v1396, 120
        %v1953 = vpop.permute.xlu0 %1952
        %v1955 = vsel %vm1456, %v1951, 0
        %v1958 = vsel %vm1456, %v1953, 0
        %1960 = vmatprep.subr.bf16.mxu0 0
        %1961 = vmatpush1.bf16.xpose.msra.mxu0 %v1958
        %1962 = vmatprep.subr.bf16.mxu0 0
        %1963 = vmatpush1.bf16.xpose.msra.mxu0 0
        %1964 = vmatprep.subr.bf16.mxu0 0
        %1965 = vmatpush1.bf16.xpose.msra.mxu0 0
        %1966 = vmatprep.subr.bf16.mxu0 0
        %1967 = vmatpush1.bf16.xpose.msra.mxu0 0
        %1968 = vmatprep.subr.bf16.mxu0 0
        %1969 = vmatpush1.bf16.xpose.msra.mxu0 0
        %1970 = vmatprep.subr.bf16.mxu0 0
        %1971 = vmatpush1.bf16.xpose.msra.mxu0 0
        %1972 = vmatprep.subr.bf16.mxu0 0
        %1973 = vmatpush1.bf16.xpose.msra.mxu0 0
        %1974 = vmatprep.subr.bf16.mxu0 0
        %1975 = vmatpush1.bf16.xpose.msra.mxu0 0
        %1976 = vmatprep.subr.bf16.mxu0 0
        %1977 = vmatpush1.bf16.xpose.msra.mxu0 0
        %1978 = vmatprep.subr.bf16.mxu0 0
        %1979 = vmatpush1.bf16.xpose.msra.mxu0 0
        %1980 = vmatprep.subr.bf16.mxu0 0
        %1981 = vmatpush1.bf16.xpose.msra.mxu0 0
        %1982 = vmatprep.subr.bf16.mxu0 0
        %1983 = vmatpush1.bf16.xpose.msra.mxu0 0
        %1984 = vmatprep.subr.bf16.mxu0 0
        %1985 = vmatpush1.bf16.xpose.msra.mxu0 0
        %1986 = vmatprep.subr.bf16.mxu0 0
        %1987 = vmatpush1.bf16.xpose.msra.mxu0 0
        %1988 = vmatprep.subr.bf16.mxu0 0
        %1989 = vmatpush1.bf16.xpose.msra.mxu0 0
        %1990 = vmatprep.subr.bf16.mxu0 0
        %1991 = vmatpush1.bf16.xpose.msra.mxu0 0
        %1992 = vmatprep.mubr.bf16.mxu0 0
        %1993 = vmatmul.mubr.bf16.gmra.mrb[0].mxu0 %v1955
        %v1994 = vpop.f32.mrb[0].mxu0
        %v1995 = vadd.f32 0.0, %v1994
        %v1996 = vpop.f32.mrb[0].mxu0
        %v1997 = vpop.f32.mrb[0].mxu0
        %v1998 = vpop.f32.mrb[0].mxu0
        %1999 = vdwg.mxu0
        %v2000 = vsel %vm1454, %v1945, -1e+30
        %v2001 = vsel %vm1455, %v1995, -1e+30
        %v2002 = vsel %vm1551, %v2000, -inf
        %2003 = vmax.xlane.f32.xlu0 %v2002
        %v2004 = vpop.xlane.xlu0 %2003
        %v2005 = vsel %vm1551, %v2001, -inf
        %2006 = vmax.xlane.f32.xlu0 %v2005
        %v2007 = vpop.xlane.xlu0 %2006
        %v2008 = vsub.f32 %v2000, %v2004
        %v2009 = vsub.f32 %v2001, %v2007
        %v2010 = vmul.f32 %v2008, 1.442695
        %v2011 = vpow.pop %v2010
        %v2012 = vmul.f32 %v2009, 1.442695
        %v2013 = vpow.pop %v2012
        %v2014 = vsel %vm1551, %v2011, 0.0
        %2015 = vadd.xlane.f32.xlu0 %v2014
        %v2016 = vpop.xlane.xlu0 %2015
        %v2017 = vsel %vm1551, %v2013, 0.0
        %2018 = vadd.xlane.f32.xlu0 %v2017
        %v2019 = vpop.xlane.xlu0 %2018
        %v2020 = vrcp.pop %v2016
        %v2021 = vrcp.pop %v2019
        %v2022 = vmul.f32 %v2011, %v2020
        %v2023 = vmul.f32 %v2013, %v2021
        %v2024 = vpack.c.bf16 %v2022, %v2022
        %v2025 = vpack.c.bf16 %v2023, %v2023
        %2026 = vrot.lane.b32.xlu0 %v1422, 120
        %v2027 = vpop.permute.xlu0 %2026
        %v2029 = vsel %vm1551, %v2024, 0
        %v2032 = vand.u32 %v2027, %v1582
        %2034 = vmatprep.subr.bf16.mxu0 0
        %2035 = vmatpush1.bf16.msra.mxu0 %v2032
        %2036 = vmatprep.subr.bf16.mxu0 0
        %2037 = vmatpush1.bf16.msra.mxu0 0
        %2038 = vmatprep.subr.bf16.mxu0 0
        %2039 = vmatpush1.bf16.msra.mxu0 0
        %2040 = vmatprep.subr.bf16.mxu0 0
        %2041 = vmatpush1.bf16.msra.mxu0 0
        %2042 = vmatprep.subr.bf16.mxu0 0
        %2043 = vmatpush1.bf16.msra.mxu0 0
        %2044 = vmatprep.subr.bf16.mxu0 0
        %2045 = vmatpush1.bf16.msra.mxu0 0
        %2046 = vmatprep.subr.bf16.mxu0 0
        %2047 = vmatpush1.bf16.msra.mxu0 0
        %2048 = vmatprep.subr.bf16.mxu0 0
        %2049 = vmatpush1.bf16.msra.mxu0 0
        %2050 = vmatprep.subr.bf16.mxu0 0
        %2051 = vmatpush1.bf16.msra.mxu0 0
        %2052 = vmatprep.subr.bf16.mxu0 0
        %2053 = vmatpush1.bf16.msra.mxu0 0
        %2054 = vmatprep.subr.bf16.mxu0 0
        %2055 = vmatpush1.bf16.msra.mxu0 0
        %2056 = vmatprep.subr.bf16.mxu0 0
        %2057 = vmatpush1.bf16.msra.mxu0 0
        %2058 = vmatprep.subr.bf16.mxu0 0
        %2059 = vmatpush1.bf16.msra.mxu0 0
        %2060 = vmatprep.subr.bf16.mxu0 0
        %2061 = vmatpush1.bf16.msra.mxu0 0
        %2062 = vmatprep.subr.bf16.mxu0 0
        %2063 = vmatpush1.bf16.msra.mxu0 0
        %2064 = vmatprep.subr.bf16.mxu0 0
        %2065 = vmatpush1.bf16.msra.mxu0 0
        %2066 = vmatprep.mubr.bf16.mxu0 0
        %2067 = vmatmul.mubr.bf16.gmra.mrb[0].mxu0 %v2029
        %v2068 = vpop.f32.mrb[0].mxu0
        %v2069 = vadd.f32 0.0, %v2068
        %v2070 = vpop.f32.mrb[0].mxu0
        %v2071 = vpop.f32.mrb[0].mxu0
        %v2072 = vpop.f32.mrb[0].mxu0
        %2073 = vdwg.mxu0
        %2074 = vrot.lane.b32.xlu0 %v1423, 120
        %v2075 = vpop.permute.xlu0 %2074
        %v2077 = vsel %vm1551, %v2025, 0
        %v2080 = vand.u32 %v2075, %v1582
        %2082 = vmatprep.subr.bf16.mxu0 0
        %2083 = vmatpush1.bf16.msra.mxu0 %v2080
        %2084 = vmatprep.subr.bf16.mxu0 0
        %2085 = vmatpush1.bf16.msra.mxu0 0
        %2086 = vmatprep.subr.bf16.mxu0 0
        %2087 = vmatpush1.bf16.msra.mxu0 0
        %2088 = vmatprep.subr.bf16.mxu0 0
        %2089 = vmatpush1.bf16.msra.mxu0 0
        %2090 = vmatprep.subr.bf16.mxu0 0
        %2091 = vmatpush1.bf16.msra.mxu0 0
        %2092 = vmatprep.subr.bf16.mxu0 0
        %2093 = vmatpush1.bf16.msra.mxu0 0
        %2094 = vmatprep.subr.bf16.mxu0 0
        %2095 = vmatpush1.bf16.msra.mxu0 0
        %2096 = vmatprep.subr.bf16.mxu0 0
        %2097 = vmatpush1.bf16.msra.mxu0 0
        %2098 = vmatprep.subr.bf16.mxu0 0
        %2099 = vmatpush1.bf16.msra.mxu0 0
        %2100 = vmatprep.subr.bf16.mxu0 0
        %2101 = vmatpush1.bf16.msra.mxu0 0
        %2102 = vmatprep.subr.bf16.mxu0 0
        %2103 = vmatpush1.bf16.msra.mxu0 0
        %2104 = vmatprep.subr.bf16.mxu0 0
        %2105 = vmatpush1.bf16.msra.mxu0 0
        %2106 = vmatprep.subr.bf16.mxu0 0
        %2107 = vmatpush1.bf16.msra.mxu0 0
        %2108 = vmatprep.subr.bf16.mxu0 0
        %2109 = vmatpush1.bf16.msra.mxu0 0
        %2110 = vmatprep.subr.bf16.mxu0 0
        %2111 = vmatpush1.bf16.msra.mxu0 0
        %2112 = vmatprep.subr.bf16.mxu0 0
        %2113 = vmatpush1.bf16.msra.mxu0 0
        %2114 = vmatprep.mubr.bf16.mxu0 0
        %2115 = vmatmul.mubr.bf16.gmra.mrb[0].mxu0 %v2077
        %v2116 = vpop.f32.mrb[0].mxu0
        %v2117 = vadd.f32 0.0, %v2116
        %v2118 = vpop.f32.mrb[0].mxu0
        %v2119 = vpop.f32.mrb[0].mxu0
        %v2120 = vpop.f32.mrb[0].mxu0
        %2121 = vdwg.mxu0
        %2122 = vrot.lane.b32.xlu0 %v1368, 116
        %v2123 = vpop.permute.xlu0 %2122
        %2124 = vrot.lane.b32.xlu0 %v1395, 116
        %v2125 = vpop.permute.xlu0 %2124
        %v2127 = vsel %vm1456, %v2123, 0
        %v2130 = vsel %vm1456, %v2125, 0
        %2132 = vmatprep.subr.bf16.mxu0 0
        %2133 = vmatpush1.bf16.xpose.msra.mxu0 %v2130
        %2134 = vmatprep.subr.bf16.mxu0 0
        %2135 = vmatpush1.bf16.xpose.msra.mxu0 0
        %2136 = vmatprep.subr.bf16.mxu0 0
        %2137 = vmatpush1.bf16.xpose.msra.mxu0 0
        %2138 = vmatprep.subr.bf16.mxu0 0
        %2139 = vmatpush1.bf16.xpose.msra.mxu0 0
        %2140 = vmatprep.subr.bf16.mxu0 0
        %2141 = vmatpush1.bf16.xpose.msra.mxu0 0
        %2142 = vmatprep.subr.bf16.mxu0 0
        %2143 = vmatpush1.bf16.xpose.msra.mxu0 0
        %2144 = vmatprep.subr.bf16.mxu0 0
        %2145 = vmatpush1.bf16.xpose.msra.mxu0 0
        %2146 = vmatprep.subr.bf16.mxu0 0
        %2147 = vmatpush1.bf16.xpose.msra.mxu0 0
        %2148 = vmatprep.subr.bf16.mxu0 0
        %2149 = vmatpush1.bf16.xpose.msra.mxu0 0
        %2150 = vmatprep.subr.bf16.mxu0 0
        %2151 = vmatpush1.bf16.xpose.msra.mxu0 0
        %2152 = vmatprep.subr.bf16.mxu0 0
        %2153 = vmatpush1.bf16.xpose.msra.mxu0 0
        %2154 = vmatprep.subr.bf16.mxu0 0
        %2155 = vmatpush1.bf16.xpose.msra.mxu0 0
        %2156 = vmatprep.subr.bf16.mxu0 0
        %2157 = vmatpush1.bf16.xpose.msra.mxu0 0
        %2158 = vmatprep.subr.bf16.mxu0 0
        %2159 = vmatpush1.bf16.xpose.msra.mxu0 0
        %2160 = vmatprep.subr.bf16.mxu0 0
        %2161 = vmatpush1.bf16.xpose.msra.mxu0 0
        %2162 = vmatprep.subr.bf16.mxu0 0
        %2163 = vmatpush1.bf16.xpose.msra.mxu0 0
        %2164 = vmatprep.mubr.bf16.mxu0 0
        %2165 = vmatmul.mubr.bf16.gmra.mrb[0].mxu0 %v2127
        %v2166 = vpop.f32.mrb[0].mxu0
        %v2167 = vadd.f32 0.0, %v2166
        %v2168 = vpop.f32.mrb[0].mxu0
        %v2169 = vpop.f32.mrb[0].mxu0
        %v2170 = vpop.f32.mrb[0].mxu0
        %2171 = vdwg.mxu0
        %2172 = vrot.lane.b32.xlu0 %v1369, 116
        %v2173 = vpop.permute.xlu0 %2172
        %2174 = vrot.lane.b32.xlu0 %v1396, 116
        %v2175 = vpop.permute.xlu0 %2174
        %v2177 = vsel %vm1456, %v2173, 0
        %v2180 = vsel %vm1456, %v2175, 0
        %2182 = vmatprep.subr.bf16.mxu0 0
        %2183 = vmatpush1.bf16.xpose.msra.mxu0 %v2180
        %2184 = vmatprep.subr.bf16.mxu0 0
        %2185 = vmatpush1.bf16.xpose.msra.mxu0 0
        %2186 = vmatprep.subr.bf16.mxu0 0
        %2187 = vmatpush1.bf16.xpose.msra.mxu0 0
        %2188 = vmatprep.subr.bf16.mxu0 0
        %2189 = vmatpush1.bf16.xpose.msra.mxu0 0
        %2190 = vmatprep.subr.bf16.mxu0 0
        %2191 = vmatpush1.bf16.xpose.msra.mxu0 0
        %2192 = vmatprep.subr.bf16.mxu0 0
        %2193 = vmatpush1.bf16.xpose.msra.mxu0 0
        %2194 = vmatprep.subr.bf16.mxu0 0
        %2195 = vmatpush1.bf16.xpose.msra.mxu0 0
        %2196 = vmatprep.subr.bf16.mxu0 0
        %2197 = vmatpush1.bf16.xpose.msra.mxu0 0
        %2198 = vmatprep.subr.bf16.mxu0 0
        %2199 = vmatpush1.bf16.xpose.msra.mxu0 0
        %2200 = vmatprep.subr.bf16.mxu0 0
        %2201 = vmatpush1.bf16.xpose.msra.mxu0 0
        %2202 = vmatprep.subr.bf16.mxu0 0
        %2203 = vmatpush1.bf16.xpose.msra.mxu0 0
        %2204 = vmatprep.subr.bf16.mxu0 0
        %2205 = vmatpush1.bf16.xpose.msra.mxu0 0
        %2206 = vmatprep.subr.bf16.mxu0 0
        %2207 = vmatpush1.bf16.xpose.msra.mxu0 0
        %2208 = vmatprep.subr.bf16.mxu0 0
        %2209 = vmatpush1.bf16.xpose.msra.mxu0 0
        %2210 = vmatprep.subr.bf16.mxu0 0
        %2211 = vmatpush1.bf16.xpose.msra.mxu0 0
        %2212 = vmatprep.subr.bf16.mxu0 0
        %2213 = vmatpush1.bf16.xpose.msra.mxu0 0
        %2214 = vmatprep.mubr.bf16.mxu0 0
        %2215 = vmatmul.mubr.bf16.gmra.mrb[0].mxu0 %v2177
        %v2216 = vpop.f32.mrb[0].mxu0
        %v2217 = vadd.f32 0.0, %v2216
        %v2218 = vpop.f32.mrb[0].mxu0
        %v2219 = vpop.f32.mrb[0].mxu0
        %v2220 = vpop.f32.mrb[0].mxu0
        %2221 = vdwg.mxu0
        %v2222 = vsel %vm1454, %v2167, -1e+30
        %v2223 = vsel %vm1455, %v2217, -1e+30
        %v2224 = vsel %vm1551, %v2222, -inf
        %2225 = vmax.xlane.f32.xlu0 %v2224
        %v2226 = vpop.xlane.xlu0 %2225
        %v2227 = vsel %vm1551, %v2223, -inf
        %2228 = vmax.xlane.f32.xlu0 %v2227
        %v2229 = vpop.xlane.xlu0 %2228
        %v2230 = vsub.f32 %v2222, %v2226
        %v2231 = vsub.f32 %v2223, %v2229
        %v2232 = vmul.f32 %v2230, 1.442695
        %v2233 = vpow.pop %v2232
        %v2234 = vmul.f32 %v2231, 1.442695
        %v2235 = vpow.pop %v2234
        %v2236 = vsel %vm1551, %v2233, 0.0
        %2237 = vadd.xlane.f32.xlu0 %v2236
        %v2238 = vpop.xlane.xlu0 %2237
        %v2239 = vsel %vm1551, %v2235, 0.0
        %2240 = vadd.xlane.f32.xlu0 %v2239
        %v2241 = vpop.xlane.xlu0 %2240
        %v2242 = vrcp.pop %v2238
        %v2243 = vrcp.pop %v2241
        %v2244 = vmul.f32 %v2233, %v2242
        %v2245 = vmul.f32 %v2235, %v2243
        %v2246 = vpack.c.bf16 %v2244, %v2244
        %v2247 = vpack.c.bf16 %v2245, %v2245
        %2248 = vrot.lane.b32.xlu0 %v1422, 116
        %v2249 = vpop.permute.xlu0 %2248
        %v2251 = vsel %vm1551, %v2246, 0
        %v2254 = vand.u32 %v2249, %v1582
        %2256 = vmatprep.subr.bf16.mxu0 0
        %2257 = vmatpush1.bf16.msra.mxu0 %v2254
        %2258 = vmatprep.subr.bf16.mxu0 0
        %2259 = vmatpush1.bf16.msra.mxu0 0
        %2260 = vmatprep.subr.bf16.mxu0 0
        %2261 = vmatpush1.bf16.msra.mxu0 0
        %2262 = vmatprep.subr.bf16.mxu0 0
        %2263 = vmatpush1.bf16.msra.mxu0 0
        %2264 = vmatprep.subr.bf16.mxu0 0
        %2265 = vmatpush1.bf16.msra.mxu0 0
        %2266 = vmatprep.subr.bf16.mxu0 0
        %2267 = vmatpush1.bf16.msra.mxu0 0
        %2268 = vmatprep.subr.bf16.mxu0 0
        %2269 = vmatpush1.bf16.msra.mxu0 0
        %2270 = vmatprep.subr.bf16.mxu0 0
        %2271 = vmatpush1.bf16.msra.mxu0 0
        %2272 = vmatprep.subr.bf16.mxu0 0
        %2273 = vmatpush1.bf16.msra.mxu0 0
        %2274 = vmatprep.subr.bf16.mxu0 0
        %2275 = vmatpush1.bf16.msra.mxu0 0
        %2276 = vmatprep.subr.bf16.mxu0 0
        %2277 = vmatpush1.bf16.msra.mxu0 0
        %2278 = vmatprep.subr.bf16.mxu0 0
        %2279 = vmatpush1.bf16.msra.mxu0 0
        %2280 = vmatprep.subr.bf16.mxu0 0
        %2281 = vmatpush1.bf16.msra.mxu0 0
        %2282 = vmatprep.subr.bf16.mxu0 0
        %2283 = vmatpush1.bf16.msra.mxu0 0
        %2284 = vmatprep.subr.bf16.mxu0 0
        %2285 = vmatpush1.bf16.msra.mxu0 0
        %2286 = vmatprep.subr.bf16.mxu0 0
        %2287 = vmatpush1.bf16.msra.mxu0 0
        %2288 = vmatprep.mubr.bf16.mxu0 0
        %2289 = vmatmul.mubr.bf16.gmra.mrb[0].mxu0 %v2251
        %v2290 = vpop.f32.mrb[0].mxu0
        %v2291 = vadd.f32 0.0, %v2290
        %v2292 = vpop.f32.mrb[0].mxu0
        %v2293 = vpop.f32.mrb[0].mxu0
        %v2294 = vpop.f32.mrb[0].mxu0
        %2295 = vdwg.mxu0
        %2296 = vrot.lane.b32.xlu0 %v1423, 116
        %v2297 = vpop.permute.xlu0 %2296
        %v2299 = vsel %vm1551, %v2247, 0
        %v2302 = vand.u32 %v2297, %v1582
        %2304 = vmatprep.subr.bf16.mxu0 0
        %2305 = vmatpush1.bf16.msra.mxu0 %v2302
        %2306 = vmatprep.subr.bf16.mxu0 0
        %2307 = vmatpush1.bf16.msra.mxu0 0
        %2308 = vmatprep.subr.bf16.mxu0 0
        %2309 = vmatpush1.bf16.msra.mxu0 0
        %2310 = vmatprep.subr.bf16.mxu0 0
        %2311 = vmatpush1.bf16.msra.mxu0 0
        %2312 = vmatprep.subr.bf16.mxu0 0
        %2313 = vmatpush1.bf16.msra.mxu0 0
        %2314 = vmatprep.subr.bf16.mxu0 0
        %2315 = vmatpush1.bf16.msra.mxu0 0
        %2316 = vmatprep.subr.bf16.mxu0 0
        %2317 = vmatpush1.bf16.msra.mxu0 0
        %2318 = vmatprep.subr.bf16.mxu0 0
        %2319 = vmatpush1.bf16.msra.mxu0 0
        %2320 = vmatprep.subr.bf16.mxu0 0
        %2321 = vmatpush1.bf16.msra.mxu0 0
        %2322 = vmatprep.subr.bf16.mxu0 0
        %2323 = vmatpush1.bf16.msra.mxu0 0
        %2324 = vmatprep.subr.bf16.mxu0 0
        %2325 = vmatpush1.bf16.msra.mxu0 0
        %2326 = vmatprep.subr.bf16.mxu0 0
        %2327 = vmatpush1.bf16.msra.mxu0 0
        %2328 = vmatprep.subr.bf16.mxu0 0
        %2329 = vmatpush1.bf16.msra.mxu0 0
        %2330 = vmatprep.subr.bf16.mxu0 0
        %2331 = vmatpush1.bf16.msra.mxu0 0
        %2332 = vmatprep.subr.bf16.mxu0 0
        %2333 = vmatpush1.bf16.msra.mxu0 0
        %2334 = vmatprep.subr.bf16.mxu0 0
        %2335 = vmatpush1.bf16.msra.mxu0 0
        %2336 = vmatprep.mubr.bf16.mxu0 0
        %2337 = vmatmul.mubr.bf16.gmra.mrb[0].mxu0 %v2299
        %v2338 = vpop.f32.mrb[0].mxu0
        %v2339 = vadd.f32 0.0, %v2338
        %v2340 = vpop.f32.mrb[0].mxu0
        %v2341 = vpop.f32.mrb[0].mxu0
        %v2342 = vpop.f32.mrb[0].mxu0
        %2343 = vdwg.mxu0
        %2344 = vrot.lane.b32.xlu0 %v1368, 112
        %v2345 = vpop.permute.xlu0 %2344
        %2346 = vrot.lane.b32.xlu0 %v1395, 112
        %v2347 = vpop.permute.xlu0 %2346
        %v2349 = vsel %vm1456, %v2345, 0
        %v2352 = vsel %vm1456, %v2347, 0
        %2354 = vmatprep.subr.bf16.mxu0 0
        %2355 = vmatpush1.bf16.xpose.msra.mxu0 %v2352
        %2356 = vmatprep.subr.bf16.mxu0 0
        %2357 = vmatpush1.bf16.xpose.msra.mxu0 0
        %2358 = vmatprep.subr.bf16.mxu0 0
        %2359 = vmatpush1.bf16.xpose.msra.mxu0 0
        %2360 = vmatprep.subr.bf16.mxu0 0
        %2361 = vmatpush1.bf16.xpose.msra.mxu0 0
        %2362 = vmatprep.subr.bf16.mxu0 0
        %2363 = vmatpush1.bf16.xpose.msra.mxu0 0
        %2364 = vmatprep.subr.bf16.mxu0 0
        %2365 = vmatpush1.bf16.xpose.msra.mxu0 0
        %2366 = vmatprep.subr.bf16.mxu0 0
        %2367 = vmatpush1.bf16.xpose.msra.mxu0 0
        %2368 = vmatprep.subr.bf16.mxu0 0
        %2369 = vmatpush1.bf16.xpose.msra.mxu0 0
        %2370 = vmatprep.subr.bf16.mxu0 0
        %2371 = vmatpush1.bf16.xpose.msra.mxu0 0
        %2372 = vmatprep.subr.bf16.mxu0 0
        %2373 = vmatpush1.bf16.xpose.msra.mxu0 0
        %2374 = vmatprep.subr.bf16.mxu0 0
        %2375 = vmatpush1.bf16.xpose.msra.mxu0 0
        %2376 = vmatprep.subr.bf16.mxu0 0
        %2377 = vmatpush1.bf16.xpose.msra.mxu0 0
        %2378 = vmatprep.subr.bf16.mxu0 0
        %2379 = vmatpush1.bf16.xpose.msra.mxu0 0
        %2380 = vmatprep.subr.bf16.mxu0 0
        %2381 = vmatpush1.bf16.xpose.msra.mxu0 0
        %2382 = vmatprep.subr.bf16.mxu0 0
        %2383 = vmatpush1.bf16.xpose.msra.mxu0 0
        %2384 = vmatprep.subr.bf16.mxu0 0
        %2385 = vmatpush1.bf16.xpose.msra.mxu0 0
        %2386 = vmatprep.mubr.bf16.mxu0 0
        %2387 = vmatmul.mubr.bf16.gmra.mrb[0].mxu0 %v2349
        %v2388 = vpop.f32.mrb[0].mxu0
        %v2389 = vadd.f32 0.0, %v2388
        %v2390 = vpop.f32.mrb[0].mxu0
        %v2391 = vpop.f32.mrb[0].mxu0
        %v2392 = vpop.f32.mrb[0].mxu0
        %2393 = vdwg.mxu0
        %2394 = vrot.lane.b32.xlu0 %v1369, 112
        %v2395 = vpop.permute.xlu0 %2394
        %2396 = vrot.lane.b32.xlu0 %v1396, 112
        %v2397 = vpop.permute.xlu0 %2396
        %v2399 = vsel %vm1456, %v2395, 0
        %v2402 = vsel %vm1456, %v2397, 0
        %2404 = vmatprep.subr.bf16.mxu0 0
        %2405 = vmatpush1.bf16.xpose.msra.mxu0 %v2402
        %2406 = vmatprep.subr.bf16.mxu0 0
        %2407 = vmatpush1.bf16.xpose.msra.mxu0 0
        %2408 = vmatprep.subr.bf16.mxu0 0
        %2409 = vmatpush1.bf16.xpose.msra.mxu0 0
        %2410 = vmatprep.subr.bf16.mxu0 0
        %2411 = vmatpush1.bf16.xpose.msra.mxu0 0
        %2412 = vmatprep.subr.bf16.mxu0 0
        %2413 = vmatpush1.bf16.xpose.msra.mxu0 0
        %2414 = vmatprep.subr.bf16.mxu0 0
        %2415 = vmatpush1.bf16.xpose.msra.mxu0 0
        %2416 = vmatprep.subr.bf16.mxu0 0
        %2417 = vmatpush1.bf16.xpose.msra.mxu0 0
        %2418 = vmatprep.subr.bf16.mxu0 0
        %2419 = vmatpush1.bf16.xpose.msra.mxu0 0
        %2420 = vmatprep.subr.bf16.mxu0 0
        %2421 = vmatpush1.bf16.xpose.msra.mxu0 0
        %2422 = vmatprep.subr.bf16.mxu0 0
        %2423 = vmatpush1.bf16.xpose.msra.mxu0 0
        %2424 = vmatprep.subr.bf16.mxu0 0
        %2425 = vmatpush1.bf16.xpose.msra.mxu0 0
        %2426 = vmatprep.subr.bf16.mxu0 0
        %2427 = vmatpush1.bf16.xpose.msra.mxu0 0
        %2428 = vmatprep.subr.bf16.mxu0 0
        %2429 = vmatpush1.bf16.xpose.msra.mxu0 0
        %2430 = vmatprep.subr.bf16.mxu0 0
        %2431 = vmatpush1.bf16.xpose.msra.mxu0 0
        %2432 = vmatprep.subr.bf16.mxu0 0
        %2433 = vmatpush1.bf16.xpose.msra.mxu0 0
        %2434 = vmatprep.subr.bf16.mxu0 0
        %2435 = vmatpush1.bf16.xpose.msra.mxu0 0
        %2436 = vmatprep.mubr.bf16.mxu0 0
        %2437 = vmatmul.mubr.bf16.gmra.mrb[0].mxu0 %v2399
        %v2438 = vpop.f32.mrb[0].mxu0
        %v2439 = vadd.f32 0.0, %v2438
        %v2440 = vpop.f32.mrb[0].mxu0
        %v2441 = vpop.f32.mrb[0].mxu0
        %v2442 = vpop.f32.mrb[0].mxu0
        %2443 = vdwg.mxu0
        %v2444 = vsel %vm1454, %v2389, -1e+30
        %v2445 = vsel %vm1455, %v2439, -1e+30
        %v2446 = vsel %vm1551, %v2444, -inf
        %2447 = vmax.xlane.f32.xlu0 %v2446
        %v2448 = vpop.xlane.xlu0 %2447
        %v2449 = vsel %vm1551, %v2445, -inf
        %2450 = vmax.xlane.f32.xlu0 %v2449
        %v2451 = vpop.xlane.xlu0 %2450
        %v2452 = vsub.f32 %v2444, %v2448
        %v2453 = vsub.f32 %v2445, %v2451
        %v2454 = vmul.f32 %v2452, 1.442695
        %v2455 = vpow.pop %v2454
        %v2456 = vmul.f32 %v2453, 1.442695
        %v2457 = vpow.pop %v2456
        %v2458 = vsel %vm1551, %v2455, 0.0
        %2459 = vadd.xlane.f32.xlu0 %v2458
        %v2460 = vpop.xlane.xlu0 %2459
        %v2461 = vsel %vm1551, %v2457, 0.0
        %2462 = vadd.xlane.f32.xlu0 %v2461
        %v2463 = vpop.xlane.xlu0 %2462
        %v2464 = vrcp.pop %v2460
        %v2465 = vrcp.pop %v2463
        %v2466 = vmul.f32 %v2455, %v2464
        %v2467 = vmul.f32 %v2457, %v2465
        %v2468 = vpack.c.bf16 %v2466, %v2466
        %v2469 = vpack.c.bf16 %v2467, %v2467
        %2470 = vrot.lane.b32.xlu0 %v1422, 112
        %v2471 = vpop.permute.xlu0 %2470
        %v2473 = vsel %vm1551, %v2468, 0
        %v2476 = vand.u32 %v2471, %v1582
        %2478 = vmatprep.subr.bf16.mxu0 0
        %2479 = vmatpush1.bf16.msra.mxu0 %v2476
        %2480 = vmatprep.subr.bf16.mxu0 0
        %2481 = vmatpush1.bf16.msra.mxu0 0
        %2482 = vmatprep.subr.bf16.mxu0 0
        %2483 = vmatpush1.bf16.msra.mxu0 0
        %2484 = vmatprep.subr.bf16.mxu0 0
        %2485 = vmatpush1.bf16.msra.mxu0 0
        %2486 = vmatprep.subr.bf16.mxu0 0
        %2487 = vmatpush1.bf16.msra.mxu0 0
        %2488 = vmatprep.subr.bf16.mxu0 0
        %2489 = vmatpush1.bf16.msra.mxu0 0
        %2490 = vmatprep.subr.bf16.mxu0 0
        %2491 = vmatpush1.bf16.msra.mxu0 0
        %2492 = vmatprep.subr.bf16.mxu0 0
        %2493 = vmatpush1.bf16.msra.mxu0 0
        %2494 = vmatprep.subr.bf16.mxu0 0
        %2495 = vmatpush1.bf16.msra.mxu0 0
        %2496 = vmatprep.subr.bf16.mxu0 0
        %2497 = vmatpush1.bf16.msra.mxu0 0
        %2498 = vmatprep.subr.bf16.mxu0 0
        %2499 = vmatpush1.bf16.msra.mxu0 0
        %2500 = vmatprep.subr.bf16.mxu0 0
        %2501 = vmatpush1.bf16.msra.mxu0 0
        %2502 = vmatprep.subr.bf16.mxu0 0
        %2503 = vmatpush1.bf16.msra.mxu0 0
        %2504 = vmatprep.subr.bf16.mxu0 0
        %2505 = vmatpush1.bf16.msra.mxu0 0
        %2506 = vmatprep.subr.bf16.mxu0 0
        %2507 = vmatpush1.bf16.msra.mxu0 0
        %2508 = vmatprep.subr.bf16.mxu0 0
        %2509 = vmatpush1.bf16.msra.mxu0 0
        %2510 = vmatprep.mubr.bf16.mxu0 0
        %2511 = vmatmul.mubr.bf16.gmra.mrb[0].mxu0 %v2473
        %v2512 = vpop.f32.mrb[0].mxu0
        %v2513 = vadd.f32 0.0, %v2512
        %v2514 = vpop.f32.mrb[0].mxu0
        %v2515 = vpop.f32.mrb[0].mxu0
        %v2516 = vpop.f32.mrb[0].mxu0
        %2517 = vdwg.mxu0
        %2518 = vrot.lane.b32.xlu0 %v1423, 112
        %v2519 = vpop.permute.xlu0 %2518
        %v2521 = vsel %vm1551, %v2469, 0
        %v2524 = vand.u32 %v2519, %v1582
        %2526 = vmatprep.subr.bf16.mxu0 0
        %2527 = vmatpush1.bf16.msra.mxu0 %v2524
        %2528 = vmatprep.subr.bf16.mxu0 0
        %2529 = vmatpush1.bf16.msra.mxu0 0
        %2530 = vmatprep.subr.bf16.mxu0 0
        %2531 = vmatpush1.bf16.msra.mxu0 0
        %2532 = vmatprep.subr.bf16.mxu0 0
        %2533 = vmatpush1.bf16.msra.mxu0 0
        %2534 = vmatprep.subr.bf16.mxu0 0
        %2535 = vmatpush1.bf16.msra.mxu0 0
        %2536 = vmatprep.subr.bf16.mxu0 0
        %2537 = vmatpush1.bf16.msra.mxu0 0
        %2538 = vmatprep.subr.bf16.mxu0 0
        %2539 = vmatpush1.bf16.msra.mxu0 0
        %2540 = vmatprep.subr.bf16.mxu0 0
        %2541 = vmatpush1.bf16.msra.mxu0 0
        %2542 = vmatprep.subr.bf16.mxu0 0
        %2543 = vmatpush1.bf16.msra.mxu0 0
        %2544 = vmatprep.subr.bf16.mxu0 0
        %2545 = vmatpush1.bf16.msra.mxu0 0
        %2546 = vmatprep.subr.bf16.mxu0 0
        %2547 = vmatpush1.bf16.msra.mxu0 0
        %2548 = vmatprep.subr.bf16.mxu0 0
        %2549 = vmatpush1.bf16.msra.mxu0 0
        %2550 = vmatprep.subr.bf16.mxu0 0
        %2551 = vmatpush1.bf16.msra.mxu0 0
        %2552 = vmatprep.subr.bf16.mxu0 0
        %2553 = vmatpush1.bf16.msra.mxu0 0
        %2554 = vmatprep.subr.bf16.mxu0 0
        %2555 = vmatpush1.bf16.msra.mxu0 0
        %2556 = vmatprep.subr.bf16.mxu0 0
        %2557 = vmatpush1.bf16.msra.mxu0 0
        %2558 = vmatprep.mubr.bf16.mxu0 0
        %2559 = vmatmul.mubr.bf16.gmra.mrb[0].mxu0 %v2521
        %v2560 = vpop.f32.mrb[0].mxu0
        %v2561 = vadd.f32 0.0, %v2560
        %v2562 = vpop.f32.mrb[0].mxu0
        %v2563 = vpop.f32.mrb[0].mxu0
        %v2564 = vpop.f32.mrb[0].mxu0
        %2565 = vdwg.mxu0
        %2566 = vrot.lane.b32.xlu0 %v1368, 108
        %v2567 = vpop.permute.xlu0 %2566
        %2568 = vrot.lane.b32.xlu0 %v1395, 108
        %v2569 = vpop.permute.xlu0 %2568
        %v2571 = vsel %vm1456, %v2567, 0
        %v2574 = vsel %vm1456, %v2569, 0
        %2576 = vmatprep.subr.bf16.mxu0 0
        %2577 = vmatpush1.bf16.xpose.msra.mxu0 %v2574
        %2578 = vmatprep.subr.bf16.mxu0 0
        %2579 = vmatpush1.bf16.xpose.msra.mxu0 0
        %2580 = vmatprep.subr.bf16.mxu0 0
        %2581 = vmatpush1.bf16.xpose.msra.mxu0 0
        %2582 = vmatprep.subr.bf16.mxu0 0
        %2583 = vmatpush1.bf16.xpose.msra.mxu0 0
        %2584 = vmatprep.subr.bf16.mxu0 0
        %2585 = vmatpush1.bf16.xpose.msra.mxu0 0
        %2586 = vmatprep.subr.bf16.mxu0 0
        %2587 = vmatpush1.bf16.xpose.msra.mxu0 0
        %2588 = vmatprep.subr.bf16.mxu0 0
        %2589 = vmatpush1.bf16.xpose.msra.mxu0 0
        %2590 = vmatprep.subr.bf16.mxu0 0
        %2591 = vmatpush1.bf16.xpose.msra.mxu0 0
        %2592 = vmatprep.subr.bf16.mxu0 0
        %2593 = vmatpush1.bf16.xpose.msra.mxu0 0
        %2594 = vmatprep.subr.bf16.mxu0 0
        %2595 = vmatpush1.bf16.xpose.msra.mxu0 0
        %2596 = vmatprep.subr.bf16.mxu0 0
        %2597 = vmatpush1.bf16.xpose.msra.mxu0 0
        %2598 = vmatprep.subr.bf16.mxu0 0
        %2599 = vmatpush1.bf16.xpose.msra.mxu0 0
        %2600 = vmatprep.subr.bf16.mxu0 0
        %2601 = vmatpush1.bf16.xpose.msra.mxu0 0
        %2602 = vmatprep.subr.bf16.mxu0 0
        %2603 = vmatpush1.bf16.xpose.msra.mxu0 0
        %2604 = vmatprep.subr.bf16.mxu0 0
        %2605 = vmatpush1.bf16.xpose.msra.mxu0 0
        %2606 = vmatprep.subr.bf16.mxu0 0
        %2607 = vmatpush1.bf16.xpose.msra.mxu0 0
        %2608 = vmatprep.mubr.bf16.mxu0 0
        %2609 = vmatmul.mubr.bf16.gmra.mrb[0].mxu0 %v2571
        %v2610 = vpop.f32.mrb[0].mxu0
        %v2611 = vadd.f32 0.0, %v2610
        %v2612 = vpop.f32.mrb[0].mxu0
        %v2613 = vpop.f32.mrb[0].mxu0
        %v2614 = vpop.f32.mrb[0].mxu0
        %2615 = vdwg.mxu0
        %2616 = vrot.lane.b32.xlu0 %v1369, 108
        %v2617 = vpop.permute.xlu0 %2616
        %2618 = vrot.lane.b32.xlu0 %v1396, 108
        %v2619 = vpop.permute.xlu0 %2618
        %v2621 = vsel %vm1456, %v2617, 0
        %v2624 = vsel %vm1456, %v2619, 0
        %2626 = vmatprep.subr.bf16.mxu0 0
        %2627 = vmatpush1.bf16.xpose.msra.mxu0 %v2624
        %2628 = vmatprep.subr.bf16.mxu0 0
        %2629 = vmatpush1.bf16.xpose.msra.mxu0 0
        %2630 = vmatprep.subr.bf16.mxu0 0
        %2631 = vmatpush1.bf16.xpose.msra.mxu0 0
        %2632 = vmatprep.subr.bf16.mxu0 0
        %2633 = vmatpush1.bf16.xpose.msra.mxu0 0
        %2634 = vmatprep.subr.bf16.mxu0 0
        %2635 = vmatpush1.bf16.xpose.msra.mxu0 0
        %2636 = vmatprep.subr.bf16.mxu0 0
        %2637 = vmatpush1.bf16.xpose.msra.mxu0 0
        %2638 = vmatprep.subr.bf16.mxu0 0
        %2639 = vmatpush1.bf16.xpose.msra.mxu0 0
        %2640 = vmatprep.subr.bf16.mxu0 0
        %2641 = vmatpush1.bf16.xpose.msra.mxu0 0
        %2642 = vmatprep.subr.bf16.mxu0 0
        %2643 = vmatpush1.bf16.xpose.msra.mxu0 0
        %2644 = vmatprep.subr.bf16.mxu0 0
        %2645 = vmatpush1.bf16.xpose.msra.mxu0 0
        %2646 = vmatprep.subr.bf16.mxu0 0
        %2647 = vmatpush1.bf16.xpose.msra.mxu0 0
        %2648 = vmatprep.subr.bf16.mxu0 0
        %2649 = vmatpush1.bf16.xpose.msra.mxu0 0
        %2650 = vmatprep.subr.bf16.mxu0 0
        %2651 = vmatpush1.bf16.xpose.msra.mxu0 0
        %2652 = vmatprep.subr.bf16.mxu0 0
        %2653 = vmatpush1.bf16.xpose.msra.mxu0 0
        %2654 = vmatprep.subr.bf16.mxu0 0
        %2655 = vmatpush1.bf16.xpose.msra.mxu0 0
        %2656 = vmatprep.subr.bf16.mxu0 0
        %2657 = vmatpush1.bf16.xpose.msra.mxu0 0
        %2658 = vmatprep.mubr.bf16.mxu0 0
        %2659 = vmatmul.mubr.bf16.gmra.mrb[0].mxu0 %v2621
        %v2660 = vpop.f32.mrb[0].mxu0
        %v2661 = vadd.f32 0.0, %v2660
        %v2662 = vpop.f32.mrb[0].mxu0
        %v2663 = vpop.f32.mrb[0].mxu0
        %v2664 = vpop.f32.mrb[0].mxu0
        %2665 = vdwg.mxu0
        %v2666 = vsel %vm1454, %v2611, -1e+30
        %v2667 = vsel %vm1455, %v2661, -1e+30
        %v2668 = vsel %vm1551, %v2666, -inf
        %2669 = vmax.xlane.f32.xlu0 %v2668
        %v2670 = vpop.xlane.xlu0 %2669
        %v2671 = vsel %vm1551, %v2667, -inf
        %2672 = vmax.xlane.f32.xlu0 %v2671
        %v2673 = vpop.xlane.xlu0 %2672
        %v2674 = vsub.f32 %v2666, %v2670
        %v2675 = vsub.f32 %v2667, %v2673
        %v2676 = vmul.f32 %v2674, 1.442695
        %v2677 = vpow.pop %v2676
        %v2678 = vmul.f32 %v2675, 1.442695
        %v2679 = vpow.pop %v2678
        %v2680 = vsel %vm1551, %v2677, 0.0
        %2681 = vadd.xlane.f32.xlu0 %v2680
        %v2682 = vpop.xlane.xlu0 %2681
        %v2683 = vsel %vm1551, %v2679, 0.0
        %2684 = vadd.xlane.f32.xlu0 %v2683
        %v2685 = vpop.xlane.xlu0 %2684
        %v2686 = vrcp.pop %v2682
        %v2687 = vrcp.pop %v2685
        %v2688 = vmul.f32 %v2677, %v2686
        %v2689 = vmul.f32 %v2679, %v2687
        %v2690 = vpack.c.bf16 %v2688, %v2688
        %v2691 = vpack.c.bf16 %v2689, %v2689
        %2692 = vrot.lane.b32.xlu0 %v1422, 108
        %v2693 = vpop.permute.xlu0 %2692
        %v2695 = vsel %vm1551, %v2690, 0
        %v2698 = vand.u32 %v2693, %v1582
        %2700 = vmatprep.subr.bf16.mxu0 0
        %2701 = vmatpush1.bf16.msra.mxu0 %v2698
        %2702 = vmatprep.subr.bf16.mxu0 0
        %2703 = vmatpush1.bf16.msra.mxu0 0
        %2704 = vmatprep.subr.bf16.mxu0 0
        %2705 = vmatpush1.bf16.msra.mxu0 0
        %2706 = vmatprep.subr.bf16.mxu0 0
        %2707 = vmatpush1.bf16.msra.mxu0 0
        %2708 = vmatprep.subr.bf16.mxu0 0
        %2709 = vmatpush1.bf16.msra.mxu0 0
        %2710 = vmatprep.subr.bf16.mxu0 0
        %2711 = vmatpush1.bf16.msra.mxu0 0
        %2712 = vmatprep.subr.bf16.mxu0 0
        %2713 = vmatpush1.bf16.msra.mxu0 0
        %2714 = vmatprep.subr.bf16.mxu0 0
        %2715 = vmatpush1.bf16.msra.mxu0 0
        %2716 = vmatprep.subr.bf16.mxu0 0
        %2717 = vmatpush1.bf16.msra.mxu0 0
        %2718 = vmatprep.subr.bf16.mxu0 0
        %2719 = vmatpush1.bf16.msra.mxu0 0
        %2720 = vmatprep.subr.bf16.mxu0 0
        %2721 = vmatpush1.bf16.msra.mxu0 0
        %2722 = vmatprep.subr.bf16.mxu0 0
        %2723 = vmatpush1.bf16.msra.mxu0 0
        %2724 = vmatprep.subr.bf16.mxu0 0
        %2725 = vmatpush1.bf16.msra.mxu0 0
        %2726 = vmatprep.subr.bf16.mxu0 0
        %2727 = vmatpush1.bf16.msra.mxu0 0
        %2728 = vmatprep.subr.bf16.mxu0 0
        %2729 = vmatpush1.bf16.msra.mxu0 0
        %2730 = vmatprep.subr.bf16.mxu0 0
        %2731 = vmatpush1.bf16.msra.mxu0 0
        %2732 = vmatprep.mubr.bf16.mxu0 0
        %2733 = vmatmul.mubr.bf16.gmra.mrb[0].mxu0 %v2695
        %v2734 = vpop.f32.mrb[0].mxu0
        %v2735 = vadd.f32 0.0, %v2734
        %v2736 = vpop.f32.mrb[0].mxu0
        %v2737 = vpop.f32.mrb[0].mxu0
        %v2738 = vpop.f32.mrb[0].mxu0
        %2739 = vdwg.mxu0
        %2740 = vrot.lane.b32.xlu0 %v1423, 108
        %v2741 = vpop.permute.xlu0 %2740
        %v2743 = vsel %vm1551, %v2691, 0
        %v2746 = vand.u32 %v2741, %v1582
        %2748 = vmatprep.subr.bf16.mxu0 0
        %2749 = vmatpush1.bf16.msra.mxu0 %v2746
        %2750 = vmatprep.subr.bf16.mxu0 0
        %2751 = vmatpush1.bf16.msra.mxu0 0
        %2752 = vmatprep.subr.bf16.mxu0 0
        %2753 = vmatpush1.bf16.msra.mxu0 0
        %2754 = vmatprep.subr.bf16.mxu0 0
        %2755 = vmatpush1.bf16.msra.mxu0 0
        %2756 = vmatprep.subr.bf16.mxu0 0
        %2757 = vmatpush1.bf16.msra.mxu0 0
        %2758 = vmatprep.subr.bf16.mxu0 0
        %2759 = vmatpush1.bf16.msra.mxu0 0
        %2760 = vmatprep.subr.bf16.mxu0 0
        %2761 = vmatpush1.bf16.msra.mxu0 0
        %2762 = vmatprep.subr.bf16.mxu0 0
        %2763 = vmatpush1.bf16.msra.mxu0 0
        %2764 = vmatprep.subr.bf16.mxu0 0
        %2765 = vmatpush1.bf16.msra.mxu0 0
        %2766 = vmatprep.subr.bf16.mxu0 0
        %2767 = vmatpush1.bf16.msra.mxu0 0
        %2768 = vmatprep.subr.bf16.mxu0 0
        %2769 = vmatpush1.bf16.msra.mxu0 0
        %2770 = vmatprep.subr.bf16.mxu0 0
        %2771 = vmatpush1.bf16.msra.mxu0 0
        %2772 = vmatprep.subr.bf16.mxu0 0
        %2773 = vmatpush1.bf16.msra.mxu0 0
        %2774 = vmatprep.subr.bf16.mxu0 0
        %2775 = vmatpush1.bf16.msra.mxu0 0
        %2776 = vmatprep.subr.bf16.mxu0 0
        %2777 = vmatpush1.bf16.msra.mxu0 0
        %2778 = vmatprep.subr.bf16.mxu0 0
        %2779 = vmatpush1.bf16.msra.mxu0 0
        %2780 = vmatprep.mubr.bf16.mxu0 0
        %2781 = vmatmul.mubr.bf16.gmra.mrb[0].mxu0 %v2743
        %v2782 = vpop.f32.mrb[0].mxu0
        %v2783 = vadd.f32 0.0, %v2782
        %v2784 = vpop.f32.mrb[0].mxu0
        %v2785 = vpop.f32.mrb[0].mxu0
        %v2786 = vpop.f32.mrb[0].mxu0
        %2787 = vdwg.mxu0
        %2788 = vrot.lane.b32.xlu0 %v1368, 104
        %v2789 = vpop.permute.xlu0 %2788
        %2790 = vrot.lane.b32.xlu0 %v1395, 104
        %v2791 = vpop.permute.xlu0 %2790
        %v2793 = vsel %vm1456, %v2789, 0
        %v2796 = vsel %vm1456, %v2791, 0
        %2798 = vmatprep.subr.bf16.mxu0 0
        %2799 = vmatpush1.bf16.xpose.msra.mxu0 %v2796
        %2800 = vmatprep.subr.bf16.mxu0 0
        %2801 = vmatpush1.bf16.xpose.msra.mxu0 0
        %2802 = vmatprep.subr.bf16.mxu0 0
        %2803 = vmatpush1.bf16.xpose.msra.mxu0 0
        %2804 = vmatprep.subr.bf16.mxu0 0
        %2805 = vmatpush1.bf16.xpose.msra.mxu0 0
        %2806 = vmatprep.subr.bf16.mxu0 0
        %2807 = vmatpush1.bf16.xpose.msra.mxu0 0
        %2808 = vmatprep.subr.bf16.mxu0 0
        %2809 = vmatpush1.bf16.xpose.msra.mxu0 0
        %2810 = vmatprep.subr.bf16.mxu0 0
        %2811 = vmatpush1.bf16.xpose.msra.mxu0 0
        %2812 = vmatprep.subr.bf16.mxu0 0
        %2813 = vmatpush1.bf16.xpose.msra.mxu0 0
        %2814 = vmatprep.subr.bf16.mxu0 0
        %2815 = vmatpush1.bf16.xpose.msra.mxu0 0
        %2816 = vmatprep.subr.bf16.mxu0 0
        %2817 = vmatpush1.bf16.xpose.msra.mxu0 0
        %2818 = vmatprep.subr.bf16.mxu0 0
        %2819 = vmatpush1.bf16.xpose.msra.mxu0 0
        %2820 = vmatprep.subr.bf16.mxu0 0
        %2821 = vmatpush1.bf16.xpose.msra.mxu0 0
        %2822 = vmatprep.subr.bf16.mxu0 0
        %2823 = vmatpush1.bf16.xpose.msra.mxu0 0
        %2824 = vmatprep.subr.bf16.mxu0 0
        %2825 = vmatpush1.bf16.xpose.msra.mxu0 0
        %2826 = vmatprep.subr.bf16.mxu0 0
        %2827 = vmatpush1.bf16.xpose.msra.mxu0 0
        %2828 = vmatprep.subr.bf16.mxu0 0
        %2829 = vmatpush1.bf16.xpose.msra.mxu0 0
        %2830 = vmatprep.mubr.bf16.mxu0 0
        %2831 = vmatmul.mubr.bf16.gmra.mrb[0].mxu0 %v2793
        %v2832 = vpop.f32.mrb[0].mxu0
        %v2833 = vadd.f32 0.0, %v2832
        %v2834 = vpop.f32.mrb[0].mxu0
        %v2835 = vpop.f32.mrb[0].mxu0
        %v2836 = vpop.f32.mrb[0].mxu0
        %2837 = vdwg.mxu0
        %2838 = vrot.lane.b32.xlu0 %v1369, 104
        %v2839 = vpop.permute.xlu0 %2838
        %2840 = vrot.lane.b32.xlu0 %v1396, 104
        %v2841 = vpop.permute.xlu0 %2840
        %v2843 = vsel %vm1456, %v2839, 0
        %v2846 = vsel %vm1456, %v2841, 0
        %2848 = vmatprep.subr.bf16.mxu0 0
        %2849 = vmatpush1.bf16.xpose.msra.mxu0 %v2846
        %2850 = vmatprep.subr.bf16.mxu0 0
        %2851 = vmatpush1.bf16.xpose.msra.mxu0 0
        %2852 = vmatprep.subr.bf16.mxu0 0
        %2853 = vmatpush1.bf16.xpose.msra.mxu0 0
        %2854 = vmatprep.subr.bf16.mxu0 0
        %2855 = vmatpush1.bf16.xpose.msra.mxu0 0
        %2856 = vmatprep.subr.bf16.mxu0 0
        %2857 = vmatpush1.bf16.xpose.msra.mxu0 0
        %2858 = vmatprep.subr.bf16.mxu0 0
        %2859 = vmatpush1.bf16.xpose.msra.mxu0 0
        %2860 = vmatprep.subr.bf16.mxu0 0
        %2861 = vmatpush1.bf16.xpose.msra.mxu0 0
        %2862 = vmatprep.subr.bf16.mxu0 0
        %2863 = vmatpush1.bf16.xpose.msra.mxu0 0
        %2864 = vmatprep.subr.bf16.mxu0 0
        %2865 = vmatpush1.bf16.xpose.msra.mxu0 0
        %2866 = vmatprep.subr.bf16.mxu0 0
        %2867 = vmatpush1.bf16.xpose.msra.mxu0 0
        %2868 = vmatprep.subr.bf16.mxu0 0
        %2869 = vmatpush1.bf16.xpose.msra.mxu0 0
        %2870 = vmatprep.subr.bf16.mxu0 0
        %2871 = vmatpush1.bf16.xpose.msra.mxu0 0
        %2872 = vmatprep.subr.bf16.mxu0 0
        %2873 = vmatpush1.bf16.xpose.msra.mxu0 0
        %2874 = vmatprep.subr.bf16.mxu0 0
        %2875 = vmatpush1.bf16.xpose.msra.mxu0 0
        %2876 = vmatprep.subr.bf16.mxu0 0
        %2877 = vmatpush1.bf16.xpose.msra.mxu0 0
        %2878 = vmatprep.subr.bf16.mxu0 0
        %2879 = vmatpush1.bf16.xpose.msra.mxu0 0
        %2880 = vmatprep.mubr.bf16.mxu0 0
        %2881 = vmatmul.mubr.bf16.gmra.mrb[0].mxu0 %v2843
        %v2882 = vpop.f32.mrb[0].mxu0
        %v2883 = vadd.f32 0.0, %v2882
        %v2884 = vpop.f32.mrb[0].mxu0
        %v2885 = vpop.f32.mrb[0].mxu0
        %v2886 = vpop.f32.mrb[0].mxu0
        %2887 = vdwg.mxu0
        %v2888 = vsel %vm1454, %v2833, -1e+30
        %v2889 = vsel %vm1455, %v2883, -1e+30
        %v2890 = vsel %vm1551, %v2888, -inf
        %2891 = vmax.xlane.f32.xlu0 %v2890
        %v2892 = vpop.xlane.xlu0 %2891
        %v2893 = vsel %vm1551, %v2889, -inf
        %2894 = vmax.xlane.f32.xlu0 %v2893
        %v2895 = vpop.xlane.xlu0 %2894
        %v2896 = vsub.f32 %v2888, %v2892
        %v2897 = vsub.f32 %v2889, %v2895
        %v2898 = vmul.f32 %v2896, 1.442695
        %v2899 = vpow.pop %v2898
        %v2900 = vmul.f32 %v2897, 1.442695
        %v2901 = vpow.pop %v2900
        %v2902 = vsel %vm1551, %v2899, 0.0
        %2903 = vadd.xlane.f32.xlu0 %v2902
        %v2904 = vpop.xlane.xlu0 %2903
        %v2905 = vsel %vm1551, %v2901, 0.0
        %2906 = vadd.xlane.f32.xlu0 %v2905
        %v2907 = vpop.xlane.xlu0 %2906
        %v2908 = vrcp.pop %v2904
        %v2909 = vrcp.pop %v2907
        %v2910 = vmul.f32 %v2899, %v2908
        %v2911 = vmul.f32 %v2901, %v2909
        %v2912 = vpack.c.bf16 %v2910, %v2910
        %v2913 = vpack.c.bf16 %v2911, %v2911
        %2914 = vrot.lane.b32.xlu0 %v1422, 104
        %v2915 = vpop.permute.xlu0 %2914
        %v2917 = vsel %vm1551, %v2912, 0
        %v2920 = vand.u32 %v2915, %v1582
        %2922 = vmatprep.subr.bf16.mxu0 0
        %2923 = vmatpush1.bf16.msra.mxu0 %v2920
        %2924 = vmatprep.subr.bf16.mxu0 0
        %2925 = vmatpush1.bf16.msra.mxu0 0
        %2926 = vmatprep.subr.bf16.mxu0 0
        %2927 = vmatpush1.bf16.msra.mxu0 0
        %2928 = vmatprep.subr.bf16.mxu0 0
        %2929 = vmatpush1.bf16.msra.mxu0 0
        %2930 = vmatprep.subr.bf16.mxu0 0
        %2931 = vmatpush1.bf16.msra.mxu0 0
        %2932 = vmatprep.subr.bf16.mxu0 0
        %2933 = vmatpush1.bf16.msra.mxu0 0
        %2934 = vmatprep.subr.bf16.mxu0 0
        %2935 = vmatpush1.bf16.msra.mxu0 0
        %2936 = vmatprep.subr.bf16.mxu0 0
        %2937 = vmatpush1.bf16.msra.mxu0 0
        %2938 = vmatprep.subr.bf16.mxu0 0
        %2939 = vmatpush1.bf16.msra.mxu0 0
        %2940 = vmatprep.subr.bf16.mxu0 0
        %2941 = vmatpush1.bf16.msra.mxu0 0
        %2942 = vmatprep.subr.bf16.mxu0 0
        %2943 = vmatpush1.bf16.msra.mxu0 0
        %2944 = vmatprep.subr.bf16.mxu0 0
        %2945 = vmatpush1.bf16.msra.mxu0 0
        %2946 = vmatprep.subr.bf16.mxu0 0
        %2947 = vmatpush1.bf16.msra.mxu0 0
        %2948 = vmatprep.subr.bf16.mxu0 0
        %2949 = vmatpush1.bf16.msra.mxu0 0
        %2950 = vmatprep.subr.bf16.mxu0 0
        %2951 = vmatpush1.bf16.msra.mxu0 0
        %2952 = vmatprep.subr.bf16.mxu0 0
        %2953 = vmatpush1.bf16.msra.mxu0 0
        %2954 = vmatprep.mubr.bf16.mxu0 0
        %2955 = vmatmul.mubr.bf16.gmra.mrb[0].mxu0 %v2917
        %v2956 = vpop.f32.mrb[0].mxu0
        %v2957 = vadd.f32 0.0, %v2956
        %v2958 = vpop.f32.mrb[0].mxu0
        %v2959 = vpop.f32.mrb[0].mxu0
        %v2960 = vpop.f32.mrb[0].mxu0
        %2961 = vdwg.mxu0
        %2962 = vrot.lane.b32.xlu0 %v1423, 104
        %v2963 = vpop.permute.xlu0 %2962
        %v2965 = vsel %vm1551, %v2913, 0
        %v2968 = vand.u32 %v2963, %v1582
        %2970 = vmatprep.subr.bf16.mxu0 0
        %2971 = vmatpush1.bf16.msra.mxu0 %v2968
        %2972 = vmatprep.subr.bf16.mxu0 0
        %2973 = vmatpush1.bf16.msra.mxu0 0
        %2974 = vmatprep.subr.bf16.mxu0 0
        %2975 = vmatpush1.bf16.msra.mxu0 0
        %2976 = vmatprep.subr.bf16.mxu0 0
        %2977 = vmatpush1.bf16.msra.mxu0 0
        %2978 = vmatprep.subr.bf16.mxu0 0
        %2979 = vmatpush1.bf16.msra.mxu0 0
        %2980 = vmatprep.subr.bf16.mxu0 0
        %2981 = vmatpush1.bf16.msra.mxu0 0
        %2982 = vmatprep.subr.bf16.mxu0 0
        %2983 = vmatpush1.bf16.msra.mxu0 0
        %2984 = vmatprep.subr.bf16.mxu0 0
        %2985 = vmatpush1.bf16.msra.mxu0 0
        %2986 = vmatprep.subr.bf16.mxu0 0
        %2987 = vmatpush1.bf16.msra.mxu0 0
        %2988 = vmatprep.subr.bf16.mxu0 0
        %2989 = vmatpush1.bf16.msra.mxu0 0
        %2990 = vmatprep.subr.bf16.mxu0 0
        %2991 = vmatpush1.bf16.msra.mxu0 0
        %2992 = vmatprep.subr.bf16.mxu0 0
        %2993 = vmatpush1.bf16.msra.mxu0 0
        %2994 = vmatprep.subr.bf16.mxu0 0
        %2995 = vmatpush1.bf16.msra.mxu0 0
        %2996 = vmatprep.subr.bf16.mxu0 0
        %2997 = vmatpush1.bf16.msra.mxu0 0
        %2998 = vmatprep.subr.bf16.mxu0 0
        %2999 = vmatpush1.bf16.msra.mxu0 0
        %3000 = vmatprep.subr.bf16.mxu0 0
        %3001 = vmatpush1.bf16.msra.mxu0 0
        %3002 = vmatprep.mubr.bf16.mxu0 0
        %3003 = vmatmul.mubr.bf16.gmra.mrb[0].mxu0 %v2965
        %v3004 = vpop.f32.mrb[0].mxu0
        %v3005 = vadd.f32 0.0, %v3004
        %v3006 = vpop.f32.mrb[0].mxu0
        %v3007 = vpop.f32.mrb[0].mxu0
        %v3008 = vpop.f32.mrb[0].mxu0
        %3009 = vdwg.mxu0
        %3010 = vrot.lane.b32.xlu0 %v1368, 100
        %v3011 = vpop.permute.xlu0 %3010
        %3012 = vrot.lane.b32.xlu0 %v1395, 100
        %v3013 = vpop.permute.xlu0 %3012
        %v3015 = vsel %vm1456, %v3011, 0
        %v3018 = vsel %vm1456, %v3013, 0
        %3020 = vmatprep.subr.bf16.mxu0 0
        %3021 = vmatpush1.bf16.xpose.msra.mxu0 %v3018
        %3022 = vmatprep.subr.bf16.mxu0 0
        %3023 = vmatpush1.bf16.xpose.msra.mxu0 0
        %3024 = vmatprep.subr.bf16.mxu0 0
        %3025 = vmatpush1.bf16.xpose.msra.mxu0 0
        %3026 = vmatprep.subr.bf16.mxu0 0
        %3027 = vmatpush1.bf16.xpose.msra.mxu0 0
        %3028 = vmatprep.subr.bf16.mxu0 0
        %3029 = vmatpush1.bf16.xpose.msra.mxu0 0
        %3030 = vmatprep.subr.bf16.mxu0 0
        %3031 = vmatpush1.bf16.xpose.msra.mxu0 0
        %3032 = vmatprep.subr.bf16.mxu0 0
        %3033 = vmatpush1.bf16.xpose.msra.mxu0 0
        %3034 = vmatprep.subr.bf16.mxu0 0
        %3035 = vmatpush1.bf16.xpose.msra.mxu0 0
        %3036 = vmatprep.subr.bf16.mxu0 0
        %3037 = vmatpush1.bf16.xpose.msra.mxu0 0
        %3038 = vmatprep.subr.bf16.mxu0 0
        %3039 = vmatpush1.bf16.xpose.msra.mxu0 0
        %3040 = vmatprep.subr.bf16.mxu0 0
        %3041 = vmatpush1.bf16.xpose.msra.mxu0 0
        %3042 = vmatprep.subr.bf16.mxu0 0
        %3043 = vmatpush1.bf16.xpose.msra.mxu0 0
        %3044 = vmatprep.subr.bf16.mxu0 0
        %3045 = vmatpush1.bf16.xpose.msra.mxu0 0
        %3046 = vmatprep.subr.bf16.mxu0 0
        %3047 = vmatpush1.bf16.xpose.msra.mxu0 0
        %3048 = vmatprep.subr.bf16.mxu0 0
        %3049 = vmatpush1.bf16.xpose.msra.mxu0 0
        %3050 = vmatprep.subr.bf16.mxu0 0
        %3051 = vmatpush1.bf16.xpose.msra.mxu0 0
        %3052 = vmatprep.mubr.bf16.mxu0 0
        %3053 = vmatmul.mubr.bf16.gmra.mrb[0].mxu0 %v3015
        %v3054 = vpop.f32.mrb[0].mxu0
        %v3055 = vadd.f32 0.0, %v3054
        %v3056 = vpop.f32.mrb[0].mxu0
        %v3057 = vpop.f32.mrb[0].mxu0
        %v3058 = vpop.f32.mrb[0].mxu0
        %3059 = vdwg.mxu0
        %3060 = vrot.lane.b32.xlu0 %v1369, 100
        %v3061 = vpop.permute.xlu0 %3060
        %3062 = vrot.lane.b32.xlu0 %v1396, 100
        %v3063 = vpop.permute.xlu0 %3062
        %v3065 = vsel %vm1456, %v3061, 0
        %v3068 = vsel %vm1456, %v3063, 0
        %3070 = vmatprep.subr.bf16.mxu0 0
        %3071 = vmatpush1.bf16.xpose.msra.mxu0 %v3068
        %3072 = vmatprep.subr.bf16.mxu0 0
        %3073 = vmatpush1.bf16.xpose.msra.mxu0 0
        %3074 = vmatprep.subr.bf16.mxu0 0
        %3075 = vmatpush1.bf16.xpose.msra.mxu0 0
        %3076 = vmatprep.subr.bf16.mxu0 0
        %3077 = vmatpush1.bf16.xpose.msra.mxu0 0
        %3078 = vmatprep.subr.bf16.mxu0 0
        %3079 = vmatpush1.bf16.xpose.msra.mxu0 0
        %3080 = vmatprep.subr.bf16.mxu0 0
        %3081 = vmatpush1.bf16.xpose.msra.mxu0 0
        %3082 = vmatprep.subr.bf16.mxu0 0
        %3083 = vmatpush1.bf16.xpose.msra.mxu0 0
        %3084 = vmatprep.subr.bf16.mxu0 0
        %3085 = vmatpush1.bf16.xpose.msra.mxu0 0
        %3086 = vmatprep.subr.bf16.mxu0 0
        %3087 = vmatpush1.bf16.xpose.msra.mxu0 0
        %3088 = vmatprep.subr.bf16.mxu0 0
        %3089 = vmatpush1.bf16.xpose.msra.mxu0 0
        %3090 = vmatprep.subr.bf16.mxu0 0
        %3091 = vmatpush1.bf16.xpose.msra.mxu0 0
        %3092 = vmatprep.subr.bf16.mxu0 0
        %3093 = vmatpush1.bf16.xpose.msra.mxu0 0
        %3094 = vmatprep.subr.bf16.mxu0 0
        %3095 = vmatpush1.bf16.xpose.msra.mxu0 0
        %3096 = vmatprep.subr.bf16.mxu0 0
        %3097 = vmatpush1.bf16.xpose.msra.mxu0 0
        %3098 = vmatprep.subr.bf16.mxu0 0
        %3099 = vmatpush1.bf16.xpose.msra.mxu0 0
        %3100 = vmatprep.subr.bf16.mxu0 0
        %3101 = vmatpush1.bf16.xpose.msra.mxu0 0
        %3102 = vmatprep.mubr.bf16.mxu0 0
        %3103 = vmatmul.mubr.bf16.gmra.mrb[0].mxu0 %v3065
        %v3104 = vpop.f32.mrb[0].mxu0
        %v3105 = vadd.f32 0.0, %v3104
        %v3106 = vpop.f32.mrb[0].mxu0
        %v3107 = vpop.f32.mrb[0].mxu0
        %v3108 = vpop.f32.mrb[0].mxu0
        %3109 = vdwg.mxu0
        %v3110 = vsel %vm1454, %v3055, -1e+30
        %v3111 = vsel %vm1455, %v3105, -1e+30
        %v3112 = vsel %vm1551, %v3110, -inf
        %3113 = vmax.xlane.f32.xlu0 %v3112
        %v3114 = vpop.xlane.xlu0 %3113
        %v3115 = vsel %vm1551, %v3111, -inf
        %3116 = vmax.xlane.f32.xlu0 %v3115
        %v3117 = vpop.xlane.xlu0 %3116
        %v3118 = vsub.f32 %v3110, %v3114
        %v3119 = vsub.f32 %v3111, %v3117
        %v3120 = vmul.f32 %v3118, 1.442695
        %v3121 = vpow.pop %v3120
        %v3122 = vmul.f32 %v3119, 1.442695
        %v3123 = vpow.pop %v3122
        %v3124 = vsel %vm1551, %v3121, 0.0
        %3125 = vadd.xlane.f32.xlu0 %v3124
        %v3126 = vpop.xlane.xlu0 %3125
        %v3127 = vsel %vm1551, %v3123, 0.0
        %3128 = vadd.xlane.f32.xlu0 %v3127
        %v3129 = vpop.xlane.xlu0 %3128
        %v3130 = vrcp.pop %v3126
        %v3131 = vrcp.pop %v3129
        %v3132 = vmul.f32 %v3121, %v3130
        %v3133 = vmul.f32 %v3123, %v3131
        %v3134 = vpack.c.bf16 %v3132, %v3132
        %v3135 = vpack.c.bf16 %v3133, %v3133
        %3136 = vrot.lane.b32.xlu0 %v1422, 100
        %v3137 = vpop.permute.xlu0 %3136
        %v3139 = vsel %vm1551, %v3134, 0
        %v3142 = vand.u32 %v3137, %v1582
        %3144 = vmatprep.subr.bf16.mxu0 0
        %3145 = vmatpush1.bf16.msra.mxu0 %v3142
        %3146 = vmatprep.subr.bf16.mxu0 0
        %3147 = vmatpush1.bf16.msra.mxu0 0
        %3148 = vmatprep.subr.bf16.mxu0 0
        %3149 = vmatpush1.bf16.msra.mxu0 0
        %3150 = vmatprep.subr.bf16.mxu0 0
        %3151 = vmatpush1.bf16.msra.mxu0 0
        %3152 = vmatprep.subr.bf16.mxu0 0
        %3153 = vmatpush1.bf16.msra.mxu0 0
        %3154 = vmatprep.subr.bf16.mxu0 0
        %3155 = vmatpush1.bf16.msra.mxu0 0
        %3156 = vmatprep.subr.bf16.mxu0 0
        %3157 = vmatpush1.bf16.msra.mxu0 0
        %3158 = vmatprep.subr.bf16.mxu0 0
        %3159 = vmatpush1.bf16.msra.mxu0 0
        %3160 = vmatprep.subr.bf16.mxu0 0
        %3161 = vmatpush1.bf16.msra.mxu0 0
        %3162 = vmatprep.subr.bf16.mxu0 0
        %3163 = vmatpush1.bf16.msra.mxu0 0
        %3164 = vmatprep.subr.bf16.mxu0 0
        %3165 = vmatpush1.bf16.msra.mxu0 0
        %3166 = vmatprep.subr.bf16.mxu0 0
        %3167 = vmatpush1.bf16.msra.mxu0 0
        %3168 = vmatprep.subr.bf16.mxu0 0
        %3169 = vmatpush1.bf16.msra.mxu0 0
        %3170 = vmatprep.subr.bf16.mxu0 0
        %3171 = vmatpush1.bf16.msra.mxu0 0
        %3172 = vmatprep.subr.bf16.mxu0 0
        %3173 = vmatpush1.bf16.msra.mxu0 0
        %3174 = vmatprep.subr.bf16.mxu0 0
        %3175 = vmatpush1.bf16.msra.mxu0 0
        %3176 = vmatprep.mubr.bf16.mxu0 0
        %3177 = vmatmul.mubr.bf16.gmra.mrb[0].mxu0 %v3139
        %v3178 = vpop.f32.mrb[0].mxu0
        %v3179 = vadd.f32 0.0, %v3178
        %v3180 = vpop.f32.mrb[0].mxu0
        %v3181 = vpop.f32.mrb[0].mxu0
        %v3182 = vpop.f32.mrb[0].mxu0
        %3183 = vdwg.mxu0
        %3184 = vrot.lane.b32.xlu0 %v1423, 100
        %v3185 = vpop.permute.xlu0 %3184
        %v3187 = vsel %vm1551, %v3135, 0
        %v3190 = vand.u32 %v3185, %v1582
        %3192 = vmatprep.subr.bf16.mxu0 0
        %3193 = vmatpush1.bf16.msra.mxu0 %v3190
        %3194 = vmatprep.subr.bf16.mxu0 0
        %3195 = vmatpush1.bf16.msra.mxu0 0
        %3196 = vmatprep.subr.bf16.mxu0 0
        %3197 = vmatpush1.bf16.msra.mxu0 0
        %3198 = vmatprep.subr.bf16.mxu0 0
        %3199 = vmatpush1.bf16.msra.mxu0 0
        %3200 = vmatprep.subr.bf16.mxu0 0
        %3201 = vmatpush1.bf16.msra.mxu0 0
        %3202 = vmatprep.subr.bf16.mxu0 0
        %3203 = vmatpush1.bf16.msra.mxu0 0
        %3204 = vmatprep.subr.bf16.mxu0 0
        %3205 = vmatpush1.bf16.msra.mxu0 0
        %3206 = vmatprep.subr.bf16.mxu0 0
        %3207 = vmatpush1.bf16.msra.mxu0 0
        %3208 = vmatprep.subr.bf16.mxu0 0
        %3209 = vmatpush1.bf16.msra.mxu0 0
        %3210 = vmatprep.subr.bf16.mxu0 0
        %3211 = vmatpush1.bf16.msra.mxu0 0
        %3212 = vmatprep.subr.bf16.mxu0 0
        %3213 = vmatpush1.bf16.msra.mxu0 0
        %3214 = vmatprep.subr.bf16.mxu0 0
        %3215 = vmatpush1.bf16.msra.mxu0 0
        %3216 = vmatprep.subr.bf16.mxu0 0
        %3217 = vmatpush1.bf16.msra.mxu0 0
        %3218 = vmatprep.subr.bf16.mxu0 0
        %3219 = vmatpush1.bf16.msra.mxu0 0
        %3220 = vmatprep.subr.bf16.mxu0 0
        %3221 = vmatpush1.bf16.msra.mxu0 0
        %3222 = vmatprep.subr.bf16.mxu0 0
        %3223 = vmatpush1.bf16.msra.mxu0 0
        %3224 = vmatprep.mubr.bf16.mxu0 0
        %3225 = vmatmul.mubr.bf16.gmra.mrb[0].mxu0 %v3187
        %v3226 = vpop.f32.mrb[0].mxu0
        %v3227 = vadd.f32 0.0, %v3226
        %v3228 = vpop.f32.mrb[0].mxu0
        %v3229 = vpop.f32.mrb[0].mxu0
        %v3230 = vpop.f32.mrb[0].mxu0
        %3231 = vdwg.mxu0
        %3234 = vrot.lane.b32.xlu0 %v1846, 4
        %v3235 = vpop.permute.xlu0 %3234
        %3236 = vrot.lane.b32.xlu0 %v1895, 4
        %v3237 = vpop.permute.xlu0 %3236
        %3242 = vrot.lane.b32.xlu0 %v2069, 8
        %v3243 = vpop.permute.xlu0 %3242
        %3244 = vrot.lane.b32.xlu0 %v2117, 8
        %v3245 = vpop.permute.xlu0 %3244
        %3250 = vrot.lane.b32.xlu0 %v2291, 12
        %v3251 = vpop.permute.xlu0 %3250
        %3252 = vrot.lane.b32.xlu0 %v2339, 12
        %v3253 = vpop.permute.xlu0 %3252
        %3258 = vrot.lane.b32.xlu0 %v2513, 16
        %v3259 = vpop.permute.xlu0 %3258
        %3260 = vrot.lane.b32.xlu0 %v2561, 16
        %v3261 = vpop.permute.xlu0 %3260
        %3266 = vrot.lane.b32.xlu0 %v2735, 20
        %v3267 = vpop.permute.xlu0 %3266
        %3268 = vrot.lane.b32.xlu0 %v2783, 20
        %v3269 = vpop.permute.xlu0 %3268
        %3274 = vrot.lane.b32.xlu0 %v2957, 24
        %v3275 = vpop.permute.xlu0 %3274
        %3276 = vrot.lane.b32.xlu0 %v3005, 24
        %v3277 = vpop.permute.xlu0 %3276
        %3282 = vrot.lane.b32.xlu0 %v3179, 28
        %v3283 = vpop.permute.xlu0 %3282
        %3284 = vrot.lane.b32.xlu0 %v3227, 28
        %v3285 = vpop.permute.xlu0 %3284
        %v3288 = vsel %vm1456, %v1621, %v3235
        %v3289 = vsel %vm1456, %v1667, %v3237
        %vm3290 = vcmask 64512
        %v3291 = vsel %vm3290, %v3288, %v3243
        %v3292 = vsel %vm3290, %v3289, %v3245
        %vm3293 = vcmask 97280
        %v3294 = vsel %vm3293, %v3291, %v3251
        %v3295 = vsel %vm3293, %v3292, %v3253
        %vm3296 = vcmask 130048
        %v3297 = vsel %vm3296, %v3294, %v3259
        %v3298 = vsel %vm3296, %v3295, %v3261
        %vm3299 = vcmask 162816
        %v3300 = vsel %vm3299, %v3297, %v3267
        %v3301 = vsel %vm3299, %v3298, %v3269
        %vm3302 = vcmask 195584
        %v3303 = vsel %vm3302, %v3300, %v3275
        %v3304 = vsel %vm3302, %v3301, %v3277
        %vm3305 = vcmask 228352
        %v3306 = vsel %vm3305, %v3303, %v3283
        %v3307 = vsel %vm3305, %v3304, %v3285
        %v3308 = vpack.c.bf16 %v3307, %v3306
        %s3309 = scalar_lea.vmem [#allocation7], 80
        %v3310 = vld [vmem:[%s3309] sm:$0xf]
        %v3311 = vld [vmem:[%s3309 + $0x4] sm:$0xf]
        %v3312 = vld [vmem:[%s3309 + $0x8] sm:$0xf]
        %v3313 = vld [vmem:[%s3309 + $0xc] sm:$0xf]
        %v3314 = vlaneseq
        %v3315 = vshrl.u32 %v3314, 7
        %v3316 = vsub.s32 0, %v3315
        %v3317 = vrot.slane %v524, %v3316
        %v3322 = vunpack.c.l.b16 %v3310
        %v3323 = vunpack.c.l.b16 %v3311
        %v3324 = vunpack.c.l.b16 %v3312
        %v3325 = vunpack.c.l.b16 %v3313
        %v3326 = vpack.c.b16 %v3323, %v3322
        %v3327 = vpack.c.b16 %v3325, %v3324
        %v3331 = vsel %vm549, %v3308, 0
        %3333 = vmatprep.subr.bf16.mxu0 0
        %3334 = vmatpush1.bf16.msra.mxu0 %v3326
        %3335 = vmatprep.subr.bf16.mxu0 0
        %3336 = vmatpush1.bf16.msra.mxu0 %v3327
        %3337 = vmatprep.subr.bf16.mxu0 0
        %3338 = vmatpush1.bf16.msra.mxu0 0
        %3339 = vmatprep.subr.bf16.mxu0 0
        %3340 = vmatpush1.bf16.msra.mxu0 0
        %3341 = vmatprep.subr.bf16.mxu0 0
        %3342 = vmatpush1.bf16.msra.mxu0 0
        %3343 = vmatprep.subr.bf16.mxu0 0
        %3344 = vmatpush1.bf16.msra.mxu0 0
        %3345 = vmatprep.subr.bf16.mxu0 0
        %3346 = vmatpush1.bf16.msra.mxu0 0
        %3347 = vmatprep.subr.bf16.mxu0 0
        %3348 = vmatpush1.bf16.msra.mxu0 0
        %3349 = vmatprep.subr.bf16.mxu0 0
        %3350 = vmatpush1.bf16.msra.mxu0 0
        %3351 = vmatprep.subr.bf16.mxu0 0
        %3352 = vmatpush1.bf16.msra.mxu0 0
        %3353 = vmatprep.subr.bf16.mxu0 0
        %3354 = vmatpush1.bf16.msra.mxu0 0
        %3355 = vmatprep.subr.bf16.mxu0 0
        %3356 = vmatpush1.bf16.msra.mxu0 0
        %3357 = vmatprep.subr.bf16.mxu0 0
        %3358 = vmatpush1.bf16.msra.mxu0 0
        %3359 = vmatprep.subr.bf16.mxu0 0
        %3360 = vmatpush1.bf16.msra.mxu0 0
        %3361 = vmatprep.subr.bf16.mxu0 0
        %3362 = vmatpush1.bf16.msra.mxu0 0
        %3363 = vmatprep.subr.bf16.mxu0 0
        %3364 = vmatpush1.bf16.msra.mxu0 0
        %3365 = vmatprep.mubr.bf16.mxu0 0
        %3366 = vmatmul.mubr.bf16.gmra.mrb[0].mxu0 %v3331
        %v3367 = vpop.f32.mrb[0].mxu0
        %v3368 = vadd.f32 %v3317, %v3367
        %v3369 = vpop.f32.mrb[0].mxu0
        %v3370 = vpop.f32.mrb[0].mxu0
        %v3371 = vadd.f32 %v3317, %v3370
        %v3372 = vpop.f32.mrb[0].mxu0
        %3373 = vdwg.mxu0
        %v3374 = vadd.f32 %v526, %v3368
        %v3375 = vadd.f32 %v527, %v3371
        %v3376 = vsel %vm549, %v3374, 0.0
        %3377 = vadd.xlane.f32.xlu0 %v3376
        %v3378 = vpop.xlane.xlu0 %3377
        %v3379 = vsel %vm549, %v3375, 0.0
        %3380 = vadd.xlane.f32.xlu0 %v3379
        %v3381 = vpop.xlane.xlu0 %3380
        %v3382 = vrcp.pop 32.0
        %v3383 = vmul.f32 %v3378, %v3382
        %v3384 = vmul.f32 %v3381, %v3382
        %v3385 = vsub.f32 %v3374, %v3383
        %v3386 = vsub.f32 %v3375, %v3384
        %v3387 = vmul.f32 %v3385, %v3385
        %v3388 = vmul.f32 %v3386, %v3386
        %v3389 = vsel %vm549, %v3387, 0.0
        %3390 = vadd.xlane.f32.xlu0 %v3389
        %v3391 = vpop.xlane.xlu0 %3390
        %v3392 = vsel %vm549, %v3388, 0.0
        %3393 = vadd.xlane.f32.xlu0 %v3392
        %v3394 = vpop.xlane.xlu0 %3393
        %v3395 = vmul.f32 %v3391, %v3382
        %v3396 = vmul.f32 %v3394, %v3382
        %v3397 = vadd.f32 %v3395, 1e-05
        %v3398 = vadd.f32 %v3396, 1e-05
        %v3399 = vrsqrt.pop %v3397
        %v3400 = vrsqrt.pop %v3398
        %v3401 = vmul.f32 %v3385, %v3399
        %v3402 = vmul.f32 %v3386, %v3400
        %v3403 = vlaneseq
        %v3404 = vshrl.u32 %v3403, 7
        %v3405 = vsub.s32 7, %v3404
        %v3406 = vrot.slane %v524, %v3405
        %v3407 = vmul.f32 %v3401, %v3406
        %v3408 = vmul.f32 %v3402, %v3406
        %v3409 = vlaneseq
        %v3410 = vshrl.u32 %v3409, 7
        %v3411 = vsub.s32 0, %v3410
        %v3412 = vrot.slane %v525, %v3411
        %v3413 = vadd.f32 %v3407, %v3412
        %v3414 = vadd.f32 %v3408, %v3412
        %v3415 = vpack.c.bf16 %v3414, %v3413
        %v3416 = vld [vmem:[#allocation8] sm:$0xf]
        %v3417 = vld [vmem:[#allocation8 + $0x4] sm:$0xf]
        %v3418 = vld [vmem:[#allocation8 + $0x8] sm:$0xf]
        %v3419 = vld [vmem:[#allocation8 + $0xc] sm:$0xf]
        %v3420 = vld [vmem:[%s7] sm:$0x1]
        %v3422 = vlaneseq
        %v3423 = vshrl.u32 %v3422, 7
        %v3424 = vsub.s32 0, %v3423
        %v3425 = vrot.slane %v3420, %v3424
        %v3431 = vunpack.c.l.b16 %v3416
        %v3432 = vunpack.c.l.b16 %v3417
        %v3433 = vunpack.c.l.b16 %v3418
        %v3434 = vunpack.c.l.b16 %v3419
        %v3435 = vpack.c.b16 %v3432, %v3431
        %v3436 = vpack.c.b16 %v3434, %v3433
        %v3440 = vsel %vm549, %v3415, 0
        %3442 = vmatprep.subr.bf16.mxu0 0
        %3443 = vmatpush1.bf16.msra.mxu0 %v3435
        %3444 = vmatprep.subr.bf16.mxu0 0
        %3445 = vmatpush1.bf16.msra.mxu0 %v3436
        %3446 = vmatprep.subr.bf16.mxu0 0
        %3447 = vmatpush1.bf16.msra.mxu0 0
        %3448 = vmatprep.subr.bf16.mxu0 0
        %3449 = vmatpush1.bf16.msra.mxu0 0
        %3450 = vmatprep.subr.bf16.mxu0 0
        %3451 = vmatpush1.bf16.msra.mxu0 0
        %3452 = vmatprep.subr.bf16.mxu0 0
        %3453 = vmatpush1.bf16.msra.mxu0 0
        %3454 = vmatprep.subr.bf16.mxu0 0
        %3455 = vmatpush1.bf16.msra.mxu0 0
        %3456 = vmatprep.subr.bf16.mxu0 0
        %3457 = vmatpush1.bf16.msra.mxu0 0
        %3458 = vmatprep.subr.bf16.mxu0 0
        %3459 = vmatpush1.bf16.msra.mxu0 0
        %3460 = vmatprep.subr.bf16.mxu0 0
        %3461 = vmatpush1.bf16.msra.mxu0 0
        %3462 = vmatprep.subr.bf16.mxu0 0
        %3463 = vmatpush1.bf16.msra.mxu0 0
        %3464 = vmatprep.subr.bf16.mxu0 0
        %3465 = vmatpush1.bf16.msra.mxu0 0
        %3466 = vmatprep.subr.bf16.mxu0 0
        %3467 = vmatpush1.bf16.msra.mxu0 0
        %3468 = vmatprep.subr.bf16.mxu0 0
        %3469 = vmatpush1.bf16.msra.mxu0 0
        %3470 = vmatprep.subr.bf16.mxu0 0
        %3471 = vmatpush1.bf16.msra.mxu0 0
        %3472 = vmatprep.subr.bf16.mxu0 0
        %3473 = vmatpush1.bf16.msra.mxu0 0
        %3474 = vmatprep.mubr.bf16.mxu0 0
        %3475 = vmatmul.mubr.bf16.gmra.mrb[0].mxu0 %v3440
        %v3476 = vpop.f32.mrb[0].mxu0
        %v3477 = vadd.f32 %v3425, %v3476
        %v3478 = vpop.f32.mrb[0].mxu0
        %v3479 = vpop.f32.mrb[0].mxu0
        %v3480 = vadd.f32 %v3425, %v3479
        %v3481 = vpop.f32.mrb[0].mxu0
        %3482 = vdwg.mxu0
        %v3483 = vmax.f32 %v3477, 0.0
        %v3484 = vmax.f32 %v3480, 0.0
        %v3485 = vpack.c.bf16 %v3484, %v3483
        %v3486 = vld [vmem:[#allocation10] sm:$0xf]
        %v3487 = vld [vmem:[#allocation10 + $0x4] sm:$0xf]
        %v3488 = vld [vmem:[#allocation10 + $0x8] sm:$0xf]
        %v3489 = vld [vmem:[#allocation10 + $0xc] sm:$0xf]
        %v3490 = vlaneseq
        %v3491 = vshrl.u32 %v3490, 7
        %v3492 = vsub.s32 1, %v3491
        %v3493 = vrot.slane %v525, %v3492
        %v3498 = vunpack.c.l.b16 %v3486
        %v3499 = vunpack.c.l.b16 %v3487
        %v3500 = vunpack.c.l.b16 %v3488
        %v3501 = vunpack.c.l.b16 %v3489
        %v3502 = vpack.c.b16 %v3499, %v3498
        %v3503 = vpack.c.b16 %v3501, %v3500
        %v3507 = vsel %vm549, %v3485, 0
        %3509 = vmatprep.subr.bf16.mxu0 0
        %3510 = vmatpush1.bf16.msra.mxu0 %v3502
        %3511 = vmatprep.subr.bf16.mxu0 0
        %3512 = vmatpush1.bf16.msra.mxu0 %v3503
        %3513 = vmatprep.subr.bf16.mxu0 0
        %3514 = vmatpush1.bf16.msra.mxu0 0
        %3515 = vmatprep.subr.bf16.mxu0 0
        %3516 = vmatpush1.bf16.msra.mxu0 0
        %3517 = vmatprep.subr.bf16.mxu0 0
        %3518 = vmatpush1.bf16.msra.mxu0 0
        %3519 = vmatprep.subr.bf16.mxu0 0
        %3520 = vmatpush1.bf16.msra.mxu0 0
        %3521 = vmatprep.subr.bf16.mxu0 0
        %3522 = vmatpush1.bf16.msra.mxu0 0
        %3523 = vmatprep.subr.bf16.mxu0 0
        %3524 = vmatpush1.bf16.msra.mxu0 0
        %3525 = vmatprep.subr.bf16.mxu0 0
        %3526 = vmatpush1.bf16.msra.mxu0 0
        %3527 = vmatprep.subr.bf16.mxu0 0
        %3528 = vmatpush1.bf16.msra.mxu0 0
        %3529 = vmatprep.subr.bf16.mxu0 0
        %3530 = vmatpush1.bf16.msra.mxu0 0
        %3531 = vmatprep.subr.bf16.mxu0 0
        %3532 = vmatpush1.bf16.msra.mxu0 0
        %3533 = vmatprep.subr.bf16.mxu0 0
        %3534 = vmatpush1.bf16.msra.mxu0 0
        %3535 = vmatprep.subr.bf16.mxu0 0
        %3536 = vmatpush1.bf16.msra.mxu0 0
        %3537 = vmatprep.subr.bf16.mxu0 0
        %3538 = vmatpush1.bf16.msra.mxu0 0
        %3539 = vmatprep.subr.bf16.mxu0 0
        %3540 = vmatpush1.bf16.msra.mxu0 0
        %3541 = vmatprep.mubr.bf16.mxu0 0
        %3542 = vmatmul.mubr.bf16.gmra.mrb[0].mxu0 %v3507
        %v3543 = vpop.f32.mrb[0].mxu0
        %v3544 = vadd.f32 %v3493, %v3543
        %v3545 = vpop.f32.mrb[0].mxu0
        %v3546 = vpop.f32.mrb[0].mxu0
        %v3547 = vadd.f32 %v3493, %v3546
        %v3548 = vpop.f32.mrb[0].mxu0
        %3549 = vdwg.mxu0
        %v3550 = vadd.f32 %v3413, %v3544
        %v3551 = vadd.f32 %v3414, %v3547
        %v3552 = vsel %vm549, %v3550, 0.0
        %3553 = vadd.xlane.f32.xlu0 %v3552
        %v3554 = vpop.xlane.xlu0 %3553
        %v3555 = vsel %vm549, %v3551, 0.0
        %3556 = vadd.xlane.f32.xlu0 %v3555
        %v3557 = vpop.xlane.xlu0 %3556
        %v3558 = vmul.f32 %v3554, %v3382
        %v3559 = vmul.f32 %v3557, %v3382
        %v3560 = vsub.f32 %v3550, %v3558
        %v3561 = vsub.f32 %v3551, %v3559
        %v3562 = vmul.f32 %v3560, %v3560
        %v3563 = vmul.f32 %v3561, %v3561
        %v3564 = vsel %vm549, %v3562, 0.0
        %3565 = vadd.xlane.f32.xlu0 %v3564
        %v3566 = vpop.xlane.xlu0 %3565
        %v3567 = vsel %vm549, %v3563, 0.0
        %3568 = vadd.xlane.f32.xlu0 %v3567
        %v3569 = vpop.xlane.xlu0 %3568
        %v3570 = vmul.f32 %v3566, %v3382
        %v3571 = vmul.f32 %v3569, %v3382
        %v3572 = vadd.f32 %v3570, 1e-05
        %v3573 = vadd.f32 %v3571, 1e-05
        %v3574 = vrsqrt.pop %v3572
        %v3575 = vrsqrt.pop %v3573
        %v3576 = vmul.f32 %v3560, %v3574
        %v3577 = vmul.f32 %v3561, %v3575
        %v3578 = vlaneseq
        %v3579 = vshrl.u32 %v3578, 7
        %v3580 = vsub.s32 2, %v3579
        %v3581 = vrot.slane %v525, %v3580
        %v3582 = vmul.f32 %v3576, %v3581
        %v3583 = vmul.f32 %v3577, %v3581
        %v3584 = vlaneseq
        %v3585 = vshrl.u32 %v3584, 7
        %v3586 = vsub.s32 3, %v3585
        %v3587 = vrot.slane %v525, %v3586
        %v3588 = vadd.f32 %v3582, %v3587
        %v3589 = vadd.f32 %v3583, %v3587
        %v3590 = vtanh.pop %v3588
        %v3591 = vtanh.pop %v3589
        %v3592 = vlaneseq
        %v3593 = vshrl.u32 %v3592, 7
        %v3594 = vsub.s32 4, %v3593
        %v3595 = vrot.slane %v525, %v3594
        %v3596 = vmul.f32 %v3590, %v3595
        %v3597 = vmul.f32 %v3591, %v3595
        %v3598 = vsel %vm549, %v3596, 0.0
        %3599 = vadd.xlane.f32.xlu0 %v3598
        %v3600 = vpop.xlane.xlu0 %3599
        %v3601 = vsel %vm549, %v3597, 0.0
        %3602 = vadd.xlane.f32.xlu0 %v3601
        %v3603 = vpop.xlane.xlu0 %3602
        %v3604 = vsel %vm1430, 0.0, -103.616325
        %v3605 = vsel %vm1431, 0.0, -103.616325
        %v3608 = vlaneseq
        %v3609 = vshrl.u32 %v3608, 7
        %v3610 = vsub.s32 0, %v3609
        %v3611 = vrot.slane %v3604, %v3610
        %v3612 = vlaneseq
        %v3613 = vshrl.u32 %v3612, 7
        %v3614 = vsub.s32 0, %v3613
        %v3615 = vrot.slane %v3605, %v3614
        %3617 = vbcast.lane.b32.xlu0 %v3611, 256
        %v3618 = vpop.permute.xlu0 %3617
        %3620 = vbcast.lane.b32.xlu0 %v3615, 256
        %v3621 = vpop.permute.xlu0 %3620
        %v3624 = vadd.f32 %v3600, %v3618
        %v3625 = vadd.f32 %v3603, %v3621
        %3628 = vset.pattern.permute.xlu0 0
        %3629 = vperm.xlu0 %3628, %v3624
        %v3630 = vpop.permute.xlu0 %3629
        %3631 = vset.pattern.permute.xlu0 0
        %3632 = vperm.xlu0 %3631, %v3625
        %v3633 = vpop.permute.xlu0 %3632
        %v3634 = vlaneseq
        %v3635 = vand.u32 %v3634, 127
        %v3636 = vlaneseq
        %v3637 = vshrl.u32 %v3636, 7
        %v3638 = vsub.s32 %v3635, %v3637
        %v3639 = vrot.slane %v3630, %v3638
        %v3640 = vlaneseq
        %v3641 = vshrl.u32 %v3640, 7
        %v3642 = vsub.s32 %v3635, %v3641
        %v3643 = vrot.slane %v3633, %v3642
        %v3644 = vsel %vm720, %v3643, %v3639
        %vm3646 = vcmask 58368
        %v3647 = vsel %vm3646, %v3644, -inf
        %3648 = vmax.xlane.f32.xlu0 %v3647
        %v3649 = vpop.xlane.xlu0 %3648
        %v3651 = vlaneseq
        %v3652 = vshrl.u32 %v3651, 7
        %v3653 = vsub.s32 0, %v3652
        %v3654 = vrot.slane %v3649, %v3653
        %v3655 = vlaneseq
        %v3656 = vshrl.u32 %v3655, 7
        %v3657 = vsub.s32 1, %v3656
        %v3658 = vrot.slane %v3649, %v3657
        %v3661 = vsub.f32 %v3624, %v3654
        %v3662 = vsub.f32 %v3625, %v3658
        %v3663 = vmul.f32 %v3661, 1.442695
        %v3664 = vpow.pop %v3663
        %v3665 = vmul.f32 %v3662, 1.442695
        %v3666 = vpow.pop %v3665
        %3669 = vset.pattern.permute.xlu0 0
        %3670 = vperm.xlu0 %3669, %v3664
        %v3671 = vpop.permute.xlu0 %3670
        %3672 = vset.pattern.permute.xlu0 0
        %3673 = vperm.xlu0 %3672, %v3666
        %v3674 = vpop.permute.xlu0 %3673
        %v3675 = vlaneseq
        %v3676 = vshrl.u32 %v3675, 7
        %v3677 = vsub.s32 %v3635, %v3676
        %v3678 = vrot.slane %v3671, %v3677
        %v3679 = vlaneseq
        %v3680 = vshrl.u32 %v3679, 7
        %v3681 = vsub.s32 %v3635, %v3680
        %v3682 = vrot.slane %v3674, %v3681
        %v3683 = vsel %vm720, %v3682, %v3678
        %v3685 = vsel %vm3646, %v3683, 0.0
        %3686 = vadd.xlane.f32.xlu0 %v3685
        %v3687 = vpop.xlane.xlu0 %3686
        %v3688 = vlog2.pop %v3687
        %v3689 = vmul.f32 %v3688, 0.6931472
        %v3691 = vlaneseq
        %v3692 = vshrl.u32 %v3691, 7
        %v3693 = vsub.s32 0, %v3692
        %v3694 = vrot.slane %v3689, %v3693
        %v3695 = vlaneseq
        %v3696 = vshrl.u32 %v3695, 7
        %v3697 = vsub.s32 1, %v3696
        %v3698 = vrot.slane %v3689, %v3697
        %v3701 = vsub.f32 %v3661, %v3694
        %v3702 = vsub.f32 %v3662, %v3698
        %3705 = vset.pattern.permute.xlu0 0
        %3706 = vperm.xlu0 %3705, %v3701
        %v3707 = vpop.permute.xlu0 %3706
        %3708 = vset.pattern.permute.xlu0 0
        %3709 = vperm.xlu0 %3708, %v3702
        %v3710 = vpop.permute.xlu0 %3709
        %v3711 = vlaneseq
        %v3712 = vshrl.u32 %v3711, 7
        %v3713 = vsub.s32 %v3635, %v3712
        %v3714 = vrot.slane %v3707, %v3713
        %v3715 = vlaneseq
        %v3716 = vshrl.u32 %v3715, 7
        %v3717 = vsub.s32 %v3635, %v3716
        %v3718 = vrot.slane %v3710, %v3717
        %vm3721 = vcmask 57344
        %3722 = vst.msk [vmem:[%s507] sm:$0x1] %vm3721, %v3714
        %3723 = vst.msk [vmem:[%s507 + $0x1] sm:$0x1] %vm3721, %v3718
        %s3724 = sand.u32 %s270, 1
        %s3725 = scalar_lea.sflag [#allocation4], %s3724
        %s3726 = sand.u32 %s270, 1
        %s3727 = smul.addr %s3726, 2
        %s3728 = scalar_lea.vmem [#allocation13], %s3727
        // Predicated region
        $region85: #{tpu_custom_call.1} parent=59 // pred_check
          %p3729 = pneg %p280
        $region86: #{tpu_custom_call.1} parent=59 // pred_check_branch
          %3731 = sbr.rel (%p3729) target = $region88
        $region87: #{tpu_custom_call.1} parent=59 // pred_region
          %s3732 = smul.u32 2, %s32
          %s3734 = ssub.s32 32, 32
          %3735 = vsyncadd %s3725, %s3734
          %s3736 = smul.addr %s3732, 16
          %s3737 = scalar_lea.hbm %s10, %s3736
          %s3738 = sshll.u32 %s3728, 4
          %s3739 = int_to_ptr.vmem [resolvable:$true] %s3738
          %3744 = dma.vmem_to_hbm [thread:$0]  %s3739, 32, %s3737, %s3725, 16, 16, 1
        $region88: #{tpu_custom_call.1} parent=59 // pred_fallthru
          _
      $region60: #{tpu_custom_call.1} parent=5 // pred_fallthru
        _
      %p3745 = scmp.le.s32.totalorder 2, %s27
      // Predicated region
      $region89: #{tpu_custom_call.1} parent=5 // pred_check
        %p3746 = pneg %p3745
      $region90: #{tpu_custom_call.1} parent=5 // pred_check_branch
        %3748 = sbr.rel (%p3746) target = $region92
      $region91: #{tpu_custom_call.1} parent=5 // pred_region
        %s3749 = ssub.s32 %s27, 2
        // Predicated region
        $region93: #{tpu_custom_call.1} parent=91 // pred_check
          %p3750 = pneg %p286
        $region94: #{tpu_custom_call.1} parent=91 // pred_check_branch
          %3752 = sbr.rel (%p3750) target = $region96
        $region95: #{tpu_custom_call.1} parent=91 // pred_region
          %s3753 = sand.u32 %s271, 1
          %s3754 = scalar_lea.sflag [#allocation4], %s3753
          %s3755 = sand.u32 %s271, 1
          %s3756 = smul.addr %s3755, 2
          %s3757 = scalar_lea.vmem [#allocation13], %s3756
          %3758 = dma.done %s3754, 32
        $region96: #{tpu_custom_call.1} parent=91 // pred_fallthru
          _
      $region92: #{tpu_custom_call.1} parent=5 // pred_fallthru
        _
    $region6: #{tpu_custom_call.1} parent=1 // loop_footer
      %s31 = sadd.s32 1, %s27
    $region7: #{tpu_custom_call.1} parent=1 // loop_footer_branch
      %26 = sbr.rel target = $region3
    $region8: #{tpu_custom_call.1} parent=1 // loop_exit
      _
    %3759 = vsyncpa [#allocation3], 1
    %s3760 = scalar_lea.sflag [#allocation3], 1
    %3761 = vsyncpa %s3760, 1
    %3762 = vsyncpa [#allocation6], 1
    %s3763 = scalar_lea.sflag [#allocation6], 1
    %3764 = vsyncpa %s3763, 1
    %3765 = vsyncpa [#allocation9], 1
    %3766 = vsyncpa [#allocation12], 1
    %3767 = vsyncpa [#allocation4], 1
    %s3768 = scalar_lea.sflag [#allocation4], 1
    %3769 = vsyncpa %s3768, 1

// kernel: tpu_custom_call.1
$region0: #{tpu_custom_call.1}
  #allocation0 [shape = 'u32[]', space=smem, size = 0x4, offset = 0x4, fixed_abs, tag = 'smem constant byte address 0x4 - core index']
  #allocation1 [shape = 'u32[144,128]{1,0:T(1,128)}', space=vmem, size = 0x12000, scoped, tag = 'internal scratch']
  %s0 = inlined_call_operand.vmem [shape: f32[4,8,32], index: 0, kind: input, shape index: {}]
  %s1 = inlined_call_operand.hbm [shape: f32[4,1,32], index: 1, kind: input, shape index: {}]
  %s2 = inlined_call_operand.vmem [shape: f32[4,8,1], index: 2, kind: input, shape index: {}]
  %s3 = inlined_call_operand.hbm [shape: f32[4,1,9], index: 3, kind: input, shape index: {}]
  %s4 = inlined_call_operand.hbm [shape: bf16[6,32,32], index: 4, kind: input, shape index: {}]
  %s5 = inlined_call_operand.hbm [shape: bf16[32,32], index: 5, kind: input, shape index: {}]
  %s6 = inlined_call_operand.hbm [shape: bf16[32,32], index: 6, kind: input, shape index: {}]
  %s7 = inlined_call_operand.vmem [shape: f32[1,32], index: 7, kind: input, shape index: {}]
  %s8 = inlined_call_operand.hbm [shape: f32[13,32], index: 8, kind: input, shape index: {}]
  %s9 = inlined_call_operand.vmem [shape: f32[32,32], index: 9, kind: input, shape index: {}]
  %s10 = inlined_call_operand.hbm [shape: f32[4,1,8], index: 10, kind: output, shape index: {}]
  %s11 = sld [smem:[#allocation0]]
  $region97: #{tpu_custom_call.1} parent=0
    _
  %s13 = ssub.s32 1, %s11
  %s14 = scalar_select 0, %s13, %s11
  $region1: #{tpu_custom_call.1} parent=0
    #allocation2 [shape = 'u8[2048]{0}', space=vmem, size = 0x800, scoped, tag = 'input window, operand 1']
    #allocation3 [shape = 's32[2]{0}', space=sflag, size = 0x8, scoped, tag = 'scoped memory for tpu_custom_call.1']
    #allocation4 [shape = 's32[2]{0}', space=sflag, size = 0x8, scoped, tag = 'scoped memory for tpu_custom_call.1']
    #allocation5 [shape = 'u8[2048]{0}', space=vmem, size = 0x800, scoped, tag = 'input window, operand 3']
    #allocation6 [shape = 's32[2]{0}', space=sflag, size = 0x8, scoped, tag = 'scoped memory for tpu_custom_call.1']
    #allocation7 [shape = 'u8[49152]{0}', space=vmem, size = 0xc000, scoped, tag = 'input window, operand 4, single buffered']
    #allocation8 [shape = 'u8[8192]{0}', space=vmem, size = 0x2000, scoped, tag = 'input window, operand 5, single buffered']
    #allocation9 [shape = 's32[1]{0}', space=sflag, size = 0x4, scoped, tag = 'scoped memory for tpu_custom_call.1']
    #allocation10 [shape = 'u8[8192]{0}', space=vmem, size = 0x2000, scoped, tag = 'input window, operand 6, single buffered']
    #allocation11 [shape = 'u8[8192]{0}', space=vmem, size = 0x2000, scoped, tag = 'input window, operand 8, single buffered']
    #allocation12 [shape = 's32[1]{0}', space=sflag, size = 0x4, scoped, tag = 'scoped memory for tpu_custom_call.1']
    #allocation13 [shape = 'u8[2048]{0}', space=vmem, size = 0x800, scoped, tag = 'output window, operand 0']
    %15 = vsyncpa [#allocation3], 0
    %s16 = scalar_lea.sflag [#allocation3], 1
    %17 = vsyncpa %s16, 0
    %18 = vsyncpa [#allocation6], 0
    %s19 = scalar_lea.sflag [#allocation6], 1
    %20 = vsyncpa %s19, 0
    %21 = vsyncpa [#allocation9], 0
    %22 = vsyncpa [#allocation12], 0
    %23 = vsyncpa [#allocation4], 0
    %s24 = scalar_lea.sflag [#allocation4], 1
    %25 = vsyncpa %s24, 0
    loop: start=0, step=1, limit=4
    $region2: #{tpu_custom_call.1} parent=1 // loop_pre_header
      _
    $region3: #{tpu_custom_call.1} parent=1 // loop_header
      %s27 = sphi 0, %s31
      %p28 = scmp.ge.s32.totalorder %s27, 4
      %s37 = sphi 0, %s39
      %s40 = sphi 0, %s37
      %s41 = sphi 0, %s40
      %s57 = sphi 0, %s41
      %s63 = sphi 0, %s65
      %s66 = sphi 0, %s63
      %s67 = sphi 0, %s66
      %s83 = sphi 0, %s67
      %s89 = sphi 0, %s91
      %s92 = sphi 0, %s89
      %s93 = sphi 0, %s92
      %s109 = sphi 0, %s93
      %s115 = sphi 0, %s117
      %s118 = sphi 0, %s115
      %s119 = sphi 0, %s118
      %s135 = sphi 0, %s119
      %s139 = sphi 0, %s139
      %s141 = sphi 0, %s139
      %s142 = sphi 0, %s141
      %s156 = sphi 0, %s142
      %s160 = sphi 0, %s160
      %s162 = sphi 0, %s160
      %s163 = sphi 0, %s162
      %s177 = sphi 0, %s163
      %s181 = sphi 0, %s181
      %s183 = sphi 0, %s181
      %s184 = sphi 0, %s183
      %s198 = sphi 0, %s184
      %s202 = sphi 0, %s202
      %s204 = sphi 0, %s202
      %s205 = sphi 0, %s204
      %s219 = sphi 0, %s205
      %s223 = sphi 0, %s223
      %s225 = sphi 0, %s223
      %s226 = sphi 0, %s225
      %s240 = sphi 0, %s226
      %s244 = sphi 0, %s244
      %s246 = sphi 0, %s244
      %s247 = sphi 0, %s246
      %s261 = sphi 0, %s247
      %s267 = sphi 0, %s269
      %s270 = sphi 0, %s267
      %s271 = sphi 0, %s270
      %s287 = sphi 0, %s271
    $region4: #{tpu_custom_call.1} parent=1 // loop_header_branch
      %30 = sbr.rel (%p28) target = $region8
    $region5: #{tpu_custom_call.1} parent=1 // loop_body
      %s32 = ssub.s32 %s27, 1
      %s33 = ssub.s32 %s27, 2
      %s34 = sadd.s32 %s27, 1
      %s35 = ssub.s32 %s27, %s34
      %p36 = scmp.eq.s32.totalorder %s35, 0
      %s38 = sadd.s32 %s37, 1
      %s39 = scalar_select %p36, %s37, %s38
      %p42 = pneg %p36
      %p43 = scmp.eq.s32.totalorder %s27, 1
      %p44 = por %p42, %p43
      %p45 = scmp.ne.s32.totalorder %s37, %s40
      %p46 = scmp.eq.s32.totalorder %s27, 0
      %p47 = por %p45, %p46
      %p48 = scmp.ne.s32.totalorder %s37, %s40
      %p49 = scmp.eq.s32.totalorder %s32, 1
      %p50 = por %p48, %p49
      %p51 = scmp.ne.s32.totalorder %s40, %s41
      %p52 = scmp.eq.s32.totalorder %s32, 0
      %p53 = por %p51, %p52
      %p54 = scmp.ne.s32.totalorder %s40, %s41
      %p55 = scmp.eq.s32.totalorder %s33, 1
      %p56 = por %p54, %p55
      %p58 = scmp.ne.s32.totalorder %s41, %s57
      %p59 = scmp.eq.s32.totalorder %s33, 0
      %p60 = por %p58, %p59
      %s61 = ssub.s32 %s27, %s34
      %p62 = scmp.eq.s32.totalorder %s61, 0
      %s64 = sadd.s32 %s63, 1
      %s65 = scalar_select %p62, %s63, %s64
      %p68 = pneg %p62
      %p69 = scmp.eq.s32.totalorder %s27, 1
      %p70 = por %p68, %p69
      %p71 = scmp.ne.s32.totalorder %s63, %s66
      %p72 = scmp.eq.s32.totalorder %s27, 0
      %p73 = por %p71, %p72
      %p74 = scmp.ne.s32.totalorder %s63, %s66
      %p75 = scmp.eq.s32.totalorder %s32, 1
      %p76 = por %p74, %p75
      %p77 = scmp.ne.s32.totalorder %s66, %s67
      %p78 = scmp.eq.s32.totalorder %s32, 0
      %p79 = por %p77, %p78
      %p80 = scmp.ne.s32.totalorder %s66, %s67
      %p81 = scmp.eq.s32.totalorder %s33, 1
      %p82 = por %p80, %p81
      %p84 = scmp.ne.s32.totalorder %s67, %s83
      %p85 = scmp.eq.s32.totalorder %s33, 0
      %p86 = por %p84, %p85
      %s87 = ssub.s32 %s27, %s34
      %p88 = scmp.eq.s32.totalorder %s87, 0
      %s90 = sadd.s32 %s89, 1
      %s91 = scalar_select %p88, %s89, %s90
      %p94 = pneg %p88
      %p95 = scmp.eq.s32.totalorder %s27, 1
      %p96 = por %p94, %p95
      %p97 = scmp.ne.s32.totalorder %s89, %s92
      %p98 = scmp.eq.s32.totalorder %s27, 0
      %p99 = por %p97, %p98
      %p100 = scmp.ne.s32.totalorder %s89, %s92
      %p101 = scmp.eq.s32.totalorder %s32, 1
      %p102 = por %p100, %p101
      %p103 = scmp.ne.s32.totalorder %s92, %s93
      %p104 = scmp.eq.s32.totalorder %s32, 0
      %p105 = por %p103, %p104
      %p106 = scmp.ne.s32.totalorder %s92, %s93
      %p107 = scmp.eq.s32.totalorder %s33, 1
      %p108 = por %p106, %p107
      %p110 = scmp.ne.s32.totalorder %s93, %s109
      %p111 = scmp.eq.s32.totalorder %s33, 0
      %p112 = por %p110, %p111
      %s113 = ssub.s32 %s27, %s34
      %p114 = scmp.eq.s32.totalorder %s113, 0
      %s116 = sadd.s32 %s115, 1
      %s117 = scalar_select %p114, %s115, %s116
      %p120 = pneg %p114
      %p121 = scmp.eq.s32.totalorder %s27, 1
      %p122 = por %p120, %p121
      %p123 = scmp.ne.s32.totalorder %s115, %s118
      %p124 = scmp.eq.s32.totalorder %s27, 0
      %p125 = por %p123, %p124
      %p126 = scmp.ne.s32.totalorder %s115, %s118
      %p127 = scmp.eq.s32.totalorder %s32, 1
      %p128 = por %p126, %p127
      %p129 = scmp.ne.s32.totalorder %s118, %s119
      %p130 = scmp.eq.s32.totalorder %s32, 0
      %p131 = por %p129, %p130
      %p132 = scmp.ne.s32.totalorder %s118, %s119
      %p133 = scmp.eq.s32.totalorder %s33, 1
      %p134 = por %p132, %p133
      %p136 = scmp.ne.s32.totalorder %s119, %s135
      %p137 = scmp.eq.s32.totalorder %s33, 0
      %p138 = por %p136, %p137
      %s140 = sadd.s32 %s139, 1
      %p143 = scmp.eq.s32.totalorder %s27, 1
      %p144 = scmp.ne.s32.totalorder %s139, %s141
      %p145 = scmp.eq.s32.totalorder %s27, 0
      %p146 = por %p144, %p145
      %p147 = scmp.ne.s32.totalorder %s139, %s141
      %p148 = scmp.eq.s32.totalorder %s32, 1
      %p149 = por %p147, %p148
      %p150 = scmp.ne.s32.totalorder %s141, %s142
      %p151 = scmp.eq.s32.totalorder %s32, 0
      %p152 = por %p150, %p151
      %p153 = scmp.ne.s32.totalorder %s141, %s142
      %p154 = scmp.eq.s32.totalorder %s33, 1
      %p155 = por %p153, %p154
      %p157 = scmp.ne.s32.totalorder %s142, %s156
      %p158 = scmp.eq.s32.totalorder %s33, 0
      %p159 = por %p157, %p158
      %s161 = sadd.s32 %s160, 1
      %p164 = scmp.eq.s32.totalorder %s27, 1
      %p165 = scmp.ne.s32.totalorder %s160, %s162
      %p166 = scmp.eq.s32.totalorder %s27, 0
      %p167 = por %p165, %p166
      %p168 = scmp.ne.s32.totalorder %s160, %s162
      %p169 = scmp.eq.s32.totalorder %s32, 1
      %p170 = por %p168, %p169
      %p171 = scmp.ne.s32.totalorder %s162, %s163
      %p172 = scmp.eq.s32.totalorder %s32, 0
      %p173 = por %p171, %p172
      %p174 = scmp.ne.s32.totalorder %s162, %s163
      %p175 = scmp.eq.s32.totalorder %s33, 1
      %p176 = por %p174, %p175
      %p178 = scmp.ne.s32.totalorder %s163, %s177
      %p179 = scmp.eq.s32.totalorder %s33, 0
      %p180 = por %p178, %p179
      %s182 = sadd.s32 %s181, 1
      %p185 = scmp.eq.s32.totalorder %s27, 1
      %p186 = scmp.ne.s32.totalorder %s181, %s183
      %p187 = scmp.eq.s32.totalorder %s27, 0
      %p188 = por %p186, %p187
      %p189 = scmp.ne.s32.totalorder %s181, %s183
      %p190 = scmp.eq.s32.totalorder %s32, 1
      %p191 = por %p189, %p190
      %p192 = scmp.ne.s32.totalorder %s183, %s184
      %p193 = scmp.eq.s32.totalorder %s32, 0
      %p194 = por %p192, %p193
      %p195 = scmp.ne.s32.totalorder %s183, %s184
      %p196 = scmp.eq.s32.totalorder %s33, 1
      %p197 = por %p195, %p196
      %p199 = scmp.ne.s32.totalorder %s184, %s198
      %p200 = scmp.eq.s32.totalorder %s33, 0
      %p201 = por %p199, %p200
      %s203 = sadd.s32 %s202, 1
      %p206 = scmp.eq.s32.totalorder %s27, 1
      %p207 = scmp.ne.s32.totalorder %s202, %s204
      %p208 = scmp.eq.s32.totalorder %s27, 0
      %p209 = por %p207, %p208
      %p210 = scmp.ne.s32.totalorder %s202, %s204
      %p211 = scmp.eq.s32.totalorder %s32, 1
      %p212 = por %p210, %p211
      %p213 = scmp.ne.s32.totalorder %s204, %s205
      %p214 = scmp.eq.s32.totalorder %s32, 0
      %p215 = por %p213, %p214
      %p216 = scmp.ne.s32.totalorder %s204, %s205
      %p217 = scmp.eq.s32.totalorder %s33, 1
      %p218 = por %p216, %p217
      %p220 = scmp.ne.s32.totalorder %s205, %s219
      %p221 = scmp.eq.s32.totalorder %s33, 0
      %p222 = por %p220, %p221
      %s224 = sadd.s32 %s223, 1
      %p227 = scmp.eq.s32.totalorder %s27, 1
      %p228 = scmp.ne.s32.totalorder %s223, %s225
      %p229 = scmp.eq.s32.totalorder %s27, 0
      %p230 = por %p228, %p229
      %p231 = scmp.ne.s32.totalorder %s223, %s225
      %p232 = scmp.eq.s32.totalorder %s32, 1
      %p233 = por %p231, %p232
      %p234 = scmp.ne.s32.totalorder %s225, %s226
      %p235 = scmp.eq.s32.totalorder %s32, 0
      %p236 = por %p234, %p235
      %p237 = scmp.ne.s32.totalorder %s225, %s226
      %p238 = scmp.eq.s32.totalorder %s33, 1
      %p239 = por %p237, %p238
      %p241 = scmp.ne.s32.totalorder %s226, %s240
      %p242 = scmp.eq.s32.totalorder %s33, 0
      %p243 = por %p241, %p242
      %s245 = sadd.s32 %s244, 1
      %p248 = scmp.eq.s32.totalorder %s27, 1
      %p249 = scmp.ne.s32.totalorder %s244, %s246
      %p250 = scmp.eq.s32.totalorder %s27, 0
      %p251 = por %p249, %p250
      %p252 = scmp.ne.s32.totalorder %s244, %s246
      %p253 = scmp.eq.s32.totalorder %s32, 1
      %p254 = por %p252, %p253
      %p255 = scmp.ne.s32.totalorder %s246, %s247
      %p256 = scmp.eq.s32.totalorder %s32, 0
      %p257 = por %p255, %p256
      %p258 = scmp.ne.s32.totalorder %s246, %s247
      %p259 = scmp.eq.s32.totalorder %s33, 1
      %p260 = por %p258, %p259
      %p262 = scmp.ne.s32.totalorder %s247, %s261
      %p263 = scmp.eq.s32.totalorder %s33, 0
      %p264 = por %p262, %p263
      %s265 = ssub.s32 %s27, %s34
      %p266 = scmp.eq.s32.totalorder %s265, 0
      %s268 = sadd.s32 %s267, 1
      %s269 = scalar_select %p266, %s267, %s268
      %p272 = pneg %p266
      %p273 = scmp.eq.s32.totalorder %s27, 1
      %p274 = por %p272, %p273
      %p275 = scmp.ne.s32.totalorder %s267, %s270
      %p276 = scmp.eq.s32.totalorder %s27, 0
      %p277 = por %p275, %p276
      %p278 = scmp.ne.s32.totalorder %s267, %s270
      %p279 = scmp.eq.s32.totalorder %s32, 1
      %p280 = por %p278, %p279
      %p281 = scmp.ne.s32.totalorder %s270, %s271
      %p282 = scmp.eq.s32.totalorder %s32, 0
      %p283 = por %p281, %p282
      %p284 = scmp.ne.s32.totalorder %s270, %s271
      %p285 = scmp.eq.s32.totalorder %s33, 1
      %p286 = por %p284, %p285
      %p288 = scmp.ne.s32.totalorder %s271, %s287
      %p289 = scmp.eq.s32.totalorder %s33, 0
      %p290 = por %p288, %p289
      %p291 = scmp.le.s32.totalorder 1, %s27
      %p292 = scmp.lt.s32.totalorder %s27, 3
      %p293 = pnand %p291, %p292
      %p294 = pneg %p293
      // Predicated region
      $region9: #{tpu_custom_call.1} parent=5 // pred_check
        _
      $region10: #{tpu_custom_call.1} parent=5 // pred_check_branch
        %296 = sbr.rel (%p293) target = $region12
      $region11: #{tpu_custom_call.1} parent=5 // pred_region
        %s297 = ssub.s32 %s27, 1
        // Predicated region
        $region13: #{tpu_custom_call.1} parent=11 // pred_check
          %p298 = pneg %p152
        $region14: #{tpu_custom_call.1} parent=11 // pred_check_branch
          %300 = sbr.rel (%p298) target = $region16
        $region15: #{tpu_custom_call.1} parent=11 // pred_region
          %s302 = ssub.s32 1536, 1536
          %303 = vsyncadd [#allocation6], %s302
          %s304 = sshll.u32 [#allocation7], 4
          %s305 = int_to_ptr.vmem [resolvable:$true] %s304
          %310 = dma.hbm_to_vmem [thread:$0]  %s4, 1536, %s305, [#allocation6], 64, 64, 4
        $region16: #{tpu_custom_call.1} parent=11 // pred_fallthru
          _
        // Predicated region
        $region17: #{tpu_custom_call.1} parent=11 // pred_check
          %p311 = pneg %p173
        $region18: #{tpu_custom_call.1} parent=11 // pred_check_branch
          %313 = sbr.rel (%p311) target = $region20
        $region19: #{tpu_custom_call.1} parent=11 // pred_region
          %s315 = ssub.s32 256, 256
          %316 = vsyncadd [#allocation9], %s315
          %s317 = sshll.u32 [#allocation8], 4
          %s318 = int_to_ptr.vmem [resolvable:$true] %s317
          %323 = dma.hbm_to_vmem [thread:$0]  %s5, 256, %s318, [#allocation9], 64, 64, 4
        $region20: #{tpu_custom_call.1} parent=11 // pred_fallthru
          _
        // Predicated region
        $region21: #{tpu_custom_call.1} parent=11 // pred_check
          %p324 = pneg %p194
        $region22: #{tpu_custom_call.1} parent=11 // pred_check_branch
          %326 = sbr.rel (%p324) target = $region24
        $region23: #{tpu_custom_call.1} parent=11 // pred_region
          %s328 = ssub.s32 256, 256
          %329 = vsyncadd [#allocation9], %s328
          %s330 = sshll.u32 [#allocation10], 4
          %s331 = int_to_ptr.vmem [resolvable:$true] %s330
          %336 = dma.hbm_to_vmem [thread:$0]  %s6, 256, %s331, [#allocation9], 64, 64, 4
        $region24: #{tpu_custom_call.1} parent=11 // pred_fallthru
          _
        // Predicated region
        $region25: #{tpu_custom_call.1} parent=11 // pred_check
          %p337 = pneg %p215
        $region26: #{tpu_custom_call.1} parent=11 // pred_check_branch
          %339 = sbr.rel (%p337) target = $region28
        $region27: #{tpu_custom_call.1} parent=11 // pred_region
          _
        $region28: #{tpu_custom_call.1} parent=11 // pred_fallthru
          _
        // Predicated region
        $region29: #{tpu_custom_call.1} parent=11 // pred_check
          %p340 = pneg %p236
        $region30: #{tpu_custom_call.1} parent=11 // pred_check_branch
          %342 = sbr.rel (%p340) target = $region32
        $region31: #{tpu_custom_call.1} parent=11 // pred_region
          %s344 = ssub.s32 256, 256
          %345 = vsyncadd [#allocation12], %s344
          %s346 = sshll.u32 [#allocation11], 4
          %s347 = int_to_ptr.vmem [resolvable:$true] %s346
          %352 = dma.hbm_to_vmem [thread:$0]  %s8, 256, %s347, [#allocation12], 128, 128, 8
        $region32: #{tpu_custom_call.1} parent=11 // pred_fallthru
          _
        // Predicated region
        $region33: #{tpu_custom_call.1} parent=11 // pred_check
          %p353 = pneg %p257
        $region34: #{tpu_custom_call.1} parent=11 // pred_check_branch
          %355 = sbr.rel (%p353) target = $region36
        $region35: #{tpu_custom_call.1} parent=11 // pred_region
          _
        $region36: #{tpu_custom_call.1} parent=11 // pred_fallthru
          _
      $region12: #{tpu_custom_call.1} parent=5 // pred_fallthru
        _
      %p356 = scmp.lt.s32.totalorder %s27, 2
      // Predicated region
      $region37: #{tpu_custom_call.1} parent=5 // pred_check
        %p357 = pneg %p356
      $region38: #{tpu_custom_call.1} parent=5 // pred_check_branch
        %359 = sbr.rel (%p357) target = $region40
      $region39: #{tpu_custom_call.1} parent=5 // pred_region
        // Predicated region
        $region41: #{tpu_custom_call.1} parent=39 // pred_check
          %p360 = pneg %p47
        $region42: #{tpu_custom_call.1} parent=39 // pred_check_branch
          %362 = sbr.rel (%p360) target = $region44
        $region43: #{tpu_custom_call.1} parent=39 // pred_region
          %s363 = smul.u32 2, %s27
          %p364 = scmp.lt.s32.totalorder %s363, 3
          %s365 = scalar_select %p364, %s363, 3
          %s366 = smul.addr %s365, 8
          %s367 = scalar_lea.vmem %s0, %s366
          %s368 = smul.u32 2, %s27
        $region44: #{tpu_custom_call.1} parent=39 // pred_fallthru
          _
        // Predicated region
        $region45: #{tpu_custom_call.1} parent=39 // pred_check
          %p369 = pneg %p73
        $region46: #{tpu_custom_call.1} parent=39 // pred_check_branch
          %371 = sbr.rel (%p369) target = $region48
        $region47: #{tpu_custom_call.1} parent=39 // pred_region
          %s372 = sand.u32 %s63, 1
          %s373 = scalar_lea.sflag [#allocation3], %s372
          %s374 = sand.u32 %s63, 1
          %s375 = smul.addr %s374, 2
          %s376 = scalar_lea.vmem [#allocation2], %s375
          %s377 = smul.u32 2, %s27
          %s379 = ssub.s32 32, 32
          %380 = vsyncadd %s373, %s379
          %s381 = smul.addr %s377, 16
          %s382 = scalar_lea.hbm %s1, %s381
          %s383 = sshll.u32 %s376, 4
          %s384 = int_to_ptr.vmem [resolvable:$true] %s383
          %389 = dma.hbm_to_vmem [thread:$0]  %s382, 32, %s384, %s373, 16, 16, 1
        $region48: #{tpu_custom_call.1} parent=39 // pred_fallthru
          _
        // Predicated region
        $region49: #{tpu_custom_call.1} parent=39 // pred_check
          %p390 = pneg %p99
        $region50: #{tpu_custom_call.1} parent=39 // pred_check_branch
          %392 = sbr.rel (%p390) target = $region52
        $region51: #{tpu_custom_call.1} parent=39 // pred_region
          %s393 = smul.u32 2, %s27
          %p394 = scmp.lt.s32.totalorder %s393, 3
          %s395 = scalar_select %p394, %s393, 3
          %s396 = smul.addr %s395, 8
          %s397 = scalar_lea.vmem %s2, %s396
          %s398 = smul.u32 2, %s27
        $region52: #{tpu_custom_call.1} parent=39 // pred_fallthru
          _
        // Predicated region
        $region53: #{tpu_custom_call.1} parent=39 // pred_check
          %p399 = pneg %p125
        $region54: #{tpu_custom_call.1} parent=39 // pred_check_branch
          %401 = sbr.rel (%p399) target = $region56
        $region55: #{tpu_custom_call.1} parent=39 // pred_region
          %s402 = sand.u32 %s27, 1
          %s403 = scalar_lea.sflag [#allocation6], %s402
          %s404 = sand.u32 %s115, 1
          %s405 = smul.addr %s404, 2
          %s406 = scalar_lea.vmem [#allocation5], %s405
          %s407 = smul.u32 2, %s27
          %s409 = ssub.s32 32, 32
          %410 = vsyncadd %s403, %s409
          %s411 = smul.addr %s407, 16
          %s412 = scalar_lea.hbm %s3, %s411
          %s413 = sshll.u32 %s406, 4
          %s414 = int_to_ptr.vmem [resolvable:$true] %s413
          %419 = dma.hbm_to_vmem [thread:$0]  %s412, 32, %s414, %s403, 16, 16, 1
        $region56: #{tpu_custom_call.1} parent=39 // pred_fallthru
          _
      $region40: #{tpu_custom_call.1} parent=5 // pred_fallthru
        _
      %p420 = scmp.le.s32.totalorder 1, %s27
      %p421 = scmp.lt.s32.totalorder %s27, 3
      %p422 = pnand %p420, %p421
      %p423 = pneg %p422
      // Predicated region
      $region57: #{tpu_custom_call.1} parent=5 // pred_check
        _
      $region58: #{tpu_custom_call.1} parent=5 // pred_check_branch
        %425 = sbr.rel (%p422) target = $region60
      $region59: #{tpu_custom_call.1} parent=5 // pred_region
        %s426 = ssub.s32 %s27, 1
        %s427 = sand.u32 %s66, 1
        %s428 = scalar_lea.sflag [#allocation3], %s427
        %s429 = sand.u32 %s66, 1
        %s430 = smul.addr %s429, 2
        %s431 = scalar_lea.vmem [#allocation2], %s430
        // Predicated region
        $region61: #{tpu_custom_call.1} parent=59 // pred_check
          %p432 = pneg %p79
        $region62: #{tpu_custom_call.1} parent=59 // pred_check_branch
          %434 = sbr.rel (%p432) target = $region64
        $region63: #{tpu_custom_call.1} parent=59 // pred_region
          %435 = dma.done %s428, 32
        $region64: #{tpu_custom_call.1} parent=59 // pred_fallthru
          _
        %s436 = sand.u32 %s32, 1
        %s437 = scalar_lea.sflag [#allocation6], %s436
        %s438 = sand.u32 %s118, 1
        %s439 = smul.addr %s438, 2
        %s440 = scalar_lea.vmem [#allocation5], %s439
        // Predicated region
        $region65: #{tpu_custom_call.1} parent=59 // pred_check
          %p441 = pneg %p131
        $region66: #{tpu_custom_call.1} parent=59 // pred_check_branch
          %443 = sbr.rel (%p441) target = $region68
        $region67: #{tpu_custom_call.1} parent=59 // pred_region
          %444 = dma.done %s437, 32
        $region68: #{tpu_custom_call.1} parent=59 // pred_fallthru
          _
        // Predicated region
        $region69: #{tpu_custom_call.1} parent=59 // pred_check
          %p445 = pneg %p152
        $region70: #{tpu_custom_call.1} parent=59 // pred_check_branch
          %447 = sbr.rel (%p445) target = $region72
        $region71: #{tpu_custom_call.1} parent=59 // pred_region
          %448 = dma.done [#allocation6], 1536
        $region72: #{tpu_custom_call.1} parent=59 // pred_fallthru
          _
        // Predicated region
        $region73: #{tpu_custom_call.1} parent=59 // pred_check
          %p449 = pneg %p173
        $region74: #{tpu_custom_call.1} parent=59 // pred_check_branch
          %451 = sbr.rel (%p449) target = $region76
        $region75: #{tpu_custom_call.1} parent=59 // pred_region
          %452 = dma.done [#allocation9], 256
        $region76: #{tpu_custom_call.1} parent=59 // pred_fallthru
          _
        // Predicated region
        $region77: #{tpu_custom_call.1} parent=59 // pred_check
          %p453 = pneg %p194
        $region78: #{tpu_custom_call.1} parent=59 // pred_check_branch
          %455 = sbr.rel (%p453) target = $region80
        $region79: #{tpu_custom_call.1} parent=59 // pred_region
          %456 = dma.done [#allocation9], 256
        $region80: #{tpu_custom_call.1} parent=59 // pred_fallthru
          _
        // Predicated region
        $region81: #{tpu_custom_call.1} parent=59 // pred_check
          %p457 = pneg %p236
        $region82: #{tpu_custom_call.1} parent=59 // pred_check_branch
          %459 = sbr.rel (%p457) target = $region84
        $region83: #{tpu_custom_call.1} parent=59 // pred_region
          %460 = dma.done [#allocation12], 256
        $region84: #{tpu_custom_call.1} parent=59 // pred_fallthru
          _
        %s461 = smul.u32 2, %s32
        %p462 = scmp.lt.s32.totalorder %s461, 3
        %s463 = scalar_select %p462, %s461, 3
        %s464 = smul.addr %s463, 8
        %s465 = scalar_lea.vmem %s0, %s464
        %p466 = pneg %p53
        %p467 = pneg %p50
        %s468 = sand.u32 %s66, 1
        %s469 = scalar_lea.sflag [#allocation3], %s468
        %s470 = sand.u32 %s66, 1
        %s471 = smul.addr %s470, 2
        %s472 = scalar_lea.vmem [#allocation2], %s471
        %p473 = pneg %p79
        %p474 = pneg %p76
        %s475 = smul.u32 2, %s32
        %p476 = scmp.lt.s32.totalorder %s475, 3
        %s477 = scalar_select %p476, %s475, 3
        %s478 = smul.addr %s477, 8
        %s479 = scalar_lea.vmem %s2, %s478
        %p480 = pneg %p105
        %p481 = pneg %p102
        %s482 = sand.u32 %s32, 1
        %s483 = scalar_lea.sflag [#allocation6], %s482
        %s484 = sand.u32 %s118, 1
        %s485 = smul.addr %s484, 2
        %s486 = scalar_lea.vmem [#allocation5], %s485
        %p487 = pneg %p131
        %p488 = pneg %p128
        %p489 = pneg %p152
        %p490 = pneg %p149
        %p491 = pneg %p173
        %p492 = pneg %p170
        %p493 = pneg %p194
        %p494 = pneg %p191
        %p495 = pneg %p215
        %p496 = pneg %p212
        %p497 = pneg %p236
        %p498 = pneg %p233
        %p499 = pneg %p257
        %p500 = pneg %p254
        %p501 = pneg %p283
        %p502 = pneg %p280
        %s503 = sand.u32 %s270, 1
        %s504 = scalar_lea.sflag [#allocation4], %s503
        %s505 = sand.u32 %s270, 1
        %s506 = smul.addr %s505, 2
        %s507 = scalar_lea.vmem [#allocation13], %s506
        %s508 = smul.u32 2, %s32
        %p509 = scmp.lt.s32.totalorder %s508, 3
        %s510 = scalar_select %p509, %s508, 3
        %s511 = smul.addr %s510, 8
        %s512 = scalar_lea.vmem %s0, %s511
        %s513 = smul.u32 2, %s32
        %s514 = smul.u32 2, %s32
        %s515 = smul.u32 2, %s32
        %p516 = scmp.lt.s32.totalorder %s515, 3
        %s517 = scalar_select %p516, %s515, 3
        %s518 = smul.addr %s517, 8
        %s519 = scalar_lea.vmem %s2, %s518
        %s520 = smul.u32 2, %s32
        %s521 = smul.u32 2, %s32
        %s522 = smul.u32 2, %s32
        %v524 = vld [vmem:[#allocation11] sm:$0xff]
        %v525 = vld [vmem:[#allocation11 + $0x8] sm:$0x1f]
        %v526 = vld [vmem:[%s512] sm:$0xff]
        %v527 = vld [vmem:[%s512 + $0x8] sm:$0xff]
        %v528 = vld [vmem:[%s431] sm:$0x1]
        %v529 = vld [vmem:[%s431 + $0x1] sm:$0x1]
        %v530 = vpack.c.bf16 %v527, %v526
        %v531 = vpack.c.bf16 %v528, %v528
        %v532 = vpack.c.bf16 %v529, %v529
        %v533 = vld [vmem:[#allocation7] sm:$0xf]
        %v534 = vld [vmem:[#allocation7 + $0x4] sm:$0xf]
        %v535 = vld [vmem:[#allocation7 + $0x8] sm:$0xf]
        %v536 = vld [vmem:[#allocation7 + $0xc] sm:$0xf]
        %v541 = vunpack.c.l.b16 %v533
        %v542 = vunpack.c.l.b16 %v534
        %v543 = vunpack.c.l.b16 %v535
        %v544 = vunpack.c.l.b16 %v536
        %v545 = vpack.c.b16 %v542, %v541
        %v546 = vpack.c.b16 %v544, %v543
        %vm549 = vcmask 261120
        %v551 = vsel %vm549, %v530, 0
        %553 = vmatprep.subr.bf16.mxu0 0
        %554 = vmatpush1.bf16.msra.mxu0 %v545
        %555 = vmatprep.subr.bf16.mxu0 0
        %556 = vmatpush1.bf16.msra.mxu0 %v546
        %557 = vmatprep.subr.bf16.mxu0 0
        %558 = vmatpush1.bf16.msra.mxu0 0
        %559 = vmatprep.subr.bf16.mxu0 0
        %560 = vmatpush1.bf16.msra.mxu0 0
        %561 = vmatprep.subr.bf16.mxu0 0
        %562 = vmatpush1.bf16.msra.mxu0 0
        %563 = vmatprep.subr.bf16.mxu0 0
        %564 = vmatpush1.bf16.msra.mxu0 0
        %565 = vmatprep.subr.bf16.mxu0 0
        %566 = vmatpush1.bf16.msra.mxu0 0
        %567 = vmatprep.subr.bf16.mxu0 0
        %568 = vmatpush1.bf16.msra.mxu0 0
        %569 = vmatprep.subr.bf16.mxu0 0
        %570 = vmatpush1.bf16.msra.mxu0 0
        %571 = vmatprep.subr.bf16.mxu0 0
        %572 = vmatpush1.bf16.msra.mxu0 0
        %573 = vmatprep.subr.bf16.mxu0 0
        %574 = vmatpush1.bf16.msra.mxu0 0
        %575 = vmatprep.subr.bf16.mxu0 0
        %576 = vmatpush1.bf16.msra.mxu0 0
        %577 = vmatprep.subr.bf16.mxu0 0
        %578 = vmatpush1.bf16.msra.mxu0 0
        %579 = vmatprep.subr.bf16.mxu0 0
        %580 = vmatpush1.bf16.msra.mxu0 0
        %581 = vmatprep.subr.bf16.mxu0 0
        %582 = vmatpush1.bf16.msra.mxu0 0
        %583 = vmatprep.subr.bf16.mxu0 0
        %584 = vmatpush1.bf16.msra.mxu0 0
        %585 = vmatprep.mubr.bf16.mxu0 0
        %586 = vmatmul.mubr.bf16.gmra.mrb[0].mxu0 %v551
        %v587 = vpop.f32.mrb[0].mxu0
        %v588 = vadd.f32 0.0, %v587
        %v589 = vpop.f32.mrb[0].mxu0
        %v590 = vpop.f32.mrb[0].mxu0
        %v591 = vadd.f32 0.0, %v590
        %v592 = vpop.f32.mrb[0].mxu0
        %593 = vdwg.mxu0
        %s594 = scalar_lea.vmem [#allocation7], 16
        %v595 = vld [vmem:[%s594] sm:$0xf]
        %v596 = vld [vmem:[%s594 + $0x4] sm:$0xf]
        %v597 = vld [vmem:[%s594 + $0x8] sm:$0xf]
        %v598 = vld [vmem:[%s594 + $0xc] sm:$0xf]
        %v603 = vunpack.c.l.b16 %v595
        %v604 = vunpack.c.l.b16 %v596
        %v605 = vunpack.c.l.b16 %v597
        %v606 = vunpack.c.l.b16 %v598
        %v607 = vpack.c.b16 %v604, %v603
        %v608 = vpack.c.b16 %v606, %v605
        %611 = vmatprep.subr.bf16.mxu0 0
        %612 = vmatpush1.bf16.msra.mxu0 %v607
        %613 = vmatprep.subr.bf16.mxu0 0
        %614 = vmatpush1.bf16.msra.mxu0 %v608
        %615 = vmatprep.subr.bf16.mxu0 0
        %616 = vmatpush1.bf16.msra.mxu0 0
        %617 = vmatprep.subr.bf16.mxu0 0
        %618 = vmatpush1.bf16.msra.mxu0 0
        %619 = vmatprep.subr.bf16.mxu0 0
        %620 = vmatpush1.bf16.msra.mxu0 0
        %621 = vmatprep.subr.bf16.mxu0 0
        %622 = vmatpush1.bf16.msra.mxu0 0
        %623 = vmatprep.subr.bf16.mxu0 0
        %624 = vmatpush1.bf16.msra.mxu0 0
        %625 = vmatprep.subr.bf16.mxu0 0
        %626 = vmatpush1.bf16.msra.mxu0 0
        %627 = vmatprep.subr.bf16.mxu0 0
        %628 = vmatpush1.bf16.msra.mxu0 0
        %629 = vmatprep.subr.bf16.mxu0 0
        %630 = vmatpush1.bf16.msra.mxu0 0
        %631 = vmatprep.subr.bf16.mxu0 0
        %632 = vmatpush1.bf16.msra.mxu0 0
        %633 = vmatprep.subr.bf16.mxu0 0
        %634 = vmatpush1.bf16.msra.mxu0 0
        %635 = vmatprep.subr.bf16.mxu0 0
        %636 = vmatpush1.bf16.msra.mxu0 0
        %637 = vmatprep.subr.bf16.mxu0 0
        %638 = vmatpush1.bf16.msra.mxu0 0
        %639 = vmatprep.subr.bf16.mxu0 0
        %640 = vmatpush1.bf16.msra.mxu0 0
        %641 = vmatprep.subr.bf16.mxu0 0
        %642 = vmatpush1.bf16.msra.mxu0 0
        %643 = vmatprep.mubr.bf16.mxu0 0
        %644 = vmatmul.mubr.bf16.gmra.mrb[0].mxu0 %v551
        %v645 = vpop.f32.mrb[0].mxu0
        %v646 = vadd.f32 0.0, %v645
        %v647 = vpop.f32.mrb[0].mxu0
        %v648 = vpop.f32.mrb[0].mxu0
        %v649 = vadd.f32 0.0, %v648
        %v650 = vpop.f32.mrb[0].mxu0
        %651 = vdwg.mxu0
        %s652 = scalar_lea.vmem [#allocation7], 32
        %v653 = vld [vmem:[%s652] sm:$0xf]
        %v654 = vld [vmem:[%s652 + $0x4] sm:$0xf]
        %v655 = vld [vmem:[%s652 + $0x8] sm:$0xf]
        %v656 = vld [vmem:[%s652 + $0xc] sm:$0xf]
        %v661 = vunpack.c.l.b16 %v653
        %v662 = vunpack.c.l.b16 %v654
        %v663 = vunpack.c.l.b16 %v655
        %v664 = vunpack.c.l.b16 %v656
        %v665 = vpack.c.b16 %v662, %v661
        %v666 = vpack.c.b16 %v664, %v663
        %669 = vmatprep.subr.bf16.mxu0 0
        %670 = vmatpush1.bf16.msra.mxu0 %v665
        %671 = vmatprep.subr.bf16.mxu0 0
        %672 = vmatpush1.bf16.msra.mxu0 %v666
        %673 = vmatprep.subr.bf16.mxu0 0
        %674 = vmatpush1.bf16.msra.mxu0 0
        %675 = vmatprep.subr.bf16.mxu0 0
        %676 = vmatpush1.bf16.msra.mxu0 0
        %677 = vmatprep.subr.bf16.mxu0 0
        %678 = vmatpush1.bf16.msra.mxu0 0
        %679 = vmatprep.subr.bf16.mxu0 0
        %680 = vmatpush1.bf16.msra.mxu0 0
        %681 = vmatprep.subr.bf16.mxu0 0
        %682 = vmatpush1.bf16.msra.mxu0 0
        %683 = vmatprep.subr.bf16.mxu0 0
        %684 = vmatpush1.bf16.msra.mxu0 0
        %685 = vmatprep.subr.bf16.mxu0 0
        %686 = vmatpush1.bf16.msra.mxu0 0
        %687 = vmatprep.subr.bf16.mxu0 0
        %688 = vmatpush1.bf16.msra.mxu0 0
        %689 = vmatprep.subr.bf16.mxu0 0
        %690 = vmatpush1.bf16.msra.mxu0 0
        %691 = vmatprep.subr.bf16.mxu0 0
        %692 = vmatpush1.bf16.msra.mxu0 0
        %693 = vmatprep.subr.bf16.mxu0 0
        %694 = vmatpush1.bf16.msra.mxu0 0
        %695 = vmatprep.subr.bf16.mxu0 0
        %696 = vmatpush1.bf16.msra.mxu0 0
        %697 = vmatprep.subr.bf16.mxu0 0
        %698 = vmatpush1.bf16.msra.mxu0 0
        %699 = vmatprep.subr.bf16.mxu0 0
        %700 = vmatpush1.bf16.msra.mxu0 0
        %701 = vmatprep.mubr.bf16.mxu0 0
        %702 = vmatmul.mubr.bf16.gmra.mrb[0].mxu0 %v551
        %v703 = vpop.f32.mrb[0].mxu0
        %v704 = vadd.f32 0.0, %v703
        %v705 = vpop.f32.mrb[0].mxu0
        %v706 = vpop.f32.mrb[0].mxu0
        %v707 = vadd.f32 0.0, %v706
        %v708 = vpop.f32.mrb[0].mxu0
        %709 = vdwg.mxu0
        %s710 = scalar_lea.vmem [#allocation7], 48
        %v711 = vld [vmem:[%s710] sm:$0xf]
        %v712 = vld [vmem:[%s710 + $0x4] sm:$0xf]
        %v713 = vld [vmem:[%s710 + $0x8] sm:$0xf]
        %v714 = vld [vmem:[%s710 + $0xc] sm:$0xf]
        %v717 = vunpack.c.l.b16 %v531
        %v718 = vunpack.c.l.b16 %v532
        %v719 = vrot.slane %v718, 7
        %vm720 = vcmask 1041409
        %v721 = vsel %vm720, %v719, %v717
        %v722 = vpack.c.b16 %v721, %v721
        %v727 = vunpack.c.l.b16 %v711
        %v728 = vunpack.c.l.b16 %v712
        %v729 = vunpack.c.l.b16 %v713
        %v730 = vunpack.c.l.b16 %v714
        %v731 = vpack.c.b16 %v728, %v727
        %v732 = vpack.c.b16 %v730, %v729
        %v736 = vsel %vm549, %v722, 0
        %738 = vmatprep.subr.bf16.mxu0 0
        %739 = vmatpush1.bf16.msra.mxu0 %v731
        %740 = vmatprep.subr.bf16.mxu0 0
        %741 = vmatpush1.bf16.msra.mxu0 %v732
        %742 = vmatprep.subr.bf16.mxu0 0
        %743 = vmatpush1.bf16.msra.mxu0 0
        %744 = vmatprep.subr.bf16.mxu0 0
        %745 = vmatpush1.bf16.msra.mxu0 0
        %746 = vmatprep.subr.bf16.mxu0 0
        %747 = vmatpush1.bf16.msra.mxu0 0
        %748 = vmatprep.subr.bf16.mxu0 0
        %749 = vmatpush1.bf16.msra.mxu0 0
        %750 = vmatprep.subr.bf16.mxu0 0
        %751 = vmatpush1.bf16.msra.mxu0 0
        %752 = vmatprep.subr.bf16.mxu0 0
        %753 = vmatpush1.bf16.msra.mxu0 0
        %754 = vmatprep.subr.bf16.mxu0 0
        %755 = vmatpush1.bf16.msra.mxu0 0
        %756 = vmatprep.subr.bf16.mxu0 0
        %757 = vmatpush1.bf16.msra.mxu0 0
        %758 = vmatprep.subr.bf16.mxu0 0
        %759 = vmatpush1.bf16.msra.mxu0 0
        %760 = vmatprep.subr.bf16.mxu0 0
        %761 = vmatpush1.bf16.msra.mxu0 0
        %762 = vmatprep.subr.bf16.mxu0 0
        %763 = vmatpush1.bf16.msra.mxu0 0
        %764 = vmatprep.subr.bf16.mxu0 0
        %765 = vmatpush1.bf16.msra.mxu0 0
        %766 = vmatprep.subr.bf16.mxu0 0
        %767 = vmatpush1.bf16.msra.mxu0 0
        %768 = vmatprep.subr.bf16.mxu0 0
        %769 = vmatpush1.bf16.msra.mxu0 0
        %770 = vmatprep.mubr.bf16.mxu0 0
        %771 = vmatmul.mubr.bf16.gmra.mrb[0].mxu0 %v736
        %v772 = vpop.f32.mrb[0].mxu0
        %v773 = vadd.f32 0.0, %v772
        %v774 = vpop.f32.mrb[0].mxu0
        %v775 = vpop.f32.mrb[0].mxu0
        %v776 = vpop.f32.mrb[0].mxu0
        %777 = vdwg.mxu0
        %s778 = scalar_lea.vmem [#allocation7], 64
        %v779 = vld [vmem:[%s778] sm:$0xf]
        %v780 = vld [vmem:[%s778 + $0x4] sm:$0xf]
        %v781 = vld [vmem:[%s778 + $0x8] sm:$0xf]
        %v782 = vld [vmem:[%s778 + $0xc] sm:$0xf]
        %v787 = vunpack.c.l.b16 %v779
        %v788 = vunpack.c.l.b16 %v780
        %v789 = vunpack.c.l.b16 %v781
        %v790 = vunpack.c.l.b16 %v782
        %v791 = vpack.c.b16 %v788, %v787
        %v792 = vpack.c.b16 %v790, %v789
        %795 = vmatprep.subr.bf16.mxu0 0
        %796 = vmatpush1.bf16.msra.mxu0 %v791
        %797 = vmatprep.subr.bf16.mxu0 0
        %798 = vmatpush1.bf16.msra.mxu0 %v792
        %799 = vmatprep.subr.bf16.mxu0 0
        %800 = vmatpush1.bf16.msra.mxu0 0
        %801 = vmatprep.subr.bf16.mxu0 0
        %802 = vmatpush1.bf16.msra.mxu0 0
        %803 = vmatprep.subr.bf16.mxu0 0
        %804 = vmatpush1.bf16.msra.mxu0 0
        %805 = vmatprep.subr.bf16.mxu0 0
        %806 = vmatpush1.bf16.msra.mxu0 0
        %807 = vmatprep.subr.bf16.mxu0 0
        %808 = vmatpush1.bf16.msra.mxu0 0
        %809 = vmatprep.subr.bf16.mxu0 0
        %810 = vmatpush1.bf16.msra.mxu0 0
        %811 = vmatprep.subr.bf16.mxu0 0
        %812 = vmatpush1.bf16.msra.mxu0 0
        %813 = vmatprep.subr.bf16.mxu0 0
        %814 = vmatpush1.bf16.msra.mxu0 0
        %815 = vmatprep.subr.bf16.mxu0 0
        %816 = vmatpush1.bf16.msra.mxu0 0
        %817 = vmatprep.subr.bf16.mxu0 0
        %818 = vmatpush1.bf16.msra.mxu0 0
        %819 = vmatprep.subr.bf16.mxu0 0
        %820 = vmatpush1.bf16.msra.mxu0 0
        %821 = vmatprep.subr.bf16.mxu0 0
        %822 = vmatpush1.bf16.msra.mxu0 0
        %823 = vmatprep.subr.bf16.mxu0 0
        %824 = vmatpush1.bf16.msra.mxu0 0
        %825 = vmatprep.subr.bf16.mxu0 0
        %826 = vmatpush1.bf16.msra.mxu0 0
        %827 = vmatprep.mubr.bf16.mxu0 0
        %828 = vmatmul.mubr.bf16.gmra.mrb[0].mxu0 %v736
        %v829 = vpop.f32.mrb[0].mxu0
        %v830 = vadd.f32 0.0, %v829
        %v831 = vpop.f32.mrb[0].mxu0
        %v832 = vpop.f32.mrb[0].mxu0
        %v833 = vpop.f32.mrb[0].mxu0
        %834 = vdwg.mxu0
        %v835 = vld [vmem:[%s9] sm:$0xff]
        %v836 = vld [vmem:[%s9 + $0x8] sm:$0xff]
        %v837 = vld [vmem:[%s9 + $0x10] sm:$0xff]
        %v838 = vld [vmem:[%s9 + $0x18] sm:$0xff]
        %v840 = vsel %vm549, %v588, 0
        %v843 = vsel %vm549, %v591, 0
        %845 = vmatprep.subr.mxu0 0.0
        %846 = vmatpush1.msra.mxu0 %v835
        %847 = vmatprep.subr.mxu0 0.0
        %848 = vmatpush1.msra.mxu0 %v836
        %849 = vmatprep.subr.mxu0 0.0
        %850 = vmatpush1.msra.mxu0 %v837
        %851 = vmatprep.subr.mxu0 0.0
        %852 = vmatpush1.msra.mxu0 %v838
        %853 = vmatprep.subr.mxu0 0.0
        %854 = vmatpush1.msra.mxu0 0.0
        %855 = vmatprep.subr.mxu0 0.0
        %856 = vmatpush1.msra.mxu0 0.0
        %857 = vmatprep.subr.mxu0 0.0
        %858 = vmatpush1.msra.mxu0 0.0
        %859 = vmatprep.subr.mxu0 0.0
        %860 = vmatpush1.msra.mxu0 0.0
        %861 = vmatprep.subr.mxu0 0.0
        %862 = vmatpush1.msra.mxu0 0.0
        %863 = vmatprep.subr.mxu0 0.0
        %864 = vmatpush1.msra.mxu0 0.0
        %865 = vmatprep.subr.mxu0 0.0
        %866 = vmatpush1.msra.mxu0 0.0
        %867 = vmatprep.subr.mxu0 0.0
        %868 = vmatpush1.msra.mxu0 0.0
        %869 = vmatprep.subr.mxu0 0.0
        %870 = vmatpush1.msra.mxu0 0.0
        %871 = vmatprep.subr.mxu0 0.0
        %872 = vmatpush1.msra.mxu0 0.0
        %873 = vmatprep.subr.mxu0 0.0
        %874 = vmatpush1.msra.mxu0 0.0
        %875 = vmatprep.subr.mxu0 0.0
        %876 = vmatpush1.msra.mxu0 0.0
        %877 = vmatprep.subr.mxu0 0.0
        %878 = vmatpush1.msra.mxu0 0.0
        %879 = vmatprep.subr.mxu0 0.0
        %880 = vmatpush1.msra.mxu0 0.0
        %881 = vmatprep.subr.mxu0 0.0
        %882 = vmatpush1.msra.mxu0 0.0
        %883 = vmatprep.subr.mxu0 0.0
        %884 = vmatpush1.msra.mxu0 0.0
        %885 = vmatprep.subr.mxu0 0.0
        %886 = vmatpush1.msra.mxu0 0.0
        %887 = vmatprep.subr.mxu0 0.0
        %888 = vmatpush1.msra.mxu0 0.0
        %889 = vmatprep.subr.mxu0 0.0
        %890 = vmatpush1.msra.mxu0 0.0
        %891 = vmatprep.subr.mxu0 0.0
        %892 = vmatpush1.msra.mxu0 0.0
        %893 = vmatprep.subr.mxu0 0.0
        %894 = vmatpush1.msra.mxu0 0.0
        %895 = vmatprep.subr.mxu0 0.0
        %896 = vmatpush1.msra.mxu0 0.0
        %897 = vmatprep.subr.mxu0 0.0
        %898 = vmatpush1.msra.mxu0 0.0
        %899 = vmatprep.subr.mxu0 0.0
        %900 = vmatpush1.msra.mxu0 0.0
        %901 = vmatprep.subr.mxu0 0.0
        %902 = vmatpush1.msra.mxu0 0.0
        %903 = vmatprep.subr.mxu0 0.0
        %904 = vmatpush1.msra.mxu0 0.0
        %905 = vmatprep.subr.mxu0 0.0
        %906 = vmatpush1.msra.mxu0 0.0
        %907 = vmatprep.subr.mxu0 0.0
        %908 = vmatpush1.msra.mxu0 0.0
        %909 = vmatprep.mubr.f32.mxu0 0.0
        %910 = vmatmul.mubr.f32.gmra.mrb[0].mxu0 %v840
        %v911 = vpop.f32.mrb[0].mxu0
        %v912 = vadd.f32 0.0, %v911
        %v913 = vpop.f32.mrb[0].mxu0
        %914 = vmatprep.mubr.f32.mxu0 0.0
        %915 = vmatmul.mubr.f32.gmra.mrb[0].mxu0 %v843
        %v916 = vpop.f32.mrb[0].mxu0
        %v917 = vadd.f32 0.0, %v916
        %v918 = vpop.f32.mrb[0].mxu0
        %919 = vdwg.mxu0
        %v920 = vsub.f32 %v588, %v912
        %v921 = vsub.f32 %v591, %v917
        %v922 = vmul.f32 %v920, %v920
        %v923 = vmul.f32 %v921, %v921
        %v925 = vsel %vm549, %v922, 0
        %v928 = vsel %vm549, %v923, 0
        %930 = vmatprep.subr.mxu0 0.0
        %931 = vmatpush1.msra.mxu0 %v835
        %932 = vmatprep.subr.mxu0 0.0
        %933 = vmatpush1.msra.mxu0 %v836
        %934 = vmatprep.subr.mxu0 0.0
        %935 = vmatpush1.msra.mxu0 %v837
        %936 = vmatprep.subr.mxu0 0.0
        %937 = vmatpush1.msra.mxu0 %v838
        %938 = vmatprep.subr.mxu0 0.0
        %939 = vmatpush1.msra.mxu0 0.0
        %940 = vmatprep.subr.mxu0 0.0
        %941 = vmatpush1.msra.mxu0 0.0
        %942 = vmatprep.subr.mxu0 0.0
        %943 = vmatpush1.msra.mxu0 0.0
        %944 = vmatprep.subr.mxu0 0.0
        %945 = vmatpush1.msra.mxu0 0.0
        %946 = vmatprep.subr.mxu0 0.0
        %947 = vmatpush1.msra.mxu0 0.0
        %948 = vmatprep.subr.mxu0 0.0
        %949 = vmatpush1.msra.mxu0 0.0
        %950 = vmatprep.subr.mxu0 0.0
        %951 = vmatpush1.msra.mxu0 0.0
        %952 = vmatprep.subr.mxu0 0.0
        %953 = vmatpush1.msra.mxu0 0.0
        %954 = vmatprep.subr.mxu0 0.0
        %955 = vmatpush1.msra.mxu0 0.0
        %956 = vmatprep.subr.mxu0 0.0
        %957 = vmatpush1.msra.mxu0 0.0
        %958 = vmatprep.subr.mxu0 0.0
        %959 = vmatpush1.msra.mxu0 0.0
        %960 = vmatprep.subr.mxu0 0.0
        %961 = vmatpush1.msra.mxu0 0.0
        %962 = vmatprep.subr.mxu0 0.0
        %963 = vmatpush1.msra.mxu0 0.0
        %964 = vmatprep.subr.mxu0 0.0
        %965 = vmatpush1.msra.mxu0 0.0
        %966 = vmatprep.subr.mxu0 0.0
        %967 = vmatpush1.msra.mxu0 0.0
        %968 = vmatprep.subr.mxu0 0.0
        %969 = vmatpush1.msra.mxu0 0.0
        %970 = vmatprep.subr.mxu0 0.0
        %971 = vmatpush1.msra.mxu0 0.0
        %972 = vmatprep.subr.mxu0 0.0
        %973 = vmatpush1.msra.mxu0 0.0
        %974 = vmatprep.subr.mxu0 0.0
        %975 = vmatpush1.msra.mxu0 0.0
        %976 = vmatprep.subr.mxu0 0.0
        %977 = vmatpush1.msra.mxu0 0.0
        %978 = vmatprep.subr.mxu0 0.0
        %979 = vmatpush1.msra.mxu0 0.0
        %980 = vmatprep.subr.mxu0 0.0
        %981 = vmatpush1.msra.mxu0 0.0
        %982 = vmatprep.subr.mxu0 0.0
        %983 = vmatpush1.msra.mxu0 0.0
        %984 = vmatprep.subr.mxu0 0.0
        %985 = vmatpush1.msra.mxu0 0.0
        %986 = vmatprep.subr.mxu0 0.0
        %987 = vmatpush1.msra.mxu0 0.0
        %988 = vmatprep.subr.mxu0 0.0
        %989 = vmatpush1.msra.mxu0 0.0
        %990 = vmatprep.subr.mxu0 0.0
        %991 = vmatpush1.msra.mxu0 0.0
        %992 = vmatprep.subr.mxu0 0.0
        %993 = vmatpush1.msra.mxu0 0.0
        %994 = vmatprep.mubr.f32.mxu0 0.0
        %995 = vmatmul.mubr.f32.gmra.mrb[0].mxu0 %v925
        %v996 = vpop.f32.mrb[0].mxu0
        %v997 = vadd.f32 1e-05, %v996
        %v998 = vpop.f32.mrb[0].mxu0
        %999 = vmatprep.mubr.f32.mxu0 0.0
        %1000 = vmatmul.mubr.f32.gmra.mrb[0].mxu0 %v928
        %v1001 = vpop.f32.mrb[0].mxu0
        %v1002 = vadd.f32 1e-05, %v1001
        %v1003 = vpop.f32.mrb[0].mxu0
        %1004 = vdwg.mxu0
        %v1005 = vrsqrt.pop %v997
        %v1006 = vrsqrt.pop %v1002
        %v1007 = vmul.f32 %v920, %v1005
        %v1008 = vmul.f32 %v921, %v1006
        %v1009 = vlaneseq
        %v1010 = vshrl.u32 %v1009, 7
        %v1011 = vsub.s32 1, %v1010
        %v1012 = vrot.slane %v524, %v1011
        %v1013 = vmul.f32 %v1007, %v1012
        %v1014 = vmul.f32 %v1008, %v1012
        %v1015 = vlaneseq
        %v1016 = vshrl.u32 %v1015, 7
        %v1017 = vsub.s32 2, %v1016
        %v1018 = vrot.slane %v524, %v1017
        %v1019 = vadd.f32 %v1013, %v1018
        %v1020 = vadd.f32 %v1014, %v1018
        %v1021 = vmul.f32 %v1019, 0.4204482
        %v1022 = vmul.f32 %v1020, 0.4204482
        %v1024 = vsel %vm549, %v646, 0
        %v1027 = vsel %vm549, %v649, 0
        %1029 = vmatprep.subr.mxu0 0.0
        %1030 = vmatpush1.msra.mxu0 %v835
        %1031 = vmatprep.subr.mxu0 0.0
        %1032 = vmatpush1.msra.mxu0 %v836
        %1033 = vmatprep.subr.mxu0 0.0
        %1034 = vmatpush1.msra.mxu0 %v837
        %1035 = vmatprep.subr.mxu0 0.0
        %1036 = vmatpush1.msra.mxu0 %v838
        %1037 = vmatprep.subr.mxu0 0.0
        %1038 = vmatpush1.msra.mxu0 0.0
        %1039 = vmatprep.subr.mxu0 0.0
        %1040 = vmatpush1.msra.mxu0 0.0
        %1041 = vmatprep.subr.mxu0 0.0
        %1042 = vmatpush1.msra.mxu0 0.0
        %1043 = vmatprep.subr.mxu0 0.0
        %1044 = vmatpush1.msra.mxu0 0.0
        %1045 = vmatprep.subr.mxu0 0.0
        %1046 = vmatpush1.msra.mxu0 0.0
        %1047 = vmatprep.subr.mxu0 0.0
        %1048 = vmatpush1.msra.mxu0 0.0
        %1049 = vmatprep.subr.mxu0 0.0
        %1050 = vmatpush1.msra.mxu0 0.0
        %1051 = vmatprep.subr.mxu0 0.0
        %1052 = vmatpush1.msra.mxu0 0.0
        %1053 = vmatprep.subr.mxu0 0.0
        %1054 = vmatpush1.msra.mxu0 0.0
        %1055 = vmatprep.subr.mxu0 0.0
        %1056 = vmatpush1.msra.mxu0 0.0
        %1057 = vmatprep.subr.mxu0 0.0
        %1058 = vmatpush1.msra.mxu0 0.0
        %1059 = vmatprep.subr.mxu0 0.0
        %1060 = vmatpush1.msra.mxu0 0.0
        %1061 = vmatprep.subr.mxu0 0.0
        %1062 = vmatpush1.msra.mxu0 0.0
        %1063 = vmatprep.subr.mxu0 0.0
        %1064 = vmatpush1.msra.mxu0 0.0
        %1065 = vmatprep.subr.mxu0 0.0
        %1066 = vmatpush1.msra.mxu0 0.0
        %1067 = vmatprep.subr.mxu0 0.0
        %1068 = vmatpush1.msra.mxu0 0.0
        %1069 = vmatprep.subr.mxu0 0.0
        %1070 = vmatpush1.msra.mxu0 0.0
        %1071 = vmatprep.subr.mxu0 0.0
        %1072 = vmatpush1.msra.mxu0 0.0
        %1073 = vmatprep.subr.mxu0 0.0
        %1074 = vmatpush1.msra.mxu0 0.0
        %1075 = vmatprep.subr.mxu0 0.0
        %1076 = vmatpush1.msra.mxu0 0.0
        %1077 = vmatprep.subr.mxu0 0.0
        %1078 = vmatpush1.msra.mxu0 0.0
        %1079 = vmatprep.subr.mxu0 0.0
        %1080 = vmatpush1.msra.mxu0 0.0
        %1081 = vmatprep.subr.mxu0 0.0
        %1082 = vmatpush1.msra.mxu0 0.0
        %1083 = vmatprep.subr.mxu0 0.0
        %1084 = vmatpush1.msra.mxu0 0.0
        %1085 = vmatprep.subr.mxu0 0.0
        %1086 = vmatpush1.msra.mxu0 0.0
        %1087 = vmatprep.subr.mxu0 0.0
        %1088 = vmatpush1.msra.mxu0 0.0
        %1089 = vmatprep.subr.mxu0 0.0
        %1090 = vmatpush1.msra.mxu0 0.0
        %1091 = vmatprep.subr.mxu0 0.0
        %1092 = vmatpush1.msra.mxu0 0.0
        %1093 = vmatprep.mubr.f32.mxu0 0.0
        %1094 = vmatmul.mubr.f32.gmra.mrb[0].mxu0 %v1024
        %v1095 = vpop.f32.mrb[0].mxu0
        %v1096 = vadd.f32 0.0, %v1095
        %v1097 = vpop.f32.mrb[0].mxu0
        %1098 = vmatprep.mubr.f32.mxu0 0.0
        %1099 = vmatmul.mubr.f32.gmra.mrb[0].mxu0 %v1027
        %v1100 = vpop.f32.mrb[0].mxu0
        %v1101 = vadd.f32 0.0, %v1100
        %v1102 = vpop.f32.mrb[0].mxu0
        %1103 = vdwg.mxu0
        %v1104 = vsub.f32 %v646, %v1096
        %v1105 = vsub.f32 %v649, %v1101
        %v1106 = vmul.f32 %v1104, %v1104
        %v1107 = vmul.f32 %v1105, %v1105
        %v1109 = vsel %vm549, %v1106, 0
        %v1112 = vsel %vm549, %v1107, 0
        %1114 = vmatprep.subr.mxu0 0.0
        %1115 = vmatpush1.msra.mxu0 %v835
        %1116 = vmatprep.subr.mxu0 0.0
        %1117 = vmatpush1.msra.mxu0 %v836
        %1118 = vmatprep.subr.mxu0 0.0
        %1119 = vmatpush1.msra.mxu0 %v837
        %1120 = vmatprep.subr.mxu0 0.0
        %1121 = vmatpush1.msra.mxu0 %v838
        %1122 = vmatprep.subr.mxu0 0.0
        %1123 = vmatpush1.msra.mxu0 0.0
        %1124 = vmatprep.subr.mxu0 0.0
        %1125 = vmatpush1.msra.mxu0 0.0
        %1126 = vmatprep.subr.mxu0 0.0
        %1127 = vmatpush1.msra.mxu0 0.0
        %1128 = vmatprep.subr.mxu0 0.0
        %1129 = vmatpush1.msra.mxu0 0.0
        %1130 = vmatprep.subr.mxu0 0.0
        %1131 = vmatpush1.msra.mxu0 0.0
        %1132 = vmatprep.subr.mxu0 0.0
        %1133 = vmatpush1.msra.mxu0 0.0
        %1134 = vmatprep.subr.mxu0 0.0
        %1135 = vmatpush1.msra.mxu0 0.0
        %1136 = vmatprep.subr.mxu0 0.0
        %1137 = vmatpush1.msra.mxu0 0.0
        %1138 = vmatprep.subr.mxu0 0.0
        %1139 = vmatpush1.msra.mxu0 0.0
        %1140 = vmatprep.subr.mxu0 0.0
        %1141 = vmatpush1.msra.mxu0 0.0
        %1142 = vmatprep.subr.mxu0 0.0
        %1143 = vmatpush1.msra.mxu0 0.0
        %1144 = vmatprep.subr.mxu0 0.0
        %1145 = vmatpush1.msra.mxu0 0.0
        %1146 = vmatprep.subr.mxu0 0.0
        %1147 = vmatpush1.msra.mxu0 0.0
        %1148 = vmatprep.subr.mxu0 0.0
        %1149 = vmatpush1.msra.mxu0 0.0
        %1150 = vmatprep.subr.mxu0 0.0
        %1151 = vmatpush1.msra.mxu0 0.0
        %1152 = vmatprep.subr.mxu0 0.0
        %1153 = vmatpush1.msra.mxu0 0.0
        %1154 = vmatprep.subr.mxu0 0.0
        %1155 = vmatpush1.msra.mxu0 0.0
        %1156 = vmatprep.subr.mxu0 0.0
        %1157 = vmatpush1.msra.mxu0 0.0
        %1158 = vmatprep.subr.mxu0 0.0
        %1159 = vmatpush1.msra.mxu0 0.0
        %1160 = vmatprep.subr.mxu0 0.0
        %1161 = vmatpush1.msra.mxu0 0.0
        %1162 = vmatprep.subr.mxu0 0.0
        %1163 = vmatpush1.msra.mxu0 0.0
        %1164 = vmatprep.subr.mxu0 0.0
        %1165 = vmatpush1.msra.mxu0 0.0
        %1166 = vmatprep.subr.mxu0 0.0
        %1167 = vmatpush1.msra.mxu0 0.0
        %1168 = vmatprep.subr.mxu0 0.0
        %1169 = vmatpush1.msra.mxu0 0.0
        %1170 = vmatprep.subr.mxu0 0.0
        %1171 = vmatpush1.msra.mxu0 0.0
        %1172 = vmatprep.subr.mxu0 0.0
        %1173 = vmatpush1.msra.mxu0 0.0
        %1174 = vmatprep.subr.mxu0 0.0
        %1175 = vmatpush1.msra.mxu0 0.0
        %1176 = vmatprep.subr.mxu0 0.0
        %1177 = vmatpush1.msra.mxu0 0.0
        %1178 = vmatprep.mubr.f32.mxu0 0.0
        %1179 = vmatmul.mubr.f32.gmra.mrb[0].mxu0 %v1109
        %v1180 = vpop.f32.mrb[0].mxu0
        %v1181 = vadd.f32 1e-05, %v1180
        %v1182 = vpop.f32.mrb[0].mxu0
        %1183 = vmatprep.mubr.f32.mxu0 0.0
        %1184 = vmatmul.mubr.f32.gmra.mrb[0].mxu0 %v1112
        %v1185 = vpop.f32.mrb[0].mxu0
        %v1186 = vadd.f32 1e-05, %v1185
        %v1187 = vpop.f32.mrb[0].mxu0
        %1188 = vdwg.mxu0
        %v1189 = vrsqrt.pop %v1181
        %v1190 = vrsqrt.pop %v1186
        %v1191 = vmul.f32 %v1104, %v1189
        %v1192 = vmul.f32 %v1105, %v1190
        %v1193 = vlaneseq
        %v1194 = vshrl.u32 %v1193, 7
        %v1195 = vsub.s32 3, %v1194
        %v1196 = vrot.slane %v524, %v1195
        %v1197 = vmul.f32 %v1191, %v1196
        %v1198 = vmul.f32 %v1192, %v1196
        %v1199 = vlaneseq
        %v1200 = vshrl.u32 %v1199, 7
        %v1201 = vsub.s32 4, %v1200
        %v1202 = vrot.slane %v524, %v1201
        %v1203 = vadd.f32 %v1197, %v1202
        %v1204 = vadd.f32 %v1198, %v1202
        %v1205 = vmul.f32 %v1203, 0.4204482
        %v1206 = vmul.f32 %v1204, 0.4204482
        %v1208 = vsel %vm549, %v773, 0
        %1210 = vmatprep.subr.mxu0 0.0
        %1211 = vmatpush1.msra.mxu0 %v835
        %1212 = vmatprep.subr.mxu0 0.0
        %1213 = vmatpush1.msra.mxu0 %v836
        %1214 = vmatprep.subr.mxu0 0.0
        %1215 = vmatpush1.msra.mxu0 %v837
        %1216 = vmatprep.subr.mxu0 0.0
        %1217 = vmatpush1.msra.mxu0 %v838
        %1218 = vmatprep.subr.mxu0 0.0
        %1219 = vmatpush1.msra.mxu0 0.0
        %1220 = vmatprep.subr.mxu0 0.0
        %1221 = vmatpush1.msra.mxu0 0.0
        %1222 = vmatprep.subr.mxu0 0.0
        %1223 = vmatpush1.msra.mxu0 0.0
        %1224 = vmatprep.subr.mxu0 0.0
        %1225 = vmatpush1.msra.mxu0 0.0
        %1226 = vmatprep.subr.mxu0 0.0
        %1227 = vmatpush1.msra.mxu0 0.0
        %1228 = vmatprep.subr.mxu0 0.0
        %1229 = vmatpush1.msra.mxu0 0.0
        %1230 = vmatprep.subr.mxu0 0.0
        %1231 = vmatpush1.msra.mxu0 0.0
        %1232 = vmatprep.subr.mxu0 0.0
        %1233 = vmatpush1.msra.mxu0 0.0
        %1234 = vmatprep.subr.mxu0 0.0
        %1235 = vmatpush1.msra.mxu0 0.0
        %1236 = vmatprep.subr.mxu0 0.0
        %1237 = vmatpush1.msra.mxu0 0.0
        %1238 = vmatprep.subr.mxu0 0.0
        %1239 = vmatpush1.msra.mxu0 0.0
        %1240 = vmatprep.subr.mxu0 0.0
        %1241 = vmatpush1.msra.mxu0 0.0
        %1242 = vmatprep.subr.mxu0 0.0
        %1243 = vmatpush1.msra.mxu0 0.0
        %1244 = vmatprep.subr.mxu0 0.0
        %1245 = vmatpush1.msra.mxu0 0.0
        %1246 = vmatprep.subr.mxu0 0.0
        %1247 = vmatpush1.msra.mxu0 0.0
        %1248 = vmatprep.subr.mxu0 0.0
        %1249 = vmatpush1.msra.mxu0 0.0
        %1250 = vmatprep.subr.mxu0 0.0
        %1251 = vmatpush1.msra.mxu0 0.0
        %1252 = vmatprep.subr.mxu0 0.0
        %1253 = vmatpush1.msra.mxu0 0.0
        %1254 = vmatprep.subr.mxu0 0.0
        %1255 = vmatpush1.msra.mxu0 0.0
        %1256 = vmatprep.subr.mxu0 0.0
        %1257 = vmatpush1.msra.mxu0 0.0
        %1258 = vmatprep.subr.mxu0 0.0
        %1259 = vmatpush1.msra.mxu0 0.0
        %1260 = vmatprep.subr.mxu0 0.0
        %1261 = vmatpush1.msra.mxu0 0.0
        %1262 = vmatprep.subr.mxu0 0.0
        %1263 = vmatpush1.msra.mxu0 0.0
        %1264 = vmatprep.subr.mxu0 0.0
        %1265 = vmatpush1.msra.mxu0 0.0
        %1266 = vmatprep.subr.mxu0 0.0
        %1267 = vmatpush1.msra.mxu0 0.0
        %1268 = vmatprep.subr.mxu0 0.0
        %1269 = vmatpush1.msra.mxu0 0.0
        %1270 = vmatprep.subr.mxu0 0.0
        %1271 = vmatpush1.msra.mxu0 0.0
        %1272 = vmatprep.subr.mxu0 0.0
        %1273 = vmatpush1.msra.mxu0 0.0
        %1274 = vmatprep.mubr.f32.mxu0 0.0
        %1275 = vmatmul.mubr.f32.gmra.mrb[0].mxu0 %v1208
        %v1276 = vpop.f32.mrb[0].mxu0
        %v1277 = vadd.f32 0.0, %v1276
        %v1278 = vpop.f32.mrb[0].mxu0
        %1279 = vdwg.mxu0
        %v1280 = vsub.f32 %v773, %v1277
        %v1281 = vmul.f32 %v1280, %v1280
        %v1283 = vsel %vm549, %v1281, 0
        %1285 = vmatprep.subr.mxu0 0.0
        %1286 = vmatpush1.msra.mxu0 %v835
        %1287 = vmatprep.subr.mxu0 0.0
        %1288 = vmatpush1.msra.mxu0 %v836
        %1289 = vmatprep.subr.mxu0 0.0
        %1290 = vmatpush1.msra.mxu0 %v837
        %1291 = vmatprep.subr.mxu0 0.0
        %1292 = vmatpush1.msra.mxu0 %v838
        %1293 = vmatprep.subr.mxu0 0.0
        %1294 = vmatpush1.msra.mxu0 0.0
        %1295 = vmatprep.subr.mxu0 0.0
        %1296 = vmatpush1.msra.mxu0 0.0
        %1297 = vmatprep.subr.mxu0 0.0
        %1298 = vmatpush1.msra.mxu0 0.0
        %1299 = vmatprep.subr.mxu0 0.0
        %1300 = vmatpush1.msra.mxu0 0.0
        %1301 = vmatprep.subr.mxu0 0.0
        %1302 = vmatpush1.msra.mxu0 0.0
        %1303 = vmatprep.subr.mxu0 0.0
        %1304 = vmatpush1.msra.mxu0 0.0
        %1305 = vmatprep.subr.mxu0 0.0
        %1306 = vmatpush1.msra.mxu0 0.0
        %1307 = vmatprep.subr.mxu0 0.0
        %1308 = vmatpush1.msra.mxu0 0.0
        %1309 = vmatprep.subr.mxu0 0.0
        %1310 = vmatpush1.msra.mxu0 0.0
        %1311 = vmatprep.subr.mxu0 0.0
        %1312 = vmatpush1.msra.mxu0 0.0
        %1313 = vmatprep.subr.mxu0 0.0
        %1314 = vmatpush1.msra.mxu0 0.0
        %1315 = vmatprep.subr.mxu0 0.0
        %1316 = vmatpush1.msra.mxu0 0.0
        %1317 = vmatprep.subr.mxu0 0.0
        %1318 = vmatpush1.msra.mxu0 0.0
        %1319 = vmatprep.subr.mxu0 0.0
        %1320 = vmatpush1.msra.mxu0 0.0
        %1321 = vmatprep.subr.mxu0 0.0
        %1322 = vmatpush1.msra.mxu0 0.0
        %1323 = vmatprep.subr.mxu0 0.0
        %1324 = vmatpush1.msra.mxu0 0.0
        %1325 = vmatprep.subr.mxu0 0.0
        %1326 = vmatpush1.msra.mxu0 0.0
        %1327 = vmatprep.subr.mxu0 0.0
        %1328 = vmatpush1.msra.mxu0 0.0
        %1329 = vmatprep.subr.mxu0 0.0
        %1330 = vmatpush1.msra.mxu0 0.0
        %1331 = vmatprep.subr.mxu0 0.0
        %1332 = vmatpush1.msra.mxu0 0.0
        %1333 = vmatprep.subr.mxu0 0.0
        %1334 = vmatpush1.msra.mxu0 0.0
        %1335 = vmatprep.subr.mxu0 0.0
        %1336 = vmatpush1.msra.mxu0 0.0
        %1337 = vmatprep.subr.mxu0 0.0
        %1338 = vmatpush1.msra.mxu0 0.0
        %1339 = vmatprep.subr.mxu0 0.0
        %1340 = vmatpush1.msra.mxu0 0.0
        %1341 = vmatprep.subr.mxu0 0.0
        %1342 = vmatpush1.msra.mxu0 0.0
        %1343 = vmatprep.subr.mxu0 0.0
        %1344 = vmatpush1.msra.mxu0 0.0
        %1345 = vmatprep.subr.mxu0 0.0
        %1346 = vmatpush1.msra.mxu0 0.0
        %1347 = vmatprep.subr.mxu0 0.0
        %1348 = vmatpush1.msra.mxu0 0.0
        %1349 = vmatprep.mubr.f32.mxu0 0.0
        %1350 = vmatmul.mubr.f32.gmra.mrb[0].mxu0 %v1283
        %v1351 = vpop.f32.mrb[0].mxu0
        %v1352 = vadd.f32 1e-05, %v1351
        %v1353 = vpop.f32.mrb[0].mxu0
        %1354 = vdwg.mxu0
        %v1355 = vrsqrt.pop %v1352
        %v1356 = vmul.f32 %v1280, %v1355
        %v1357 = vlaneseq
        %v1358 = vshrl.u32 %v1357, 7
        %v1359 = vsub.s32 5, %v1358
        %v1360 = vrot.slane %v524, %v1359
        %v1361 = vmul.f32 %v1356, %v1360
        %v1362 = vlaneseq
        %v1363 = vshrl.u32 %v1362, 7
        %v1364 = vsub.s32 6, %v1363
        %v1365 = vrot.slane %v524, %v1364
        %v1366 = vadd.f32 %v1361, %v1365
        %v1367 = vmul.f32 %v1366, 0.4204482
        %v1368 = vpack.c.bf16 %v1021, %v1021
        %v1369 = vpack.c.bf16 %v1022, %v1022
        %v1372 = vunpack.c.l.s4 1966171168
        %v1373 = vunpack.c.0.s8 %v1372
        %v1374 = vlaneseq
        %v1375 = vshrl.u32 %v1374, 7
        %v1376 = vsub.s32 %v1373, %v1375
        %v1377 = vrot.slane %v1367, %v1376
        %v1378 = vcombine.high %v1377, %v1377
        %v1380 = vunpack.c.l.s4 1966171168
        %v1381 = vunpack.c.0.s8 %v1380
        %v1382 = vlaneseq
        %v1383 = vshrl.u32 %v1382, 7
        %v1384 = vsub.s32 %v1381, %v1383
        %v1385 = vrot.slane %v1377, %v1384
        %v1387 = vunpack.c.l.s4 1966171168
        %v1388 = vunpack.c.0.s8 %v1387
        %v1389 = vlaneseq
        %v1390 = vshrl.u32 %v1389, 7
        %v1391 = vsub.s32 %v1388, %v1390
        %v1392 = vrot.slane %v1378, %v1391
        %v1395 = vpack.c.bf16 %v1385, %v1205
        %v1396 = vpack.c.bf16 %v1392, %v1206
        %v1399 = vunpack.c.l.s4 1966171168
        %v1400 = vunpack.c.0.s8 %v1399
        %v1401 = vlaneseq
        %v1402 = vshrl.u32 %v1401, 7
        %v1403 = vsub.s32 %v1400, %v1402
        %v1404 = vrot.slane %v830, %v1403
        %v1405 = vcombine.high %v1404, %v1404
        %v1407 = vunpack.c.l.s4 1966171168
        %v1408 = vunpack.c.0.s8 %v1407
        %v1409 = vlaneseq
        %v1410 = vshrl.u32 %v1409, 7
        %v1411 = vsub.s32 %v1408, %v1410
        %v1412 = vrot.slane %v1404, %v1411
        %v1414 = vunpack.c.l.s4 1966171168
        %v1415 = vunpack.c.0.s8 %v1414
        %v1416 = vlaneseq
        %v1417 = vshrl.u32 %v1416, 7
        %v1418 = vsub.s32 %v1415, %v1417
        %v1419 = vrot.slane %v1405, %v1418
        %v1422 = vpack.c.bf16 %v1412, %v704
        %v1423 = vpack.c.bf16 %v1419, %v707
        %v1424 = vld [vmem:[%s440] sm:$0x1]
        %v1425 = vld [vmem:[%s440 + $0x1] sm:$0x1]
        %v1426 = vld [vmem:[%s519] sm:$0xff]
        %v1427 = vld [vmem:[%s519 + $0x8] sm:$0xff]
        %vm1428 = vcmp.gt.f32.partialorder %v1426, 0.0
        %vm1429 = vcmp.gt.f32.partialorder %v1427, 0.0
        %vm1430 = vcmp.gt.f32.partialorder %v1424, 0.0
        %vm1431 = vcmp.gt.f32.partialorder %v1425, 0.0
        %v1432 = vsel %vm1428, 1, 0
        %v1433 = vsel %vm1429, 1, 0
        %1434 = vset.pattern.permute.xlu0 0
        %1435 = vperm.xlu0 %1434, %v1432
        %v1436 = vpop.permute.xlu0 %1435
        %1437 = vset.pattern.permute.xlu0 0
        %1438 = vperm.xlu0 %1437, %v1433
        %v1439 = vpop.permute.xlu0 %1438
        %vm1440 = vcmp.eq.s32.totalorder %v1436, 1
        %vm1441 = vcmp.eq.s32.totalorder %v1439, 1
        %v1442 = vsel %vm1430, 1, 0
        %v1443 = vsel %vm1431, 1, 0
        %v1444 = vlaneseq
        %v1445 = vshrl.u32 %v1444, 7
        %v1446 = vsub.s32 0, %v1445
        %v1447 = vrot.slane %v1442, %v1446
        %v1448 = vlaneseq
        %v1449 = vshrl.u32 %v1448, 7
        %v1450 = vsub.s32 0, %v1449
        %v1451 = vrot.slane %v1443, %v1450
        %vm1452 = vcmp.eq.s32.totalorder %v1447, 1
        %vm1453 = vcmp.eq.s32.totalorder %v1451, 1
        %vm1454 = vmand %vm1440, %vm1452
        %vm1455 = vmand %vm1441, %vm1453
        %vm1456 = vcmask 31744
        %v1458 = vsel %vm1456, %v1368, 0
        %v1461 = vsel %vm1456, %v1395, 0
        %1463 = vmatprep.subr.bf16.mxu0 0
        %1464 = vmatpush1.bf16.xpose.msra.mxu0 %v1461
        %1465 = vmatprep.subr.bf16.mxu0 0
        %1466 = vmatpush1.bf16.xpose.msra.mxu0 0
        %1467 = vmatprep.subr.bf16.mxu0 0
        %1468 = vmatpush1.bf16.xpose.msra.mxu0 0
        %1469 = vmatprep.subr.bf16.mxu0 0
        %1470 = vmatpush1.bf16.xpose.msra.mxu0 0
        %1471 = vmatprep.subr.bf16.mxu0 0
        %1472 = vmatpush1.bf16.xpose.msra.mxu0 0
        %1473 = vmatprep.subr.bf16.mxu0 0
        %1474 = vmatpush1.bf16.xpose.msra.mxu0 0
        %1475 = vmatprep.subr.bf16.mxu0 0
        %1476 = vmatpush1.bf16.xpose.msra.mxu0 0
        %1477 = vmatprep.subr.bf16.mxu0 0
        %1478 = vmatpush1.bf16.xpose.msra.mxu0 0
        %1479 = vmatprep.subr.bf16.mxu0 0
        %1480 = vmatpush1.bf16.xpose.msra.mxu0 0
        %1481 = vmatprep.subr.bf16.mxu0 0
        %1482 = vmatpush1.bf16.xpose.msra.mxu0 0
        %1483 = vmatprep.subr.bf16.mxu0 0
        %1484 = vmatpush1.bf16.xpose.msra.mxu0 0
        %1485 = vmatprep.subr.bf16.mxu0 0
        %1486 = vmatpush1.bf16.xpose.msra.mxu0 0
        %1487 = vmatprep.subr.bf16.mxu0 0
        %1488 = vmatpush1.bf16.xpose.msra.mxu0 0
        %1489 = vmatprep.subr.bf16.mxu0 0
        %1490 = vmatpush1.bf16.xpose.msra.mxu0 0
        %1491 = vmatprep.subr.bf16.mxu0 0
        %1492 = vmatpush1.bf16.xpose.msra.mxu0 0
        %1493 = vmatprep.subr.bf16.mxu0 0
        %1494 = vmatpush1.bf16.xpose.msra.mxu0 0
        %1495 = vmatprep.mubr.bf16.mxu0 0
        %1496 = vmatmul.mubr.bf16.gmra.mrb[0].mxu0 %v1458
        %v1497 = vpop.f32.mrb[0].mxu0
        %v1498 = vadd.f32 0.0, %v1497
        %v1499 = vpop.f32.mrb[0].mxu0
        %v1500 = vpop.f32.mrb[0].mxu0
        %v1501 = vpop.f32.mrb[0].mxu0
        %1502 = vdwg.mxu0
        %v1504 = vsel %vm1456, %v1369, 0
        %v1507 = vsel %vm1456, %v1396, 0
        %1509 = vmatprep.subr.bf16.mxu0 0
        %1510 = vmatpush1.bf16.xpose.msra.mxu0 %v1507
        %1511 = vmatprep.subr.bf16.mxu0 0
        %1512 = vmatpush1.bf16.xpose.msra.mxu0 0
        %1513 = vmatprep.subr.bf16.mxu0 0
        %1514 = vmatpush1.bf16.xpose.msra.mxu0 0
        %1515 = vmatprep.subr.bf16.mxu0 0
        %1516 = vmatpush1.bf16.xpose.msra.mxu0 0
        %1517 = vmatprep.subr.bf16.mxu0 0
        %1518 = vmatpush1.bf16.xpose.msra.mxu0 0
        %1519 = vmatprep.subr.bf16.mxu0 0
        %1520 = vmatpush1.bf16.xpose.msra.mxu0 0
        %1521 = vmatprep.subr.bf16.mxu0 0
        %1522 = vmatpush1.bf16.xpose.msra.mxu0 0
        %1523 = vmatprep.subr.bf16.mxu0 0
        %1524 = vmatpush1.bf16.xpose.msra.mxu0 0
        %1525 = vmatprep.subr.bf16.mxu0 0
        %1526 = vmatpush1.bf16.xpose.msra.mxu0 0
        %1527 = vmatprep.subr.bf16.mxu0 0
        %1528 = vmatpush1.bf16.xpose.msra.mxu0 0
        %1529 = vmatprep.subr.bf16.mxu0 0
        %1530 = vmatpush1.bf16.xpose.msra.mxu0 0
        %1531 = vmatprep.subr.bf16.mxu0 0
        %1532 = vmatpush1.bf16.xpose.msra.mxu0 0
        %1533 = vmatprep.subr.bf16.mxu0 0
        %1534 = vmatpush1.bf16.xpose.msra.mxu0 0
        %1535 = vmatprep.subr.bf16.mxu0 0
        %1536 = vmatpush1.bf16.xpose.msra.mxu0 0
        %1537 = vmatprep.subr.bf16.mxu0 0
        %1538 = vmatpush1.bf16.xpose.msra.mxu0 0
        %1539 = vmatprep.subr.bf16.mxu0 0
        %1540 = vmatpush1.bf16.xpose.msra.mxu0 0
        %1541 = vmatprep.mubr.bf16.mxu0 0
        %1542 = vmatmul.mubr.bf16.gmra.mrb[0].mxu0 %v1504
        %v1543 = vpop.f32.mrb[0].mxu0
        %v1544 = vadd.f32 0.0, %v1543
        %v1545 = vpop.f32.mrb[0].mxu0
        %v1546 = vpop.f32.mrb[0].mxu0
        %v1547 = vpop.f32.mrb[0].mxu0
        %1548 = vdwg.mxu0
        %v1549 = vsel %vm1454, %v1498, -1e+30
        %v1550 = vsel %vm1455, %v1544, -1e+30
        %vm1551 = vcmask 72704
        %v1552 = vsel %vm1551, %v1549, -inf
        %1553 = vmax.xlane.f32.xlu0 %v1552
        %v1554 = vpop.xlane.xlu0 %1553
        %v1555 = vsel %vm1551, %v1550, -inf
        %1556 = vmax.xlane.f32.xlu0 %v1555
        %v1557 = vpop.xlane.xlu0 %1556
        %v1558 = vsub.f32 %v1549, %v1554
        %v1559 = vsub.f32 %v1550, %v1557
        %v1560 = vmul.f32 %v1558, 1.442695
        %v1561 = vpow.pop %v1560
        %v1562 = vmul.f32 %v1559, 1.442695
        %v1563 = vpow.pop %v1562
        %v1564 = vsel %vm1551, %v1561, 0.0
        %1565 = vadd.xlane.f32.xlu0 %v1564
        %v1566 = vpop.xlane.xlu0 %1565
        %v1567 = vsel %vm1551, %v1563, 0.0
        %1568 = vadd.xlane.f32.xlu0 %v1567
        %v1569 = vpop.xlane.xlu0 %1568
        %v1570 = vrcp.pop %v1566
        %v1571 = vrcp.pop %v1569
        %v1572 = vmul.f32 %v1561, %v1570
        %v1573 = vmul.f32 %v1563, %v1571
        %v1574 = vpack.c.bf16 %v1572, %v1572
        %v1575 = vpack.c.bf16 %v1573, %v1573
        %v1577 = vsel %vm1551, %v1574, 0
        %vm1579 = vcmask 1043456
        %vm1580 = vcmask 1044480
        %v1581 = vsel %vm1579, 4294967295, 65535
        %v1582 = vsel %vm1580, %v1581, 0
        %v1584 = vand.u32 %v1422, %v1582
        %1586 = vmatprep.subr.bf16.mxu0 0
        %1587 = vmatpush1.bf16.msra.mxu0 %v1584
        %1588 = vmatprep.subr.bf16.mxu0 0
        %1589 = vmatpush1.bf16.msra.mxu0 0
        %1590 = vmatprep.subr.bf16.mxu0 0
        %1591 = vmatpush1.bf16.msra.mxu0 0
        %1592 = vmatprep.subr.bf16.mxu0 0
        %1593 = vmatpush1.bf16.msra.mxu0 0
        %1594 = vmatprep.subr.bf16.mxu0 0
        %1595 = vmatpush1.bf16.msra.mxu0 0
        %1596 = vmatprep.subr.bf16.mxu0 0
        %1597 = vmatpush1.bf16.msra.mxu0 0
        %1598 = vmatprep.subr.bf16.mxu0 0
        %1599 = vmatpush1.bf16.msra.mxu0 0
        %1600 = vmatprep.subr.bf16.mxu0 0
        %1601 = vmatpush1.bf16.msra.mxu0 0
        %1602 = vmatprep.subr.bf16.mxu0 0
        %1603 = vmatpush1.bf16.msra.mxu0 0
        %1604 = vmatprep.subr.bf16.mxu0 0
        %1605 = vmatpush1.bf16.msra.mxu0 0
        %1606 = vmatprep.subr.bf16.mxu0 0
        %1607 = vmatpush1.bf16.msra.mxu0 0
        %1608 = vmatprep.subr.bf16.mxu0 0
        %1609 = vmatpush1.bf16.msra.mxu0 0
        %1610 = vmatprep.subr.bf16.mxu0 0
        %1611 = vmatpush1.bf16.msra.mxu0 0
        %1612 = vmatprep.subr.bf16.mxu0 0
        %1613 = vmatpush1.bf16.msra.mxu0 0
        %1614 = vmatprep.subr.bf16.mxu0 0
        %1615 = vmatpush1.bf16.msra.mxu0 0
        %1616 = vmatprep.subr.bf16.mxu0 0
        %1617 = vmatpush1.bf16.msra.mxu0 0
        %1618 = vmatprep.mubr.bf16.mxu0 0
        %1619 = vmatmul.mubr.bf16.gmra.mrb[0].mxu0 %v1577
        %v1620 = vpop.f32.mrb[0].mxu0
        %v1621 = vadd.f32 0.0, %v1620
        %v1622 = vpop.f32.mrb[0].mxu0
        %v1623 = vpop.f32.mrb[0].mxu0
        %v1624 = vpop.f32.mrb[0].mxu0
        %1625 = vdwg.mxu0
        %v1627 = vsel %vm1551, %v1575, 0
        %v1630 = vand.u32 %v1423, %v1582
        %1632 = vmatprep.subr.bf16.mxu0 0
        %1633 = vmatpush1.bf16.msra.mxu0 %v1630
        %1634 = vmatprep.subr.bf16.mxu0 0
        %1635 = vmatpush1.bf16.msra.mxu0 0
        %1636 = vmatprep.subr.bf16.mxu0 0
        %1637 = vmatpush1.bf16.msra.mxu0 0
        %1638 = vmatprep.subr.bf16.mxu0 0
        %1639 = vmatpush1.bf16.msra.mxu0 0
        %1640 = vmatprep.subr.bf16.mxu0 0
        %1641 = vmatpush1.bf16.msra.mxu0 0
        %1642 = vmatprep.subr.bf16.mxu0 0
        %1643 = vmatpush1.bf16.msra.mxu0 0
        %1644 = vmatprep.subr.bf16.mxu0 0
        %1645 = vmatpush1.bf16.msra.mxu0 0
        %1646 = vmatprep.subr.bf16.mxu0 0
        %1647 = vmatpush1.bf16.msra.mxu0 0
        %1648 = vmatprep.subr.bf16.mxu0 0
        %1649 = vmatpush1.bf16.msra.mxu0 0
        %1650 = vmatprep.subr.bf16.mxu0 0
        %1651 = vmatpush1.bf16.msra.mxu0 0
        %1652 = vmatprep.subr.bf16.mxu0 0
        %1653 = vmatpush1.bf16.msra.mxu0 0
        %1654 = vmatprep.subr.bf16.mxu0 0
        %1655 = vmatpush1.bf16.msra.mxu0 0
        %1656 = vmatprep.subr.bf16.mxu0 0
        %1657 = vmatpush1.bf16.msra.mxu0 0
        %1658 = vmatprep.subr.bf16.mxu0 0
        %1659 = vmatpush1.bf16.msra.mxu0 0
        %1660 = vmatprep.subr.bf16.mxu0 0
        %1661 = vmatpush1.bf16.msra.mxu0 0
        %1662 = vmatprep.subr.bf16.mxu0 0
        %1663 = vmatpush1.bf16.msra.mxu0 0
        %1664 = vmatprep.mubr.bf16.mxu0 0
        %1665 = vmatmul.mubr.bf16.gmra.mrb[0].mxu0 %v1627
        %v1666 = vpop.f32.mrb[0].mxu0
        %v1667 = vadd.f32 0.0, %v1666
        %v1668 = vpop.f32.mrb[0].mxu0
        %v1669 = vpop.f32.mrb[0].mxu0
        %v1670 = vpop.f32.mrb[0].mxu0
        %1671 = vdwg.mxu0
        %1673 = vrot.lane.b32.xlu0 %v1368, 124
        %v1674 = vpop.permute.xlu0 %1673
        %1676 = vrot.lane.b32.xlu0 %v1395, 124
        %v1677 = vpop.permute.xlu0 %1676
        %v1679 = vsel %vm1456, %v1674, 0
        %v1682 = vsel %vm1456, %v1677, 0
        %1684 = vmatprep.subr.bf16.mxu0 0
        %1685 = vmatpush1.bf16.xpose.msra.mxu0 %v1682
        %1686 = vmatprep.subr.bf16.mxu0 0
        %1687 = vmatpush1.bf16.xpose.msra.mxu0 0
        %1688 = vmatprep.subr.bf16.mxu0 0
        %1689 = vmatpush1.bf16.xpose.msra.mxu0 0
        %1690 = vmatprep.subr.bf16.mxu0 0
        %1691 = vmatpush1.bf16.xpose.msra.mxu0 0
        %1692 = vmatprep.subr.bf16.mxu0 0
        %1693 = vmatpush1.bf16.xpose.msra.mxu0 0
        %1694 = vmatprep.subr.bf16.mxu0 0
        %1695 = vmatpush1.bf16.xpose.msra.mxu0 0
        %1696 = vmatprep.subr.bf16.mxu0 0
        %1697 = vmatpush1.bf16.xpose.msra.mxu0 0
        %1698 = vmatprep.subr.bf16.mxu0 0
        %1699 = vmatpush1.bf16.xpose.msra.mxu0 0
        %1700 = vmatprep.subr.bf16.mxu0 0
        %1701 = vmatpush1.bf16.xpose.msra.mxu0 0
        %1702 = vmatprep.subr.bf16.mxu0 0
        %1703 = vmatpush1.bf16.xpose.msra.mxu0 0
        %1704 = vmatprep.subr.bf16.mxu0 0
        %1705 = vmatpush1.bf16.xpose.msra.mxu0 0
        %1706 = vmatprep.subr.bf16.mxu0 0
        %1707 = vmatpush1.bf16.xpose.msra.mxu0 0
        %1708 = vmatprep.subr.bf16.mxu0 0
        %1709 = vmatpush1.bf16.xpose.msra.mxu0 0
        %1710 = vmatprep.subr.bf16.mxu0 0
        %1711 = vmatpush1.bf16.xpose.msra.mxu0 0
        %1712 = vmatprep.subr.bf16.mxu0 0
        %1713 = vmatpush1.bf16.xpose.msra.mxu0 0
        %1714 = vmatprep.subr.bf16.mxu0 0
        %1715 = vmatpush1.bf16.xpose.msra.mxu0 0
        %1716 = vmatprep.mubr.bf16.mxu0 0
        %1717 = vmatmul.mubr.bf16.gmra.mrb[0].mxu0 %v1679
        %v1718 = vpop.f32.mrb[0].mxu0
        %v1719 = vadd.f32 0.0, %v1718
        %v1720 = vpop.f32.mrb[0].mxu0
        %v1721 = vpop.f32.mrb[0].mxu0
        %v1722 = vpop.f32.mrb[0].mxu0
        %1723 = vdwg.mxu0
        %1725 = vrot.lane.b32.xlu0 %v1369, 124
        %v1726 = vpop.permute.xlu0 %1725
        %1728 = vrot.lane.b32.xlu0 %v1396, 124
        %v1729 = vpop.permute.xlu0 %1728
        %v1731 = vsel %vm1456, %v1726, 0
        %v1734 = vsel %vm1456, %v1729, 0
        %1736 = vmatprep.subr.bf16.mxu0 0
        %1737 = vmatpush1.bf16.xpose.msra.mxu0 %v1734
        %1738 = vmatprep.subr.bf16.mxu0 0
        %1739 = vmatpush1.bf16.xpose.msra.mxu0 0
        %1740 = vmatprep.subr.bf16.mxu0 0
        %1741 = vmatpush1.bf16.xpose.msra.mxu0 0
        %1742 = vmatprep.subr.bf16.mxu0 0
        %1743 = vmatpush1.bf16.xpose.msra.mxu0 0
        %1744 = vmatprep.subr.bf16.mxu0 0
        %1745 = vmatpush1.bf16.xpose.msra.mxu0 0
        %1746 = vmatprep.subr.bf16.mxu0 0
        %1747 = vmatpush1.bf16.xpose.msra.mxu0 0
        %1748 = vmatprep.subr.bf16.mxu0 0
        %1749 = vmatpush1.bf16.xpose.msra.mxu0 0
        %1750 = vmatprep.subr.bf16.mxu0 0
        %1751 = vmatpush1.bf16.xpose.msra.mxu0 0
        %1752 = vmatprep.subr.bf16.mxu0 0
        %1753 = vmatpush1.bf16.xpose.msra.mxu0 0
        %1754 = vmatprep.subr.bf16.mxu0 0
        %1755 = vmatpush1.bf16.xpose.msra.mxu0 0
        %1756 = vmatprep.subr.bf16.mxu0 0
        %1757 = vmatpush1.bf16.xpose.msra.mxu0 0
        %1758 = vmatprep.subr.bf16.mxu0 0
        %1759 = vmatpush1.bf16.xpose.msra.mxu0 0
        %1760 = vmatprep.subr.bf16.mxu0 0
        %1761 = vmatpush1.bf16.xpose.msra.mxu0 0
        %1762 = vmatprep.subr.bf16.mxu0 0
        %1763 = vmatpush1.bf16.xpose.msra.mxu0 0
        %1764 = vmatprep.subr.bf16.mxu0 0
        %1765 = vmatpush1.bf16.xpose.msra.mxu0 0
        %1766 = vmatprep.subr.bf16.mxu0 0
        %1767 = vmatpush1.bf16.xpose.msra.mxu0 0
        %1768 = vmatprep.mubr.bf16.mxu0 0
        %1769 = vmatmul.mubr.bf16.gmra.mrb[0].mxu0 %v1731
        %v1770 = vpop.f32.mrb[0].mxu0
        %v1771 = vadd.f32 0.0, %v1770
        %v1772 = vpop.f32.mrb[0].mxu0
        %v1773 = vpop.f32.mrb[0].mxu0
        %v1774 = vpop.f32.mrb[0].mxu0
        %1775 = vdwg.mxu0
        %v1776 = vsel %vm1454, %v1719, -1e+30
        %v1777 = vsel %vm1455, %v1771, -1e+30
        %v1778 = vsel %vm1551, %v1776, -inf
        %1779 = vmax.xlane.f32.xlu0 %v1778
        %v1780 = vpop.xlane.xlu0 %1779
        %v1781 = vsel %vm1551, %v1777, -inf
        %1782 = vmax.xlane.f32.xlu0 %v1781
        %v1783 = vpop.xlane.xlu0 %1782
        %v1784 = vsub.f32 %v1776, %v1780
        %v1785 = vsub.f32 %v1777, %v1783
        %v1786 = vmul.f32 %v1784, 1.442695
        %v1787 = vpow.pop %v1786
        %v1788 = vmul.f32 %v1785, 1.442695
        %v1789 = vpow.pop %v1788
        %v1790 = vsel %vm1551, %v1787, 0.0
        %1791 = vadd.xlane.f32.xlu0 %v1790
        %v1792 = vpop.xlane.xlu0 %1791
        %v1793 = vsel %vm1551, %v1789, 0.0
        %1794 = vadd.xlane.f32.xlu0 %v1793
        %v1795 = vpop.xlane.xlu0 %1794
        %v1796 = vrcp.pop %v1792
        %v1797 = vrcp.pop %v1795
        %v1798 = vmul.f32 %v1787, %v1796
        %v1799 = vmul.f32 %v1789, %v1797
        %v1800 = vpack.c.bf16 %v1798, %v1798
        %v1801 = vpack.c.bf16 %v1799, %v1799
        %1803 = vrot.lane.b32.xlu0 %v1422, 124
        %v1804 = vpop.permute.xlu0 %1803
        %v1806 = vsel %vm1551, %v1800, 0
        %v1809 = vand.u32 %v1804, %v1582
        %1811 = vmatprep.subr.bf16.mxu0 0
        %1812 = vmatpush1.bf16.msra.mxu0 %v1809
        %1813 = vmatprep.subr.bf16.mxu0 0
        %1814 = vmatpush1.bf16.msra.mxu0 0
        %1815 = vmatprep.subr.bf16.mxu0 0
        %1816 = vmatpush1.bf16.msra.mxu0 0
        %1817 = vmatprep.subr.bf16.mxu0 0
        %1818 = vmatpush1.bf16.msra.mxu0 0
        %1819 = vmatprep.subr.bf16.mxu0 0
        %1820 = vmatpush1.bf16.msra.mxu0 0
        %1821 = vmatprep.subr.bf16.mxu0 0
        %1822 = vmatpush1.bf16.msra.mxu0 0
        %1823 = vmatprep.subr.bf16.mxu0 0
        %1824 = vmatpush1.bf16.msra.mxu0 0
        %1825 = vmatprep.subr.bf16.mxu0 0
        %1826 = vmatpush1.bf16.msra.mxu0 0
        %1827 = vmatprep.subr.bf16.mxu0 0
        %1828 = vmatpush1.bf16.msra.mxu0 0
        %1829 = vmatprep.subr.bf16.mxu0 0
        %1830 = vmatpush1.bf16.msra.mxu0 0
        %1831 = vmatprep.subr.bf16.mxu0 0
        %1832 = vmatpush1.bf16.msra.mxu0 0
        %1833 = vmatprep.subr.bf16.mxu0 0
        %1834 = vmatpush1.bf16.msra.mxu0 0
        %1835 = vmatprep.subr.bf16.mxu0 0
        %1836 = vmatpush1.bf16.msra.mxu0 0
        %1837 = vmatprep.subr.bf16.mxu0 0
        %1838 = vmatpush1.bf16.msra.mxu0 0
        %1839 = vmatprep.subr.bf16.mxu0 0
        %1840 = vmatpush1.bf16.msra.mxu0 0
        %1841 = vmatprep.subr.bf16.mxu0 0
        %1842 = vmatpush1.bf16.msra.mxu0 0
        %1843 = vmatprep.mubr.bf16.mxu0 0
        %1844 = vmatmul.mubr.bf16.gmra.mrb[0].mxu0 %v1806
        %v1845 = vpop.f32.mrb[0].mxu0
        %v1846 = vadd.f32 0.0, %v1845
        %v1847 = vpop.f32.mrb[0].mxu0
        %v1848 = vpop.f32.mrb[0].mxu0
        %v1849 = vpop.f32.mrb[0].mxu0
        %1850 = vdwg.mxu0
        %1852 = vrot.lane.b32.xlu0 %v1423, 124
        %v1853 = vpop.permute.xlu0 %1852
        %v1855 = vsel %vm1551, %v1801, 0
        %v1858 = vand.u32 %v1853, %v1582
        %1860 = vmatprep.subr.bf16.mxu0 0
        %1861 = vmatpush1.bf16.msra.mxu0 %v1858
        %1862 = vmatprep.subr.bf16.mxu0 0
        %1863 = vmatpush1.bf16.msra.mxu0 0
        %1864 = vmatprep.subr.bf16.mxu0 0
        %1865 = vmatpush1.bf16.msra.mxu0 0
        %1866 = vmatprep.subr.bf16.mxu0 0
        %1867 = vmatpush1.bf16.msra.mxu0 0
        %1868 = vmatprep.subr.bf16.mxu0 0
        %1869 = vmatpush1.bf16.msra.mxu0 0
        %1870 = vmatprep.subr.bf16.mxu0 0
        %1871 = vmatpush1.bf16.msra.mxu0 0
        %1872 = vmatprep.subr.bf16.mxu0 0
        %1873 = vmatpush1.bf16.msra.mxu0 0
        %1874 = vmatprep.subr.bf16.mxu0 0
        %1875 = vmatpush1.bf16.msra.mxu0 0
        %1876 = vmatprep.subr.bf16.mxu0 0
        %1877 = vmatpush1.bf16.msra.mxu0 0
        %1878 = vmatprep.subr.bf16.mxu0 0
        %1879 = vmatpush1.bf16.msra.mxu0 0
        %1880 = vmatprep.subr.bf16.mxu0 0
        %1881 = vmatpush1.bf16.msra.mxu0 0
        %1882 = vmatprep.subr.bf16.mxu0 0
        %1883 = vmatpush1.bf16.msra.mxu0 0
        %1884 = vmatprep.subr.bf16.mxu0 0
        %1885 = vmatpush1.bf16.msra.mxu0 0
        %1886 = vmatprep.subr.bf16.mxu0 0
        %1887 = vmatpush1.bf16.msra.mxu0 0
        %1888 = vmatprep.subr.bf16.mxu0 0
        %1889 = vmatpush1.bf16.msra.mxu0 0
        %1890 = vmatprep.subr.bf16.mxu0 0
        %1891 = vmatpush1.bf16.msra.mxu0 0
        %1892 = vmatprep.mubr.bf16.mxu0 0
        %1893 = vmatmul.mubr.bf16.gmra.mrb[0].mxu0 %v1855
        %v1894 = vpop.f32.mrb[0].mxu0
        %v1895 = vadd.f32 0.0, %v1894
        %v1896 = vpop.f32.mrb[0].mxu0
        %v1897 = vpop.f32.mrb[0].mxu0
        %v1898 = vpop.f32.mrb[0].mxu0
        %1899 = vdwg.mxu0
        %1900 = vrot.lane.b32.xlu0 %v1368, 120
        %v1901 = vpop.permute.xlu0 %1900
        %1902 = vrot.lane.b32.xlu0 %v1395, 120
        %v1903 = vpop.permute.xlu0 %1902
        %v1905 = vsel %vm1456, %v1901, 0
        %v1908 = vsel %vm1456, %v1903, 0
        %1910 = vmatprep.subr.bf16.mxu0 0
        %1911 = vmatpush1.bf16.xpose.msra.mxu0 %v1908
        %1912 = vmatprep.subr.bf16.mxu0 0
        %1913 = vmatpush1.bf16.xpose.msra.mxu0 0
        %1914 = vmatprep.subr.bf16.mxu0 0
        %1915 = vmatpush1.bf16.xpose.msra.mxu0 0
        %1916 = vmatprep.subr.bf16.mxu0 0
        %1917 = vmatpush1.bf16.xpose.msra.mxu0 0
        %1918 = vmatprep.subr.bf16.mxu0 0
        %1919 = vmatpush1.bf16.xpose.msra.mxu0 0
        %1920 = vmatprep.subr.bf16.mxu0 0
        %1921 = vmatpush1.bf16.xpose.msra.mxu0 0
        %1922 = vmatprep.subr.bf16.mxu0 0
        %1923 = vmatpush1.bf16.xpose.msra.mxu0 0
        %1924 = vmatprep.subr.bf16.mxu0 0
        %1925 = vmatpush1.bf16.xpose.msra.mxu0 0
        %1926 = vmatprep.subr.bf16.mxu0 0
        %1927 = vmatpush1.bf16.xpose.msra.mxu0 0
        %1928 = vmatprep.subr.bf16.mxu0 0
        %1929 = vmatpush1.bf16.xpose.msra.mxu0 0
        %1930 = vmatprep.subr.bf16.mxu0 0
        %1931 = vmatpush1.bf16.xpose.msra.mxu0 0
        %1932 = vmatprep.subr.bf16.mxu0 0
        %1933 = vmatpush1.bf16.xpose.msra.mxu0 0
        %1934 = vmatprep.subr.bf16.mxu0 0
        %1935 = vmatpush1.bf16.xpose.msra.mxu0 0
        %1936 = vmatprep.subr.bf16.mxu0 0
        %1937 = vmatpush1.bf16.xpose.msra.mxu0 0
        %1938 = vmatprep.subr.bf16.mxu0 0
        %1939 = vmatpush1.bf16.xpose.msra.mxu0 0
        %1940 = vmatprep.subr.bf16.mxu0 0
        %1941 = vmatpush1.bf16.xpose.msra.mxu0 0
        %1942 = vmatprep.mubr.bf16.mxu0 0
        %1943 = vmatmul.mubr.bf16.gmra.mrb[0].mxu0 %v1905
        %v1944 = vpop.f32.mrb[0].mxu0
        %v1945 = vadd.f32 0.0, %v1944
        %v1946 = vpop.f32.mrb[0].mxu0
        %v1947 = vpop.f32.mrb[0].mxu0
        %v1948 = vpop.f32.mrb[0].mxu0
        %1949 = vdwg.mxu0
        %1950 = vrot.lane.b32.xlu0 %v1369, 120
        %v1951 = vpop.permute.xlu0 %1950
        %1952 = vrot.lane.b32.xlu0 %v1396, 120
        %v1953 = vpop.permute.xlu0 %1952
        %v1955 = vsel %vm1456, %v1951, 0
        %v1958 = vsel %vm1456, %v1953, 0
        %1960 = vmatprep.subr.bf16.mxu0 0
        %1961 = vmatpush1.bf16.xpose.msra.mxu0 %v1958
        %1962 = vmatprep.subr.bf16.mxu0 0
        %1963 = vmatpush1.bf16.xpose.msra.mxu0 0
        %1964 = vmatprep.subr.bf16.mxu0 0
        %1965 = vmatpush1.bf16.xpose.msra.mxu0 0
        %1966 = vmatprep.subr.bf16.mxu0 0
        %1967 = vmatpush1.bf16.xpose.msra.mxu0 0
        %1968 = vmatprep.subr.bf16.mxu0 0
        %1969 = vmatpush1.bf16.xpose.msra.mxu0 0
        %1970 = vmatprep.subr.bf16.mxu0 0
        %1971 = vmatpush1.bf16.xpose.msra.mxu0 0
        %1972 = vmatprep.subr.bf16.mxu0 0
        %1973 = vmatpush1.bf16.xpose.msra.mxu0 0
        %1974 = vmatprep.subr.bf16.mxu0 0
        %1975 = vmatpush1.bf16.xpose.msra.mxu0 0
        %1976 = vmatprep.subr.bf16.mxu0 0
        %1977 = vmatpush1.bf16.xpose.msra.mxu0 0
        %1978 = vmatprep.subr.bf16.mxu0 0
        %1979 = vmatpush1.bf16.xpose.msra.mxu0 0
        %1980 = vmatprep.subr.bf16.mxu0 0
        %1981 = vmatpush1.bf16.xpose.msra.mxu0 0
        %1982 = vmatprep.subr.bf16.mxu0 0
        %1983 = vmatpush1.bf16.xpose.msra.mxu0 0
        %1984 = vmatprep.subr.bf16.mxu0 0
        %1985 = vmatpush1.bf16.xpose.msra.mxu0 0
        %1986 = vmatprep.subr.bf16.mxu0 0
        %1987 = vmatpush1.bf16.xpose.msra.mxu0 0
        %1988 = vmatprep.subr.bf16.mxu0 0
        %1989 = vmatpush1.bf16.xpose.msra.mxu0 0
        %1990 = vmatprep.subr.bf16.mxu0 0
        %1991 = vmatpush1.bf16.xpose.msra.mxu0 0
        %1992 = vmatprep.mubr.bf16.mxu0 0
        %1993 = vmatmul.mubr.bf16.gmra.mrb[0].mxu0 %v1955
        %v1994 = vpop.f32.mrb[0].mxu0
        %v1995 = vadd.f32 0.0, %v1994
        %v1996 = vpop.f32.mrb[0].mxu0
        %v1997 = vpop.f32.mrb[0].mxu0
        %v1998 = vpop.f32.mrb[0].mxu0
        %1999 = vdwg.mxu0
        %v2000 = vsel %vm1454, %v1945, -1e+30
        %v2001 = vsel %vm1455, %v1995, -1e+30
        %v2002 = vsel %vm1551, %v2000, -inf
        %2003 = vmax.xlane.f32.xlu0 %v2002
        %v2004 = vpop.xlane.xlu0 %2003
        %v2005 = vsel %vm1551, %v2001, -inf
        %2006 = vmax.xlane.f32.xlu0 %v2005
        %v2007 = vpop.xlane.xlu0 %2006
        %v2008 = vsub.f32 %v2000, %v2004
        %v2009 = vsub.f32 %v2001, %v2007
        %v2010 = vmul.f32 %v2008, 1.442695
        %v2011 = vpow.pop %v2010
        %v2012 = vmul.f32 %v2009, 1.442695
        %v2013 = vpow.pop %v2012
        %v2014 = vsel %vm1551, %v2011, 0.0
        %2015 = vadd.xlane.f32.xlu0 %v2014
        %v2016 = vpop.xlane.xlu0 %2015
        %v2017 = vsel %vm1551, %v2013, 0.0
        %2018 = vadd.xlane.f32.xlu0 %v2017
        %v2019 = vpop.xlane.xlu0 %2018
        %v2020 = vrcp.pop %v2016
        %v2021 = vrcp.pop %v2019
        %v2022 = vmul.f32 %v2011, %v2020
        %v2023 = vmul.f32 %v2013, %v2021
        %v2024 = vpack.c.bf16 %v2022, %v2022
        %v2025 = vpack.c.bf16 %v2023, %v2023
        %2026 = vrot.lane.b32.xlu0 %v1422, 120
        %v2027 = vpop.permute.xlu0 %2026
        %v2029 = vsel %vm1551, %v2024, 0
        %v2032 = vand.u32 %v2027, %v1582
        %2034 = vmatprep.subr.bf16.mxu0 0
        %2035 = vmatpush1.bf16.msra.mxu0 %v2032
        %2036 = vmatprep.subr.bf16.mxu0 0
        %2037 = vmatpush1.bf16.msra.mxu0 0
        %2038 = vmatprep.subr.bf16.mxu0 0
        %2039 = vmatpush1.bf16.msra.mxu0 0
        %2040 = vmatprep.subr.bf16.mxu0 0
        %2041 = vmatpush1.bf16.msra.mxu0 0
        %2042 = vmatprep.subr.bf16.mxu0 0
        %2043 = vmatpush1.bf16.msra.mxu0 0
        %2044 = vmatprep.subr.bf16.mxu0 0
        %2045 = vmatpush1.bf16.msra.mxu0 0
        %2046 = vmatprep.subr.bf16.mxu0 0
        %2047 = vmatpush1.bf16.msra.mxu0 0
        %2048 = vmatprep.subr.bf16.mxu0 0
        %2049 = vmatpush1.bf16.msra.mxu0 0
        %2050 = vmatprep.subr.bf16.mxu0 0
        %2051 = vmatpush1.bf16.msra.mxu0 0
        %2052 = vmatprep.subr.bf16.mxu0 0
        %2053 = vmatpush1.bf16.msra.mxu0 0
        %2054 = vmatprep.subr.bf16.mxu0 0
        %2055 = vmatpush1.bf16.msra.mxu0 0
        %2056 = vmatprep.subr.bf16.mxu0 0
        %2057 = vmatpush1.bf16.msra.mxu0 0
        %2058 = vmatprep.subr.bf16.mxu0 0
        %2059 = vmatpush1.bf16.msra.mxu0 0
        %2060 = vmatprep.subr.bf16.mxu0 0
        %2061 = vmatpush1.bf16.msra.mxu0 0
        %2062 = vmatprep.subr.bf16.mxu0 0
        %2063 = vmatpush1.bf16.msra.mxu0 0
        %2064 = vmatprep.subr.bf16.mxu0 0
        %2065 = vmatpush1.bf16.msra.mxu0 0
        %2066 = vmatprep.mubr.bf16.mxu0 0
        %2067 = vmatmul.mubr.bf16.gmra.mrb[0].mxu0 %v2029
        %v2068 = vpop.f32.mrb[0].mxu0
        %v2069 = vadd.f32 0.0, %v2068
        %v2070 = vpop.f32.mrb[0].mxu0
        %v2071 = vpop.f32.mrb[0].mxu0
        %v2072 = vpop.f32.mrb[0].mxu0
        %2073 = vdwg.mxu0
        %2074 = vrot.lane.b32.xlu0 %v1423, 120
        %v2075 = vpop.permute.xlu0 %2074
        %v2077 = vsel %vm1551, %v2025, 0
        %v2080 = vand.u32 %v2075, %v1582
        %2082 = vmatprep.subr.bf16.mxu0 0
        %2083 = vmatpush1.bf16.msra.mxu0 %v2080
        %2084 = vmatprep.subr.bf16.mxu0 0
        %2085 = vmatpush1.bf16.msra.mxu0 0
        %2086 = vmatprep.subr.bf16.mxu0 0
        %2087 = vmatpush1.bf16.msra.mxu0 0
        %2088 = vmatprep.subr.bf16.mxu0 0
        %2089 = vmatpush1.bf16.msra.mxu0 0
        %2090 = vmatprep.subr.bf16.mxu0 0
        %2091 = vmatpush1.bf16.msra.mxu0 0
        %2092 = vmatprep.subr.bf16.mxu0 0
        %2093 = vmatpush1.bf16.msra.mxu0 0
        %2094 = vmatprep.subr.bf16.mxu0 0
        %2095 = vmatpush1.bf16.msra.mxu0 0
        %2096 = vmatprep.subr.bf16.mxu0 0
        %2097 = vmatpush1.bf16.msra.mxu0 0
        %2098 = vmatprep.subr.bf16.mxu0 0
        %2099 = vmatpush1.bf16.msra.mxu0 0
        %2100 = vmatprep.subr.bf16.mxu0 0
        %2101 = vmatpush1.bf16.msra.mxu0 0
        %2102 = vmatprep.subr.bf16.mxu0 0
        %2103 = vmatpush1.bf16.msra.mxu0 0
        %2104 = vmatprep.subr.bf16.mxu0 0
        %2105 = vmatpush1.bf16.msra.mxu0 0
        %2106 = vmatprep.subr.bf16.mxu0 0
        %2107 = vmatpush1.bf16.msra.mxu0 0
        %2108 = vmatprep.subr.bf16.mxu0 0
        %2109 = vmatpush1.bf16.msra.mxu0 0
        %2110 = vmatprep.subr.bf16.mxu0 0
        %2111 = vmatpush1.bf16.msra.mxu0 0
        %2112 = vmatprep.subr.bf16.mxu0 0
        %2113 = vmatpush1.bf16.msra.mxu0 0
        %2114 = vmatprep.mubr.bf16.mxu0 0
        %2115 = vmatmul.mubr.bf16.gmra.mrb[0].mxu0 %v2077
        %v2116 = vpop.f32.mrb[0].mxu0
        %v2117 = vadd.f32 0.0, %v2116
        %v2118 = vpop.f32.mrb[0].mxu0
        %v2119 = vpop.f32.mrb[0].mxu0
        %v2120 = vpop.f32.mrb[0].mxu0
        %2121 = vdwg.mxu0
        %2122 = vrot.lane.b32.xlu0 %v1368, 116
        %v2123 = vpop.permute.xlu0 %2122
        %2124 = vrot.lane.b32.xlu0 %v1395, 116
        %v2125 = vpop.permute.xlu0 %2124
        %v2127 = vsel %vm1456, %v2123, 0
        %v2130 = vsel %vm1456, %v2125, 0
        %2132 = vmatprep.subr.bf16.mxu0 0
        %2133 = vmatpush1.bf16.xpose.msra.mxu0 %v2130
        %2134 = vmatprep.subr.bf16.mxu0 0
        %2135 = vmatpush1.bf16.xpose.msra.mxu0 0
        %2136 = vmatprep.subr.bf16.mxu0 0
        %2137 = vmatpush1.bf16.xpose.msra.mxu0 0
        %2138 = vmatprep.subr.bf16.mxu0 0
        %2139 = vmatpush1.bf16.xpose.msra.mxu0 0
        %2140 = vmatprep.subr.bf16.mxu0 0
        %2141 = vmatpush1.bf16.xpose.msra.mxu0 0
        %2142 = vmatprep.subr.bf16.mxu0 0
        %2143 = vmatpush1.bf16.xpose.msra.mxu0 0
        %2144 = vmatprep.subr.bf16.mxu0 0
        %2145 = vmatpush1.bf16.xpose.msra.mxu0 0
        %2146 = vmatprep.subr.bf16.mxu0 0
        %2147 = vmatpush1.bf16.xpose.msra.mxu0 0
        %2148 = vmatprep.subr.bf16.mxu0 0
        %2149 = vmatpush1.bf16.xpose.msra.mxu0 0
        %2150 = vmatprep.subr.bf16.mxu0 0
        %2151 = vmatpush1.bf16.xpose.msra.mxu0 0
        %2152 = vmatprep.subr.bf16.mxu0 0
        %2153 = vmatpush1.bf16.xpose.msra.mxu0 0
        %2154 = vmatprep.subr.bf16.mxu0 0
        %2155 = vmatpush1.bf16.xpose.msra.mxu0 0
        %2156 = vmatprep.subr.bf16.mxu0 0
        %2157 = vmatpush1.bf16.xpose.msra.mxu0 0
        %2158 = vmatprep.subr.bf16.mxu0 0
        %2159 = vmatpush1.bf16.xpose.msra.mxu0 0
        %2160 = vmatprep.subr.bf16.mxu0 0
        %2161 = vmatpush1.bf16.xpose.msra.mxu0 0
        %2162 = vmatprep.subr.bf16.mxu0 0
        %2163 = vmatpush1.bf16.xpose.msra.mxu0 0
        %2164 = vmatprep.mubr.bf16.mxu0 0
        %2165 = vmatmul.mubr.bf16.gmra.mrb[0].mxu0 %v2127
        %v2166 = vpop.f32.mrb[0].mxu0
        %v2167 = vadd.f32 0.0, %v2166
        %v2168 = vpop.f32.mrb[0].mxu0
        %v2169 = vpop.f32.mrb[0].mxu0
        %v2170 = vpop.f32.mrb[0].mxu0
        %2171 = vdwg.mxu0
        %2172 = vrot.lane.b32.xlu0 %v1369, 116
        %v2173 = vpop.permute.xlu0 %2172
        %2174 = vrot.lane.b32.xlu0 %v1396, 116
        %v2175 = vpop.permute.xlu0 %2174
        %v2177 = vsel %vm1456, %v2173, 0
        %v2180 = vsel %vm1456, %v2175, 0
        %2182 = vmatprep.subr.bf16.mxu0 0
        %2183 = vmatpush1.bf16.xpose.msra.mxu0 %v2180
        %2184 = vmatprep.subr.bf16.mxu0 0
        %2185 = vmatpush1.bf16.xpose.msra.mxu0 0
        %2186 = vmatprep.subr.bf16.mxu0 0
        %2187 = vmatpush1.bf16.xpose.msra.mxu0 0
        %2188 = vmatprep.subr.bf16.mxu0 0
        %2189 = vmatpush1.bf16.xpose.msra.mxu0 0
        %2190 = vmatprep.subr.bf16.mxu0 0
        %2191 = vmatpush1.bf16.xpose.msra.mxu0 0
        %2192 = vmatprep.subr.bf16.mxu0 0
        %2193 = vmatpush1.bf16.xpose.msra.mxu0 0
        %2194 = vmatprep.subr.bf16.mxu0 0
        %2195 = vmatpush1.bf16.xpose.msra.mxu0 0
        %2196 = vmatprep.subr.bf16.mxu0 0
        %2197 = vmatpush1.bf16.xpose.msra.mxu0 0
        %2198 = vmatprep.subr.bf16.mxu0 0
        %2199 = vmatpush1.bf16.xpose.msra.mxu0 0
        %2200 = vmatprep.subr.bf16.mxu0 0
        %2201 = vmatpush1.bf16.xpose.msra.mxu0 0
        %2202 = vmatprep.subr.bf16.mxu0 0
        %2203 = vmatpush1.bf16.xpose.msra.mxu0 0
        %2204 = vmatprep.subr.bf16.mxu0 0
        %2205 = vmatpush1.bf16.xpose.msra.mxu0 0
        %2206 = vmatprep.subr.bf16.mxu0 0
        %2207 = vmatpush1.bf16.xpose.msra.mxu0 0
        %2208 = vmatprep.subr.bf16.mxu0 0
        %2209 = vmatpush1.bf16.xpose.msra.mxu0 0
        %2210 = vmatprep.subr.bf16.mxu0 0
        %2211 = vmatpush1.bf16.xpose.msra.mxu0 0
        %2212 = vmatprep.subr.bf16.mxu0 0
        %2213 = vmatpush1.bf16.xpose.msra.mxu0 0
        %2214 = vmatprep.mubr.bf16.mxu0 0
        %2215 = vmatmul.mubr.bf16.gmra.mrb[0].mxu0 %v2177
        %v2216 = vpop.f32.mrb[0].mxu0
        %v2217 = vadd.f32 0.0, %v2216
        %v2218 = vpop.f32.mrb[0].mxu0
        %v2219 = vpop.f32.mrb[0].mxu0
        %v2220 = vpop.f32.mrb[0].mxu0
        %2221 = vdwg.mxu0
        %v2222 = vsel %vm1454, %v2167, -1e+30
        %v2223 = vsel %vm1455, %v2217, -1e+30
        %v2224 = vsel %vm1551, %v2222, -inf
        %2225 = vmax.xlane.f32.xlu0 %v2224
        %v2226 = vpop.xlane.xlu0 %2225
        %v2227 = vsel %vm1551, %v2223, -inf
        %2228 = vmax.xlane.f32.xlu0 %v2227
        %v2229 = vpop.xlane.xlu0 %2228
        %v2230 = vsub.f32 %v2222, %v2226
        %v2231 = vsub.f32 %v2223, %v2229
        %v2232 = vmul.f32 %v2230, 1.442695
        %v2233 = vpow.pop %v2232
        %v2234 = vmul.f32 %v2231, 1.442695
        %v2235 = vpow.pop %v2234
        %v2236 = vsel %vm1551, %v2233, 0.0
        %2237 = vadd.xlane.f32.xlu0 %v2236
        %v2238 = vpop.xlane.xlu0 %2237
        %v2239 = vsel %vm1551, %v2235, 0.0
        %2240 = vadd.xlane.f32.xlu0 %v2239
        %v2241 = vpop.xlane.xlu0 %2240
        %v2242 = vrcp.pop %v2238
        %v2243 = vrcp.pop %v2241
        %v2244 = vmul.f32 %v2233, %v2242
        %v2245 = vmul.f32 %v2235, %v2243
        %v2246 = vpack.c.bf16 %v2244, %v2244
        %v2247 = vpack.c.bf16 %v2245, %v2245
        %2248 = vrot.lane.b32.xlu0 %v1422, 116
        %v2249 = vpop.permute.xlu0 %2248
        %v2251 = vsel %vm1551, %v2246, 0
        %v2254 = vand.u32 %v2249, %v1582
        %2256 = vmatprep.subr.bf16.mxu0 0
        %2257 = vmatpush1.bf16.msra.mxu0 %v2254
        %2258 = vmatprep.subr.bf16.mxu0 0
        %2259 = vmatpush1.bf16.msra.mxu0 0
        %2260 = vmatprep.subr.bf16.mxu0 0
        %2261 = vmatpush1.bf16.msra.mxu0 0
        %2262 = vmatprep.subr.bf16.mxu0 0
        %2263 = vmatpush1.bf16.msra.mxu0 0
        %2264 = vmatprep.subr.bf16.mxu0 0
        %2265 = vmatpush1.bf16.msra.mxu0 0
        %2266 = vmatprep.subr.bf16.mxu0 0
        %2267 = vmatpush1.bf16.msra.mxu0 0
        %2268 = vmatprep.subr.bf16.mxu0 0
        %2269 = vmatpush1.bf16.msra.mxu0 0
        %2270 = vmatprep.subr.bf16.mxu0 0
        %2271 = vmatpush1.bf16.msra.mxu0 0
        %2272 = vmatprep.subr.bf16.mxu0 0
        %2273 = vmatpush1.bf16.msra.mxu0 0
        %2274 = vmatprep.subr.bf16.mxu0 0
        %2275 = vmatpush1.bf16.msra.mxu0 0
        %2276 = vmatprep.subr.bf16.mxu0 0
        %2277 = vmatpush1.bf16.msra.mxu0 0
        %2278 = vmatprep.subr.bf16.mxu0 0
        %2279 = vmatpush1.bf16.msra.mxu0 0
        %2280 = vmatprep.subr.bf16.mxu0 0
        %2281 = vmatpush1.bf16.msra.mxu0 0
        %2282 = vmatprep.subr.bf16.mxu0 0
        %2283 = vmatpush1.bf16.msra.mxu0 0
        %2284 = vmatprep.subr.bf16.mxu0 0
        %2285 = vmatpush1.bf16.msra.mxu0 0
        %2286 = vmatprep.subr.bf16.mxu0 0
        %2287 = vmatpush1.bf16.msra.mxu0 0
        %2288 = vmatprep.mubr.bf16.mxu0 0
        %2289 = vmatmul.mubr.bf16.gmra.mrb[0].mxu0 %v2251
        %v2290 = vpop.f32.mrb[0].mxu0
        %v2291 = vadd.f32 0.0, %v2290
        %v2292 = vpop.f32.mrb[0].mxu0
        %v2293 = vpop.f32.mrb[0].mxu0
        %v2294 = vpop.f32.mrb[0].mxu0
        %2295 = vdwg.mxu0
        %2296 = vrot.lane.b32.xlu0 %v1423, 116
        %v2297 = vpop.permute.xlu0 %2296
        %v2299 = vsel %vm1551, %v2247, 0
        %v2302 = vand.u32 %v2297, %v1582
        %2304 = vmatprep.subr.bf16.mxu0 0
        %2305 = vmatpush1.bf16.msra.mxu0 %v2302
        %2306 = vmatprep.subr.bf16.mxu0 0
        %2307 = vmatpush1.bf16.msra.mxu0 0
        %2308 = vmatprep.subr.bf16.mxu0 0
        %2309 = vmatpush1.bf16.msra.mxu0 0
        %2310 = vmatprep.subr.bf16.mxu0 0
        %2311 = vmatpush1.bf16.msra.mxu0 0
        %2312 = vmatprep.subr.bf16.mxu0 0
        %2313 = vmatpush1.bf16.msra.mxu0 0
        %2314 = vmatprep.subr.bf16.mxu0 0
        %2315 = vmatpush1.bf16.msra.mxu0 0
        %2316 = vmatprep.subr.bf16.mxu0 0
        %2317 = vmatpush1.bf16.msra.mxu0 0
        %2318 = vmatprep.subr.bf16.mxu0 0
        %2319 = vmatpush1.bf16.msra.mxu0 0
        %2320 = vmatprep.subr.bf16.mxu0 0
        %2321 = vmatpush1.bf16.msra.mxu0 0
        %2322 = vmatprep.subr.bf16.mxu0 0
        %2323 = vmatpush1.bf16.msra.mxu0 0
        %2324 = vmatprep.subr.bf16.mxu0 0
        %2325 = vmatpush1.bf16.msra.mxu0 0
        %2326 = vmatprep.subr.bf16.mxu0 0
        %2327 = vmatpush1.bf16.msra.mxu0 0
        %2328 = vmatprep.subr.bf16.mxu0 0
        %2329 = vmatpush1.bf16.msra.mxu0 0
        %2330 = vmatprep.subr.bf16.mxu0 0
        %2331 = vmatpush1.bf16.msra.mxu0 0
        %2332 = vmatprep.subr.bf16.mxu0 0
        %2333 = vmatpush1.bf16.msra.mxu0 0
        %2334 = vmatprep.subr.bf16.mxu0 0
        %2335 = vmatpush1.bf16.msra.mxu0 0
        %2336 = vmatprep.mubr.bf16.mxu0 0
        %2337 = vmatmul.mubr.bf16.gmra.mrb[0].mxu0 %v2299
        %v2338 = vpop.f32.mrb[0].mxu0
        %v2339 = vadd.f32 0.0, %v2338
        %v2340 = vpop.f32.mrb[0].mxu0
        %v2341 = vpop.f32.mrb[0].mxu0
        %v2342 = vpop.f32.mrb[0].mxu0
        %2343 = vdwg.mxu0
        %2344 = vrot.lane.b32.xlu0 %v1368, 112
        %v2345 = vpop.permute.xlu0 %2344
        %2346 = vrot.lane.b32.xlu0 %v1395, 112
        %v2347 = vpop.permute.xlu0 %2346
        %v2349 = vsel %vm1456, %v2345, 0
        %v2352 = vsel %vm1456, %v2347, 0
        %2354 = vmatprep.subr.bf16.mxu0 0
        %2355 = vmatpush1.bf16.xpose.msra.mxu0 %v2352
        %2356 = vmatprep.subr.bf16.mxu0 0
        %2357 = vmatpush1.bf16.xpose.msra.mxu0 0
        %2358 = vmatprep.subr.bf16.mxu0 0
        %2359 = vmatpush1.bf16.xpose.msra.mxu0 0
        %2360 = vmatprep.subr.bf16.mxu0 0
        %2361 = vmatpush1.bf16.xpose.msra.mxu0 0
        %2362 = vmatprep.subr.bf16.mxu0 0
        %2363 = vmatpush1.bf16.xpose.msra.mxu0 0
        %2364 = vmatprep.subr.bf16.mxu0 0
        %2365 = vmatpush1.bf16.xpose.msra.mxu0 0
        %2366 = vmatprep.subr.bf16.mxu0 0
        %2367 = vmatpush1.bf16.xpose.msra.mxu0 0
        %2368 = vmatprep.subr.bf16.mxu0 0
        %2369 = vmatpush1.bf16.xpose.msra.mxu0 0
        %2370 = vmatprep.subr.bf16.mxu0 0
        %2371 = vmatpush1.bf16.xpose.msra.mxu0 0
        %2372 = vmatprep.subr.bf16.mxu0 0
        %2373 = vmatpush1.bf16.xpose.msra.mxu0 0
        %2374 = vmatprep.subr.bf16.mxu0 0
        %2375 = vmatpush1.bf16.xpose.msra.mxu0 0
        %2376 = vmatprep.subr.bf16.mxu0 0
        %2377 = vmatpush1.bf16.xpose.msra.mxu0 0
        %2378 = vmatprep.subr.bf16.mxu0 0
        %2379 = vmatpush1.bf16.xpose.msra.mxu0 0
        %2380 = vmatprep.subr.bf16.mxu0 0
        %2381 = vmatpush1.bf16.xpose.msra.mxu0 0
        %2382 = vmatprep.subr.bf16.mxu0 0
        %2383 = vmatpush1.bf16.xpose.msra.mxu0 0
        %2384 = vmatprep.subr.bf16.mxu0 0
        %2385 = vmatpush1.bf16.xpose.msra.mxu0 0
        %2386 = vmatprep.mubr.bf16.mxu0 0
        %2387 = vmatmul.mubr.bf16.gmra.mrb[0].mxu0 %v2349
        %v2388 = vpop.f32.mrb[0].mxu0
        %v2389 = vadd.f32 0.0, %v2388
        %v2390 = vpop.f32.mrb[0].mxu0
        %v2391 = vpop.f32.mrb[0].mxu0
        %v2392 = vpop.f32.mrb[0].mxu0
        %2393 = vdwg.mxu0
        %2394 = vrot.lane.b32.xlu0 %v1369, 112
        %v2395 = vpop.permute.xlu0 %2394
        %2396 = vrot.lane.b32.xlu0 %v1396, 112
        %v2397 = vpop.permute.xlu0 %2396
        %v2399 = vsel %vm1456, %v2395, 0
        %v2402 = vsel %vm1456, %v2397, 0
        %2404 = vmatprep.subr.bf16.mxu0 0
        %2405 = vmatpush1.bf16.xpose.msra.mxu0 %v2402
        %2406 = vmatprep.subr.bf16.mxu0 0
        %2407 = vmatpush1.bf16.xpose.msra.mxu0 0
        %2408 = vmatprep.subr.bf16.mxu0 0
        %2409 = vmatpush1.bf16.xpose.msra.mxu0 0
        %2410 = vmatprep.subr.bf16.mxu0 0
        %2411 = vmatpush1.bf16.xpose.msra.mxu0 0
        %2412 = vmatprep.subr.bf16.mxu0 0
        %2413 = vmatpush1.bf16.xpose.msra.mxu0 0
        %2414 = vmatprep.subr.bf16.mxu0 0
        %2415 = vmatpush1.bf16.xpose.msra.mxu0 0
        %2416 = vmatprep.subr.bf16.mxu0 0
        %2417 = vmatpush1.bf16.xpose.msra.mxu0 0
        %2418 = vmatprep.subr.bf16.mxu0 0
        %2419 = vmatpush1.bf16.xpose.msra.mxu0 0
        %2420 = vmatprep.subr.bf16.mxu0 0
        %2421 = vmatpush1.bf16.xpose.msra.mxu0 0
        %2422 = vmatprep.subr.bf16.mxu0 0
        %2423 = vmatpush1.bf16.xpose.msra.mxu0 0
        %2424 = vmatprep.subr.bf16.mxu0 0
        %2425 = vmatpush1.bf16.xpose.msra.mxu0 0
        %2426 = vmatprep.subr.bf16.mxu0 0
        %2427 = vmatpush1.bf16.xpose.msra.mxu0 0
        %2428 = vmatprep.subr.bf16.mxu0 0
        %2429 = vmatpush1.bf16.xpose.msra.mxu0 0
        %2430 = vmatprep.subr.bf16.mxu0 0
        %2431 = vmatpush1.bf16.xpose.msra.mxu0 0
        %2432 = vmatprep.subr.bf16.mxu0 0
        %2433 = vmatpush1.bf16.xpose.msra.mxu0 0
        %2434 = vmatprep.subr.bf16.mxu0 0
        %2435 = vmatpush1.bf16.xpose.msra.mxu0 0
        %2436 = vmatprep.mubr.bf16.mxu0 0
        %2437 = vmatmul.mubr.bf16.gmra.mrb[0].mxu0 %v2399
        %v2438 = vpop.f32.mrb[0].mxu0
        %v2439 = vadd.f32 0.0, %v2438
        %v2440 = vpop.f32.mrb[0].mxu0
        %v2441 = vpop.f32.mrb[0].mxu0
        %v2442 = vpop.f32.mrb[0].mxu0
        %2443 = vdwg.mxu0
        %v2444 = vsel %vm1454, %v2389, -1e+30
        %v2445 = vsel %vm1455, %v2439, -1e+30
        %v2446 = vsel %vm1551, %v2444, -inf
        %2447 = vmax.xlane.f32.xlu0 %v2446
        %v2448 = vpop.xlane.xlu0 %2447
        %v2449 = vsel %vm1551, %v2445, -inf
        %2450 = vmax.xlane.f32.xlu0 %v2449
        %v2451 = vpop.xlane.xlu0 %2450
        %v2452 = vsub.f32 %v2444, %v2448
        %v2453 = vsub.f32 %v2445, %v2451
        %v2454 = vmul.f32 %v2452, 1.442695
        %v2455 = vpow.pop %v2454
        %v2456 = vmul.f32 %v2453, 1.442695
        %v2457 = vpow.pop %v2456
        %v2458 = vsel %vm1551, %v2455, 0.0
        %2459 = vadd.xlane.f32.xlu0 %v2458
        %v2460 = vpop.xlane.xlu0 %2459
        %v2461 = vsel %vm1551, %v2457, 0.0
        %2462 = vadd.xlane.f32.xlu0 %v2461
        %v2463 = vpop.xlane.xlu0 %2462
        %v2464 = vrcp.pop %v2460
        %v2465 = vrcp.pop %v2463
        %v2466 = vmul.f32 %v2455, %v2464
        %v2467 = vmul.f32 %v2457, %v2465
        %v2468 = vpack.c.bf16 %v2466, %v2466
        %v2469 = vpack.c.bf16 %v2467, %v2467
        %2470 = vrot.lane.b32.xlu0 %v1422, 112
        %v2471 = vpop.permute.xlu0 %2470
        %v2473 = vsel %vm1551, %v2468, 0
        %v2476 = vand.u32 %v2471, %v1582
        %2478 = vmatprep.subr.bf16.mxu0 0
        %2479 = vmatpush1.bf16.msra.mxu0 %v2476
        %2480 = vmatprep.subr.bf16.mxu0 0
        %2481 = vmatpush1.bf16.msra.mxu0 0
        %2482 = vmatprep.subr.bf16.mxu0 0
        %2483 = vmatpush1.bf16.msra.mxu0 0
        %2484 = vmatprep.subr.bf16.mxu0 0
        %2485 = vmatpush1.bf16.msra.mxu0 0
        %2486 = vmatprep.subr.bf16.mxu0 0
        %2487 = vmatpush1.bf16.msra.mxu0 0
        %2488 = vmatprep.subr.bf16.mxu0 0
        %2489 = vmatpush1.bf16.msra.mxu0 0
        %2490 = vmatprep.subr.bf16.mxu0 0
        %2491 = vmatpush1.bf16.msra.mxu0 0
        %2492 = vmatprep.subr.bf16.mxu0 0
        %2493 = vmatpush1.bf16.msra.mxu0 0
        %2494 = vmatprep.subr.bf16.mxu0 0
        %2495 = vmatpush1.bf16.msra.mxu0 0
        %2496 = vmatprep.subr.bf16.mxu0 0
        %2497 = vmatpush1.bf16.msra.mxu0 0
        %2498 = vmatprep.subr.bf16.mxu0 0
        %2499 = vmatpush1.bf16.msra.mxu0 0
        %2500 = vmatprep.subr.bf16.mxu0 0
        %2501 = vmatpush1.bf16.msra.mxu0 0
        %2502 = vmatprep.subr.bf16.mxu0 0
        %2503 = vmatpush1.bf16.msra.mxu0 0
        %2504 = vmatprep.subr.bf16.mxu0 0
        %2505 = vmatpush1.bf16.msra.mxu0 0
        %2506 = vmatprep.subr.bf16.mxu0 0
        %2507 = vmatpush1.bf16.msra.mxu0 0
        %2508 = vmatprep.subr.bf16.mxu0 0
        %2509 = vmatpush1.bf16.msra.mxu0 0
        %2510 = vmatprep.mubr.bf16.mxu0 0
        %2511 = vmatmul.mubr.bf16.gmra.mrb[0].mxu0 %v2473
        %v2512 = vpop.f32.mrb[0].mxu0
        %v2513 = vadd.f32 0.0, %v2512
        %v2514 = vpop.f32.mrb[0].mxu0
        %v2515 = vpop.f32.mrb[0].mxu0
        %v2516 = vpop.f32.mrb[0].mxu0
        %2517 = vdwg.mxu0
        %2518 = vrot.lane.b32.xlu0 %v1423, 112
        %v2519 = vpop.permute.xlu0 %2518
        %v2521 = vsel %vm1551, %v2469, 0
        %v2524 = vand.u32 %v2519, %v1582
        %2526 = vmatprep.subr.bf16.mxu0 0
        %2527 = vmatpush1.bf16.msra.mxu0 %v2524
        %2528 = vmatprep.subr.bf16.mxu0 0
        %2529 = vmatpush1.bf16.msra.mxu0 0
        %2530 = vmatprep.subr.bf16.mxu0 0
        %2531 = vmatpush1.bf16.msra.mxu0 0
        %2532 = vmatprep.subr.bf16.mxu0 0
        %2533 = vmatpush1.bf16.msra.mxu0 0
        %2534 = vmatprep.subr.bf16.mxu0 0
        %2535 = vmatpush1.bf16.msra.mxu0 0
        %2536 = vmatprep.subr.bf16.mxu0 0
        %2537 = vmatpush1.bf16.msra.mxu0 0
        %2538 = vmatprep.subr.bf16.mxu0 0
        %2539 = vmatpush1.bf16.msra.mxu0 0
        %2540 = vmatprep.subr.bf16.mxu0 0
        %2541 = vmatpush1.bf16.msra.mxu0 0
        %2542 = vmatprep.subr.bf16.mxu0 0
        %2543 = vmatpush1.bf16.msra.mxu0 0
        %2544 = vmatprep.subr.bf16.mxu0 0
        %2545 = vmatpush1.bf16.msra.mxu0 0
        %2546 = vmatprep.subr.bf16.mxu0 0
        %2547 = vmatpush1.bf16.msra.mxu0 0
        %2548 = vmatprep.subr.bf16.mxu0 0
        %2549 = vmatpush1.bf16.msra.mxu0 0
        %2550 = vmatprep.subr.bf16.mxu0 0
        %2551 = vmatpush1.bf16.msra.mxu0 0
        %2552 = vmatprep.subr.bf16.mxu0 0
        %2553 = vmatpush1.bf16.msra.mxu0 0
        %2554 = vmatprep.subr.bf16.mxu0 0
        %2555 = vmatpush1.bf16.msra.mxu0 0
        %2556 = vmatprep.subr.bf16.mxu0 0
        %2557 = vmatpush1.bf16.msra.mxu0 0
        %2558 = vmatprep.mubr.bf16.mxu0 0
        %2559 = vmatmul.mubr.bf16.gmra.mrb[0].mxu0 %v2521
        %v2560 = vpop.f32.mrb[0].mxu0
        %v2561 = vadd.f32 0.0, %v2560
        %v2562 = vpop.f32.mrb[0].mxu0
        %v2563 = vpop.f32.mrb[0].mxu0
        %v2564 = vpop.f32.mrb[0].mxu0
        %2565 = vdwg.mxu0
        %2566 = vrot.lane.b32.xlu0 %v1368, 108
        %v2567 = vpop.permute.xlu0 %2566
        %2568 = vrot.lane.b32.xlu0 %v1395, 108
        %v2569 = vpop.permute.xlu0 %2568
        %v2571 = vsel %vm1456, %v2567, 0
        %v2574 = vsel %vm1456, %v2569, 0
        %2576 = vmatprep.subr.bf16.mxu0 0
        %2577 = vmatpush1.bf16.xpose.msra.mxu0 %v2574
        %2578 = vmatprep.subr.bf16.mxu0 0
        %2579 = vmatpush1.bf16.xpose.msra.mxu0 0
        %2580 = vmatprep.subr.bf16.mxu0 0
        %2581 = vmatpush1.bf16.xpose.msra.mxu0 0
        %2582 = vmatprep.subr.bf16.mxu0 0
        %2583 = vmatpush1.bf16.xpose.msra.mxu0 0
        %2584 = vmatprep.subr.bf16.mxu0 0
        %2585 = vmatpush1.bf16.xpose.msra.mxu0 0
        %2586 = vmatprep.subr.bf16.mxu0 0
        %2587 = vmatpush1.bf16.xpose.msra.mxu0 0
        %2588 = vmatprep.subr.bf16.mxu0 0
        %2589 = vmatpush1.bf16.xpose.msra.mxu0 0
        %2590 = vmatprep.subr.bf16.mxu0 0
        %2591 = vmatpush1.bf16.xpose.msra.mxu0 0
        %2592 = vmatprep.subr.bf16.mxu0 0
        %2593 = vmatpush1.bf16.xpose.msra.mxu0 0
        %2594 = vmatprep.subr.bf16.mxu0 0
        %2595 = vmatpush1.bf16.xpose.msra.mxu0 0
        %2596 = vmatprep.subr.bf16.mxu0 0
        %2597 = vmatpush1.bf16.xpose.msra.mxu0 0
        %2598 = vmatprep.subr.bf16.mxu0 0
        %2599 = vmatpush1.bf16.xpose.msra.mxu0 0
        %2600 = vmatprep.subr.bf16.mxu0 0
        %2601 = vmatpush1.bf16.xpose.msra.mxu0 0
        %2602 = vmatprep.subr.bf16.mxu0 0
        %2603 = vmatpush1.bf16.xpose.msra.mxu0 0
        %2604 = vmatprep.subr.bf16.mxu0 0
        %2605 = vmatpush1.bf16.xpose.msra.mxu0 0
        %2606 = vmatprep.subr.bf16.mxu0 0
        %2607 = vmatpush1.bf16.xpose.msra.mxu0 0
        %2608 = vmatprep.mubr.bf16.mxu0 0
        %2609 = vmatmul.mubr.bf16.gmra.mrb[0].mxu0 %v2571
        %v2610 = vpop.f32.mrb[0].mxu0
        %v2611 = vadd.f32 0.0, %v2610
        %v2612 = vpop.f32.mrb[0].mxu0
        %v2613 = vpop.f32.mrb[0].mxu0
        %v2614 = vpop.f32.mrb[0].mxu0
        %2615 = vdwg.mxu0
        %2616 = vrot.lane.b32.xlu0 %v1369, 108
        %v2617 = vpop.permute.xlu0 %2616
        %2618 = vrot.lane.b32.xlu0 %v1396, 108
        %v2619 = vpop.permute.xlu0 %2618
        %v2621 = vsel %vm1456, %v2617, 0
        %v2624 = vsel %vm1456, %v2619, 0
        %2626 = vmatprep.subr.bf16.mxu0 0
        %2627 = vmatpush1.bf16.xpose.msra.mxu0 %v2624
        %2628 = vmatprep.subr.bf16.mxu0 0
        %2629 = vmatpush1.bf16.xpose.msra.mxu0 0
        %2630 = vmatprep.subr.bf16.mxu0 0
        %2631 = vmatpush1.bf16.xpose.msra.mxu0 0
        %2632 = vmatprep.subr.bf16.mxu0 0
        %2633 = vmatpush1.bf16.xpose.msra.mxu0 0
        %2634 = vmatprep.subr.bf16.mxu0 0
        %2635 = vmatpush1.bf16.xpose.msra.mxu0 0
        %2636 = vmatprep.subr.bf16.mxu0 0
        %2637 = vmatpush1.bf16.xpose.msra.mxu0 0
        %2638 = vmatprep.subr.bf16.mxu0 0
        %2639 = vmatpush1.bf16.xpose.msra.mxu0 0
        %2640 = vmatprep.subr.bf16.mxu0 0
        %2641 = vmatpush1.bf16.xpose.msra.mxu0 0
        %2642 = vmatprep.subr.bf16.mxu0 0
        %2643 = vmatpush1.bf16.xpose.msra.mxu0 0
        %2644 = vmatprep.subr.bf16.mxu0 0
        %2645 = vmatpush1.bf16.xpose.msra.mxu0 0
        %2646 = vmatprep.subr.bf16.mxu0 0
        %2647 = vmatpush1.bf16.xpose.msra.mxu0 0
        %2648 = vmatprep.subr.bf16.mxu0 0
        %2649 = vmatpush1.bf16.xpose.msra.mxu0 0
        %2650 = vmatprep.subr.bf16.mxu0 0
        %2651 = vmatpush1.bf16.xpose.msra.mxu0 0
        %2652 = vmatprep.subr.bf16.mxu0 0
        %2653 = vmatpush1.bf16.xpose.msra.mxu0 0
        %2654 = vmatprep.subr.bf16.mxu0 0
        %2655 = vmatpush1.bf16.xpose.msra.mxu0 0
        %2656 = vmatprep.subr.bf16.mxu0 0
        %2657 = vmatpush1.bf16.xpose.msra.mxu0 0
        %2658 = vmatprep.mubr.bf16.mxu0 0
        %2659 = vmatmul.mubr.bf16.gmra.mrb[0].mxu0 %v2621
        %v2660 = vpop.f32.mrb[0].mxu0
        %v2661 = vadd.f32 0.0, %v2660
        %v2662 = vpop.f32.mrb[0].mxu0
        %v2663 = vpop.f32.mrb[0].mxu0
        %v2664 = vpop.f32.mrb[0].mxu0
        %2665 = vdwg.mxu0
        %v2666 = vsel %vm1454, %v2611, -1e+30
        %v2667 = vsel %vm1455, %v2661, -1e+30
        %v2668 = vsel %vm1551, %v2666, -inf
        %2669 = vmax.xlane.f32.xlu0 %v2668
        %v2670 = vpop.xlane.xlu0 %2669
        %v2671 = vsel %vm1551, %v2667, -inf
        %2672 = vmax.xlane.f32.xlu0 %v2671
        %v2673 = vpop.xlane.xlu0 %2672
        %v2674 = vsub.f32 %v2666, %v2670
        %v2675 = vsub.f32 %v2667, %v2673
        %v2676 = vmul.f32 %v2674, 1.442695
        %v2677 = vpow.pop %v2676
        %v2678 = vmul.f32 %v2675, 1.442695
        %v2679 = vpow.pop %v2678
        %v2680 = vsel %vm1551, %v2677, 0.0
        %2681 = vadd.xlane.f32.xlu0 %v2680
        %v2682 = vpop.xlane.xlu0 %2681
        %v2683 = vsel %vm1551, %v2679, 0.0
        %2684 = vadd.xlane.f32.xlu0 %v2683
        %v2685 = vpop.xlane.xlu0 %2684
        %v2686 = vrcp.pop %v2682
        %v2687 = vrcp.pop %v2685
        %v2688 = vmul.f32 %v2677, %v2686
        %v2689 = vmul.f32 %v2679, %v2687
        %v2690 = vpack.c.bf16 %v2688, %v2688
        %v2691 = vpack.c.bf16 %v2689, %v2689
        %2692 = vrot.lane.b32.xlu0 %v1422, 108
        %v2693 = vpop.permute.xlu0 %2692
        %v2695 = vsel %vm1551, %v2690, 0
        %v2698 = vand.u32 %v2693, %v1582
        %2700 = vmatprep.subr.bf16.mxu0 0
        %2701 = vmatpush1.bf16.msra.mxu0 %v2698
        %2702 = vmatprep.subr.bf16.mxu0 0
        %2703 = vmatpush1.bf16.msra.mxu0 0
        %2704 = vmatprep.subr.bf16.mxu0 0
        %2705 = vmatpush1.bf16.msra.mxu0 0
        %2706 = vmatprep.subr.bf16.mxu0 0
        %2707 = vmatpush1.bf16.msra.mxu0 0
        %2708 = vmatprep.subr.bf16.mxu0 0
        %2709 = vmatpush1.bf16.msra.mxu0 0
        %2710 = vmatprep.subr.bf16.mxu0 0
        %2711 = vmatpush1.bf16.msra.mxu0 0
        %2712 = vmatprep.subr.bf16.mxu0 0
        %2713 = vmatpush1.bf16.msra.mxu0 0
        %2714 = vmatprep.subr.bf16.mxu0 0
        %2715 = vmatpush1.bf16.msra.mxu0 0
        %2716 = vmatprep.subr.bf16.mxu0 0
        %2717 = vmatpush1.bf16.msra.mxu0 0
        %2718 = vmatprep.subr.bf16.mxu0 0
        %2719 = vmatpush1.bf16.msra.mxu0 0
        %2720 = vmatprep.subr.bf16.mxu0 0
        %2721 = vmatpush1.bf16.msra.mxu0 0
        %2722 = vmatprep.subr.bf16.mxu0 0
        %2723 = vmatpush1.bf16.msra.mxu0 0
        %2724 = vmatprep.subr.bf16.mxu0 0
        %2725 = vmatpush1.bf16.msra.mxu0 0
        %2726 = vmatprep.subr.bf16.mxu0 0
        %2727 = vmatpush1.bf16.msra.mxu0 0
        %2728 = vmatprep.subr.bf16.mxu0 0
        %2729 = vmatpush1.bf16.msra.mxu0 0
        %2730 = vmatprep.subr.bf16.mxu0 0
        %2731 = vmatpush1.bf16.msra.mxu0 0
        %2732 = vmatprep.mubr.bf16.mxu0 0
        %2733 = vmatmul.mubr.bf16.gmra.mrb[0].mxu0 %v2695
        %v2734 = vpop.f32.mrb[0].mxu0
        %v2735 = vadd.f32 0.0, %v2734
        %v2736 = vpop.f32.mrb[0].mxu0
        %v2737 = vpop.f32.mrb[0].mxu0
        %v2738 = vpop.f32.mrb[0].mxu0
        %2739 = vdwg.mxu0
        %2740 = vrot.lane.b32.xlu0 %v1423, 108
        %v2741 = vpop.permute.xlu0 %2740
        %v2743 = vsel %vm1551, %v2691, 0
        %v2746 = vand.u32 %v2741, %v1582
        %2748 = vmatprep.subr.bf16.mxu0 0
        %2749 = vmatpush1.bf16.msra.mxu0 %v2746
        %2750 = vmatprep.subr.bf16.mxu0 0
        %2751 = vmatpush1.bf16.msra.mxu0 0
        %2752 = vmatprep.subr.bf16.mxu0 0
        %2753 = vmatpush1.bf16.msra.mxu0 0
        %2754 = vmatprep.subr.bf16.mxu0 0
        %2755 = vmatpush1.bf16.msra.mxu0 0
        %2756 = vmatprep.subr.bf16.mxu0 0
        %2757 = vmatpush1.bf16.msra.mxu0 0
        %2758 = vmatprep.subr.bf16.mxu0 0
        %2759 = vmatpush1.bf16.msra.mxu0 0
        %2760 = vmatprep.subr.bf16.mxu0 0
        %2761 = vmatpush1.bf16.msra.mxu0 0
        %2762 = vmatprep.subr.bf16.mxu0 0
        %2763 = vmatpush1.bf16.msra.mxu0 0
        %2764 = vmatprep.subr.bf16.mxu0 0
        %2765 = vmatpush1.bf16.msra.mxu0 0
        %2766 = vmatprep.subr.bf16.mxu0 0
        %2767 = vmatpush1.bf16.msra.mxu0 0
        %2768 = vmatprep.subr.bf16.mxu0 0
        %2769 = vmatpush1.bf16.msra.mxu0 0
        %2770 = vmatprep.subr.bf16.mxu0 0
        %2771 = vmatpush1.bf16.msra.mxu0 0
        %2772 = vmatprep.subr.bf16.mxu0 0
        %2773 = vmatpush1.bf16.msra.mxu0 0
        %2774 = vmatprep.subr.bf16.mxu0 0
        %2775 = vmatpush1.bf16.msra.mxu0 0
        %2776 = vmatprep.subr.bf16.mxu0 0
        %2777 = vmatpush1.bf16.msra.mxu0 0
        %2778 = vmatprep.subr.bf16.mxu0 0
        %2779 = vmatpush1.bf16.msra.mxu0 0
        %2780 = vmatprep.mubr.bf16.mxu0 0
        %2781 = vmatmul.mubr.bf16.gmra.mrb[0].mxu0 %v2743
        %v2782 = vpop.f32.mrb[0].mxu0
        %v2783 = vadd.f32 0.0, %v2782
        %v2784 = vpop.f32.mrb[0].mxu0
        %v2785 = vpop.f32.mrb[0].mxu0
        %v2786 = vpop.f32.mrb[0].mxu0
        %2787 = vdwg.mxu0
        %2788 = vrot.lane.b32.xlu0 %v1368, 104
        %v2789 = vpop.permute.xlu0 %2788
        %2790 = vrot.lane.b32.xlu0 %v1395, 104
        %v2791 = vpop.permute.xlu0 %2790
        %v2793 = vsel %vm1456, %v2789, 0
        %v2796 = vsel %vm1456, %v2791, 0
        %2798 = vmatprep.subr.bf16.mxu0 0
        %2799 = vmatpush1.bf16.xpose.msra.mxu0 %v2796
        %2800 = vmatprep.subr.bf16.mxu0 0
        %2801 = vmatpush1.bf16.xpose.msra.mxu0 0
        %2802 = vmatprep.subr.bf16.mxu0 0
        %2803 = vmatpush1.bf16.xpose.msra.mxu0 0
        %2804 = vmatprep.subr.bf16.mxu0 0
        %2805 = vmatpush1.bf16.xpose.msra.mxu0 0
        %2806 = vmatprep.subr.bf16.mxu0 0
        %2807 = vmatpush1.bf16.xpose.msra.mxu0 0
        %2808 = vmatprep.subr.bf16.mxu0 0
        %2809 = vmatpush1.bf16.xpose.msra.mxu0 0
        %2810 = vmatprep.subr.bf16.mxu0 0
        %2811 = vmatpush1.bf16.xpose.msra.mxu0 0
        %2812 = vmatprep.subr.bf16.mxu0 0
        %2813 = vmatpush1.bf16.xpose.msra.mxu0 0
        %2814 = vmatprep.subr.bf16.mxu0 0
        %2815 = vmatpush1.bf16.xpose.msra.mxu0 0
        %2816 = vmatprep.subr.bf16.mxu0 0
        %2817 = vmatpush1.bf16.xpose.msra.mxu0 0
        %2818 = vmatprep.subr.bf16.mxu0 0
        %2819 = vmatpush1.bf16.xpose.msra.mxu0 0
        %2820 = vmatprep.subr.bf16.mxu0 0
        %2821 = vmatpush1.bf16.xpose.msra.mxu0 0
        %2822 = vmatprep.subr.bf16.mxu0 0
        %2823 = vmatpush1.bf16.xpose.msra.mxu0 0
        %2824 = vmatprep.subr.bf16.mxu0 0
        %2825 = vmatpush1.bf16.xpose.msra.mxu0 0
        %2826 = vmatprep.subr.bf16.mxu0 0
        %2827 = vmatpush1.bf16.xpose.msra.mxu0 0
        %2828 = vmatprep.subr.bf16.mxu0 0
        %2829 = vmatpush1.bf16.xpose.msra.mxu0 0
        %2830 = vmatprep.mubr.bf16.mxu0 0
        %2831 = vmatmul.mubr.bf16.gmra.mrb[0].mxu0 %v2793
        %v2832 = vpop.f32.mrb[0].mxu0
        %v2833 = vadd.f32 0.0, %v2832
        %v2834 = vpop.f32.mrb[0].mxu0
        %v2835 = vpop.f32.mrb[0].mxu0
        %v2836 = vpop.f32.mrb[0].mxu0
        %2837 = vdwg.mxu0
        %2838 = vrot.lane.b32.xlu0 %v1369, 104
        %v2839 = vpop.permute.xlu0 %2838
        %2840 = vrot.lane.b32.xlu0 %v1396, 104
        %v2841 = vpop.permute.xlu0 %2840
        %v2843 = vsel %vm1456, %v2839, 0
        %v2846 = vsel %vm1456, %v2841, 0
        %2848 = vmatprep.subr.bf16.mxu0 0
        %2849 = vmatpush1.bf16.xpose.msra.mxu0 %v2846
        %2850 = vmatprep.subr.bf16.mxu0 0
        %2851 = vmatpush1.bf16.xpose.msra.mxu0 0
        %2852 = vmatprep.subr.bf16.mxu0 0
        %2853 = vmatpush1.bf16.xpose.msra.mxu0 0
        %2854 = vmatprep.subr.bf16.mxu0 0
        %2855 = vmatpush1.bf16.xpose.msra.mxu0 0
        %2856 = vmatprep.subr.bf16.mxu0 0
        %2857 = vmatpush1.bf16.xpose.msra.mxu0 0
        %2858 = vmatprep.subr.bf16.mxu0 0
        %2859 = vmatpush1.bf16.xpose.msra.mxu0 0
        %2860 = vmatprep.subr.bf16.mxu0 0
        %2861 = vmatpush1.bf16.xpose.msra.mxu0 0
        %2862 = vmatprep.subr.bf16.mxu0 0
        %2863 = vmatpush1.bf16.xpose.msra.mxu0 0
        %2864 = vmatprep.subr.bf16.mxu0 0
        %2865 = vmatpush1.bf16.xpose.msra.mxu0 0
        %2866 = vmatprep.subr.bf16.mxu0 0
        %2867 = vmatpush1.bf16.xpose.msra.mxu0 0
        %2868 = vmatprep.subr.bf16.mxu0 0
        %2869 = vmatpush1.bf16.xpose.msra.mxu0 0
        %2870 = vmatprep.subr.bf16.mxu0 0
        %2871 = vmatpush1.bf16.xpose.msra.mxu0 0
        %2872 = vmatprep.subr.bf16.mxu0 0
        %2873 = vmatpush1.bf16.xpose.msra.mxu0 0
        %2874 = vmatprep.subr.bf16.mxu0 0
        %2875 = vmatpush1.bf16.xpose.msra.mxu0 0
        %2876 = vmatprep.subr.bf16.mxu0 0
        %2877 = vmatpush1.bf16.xpose.msra.mxu0 0
        %2878 = vmatprep.subr.bf16.mxu0 0
        %2879 = vmatpush1.bf16.xpose.msra.mxu0 0
        %2880 = vmatprep.mubr.bf16.mxu0 0
        %2881 = vmatmul.mubr.bf16.gmra.mrb[0].mxu0 %v2843
        %v2882 = vpop.f32.mrb[0].mxu0
        %v2883 = vadd.f32 0.0, %v2882
        %v2884 = vpop.f32.mrb[0].mxu0
        %v2885 = vpop.f32.mrb[0].mxu0
        %v2886 = vpop.f32.mrb[0].mxu0
        %2887 = vdwg.mxu0
        %v2888 = vsel %vm1454, %v2833, -1e+30
        %v2889 = vsel %vm1455, %v2883, -1e+30
        %v2890 = vsel %vm1551, %v2888, -inf
        %2891 = vmax.xlane.f32.xlu0 %v2890
        %v2892 = vpop.xlane.xlu0 %2891
        %v2893 = vsel %vm1551, %v2889, -inf
        %2894 = vmax.xlane.f32.xlu0 %v2893
        %v2895 = vpop.xlane.xlu0 %2894
        %v2896 = vsub.f32 %v2888, %v2892
        %v2897 = vsub.f32 %v2889, %v2895
        %v2898 = vmul.f32 %v2896, 1.442695
        %v2899 = vpow.pop %v2898
        %v2900 = vmul.f32 %v2897, 1.442695
        %v2901 = vpow.pop %v2900
        %v2902 = vsel %vm1551, %v2899, 0.0
        %2903 = vadd.xlane.f32.xlu0 %v2902
        %v2904 = vpop.xlane.xlu0 %2903
        %v2905 = vsel %vm1551, %v2901, 0.0
        %2906 = vadd.xlane.f32.xlu0 %v2905
        %v2907 = vpop.xlane.xlu0 %2906
        %v2908 = vrcp.pop %v2904
        %v2909 = vrcp.pop %v2907
        %v2910 = vmul.f32 %v2899, %v2908
        %v2911 = vmul.f32 %v2901, %v2909
        %v2912 = vpack.c.bf16 %v2910, %v2910
        %v2913 = vpack.c.bf16 %v2911, %v2911
        %2914 = vrot.lane.b32.xlu0 %v1422, 104
        %v2915 = vpop.permute.xlu0 %2914
        %v2917 = vsel %vm1551, %v2912, 0
        %v2920 = vand.u32 %v2915, %v1582
        %2922 = vmatprep.subr.bf16.mxu0 0
        %2923 = vmatpush1.bf16.msra.mxu0 %v2920
        %2924 = vmatprep.subr.bf16.mxu0 0
        %2925 = vmatpush1.bf16.msra.mxu0 0
        %2926 = vmatprep.subr.bf16.mxu0 0
        %2927 = vmatpush1.bf16.msra.mxu0 0
        %2928 = vmatprep.subr.bf16.mxu0 0
        %2929 = vmatpush1.bf16.msra.mxu0 0
        %2930 = vmatprep.subr.bf16.mxu0 0
        %2931 = vmatpush1.bf16.msra.mxu0 0
        %2932 = vmatprep.subr.bf16.mxu0 0
        %2933 = vmatpush1.bf16.msra.mxu0 0
        %2934 = vmatprep.subr.bf16.mxu0 0
        %2935 = vmatpush1.bf16.msra.mxu0 0
        %2936 = vmatprep.subr.bf16.mxu0 0
        %2937 = vmatpush1.bf16.msra.mxu0 0
        %2938 = vmatprep.subr.bf16.mxu0 0
        %2939 = vmatpush1.bf16.msra.mxu0 0
        %2940 = vmatprep.subr.bf16.mxu0 0
        %2941 = vmatpush1.bf16.msra.mxu0 0
        %2942 = vmatprep.subr.bf16.mxu0 0
        %2943 = vmatpush1.bf16.msra.mxu0 0
        %2944 = vmatprep.subr.bf16.mxu0 0
        %2945 = vmatpush1.bf16.msra.mxu0 0
        %2946 = vmatprep.subr.bf16.mxu0 0
        %2947 = vmatpush1.bf16.msra.mxu0 0
        %2948 = vmatprep.subr.bf16.mxu0 0
        %2949 = vmatpush1.bf16.msra.mxu0 0
        %2950 = vmatprep.subr.bf16.mxu0 0
        %2951 = vmatpush1.bf16.msra.mxu0 0
        %2952 = vmatprep.subr.bf16.mxu0 0
        %2953 = vmatpush1.bf16.msra.mxu0 0
        %2954 = vmatprep.mubr.bf16.mxu0 0
        %2955 = vmatmul.mubr.bf16.gmra.mrb[0].mxu0 %v2917
        %v2956 = vpop.f32.mrb[0].mxu0
        %v2957 = vadd.f32 0.0, %v2956
        %v2958 = vpop.f32.mrb[0].mxu0
        %v2959 = vpop.f32.mrb[0].mxu0
        %v2960 = vpop.f32.mrb[0].mxu0
        %2961 = vdwg.mxu0
        %2962 = vrot.lane.b32.xlu0 %v1423, 104
        %v2963 = vpop.permute.xlu0 %2962
        %v2965 = vsel %vm1551, %v2913, 0
        %v2968 = vand.u32 %v2963, %v1582
        %2970 = vmatprep.subr.bf16.mxu0 0
        %2971 = vmatpush1.bf16.msra.mxu0 %v2968
        %2972 = vmatprep.subr.bf16.mxu0 0
        %2973 = vmatpush1.bf16.msra.mxu0 0
        %2974 = vmatprep.subr.bf16.mxu0 0
        %2975 = vmatpush1.bf16.msra.mxu0 0
        %2976 = vmatprep.subr.bf16.mxu0 0
        %2977 = vmatpush1.bf16.msra.mxu0 0
        %2978 = vmatprep.subr.bf16.mxu0 0
        %2979 = vmatpush1.bf16.msra.mxu0 0
        %2980 = vmatprep.subr.bf16.mxu0 0
        %2981 = vmatpush1.bf16.msra.mxu0 0
        %2982 = vmatprep.subr.bf16.mxu0 0
        %2983 = vmatpush1.bf16.msra.mxu0 0
        %2984 = vmatprep.subr.bf16.mxu0 0
        %2985 = vmatpush1.bf16.msra.mxu0 0
        %2986 = vmatprep.subr.bf16.mxu0 0
        %2987 = vmatpush1.bf16.msra.mxu0 0
        %2988 = vmatprep.subr.bf16.mxu0 0
        %2989 = vmatpush1.bf16.msra.mxu0 0
        %2990 = vmatprep.subr.bf16.mxu0 0
        %2991 = vmatpush1.bf16.msra.mxu0 0
        %2992 = vmatprep.subr.bf16.mxu0 0
        %2993 = vmatpush1.bf16.msra.mxu0 0
        %2994 = vmatprep.subr.bf16.mxu0 0
        %2995 = vmatpush1.bf16.msra.mxu0 0
        %2996 = vmatprep.subr.bf16.mxu0 0
        %2997 = vmatpush1.bf16.msra.mxu0 0
        %2998 = vmatprep.subr.bf16.mxu0 0
        %2999 = vmatpush1.bf16.msra.mxu0 0
        %3000 = vmatprep.subr.bf16.mxu0 0
        %3001 = vmatpush1.bf16.msra.mxu0 0
        %3002 = vmatprep.mubr.bf16.mxu0 0
        %3003 = vmatmul.mubr.bf16.gmra.mrb[0].mxu0 %v2965
        %v3004 = vpop.f32.mrb[0].mxu0
        %v3005 = vadd.f32 0.0, %v3004
        %v3006 = vpop.f32.mrb[0].mxu0
        %v3007 = vpop.f32.mrb[0].mxu0
        %v3008 = vpop.f32.mrb[0].mxu0
        %3009 = vdwg.mxu0
        %3010 = vrot.lane.b32.xlu0 %v1368, 100
        %v3011 = vpop.permute.xlu0 %3010
        %3012 = vrot.lane.b32.xlu0 %v1395, 100
        %v3013 = vpop.permute.xlu0 %3012
        %v3015 = vsel %vm1456, %v3011, 0
        %v3018 = vsel %vm1456, %v3013, 0
        %3020 = vmatprep.subr.bf16.mxu0 0
        %3021 = vmatpush1.bf16.xpose.msra.mxu0 %v3018
        %3022 = vmatprep.subr.bf16.mxu0 0
        %3023 = vmatpush1.bf16.xpose.msra.mxu0 0
        %3024 = vmatprep.subr.bf16.mxu0 0
        %3025 = vmatpush1.bf16.xpose.msra.mxu0 0
        %3026 = vmatprep.subr.bf16.mxu0 0
        %3027 = vmatpush1.bf16.xpose.msra.mxu0 0
        %3028 = vmatprep.subr.bf16.mxu0 0
        %3029 = vmatpush1.bf16.xpose.msra.mxu0 0
        %3030 = vmatprep.subr.bf16.mxu0 0
        %3031 = vmatpush1.bf16.xpose.msra.mxu0 0
        %3032 = vmatprep.subr.bf16.mxu0 0
        %3033 = vmatpush1.bf16.xpose.msra.mxu0 0
        %3034 = vmatprep.subr.bf16.mxu0 0
        %3035 = vmatpush1.bf16.xpose.msra.mxu0 0
        %3036 = vmatprep.subr.bf16.mxu0 0
        %3037 = vmatpush1.bf16.xpose.msra.mxu0 0
        %3038 = vmatprep.subr.bf16.mxu0 0
        %3039 = vmatpush1.bf16.xpose.msra.mxu0 0
        %3040 = vmatprep.subr.bf16.mxu0 0
        %3041 = vmatpush1.bf16.xpose.msra.mxu0 0
        %3042 = vmatprep.subr.bf16.mxu0 0
        %3043 = vmatpush1.bf16.xpose.msra.mxu0 0
        %3044 = vmatprep.subr.bf16.mxu0 0
        %3045 = vmatpush1.bf16.xpose.msra.mxu0 0
        %3046 = vmatprep.subr.bf16.mxu0 0
        %3047 = vmatpush1.bf16.xpose.msra.mxu0 0
        %3048 = vmatprep.subr.bf16.mxu0 0
        %3049 = vmatpush1.bf16.xpose.msra.mxu0 0
        %3050 = vmatprep.subr.bf16.mxu0 0
        %3051 = vmatpush1.bf16.xpose.msra.mxu0 0
        %3052 = vmatprep.mubr.bf16.mxu0 0
        %3053 = vmatmul.mubr.bf16.gmra.mrb[0].mxu0 %v3015
        %v3054 = vpop.f32.mrb[0].mxu0
        %v3055 = vadd.f32 0.0, %v3054
        %v3056 = vpop.f32.mrb[0].mxu0
        %v3057 = vpop.f32.mrb[0].mxu0
        %v3058 = vpop.f32.mrb[0].mxu0
        %3059 = vdwg.mxu0
        %3060 = vrot.lane.b32.xlu0 %v1369, 100
        %v3061 = vpop.permute.xlu0 %3060
        %3062 = vrot.lane.b32.xlu0 %v1396, 100
        %v3063 = vpop.permute.xlu0 %3062
        %v3065 = vsel %vm1456, %v3061, 0
        %v3068 = vsel %vm1456, %v3063, 0
        %3070 = vmatprep.subr.bf16.mxu0 0
        %3071 = vmatpush1.bf16.xpose.msra.mxu0 %v3068
        %3072 = vmatprep.subr.bf16.mxu0 0
        %3073 = vmatpush1.bf16.xpose.msra.mxu0 0
        %3074 = vmatprep.subr.bf16.mxu0 0
        %3075 = vmatpush1.bf16.xpose.msra.mxu0 0
        %3076 = vmatprep.subr.bf16.mxu0 0
        %3077 = vmatpush1.bf16.xpose.msra.mxu0 0
        %3078 = vmatprep.subr.bf16.mxu0 0
        %3079 = vmatpush1.bf16.xpose.msra.mxu0 0
        %3080 = vmatprep.subr.bf16.mxu0 0
        %3081 = vmatpush1.bf16.xpose.msra.mxu0 0
        %3082 = vmatprep.subr.bf16.mxu0 0
        %3083 = vmatpush1.bf16.xpose.msra.mxu0 0
        %3084 = vmatprep.subr.bf16.mxu0 0
        %3085 = vmatpush1.bf16.xpose.msra.mxu0 0
        %3086 = vmatprep.subr.bf16.mxu0 0
        %3087 = vmatpush1.bf16.xpose.msra.mxu0 0
        %3088 = vmatprep.subr.bf16.mxu0 0
        %3089 = vmatpush1.bf16.xpose.msra.mxu0 0
        %3090 = vmatprep.subr.bf16.mxu0 0
        %3091 = vmatpush1.bf16.xpose.msra.mxu0 0
        %3092 = vmatprep.subr.bf16.mxu0 0
        %3093 = vmatpush1.bf16.xpose.msra.mxu0 0
        %3094 = vmatprep.subr.bf16.mxu0 0
        %3095 = vmatpush1.bf16.xpose.msra.mxu0 0
        %3096 = vmatprep.subr.bf16.mxu0 0
        %3097 = vmatpush1.bf16.xpose.msra.mxu0 0
        %3098 = vmatprep.subr.bf16.mxu0 0
        %3099 = vmatpush1.bf16.xpose.msra.mxu0 0
        %3100 = vmatprep.subr.bf16.mxu0 0
        %3101 = vmatpush1.bf16.xpose.msra.mxu0 0
        %3102 = vmatprep.mubr.bf16.mxu0 0
        %3103 = vmatmul.mubr.bf16.gmra.mrb[0].mxu0 %v3065
        %v3104 = vpop.f32.mrb[0].mxu0
        %v3105 = vadd.f32 0.0, %v3104
        %v3106 = vpop.f32.mrb[0].mxu0
        %v3107 = vpop.f32.mrb[0].mxu0
        %v3108 = vpop.f32.mrb[0].mxu0
        %3109 = vdwg.mxu0
        %v3110 = vsel %vm1454, %v3055, -1e+30
        %v3111 = vsel %vm1455, %v3105, -1e+30
        %v3112 = vsel %vm1551, %v3110, -inf
        %3113 = vmax.xlane.f32.xlu0 %v3112
        %v3114 = vpop.xlane.xlu0 %3113
        %v3115 = vsel %vm1551, %v3111, -inf
        %3116 = vmax.xlane.f32.xlu0 %v3115
        %v3117 = vpop.xlane.xlu0 %3116
        %v3118 = vsub.f32 %v3110, %v3114
        %v3119 = vsub.f32 %v3111, %v3117
        %v3120 = vmul.f32 %v3118, 1.442695
        %v3121 = vpow.pop %v3120
        %v3122 = vmul.f32 %v3119, 1.442695
        %v3123 = vpow.pop %v3122
        %v3124 = vsel %vm1551, %v3121, 0.0
        %3125 = vadd.xlane.f32.xlu0 %v3124
        %v3126 = vpop.xlane.xlu0 %3125
        %v3127 = vsel %vm1551, %v3123, 0.0
        %3128 = vadd.xlane.f32.xlu0 %v3127
        %v3129 = vpop.xlane.xlu0 %3128
        %v3130 = vrcp.pop %v3126
        %v3131 = vrcp.pop %v3129
        %v3132 = vmul.f32 %v3121, %v3130
        %v3133 = vmul.f32 %v3123, %v3131
        %v3134 = vpack.c.bf16 %v3132, %v3132
        %v3135 = vpack.c.bf16 %v3133, %v3133
        %3136 = vrot.lane.b32.xlu0 %v1422, 100
        %v3137 = vpop.permute.xlu0 %3136
        %v3139 = vsel %vm1551, %v3134, 0
        %v3142 = vand.u32 %v3137, %v1582
        %3144 = vmatprep.subr.bf16.mxu0 0
        %3145 = vmatpush1.bf16.msra.mxu0 %v3142
        %3146 = vmatprep.subr.bf16.mxu0 0
        %3147 = vmatpush1.bf16.msra.mxu0 0
        %3148 = vmatprep.subr.bf16.mxu0 0
        %3149 = vmatpush1.bf16.msra.mxu0 0
        %3150 = vmatprep.subr.bf16.mxu0 0
        %3151 = vmatpush1.bf16.msra.mxu0 0
        %3152 = vmatprep.subr.bf16.mxu0 0
        %3153 = vmatpush1.bf16.msra.mxu0 0
        %3154 = vmatprep.subr.bf16.mxu0 0
        %3155 = vmatpush1.bf16.msra.mxu0 0
        %3156 = vmatprep.subr.bf16.mxu0 0
        %3157 = vmatpush1.bf16.msra.mxu0 0
        %3158 = vmatprep.subr.bf16.mxu0 0
        %3159 = vmatpush1.bf16.msra.mxu0 0
        %3160 = vmatprep.subr.bf16.mxu0 0
        %3161 = vmatpush1.bf16.msra.mxu0 0
        %3162 = vmatprep.subr.bf16.mxu0 0
        %3163 = vmatpush1.bf16.msra.mxu0 0
        %3164 = vmatprep.subr.bf16.mxu0 0
        %3165 = vmatpush1.bf16.msra.mxu0 0
        %3166 = vmatprep.subr.bf16.mxu0 0
        %3167 = vmatpush1.bf16.msra.mxu0 0
        %3168 = vmatprep.subr.bf16.mxu0 0
        %3169 = vmatpush1.bf16.msra.mxu0 0
        %3170 = vmatprep.subr.bf16.mxu0 0
        %3171 = vmatpush1.bf16.msra.mxu0 0
        %3172 = vmatprep.subr.bf16.mxu0 0
        %3173 = vmatpush1.bf16.msra.mxu0 0
        %3174 = vmatprep.subr.bf16.mxu0 0
        %3175 = vmatpush1.bf16.msra.mxu0 0
        %3176 = vmatprep.mubr.bf16.mxu0 0
        %3177 = vmatmul.mubr.bf16.gmra.mrb[0].mxu0 %v3139
        %v3178 = vpop.f32.mrb[0].mxu0
        %v3179 = vadd.f32 0.0, %v3178
        %v3180 = vpop.f32.mrb[0].mxu0
        %v3181 = vpop.f32.mrb[0].mxu0
        %v3182 = vpop.f32.mrb[0].mxu0
        %3183 = vdwg.mxu0
        %3184 = vrot.lane.b32.xlu0 %v1423, 100
        %v3185 = vpop.permute.xlu0 %3184
        %v3187 = vsel %vm1551, %v3135, 0
        %v3190 = vand.u32 %v3185, %v1582
        %3192 = vmatprep.subr.bf16.mxu0 0
        %3193 = vmatpush1.bf16.msra.mxu0 %v3190
        %3194 = vmatprep.subr.bf16.mxu0 0
        %3195 = vmatpush1.bf16.msra.mxu0 0
        %3196 = vmatprep.subr.bf16.mxu0 0
        %3197 = vmatpush1.bf16.msra.mxu0 0
        %3198 = vmatprep.subr.bf16.mxu0 0
        %3199 = vmatpush1.bf16.msra.mxu0 0
        %3200 = vmatprep.subr.bf16.mxu0 0
        %3201 = vmatpush1.bf16.msra.mxu0 0
        %3202 = vmatprep.subr.bf16.mxu0 0
        %3203 = vmatpush1.bf16.msra.mxu0 0
        %3204 = vmatprep.subr.bf16.mxu0 0
        %3205 = vmatpush1.bf16.msra.mxu0 0
        %3206 = vmatprep.subr.bf16.mxu0 0
        %3207 = vmatpush1.bf16.msra.mxu0 0
        %3208 = vmatprep.subr.bf16.mxu0 0
        %3209 = vmatpush1.bf16.msra.mxu0 0
        %3210 = vmatprep.subr.bf16.mxu0 0
        %3211 = vmatpush1.bf16.msra.mxu0 0
        %3212 = vmatprep.subr.bf16.mxu0 0
        %3213 = vmatpush1.bf16.msra.mxu0 0
        %3214 = vmatprep.subr.bf16.mxu0 0
        %3215 = vmatpush1.bf16.msra.mxu0 0
        %3216 = vmatprep.subr.bf16.mxu0 0
        %3217 = vmatpush1.bf16.msra.mxu0 0
        %3218 = vmatprep.subr.bf16.mxu0 0
        %3219 = vmatpush1.bf16.msra.mxu0 0
        %3220 = vmatprep.subr.bf16.mxu0 0
        %3221 = vmatpush1.bf16.msra.mxu0 0
        %3222 = vmatprep.subr.bf16.mxu0 0
        %3223 = vmatpush1.bf16.msra.mxu0 0
        %3224 = vmatprep.mubr.bf16.mxu0 0
        %3225 = vmatmul.mubr.bf16.gmra.mrb[0].mxu0 %v3187
        %v3226 = vpop.f32.mrb[0].mxu0
        %v3227 = vadd.f32 0.0, %v3226
        %v3228 = vpop.f32.mrb[0].mxu0
        %v3229 = vpop.f32.mrb[0].mxu0
        %v3230 = vpop.f32.mrb[0].mxu0
        %3231 = vdwg.mxu0
        %3234 = vrot.lane.b32.xlu0 %v1846, 4
        %v3235 = vpop.permute.xlu0 %3234
        %3236 = vrot.lane.b32.xlu0 %v1895, 4
        %v3237 = vpop.permute.xlu0 %3236
        %3242 = vrot.lane.b32.xlu0 %v2069, 8
        %v3243 = vpop.permute.xlu0 %3242
        %3244 = vrot.lane.b32.xlu0 %v2117, 8
        %v3245 = vpop.permute.xlu0 %3244
        %3250 = vrot.lane.b32.xlu0 %v2291, 12
        %v3251 = vpop.permute.xlu0 %3250
        %3252 = vrot.lane.b32.xlu0 %v2339, 12
        %v3253 = vpop.permute.xlu0 %3252
        %3258 = vrot.lane.b32.xlu0 %v2513, 16
        %v3259 = vpop.permute.xlu0 %3258
        %3260 = vrot.lane.b32.xlu0 %v2561, 16
        %v3261 = vpop.permute.xlu0 %3260
        %3266 = vrot.lane.b32.xlu0 %v2735, 20
        %v3267 = vpop.permute.xlu0 %3266
        %3268 = vrot.lane.b32.xlu0 %v2783, 20
        %v3269 = vpop.permute.xlu0 %3268
        %3274 = vrot.lane.b32.xlu0 %v2957, 24
        %v3275 = vpop.permute.xlu0 %3274
        %3276 = vrot.lane.b32.xlu0 %v3005, 24
        %v3277 = vpop.permute.xlu0 %3276
        %3282 = vrot.lane.b32.xlu0 %v3179, 28
        %v3283 = vpop.permute.xlu0 %3282
        %3284 = vrot.lane.b32.xlu0 %v3227, 28
        %v3285 = vpop.permute.xlu0 %3284
        %v3288 = vsel %vm1456, %v1621, %v3235
        %v3289 = vsel %vm1456, %v1667, %v3237
        %vm3290 = vcmask 64512
        %v3291 = vsel %vm3290, %v3288, %v3243
        %v3292 = vsel %vm3290, %v3289, %v3245
        %vm3293 = vcmask 97280
        %v3294 = vsel %vm3293, %v3291, %v3251
        %v3295 = vsel %vm3293, %v3292, %v3253
        %vm3296 = vcmask 130048
        %v3297 = vsel %vm3296, %v3294, %v3259
        %v3298 = vsel %vm3296, %v3295, %v3261
        %vm3299 = vcmask 162816
        %v3300 = vsel %vm3299, %v3297, %v3267
        %v3301 = vsel %vm3299, %v3298, %v3269
        %vm3302 = vcmask 195584
        %v3303 = vsel %vm3302, %v3300, %v3275
        %v3304 = vsel %vm3302, %v3301, %v3277
        %vm3305 = vcmask 228352
        %v3306 = vsel %vm3305, %v3303, %v3283
        %v3307 = vsel %vm3305, %v3304, %v3285
        %v3308 = vpack.c.bf16 %v3307, %v3306
        %s3309 = scalar_lea.vmem [#allocation7], 80
        %v3310 = vld [vmem:[%s3309] sm:$0xf]
        %v3311 = vld [vmem:[%s3309 + $0x4] sm:$0xf]
        %v3312 = vld [vmem:[%s3309 + $0x8] sm:$0xf]
        %v3313 = vld [vmem:[%s3309 + $0xc] sm:$0xf]
        %v3314 = vlaneseq
        %v3315 = vshrl.u32 %v3314, 7
        %v3316 = vsub.s32 0, %v3315
        %v3317 = vrot.slane %v524, %v3316
        %v3322 = vunpack.c.l.b16 %v3310
        %v3323 = vunpack.c.l.b16 %v3311
        %v3324 = vunpack.c.l.b16 %v3312
        %v3325 = vunpack.c.l.b16 %v3313
        %v3326 = vpack.c.b16 %v3323, %v3322
        %v3327 = vpack.c.b16 %v3325, %v3324
        %v3331 = vsel %vm549, %v3308, 0
        %3333 = vmatprep.subr.bf16.mxu0 0
        %3334 = vmatpush1.bf16.msra.mxu0 %v3326
        %3335 = vmatprep.subr.bf16.mxu0 0
        %3336 = vmatpush1.bf16.msra.mxu0 %v3327
        %3337 = vmatprep.subr.bf16.mxu0 0
        %3338 = vmatpush1.bf16.msra.mxu0 0
        %3339 = vmatprep.subr.bf16.mxu0 0
        %3340 = vmatpush1.bf16.msra.mxu0 0
        %3341 = vmatprep.subr.bf16.mxu0 0
        %3342 = vmatpush1.bf16.msra.mxu0 0
        %3343 = vmatprep.subr.bf16.mxu0 0
        %3344 = vmatpush1.bf16.msra.mxu0 0
        %3345 = vmatprep.subr.bf16.mxu0 0
        %3346 = vmatpush1.bf16.msra.mxu0 0
        %3347 = vmatprep.subr.bf16.mxu0 0
        %3348 = vmatpush1.bf16.msra.mxu0 0
        %3349 = vmatprep.subr.bf16.mxu0 0
        %3350 = vmatpush1.bf16.msra.mxu0 0
        %3351 = vmatprep.subr.bf16.mxu0 0
        %3352 = vmatpush1.bf16.msra.mxu0 0
        %3353 = vmatprep.subr.bf16.mxu0 0
        %3354 = vmatpush1.bf16.msra.mxu0 0
        %3355 = vmatprep.subr.bf16.mxu0 0
        %3356 = vmatpush1.bf16.msra.mxu0 0
        %3357 = vmatprep.subr.bf16.mxu0 0
        %3358 = vmatpush1.bf16.msra.mxu0 0
        %3359 = vmatprep.subr.bf16.mxu0 0
        %3360 = vmatpush1.bf16.msra.mxu0 0
        %3361 = vmatprep.subr.bf16.mxu0 0
        %3362 = vmatpush1.bf16.msra.mxu0 0
        %3363 = vmatprep.subr.bf16.mxu0 0
        %3364 = vmatpush1.bf16.msra.mxu0 0
        %3365 = vmatprep.mubr.bf16.mxu0 0
        %3366 = vmatmul.mubr.bf16.gmra.mrb[0].mxu0 %v3331
        %v3367 = vpop.f32.mrb[0].mxu0
        %v3368 = vadd.f32 %v3317, %v3367
        %v3369 = vpop.f32.mrb[0].mxu0
        %v3370 = vpop.f32.mrb[0].mxu0
        %v3371 = vadd.f32 %v3317, %v3370
        %v3372 = vpop.f32.mrb[0].mxu0
        %3373 = vdwg.mxu0
        %v3374 = vadd.f32 %v526, %v3368
        %v3375 = vadd.f32 %v527, %v3371
        %v3376 = vsel %vm549, %v3374, 0.0
        %3377 = vadd.xlane.f32.xlu0 %v3376
        %v3378 = vpop.xlane.xlu0 %3377
        %v3379 = vsel %vm549, %v3375, 0.0
        %3380 = vadd.xlane.f32.xlu0 %v3379
        %v3381 = vpop.xlane.xlu0 %3380
        %v3382 = vrcp.pop 32.0
        %v3383 = vmul.f32 %v3378, %v3382
        %v3384 = vmul.f32 %v3381, %v3382
        %v3385 = vsub.f32 %v3374, %v3383
        %v3386 = vsub.f32 %v3375, %v3384
        %v3387 = vmul.f32 %v3385, %v3385
        %v3388 = vmul.f32 %v3386, %v3386
        %v3389 = vsel %vm549, %v3387, 0.0
        %3390 = vadd.xlane.f32.xlu0 %v3389
        %v3391 = vpop.xlane.xlu0 %3390
        %v3392 = vsel %vm549, %v3388, 0.0
        %3393 = vadd.xlane.f32.xlu0 %v3392
        %v3394 = vpop.xlane.xlu0 %3393
        %v3395 = vmul.f32 %v3391, %v3382
        %v3396 = vmul.f32 %v3394, %v3382
        %v3397 = vadd.f32 %v3395, 1e-05
        %v3398 = vadd.f32 %v3396, 1e-05
        %v3399 = vrsqrt.pop %v3397
        %v3400 = vrsqrt.pop %v3398
        %v3401 = vmul.f32 %v3385, %v3399
        %v3402 = vmul.f32 %v3386, %v3400
        %v3403 = vlaneseq
        %v3404 = vshrl.u32 %v3403, 7
        %v3405 = vsub.s32 7, %v3404
        %v3406 = vrot.slane %v524, %v3405
        %v3407 = vmul.f32 %v3401, %v3406
        %v3408 = vmul.f32 %v3402, %v3406
        %v3409 = vlaneseq
        %v3410 = vshrl.u32 %v3409, 7
        %v3411 = vsub.s32 0, %v3410
        %v3412 = vrot.slane %v525, %v3411
        %v3413 = vadd.f32 %v3407, %v3412
        %v3414 = vadd.f32 %v3408, %v3412
        %v3415 = vpack.c.bf16 %v3414, %v3413
        %v3416 = vld [vmem:[#allocation8] sm:$0xf]
        %v3417 = vld [vmem:[#allocation8 + $0x4] sm:$0xf]
        %v3418 = vld [vmem:[#allocation8 + $0x8] sm:$0xf]
        %v3419 = vld [vmem:[#allocation8 + $0xc] sm:$0xf]
        %v3420 = vld [vmem:[%s7] sm:$0x1]
        %v3422 = vlaneseq
        %v3423 = vshrl.u32 %v3422, 7
        %v3424 = vsub.s32 0, %v3423
        %v3425 = vrot.slane %v3420, %v3424
        %v3431 = vunpack.c.l.b16 %v3416
        %v3432 = vunpack.c.l.b16 %v3417
        %v3433 = vunpack.c.l.b16 %v3418
        %v3434 = vunpack.c.l.b16 %v3419
        %v3435 = vpack.c.b16 %v3432, %v3431
        %v3436 = vpack.c.b16 %v3434, %v3433
        %v3440 = vsel %vm549, %v3415, 0
        %3442 = vmatprep.subr.bf16.mxu0 0
        %3443 = vmatpush1.bf16.msra.mxu0 %v3435
        %3444 = vmatprep.subr.bf16.mxu0 0
        %3445 = vmatpush1.bf16.msra.mxu0 %v3436
        %3446 = vmatprep.subr.bf16.mxu0 0
        %3447 = vmatpush1.bf16.msra.mxu0 0
        %3448 = vmatprep.subr.bf16.mxu0 0
        %3449 = vmatpush1.bf16.msra.mxu0 0
        %3450 = vmatprep.subr.bf16.mxu0 0
        %3451 = vmatpush1.bf16.msra.mxu0 0
        %3452 = vmatprep.subr.bf16.mxu0 0
        %3453 = vmatpush1.bf16.msra.mxu0 0
        %3454 = vmatprep.subr.bf16.mxu0 0
        %3455 = vmatpush1.bf16.msra.mxu0 0
        %3456 = vmatprep.subr.bf16.mxu0 0
        %3457 = vmatpush1.bf16.msra.mxu0 0
        %3458 = vmatprep.subr.bf16.mxu0 0
        %3459 = vmatpush1.bf16.msra.mxu0 0
        %3460 = vmatprep.subr.bf16.mxu0 0
        %3461 = vmatpush1.bf16.msra.mxu0 0
        %3462 = vmatprep.subr.bf16.mxu0 0
        %3463 = vmatpush1.bf16.msra.mxu0 0
        %3464 = vmatprep.subr.bf16.mxu0 0
        %3465 = vmatpush1.bf16.msra.mxu0 0
        %3466 = vmatprep.subr.bf16.mxu0 0
        %3467 = vmatpush1.bf16.msra.mxu0 0
        %3468 = vmatprep.subr.bf16.mxu0 0
        %3469 = vmatpush1.bf16.msra.mxu0 0
        %3470 = vmatprep.subr.bf16.mxu0 0
        %3471 = vmatpush1.bf16.msra.mxu0 0
        %3472 = vmatprep.subr.bf16.mxu0 0
        %3473 = vmatpush1.bf16.msra.mxu0 0
        %3474 = vmatprep.mubr.bf16.mxu0 0
        %3475 = vmatmul.mubr.bf16.gmra.mrb[0].mxu0 %v3440
        %v3476 = vpop.f32.mrb[0].mxu0
        %v3477 = vadd.f32 %v3425, %v3476
        %v3478 = vpop.f32.mrb[0].mxu0
        %v3479 = vpop.f32.mrb[0].mxu0
        %v3480 = vadd.f32 %v3425, %v3479
        %v3481 = vpop.f32.mrb[0].mxu0
        %3482 = vdwg.mxu0
        %v3483 = vmax.f32 %v3477, 0.0
        %v3484 = vmax.f32 %v3480, 0.0
        %v3485 = vpack.c.bf16 %v3484, %v3483
        %v3486 = vld [vmem:[#allocation10] sm:$0xf]
        %v3487 = vld [vmem:[#allocation10 + $0x4] sm:$0xf]
        %v3488 = vld [vmem:[#allocation10 + $0x8] sm:$0xf]
        %v3489 = vld [vmem:[#allocation10 + $0xc] sm:$0xf]
        %v3490 = vlaneseq
        %v3491 = vshrl.u32 %v3490, 7
        %v3492 = vsub.s32 1, %v3491
        %v3493 = vrot.slane %v525, %v3492
        %v3498 = vunpack.c.l.b16 %v3486
        %v3499 = vunpack.c.l.b16 %v3487
        %v3500 = vunpack.c.l.b16 %v3488
        %v3501 = vunpack.c.l.b16 %v3489
        %v3502 = vpack.c.b16 %v3499, %v3498
        %v3503 = vpack.c.b16 %v3501, %v3500
        %v3507 = vsel %vm549, %v3485, 0
        %3509 = vmatprep.subr.bf16.mxu0 0
        %3510 = vmatpush1.bf16.msra.mxu0 %v3502
        %3511 = vmatprep.subr.bf16.mxu0 0
        %3512 = vmatpush1.bf16.msra.mxu0 %v3503
        %3513 = vmatprep.subr.bf16.mxu0 0
        %3514 = vmatpush1.bf16.msra.mxu0 0
        %3515 = vmatprep.subr.bf16.mxu0 0
        %3516 = vmatpush1.bf16.msra.mxu0 0
        %3517 = vmatprep.subr.bf16.mxu0 0
        %3518 = vmatpush1.bf16.msra.mxu0 0
        %3519 = vmatprep.subr.bf16.mxu0 0
        %3520 = vmatpush1.bf16.msra.mxu0 0
        %3521 = vmatprep.subr.bf16.mxu0 0
        %3522 = vmatpush1.bf16.msra.mxu0 0
        %3523 = vmatprep.subr.bf16.mxu0 0
        %3524 = vmatpush1.bf16.msra.mxu0 0
        %3525 = vmatprep.subr.bf16.mxu0 0
        %3526 = vmatpush1.bf16.msra.mxu0 0
        %3527 = vmatprep.subr.bf16.mxu0 0
        %3528 = vmatpush1.bf16.msra.mxu0 0
        %3529 = vmatprep.subr.bf16.mxu0 0
        %3530 = vmatpush1.bf16.msra.mxu0 0
        %3531 = vmatprep.subr.bf16.mxu0 0
        %3532 = vmatpush1.bf16.msra.mxu0 0
        %3533 = vmatprep.subr.bf16.mxu0 0
        %3534 = vmatpush1.bf16.msra.mxu0 0
        %3535 = vmatprep.subr.bf16.mxu0 0
        %3536 = vmatpush1.bf16.msra.mxu0 0
        %3537 = vmatprep.subr.bf16.mxu0 0
        %3538 = vmatpush1.bf16.msra.mxu0 0
        %3539 = vmatprep.subr.bf16.mxu0 0
        %3540 = vmatpush1.bf16.msra.mxu0 0
        %3541 = vmatprep.mubr.bf16.mxu0 0
        %3542 = vmatmul.mubr.bf16.gmra.mrb[0].mxu0 %v3507
        %v3543 = vpop.f32.mrb[0].mxu0
        %v3544 = vadd.f32 %v3493, %v3543
        %v3545 = vpop.f32.mrb[0].mxu0
        %v3546 = vpop.f32.mrb[0].mxu0
        %v3547 = vadd.f32 %v3493, %v3546
        %v3548 = vpop.f32.mrb[0].mxu0
        %3549 = vdwg.mxu0
        %v3550 = vadd.f32 %v3413, %v3544
        %v3551 = vadd.f32 %v3414, %v3547
        %v3552 = vsel %vm549, %v3550, 0.0
        %3553 = vadd.xlane.f32.xlu0 %v3552
        %v3554 = vpop.xlane.xlu0 %3553
        %v3555 = vsel %vm549, %v3551, 0.0
        %3556 = vadd.xlane.f32.xlu0 %v3555
        %v3557 = vpop.xlane.xlu0 %3556
        %v3558 = vmul.f32 %v3554, %v3382
        %v3559 = vmul.f32 %v3557, %v3382
        %v3560 = vsub.f32 %v3550, %v3558
        %v3561 = vsub.f32 %v3551, %v3559
        %v3562 = vmul.f32 %v3560, %v3560
        %v3563 = vmul.f32 %v3561, %v3561
        %v3564 = vsel %vm549, %v3562, 0.0
        %3565 = vadd.xlane.f32.xlu0 %v3564
        %v3566 = vpop.xlane.xlu0 %3565
        %v3567 = vsel %vm549, %v3563, 0.0
        %3568 = vadd.xlane.f32.xlu0 %v3567
        %v3569 = vpop.xlane.xlu0 %3568
        %v3570 = vmul.f32 %v3566, %v3382
        %v3571 = vmul.f32 %v3569, %v3382
        %v3572 = vadd.f32 %v3570, 1e-05
        %v3573 = vadd.f32 %v3571, 1e-05
        %v3574 = vrsqrt.pop %v3572
        %v3575 = vrsqrt.pop %v3573
        %v3576 = vmul.f32 %v3560, %v3574
        %v3577 = vmul.f32 %v3561, %v3575
        %v3578 = vlaneseq
        %v3579 = vshrl.u32 %v3578, 7
        %v3580 = vsub.s32 2, %v3579
        %v3581 = vrot.slane %v525, %v3580
        %v3582 = vmul.f32 %v3576, %v3581
        %v3583 = vmul.f32 %v3577, %v3581
        %v3584 = vlaneseq
        %v3585 = vshrl.u32 %v3584, 7
        %v3586 = vsub.s32 3, %v3585
        %v3587 = vrot.slane %v525, %v3586
        %v3588 = vadd.f32 %v3582, %v3587
        %v3589 = vadd.f32 %v3583, %v3587
        %v3590 = vtanh.pop %v3588
        %v3591 = vtanh.pop %v3589
        %v3592 = vlaneseq
        %v3593 = vshrl.u32 %v3592, 7
        %v3594 = vsub.s32 4, %v3593
        %v3595 = vrot.slane %v525, %v3594
        %v3596 = vmul.f32 %v3590, %v3595
        %v3597 = vmul.f32 %v3591, %v3595
        %v3598 = vsel %vm549, %v3596, 0.0
        %3599 = vadd.xlane.f32.xlu0 %v3598
        %v3600 = vpop.xlane.xlu0 %3599
        %v3601 = vsel %vm549, %v3597, 0.0
        %3602 = vadd.xlane.f32.xlu0 %v3601
        %v3603 = vpop.xlane.xlu0 %3602
        %v3604 = vsel %vm1430, 0.0, -103.616325
        %v3605 = vsel %vm1431, 0.0, -103.616325
        %v3608 = vlaneseq
        %v3609 = vshrl.u32 %v3608, 7
        %v3610 = vsub.s32 0, %v3609
        %v3611 = vrot.slane %v3604, %v3610
        %v3612 = vlaneseq
        %v3613 = vshrl.u32 %v3612, 7
        %v3614 = vsub.s32 0, %v3613
        %v3615 = vrot.slane %v3605, %v3614
        %3617 = vbcast.lane.b32.xlu0 %v3611, 256
        %v3618 = vpop.permute.xlu0 %3617
        %3620 = vbcast.lane.b32.xlu0 %v3615, 256
        %v3621 = vpop.permute.xlu0 %3620
        %v3624 = vadd.f32 %v3600, %v3618
        %v3625 = vadd.f32 %v3603, %v3621
        %3628 = vset.pattern.permute.xlu0 0
        %3629 = vperm.xlu0 %3628, %v3624
        %v3630 = vpop.permute.xlu0 %3629
        %3631 = vset.pattern.permute.xlu0 0
        %3632 = vperm.xlu0 %3631, %v3625
        %v3633 = vpop.permute.xlu0 %3632
        %v3634 = vlaneseq
        %v3635 = vand.u32 %v3634, 127
        %v3636 = vlaneseq
        %v3637 = vshrl.u32 %v3636, 7
        %v3638 = vsub.s32 %v3635, %v3637
        %v3639 = vrot.slane %v3630, %v3638
        %v3640 = vlaneseq
        %v3641 = vshrl.u32 %v3640, 7
        %v3642 = vsub.s32 %v3635, %v3641
        %v3643 = vrot.slane %v3633, %v3642
        %v3644 = vsel %vm720, %v3643, %v3639
        %vm3646 = vcmask 58368
        %v3647 = vsel %vm3646, %v3644, -inf
        %3648 = vmax.xlane.f32.xlu0 %v3647
        %v3649 = vpop.xlane.xlu0 %3648
        %v3651 = vlaneseq
        %v3652 = vshrl.u32 %v3651, 7
        %v3653 = vsub.s32 0, %v3652
        %v3654 = vrot.slane %v3649, %v3653
        %v3655 = vlaneseq
        %v3656 = vshrl.u32 %v3655, 7
        %v3657 = vsub.s32 1, %v3656
        %v3658 = vrot.slane %v3649, %v3657
        %v3661 = vsub.f32 %v3624, %v3654
        %v3662 = vsub.f32 %v3625, %v3658
        %v3663 = vmul.f32 %v3661, 1.442695
        %v3664 = vpow.pop %v3663
        %v3665 = vmul.f32 %v3662, 1.442695
        %v3666 = vpow.pop %v3665
        %3669 = vset.pattern.permute.xlu0 0
        %3670 = vperm.xlu0 %3669, %v3664
        %v3671 = vpop.permute.xlu0 %3670
        %3672 = vset.pattern.permute.xlu0 0
        %3673 = vperm.xlu0 %3672, %v3666
        %v3674 = vpop.permute.xlu0 %3673
        %v3675 = vlaneseq
        %v3676 = vshrl.u32 %v3675, 7
        %v3677 = vsub.s32 %v3635, %v3676
        %v3678 = vrot.slane %v3671, %v3677
        %v3679 = vlaneseq
        %v3680 = vshrl.u32 %v3679, 7
        %v3681 = vsub.s32 %v3635, %v3680
        %v3682 = vrot.slane %v3674, %v3681
        %v3683 = vsel %vm720, %v3682, %v3678
        %v3685 = vsel %vm3646, %v3683, 0.0
        %3686 = vadd.xlane.f32.xlu0 %v3685
        %v3687 = vpop.xlane.xlu0 %3686
        %v3688 = vlog2.pop %v3687
        %v3689 = vmul.f32 %v3688, 0.6931472
        %v3691 = vlaneseq
        %v3692 = vshrl.u32 %v3691, 7
        %v3693 = vsub.s32 0, %v3692
        %v3694 = vrot.slane %v3689, %v3693
        %v3695 = vlaneseq
        %v3696 = vshrl.u32 %v3695, 7
        %v3697 = vsub.s32 1, %v3696
        %v3698 = vrot.slane %v3689, %v3697
        %v3701 = vsub.f32 %v3661, %v3694
        %v3702 = vsub.f32 %v3662, %v3698
        %3705 = vset.pattern.permute.xlu0 0
        %3706 = vperm.xlu0 %3705, %v3701
        %v3707 = vpop.permute.xlu0 %3706
        %3708 = vset.pattern.permute.xlu0 0
        %3709 = vperm.xlu0 %3708, %v3702
        %v3710 = vpop.permute.xlu0 %3709
        %v3711 = vlaneseq
        %v3712 = vshrl.u32 %v3711, 7
        %v3713 = vsub.s32 %v3635, %v3712
        %v3714 = vrot.slane %v3707, %v3713
        %v3715 = vlaneseq
        %v3716 = vshrl.u32 %v3715, 7
        %v3717 = vsub.s32 %v3635, %v3716
        %v3718 = vrot.slane %v3710, %v3717
        %vm3721 = vcmask 57344
        %3722 = vst.msk [vmem:[%s507] sm:$0x1] %vm3721, %v3714
        %3723 = vst.msk [vmem:[%s507 + $0x1] sm:$0x1] %vm3721, %v3718
        %s3724 = sand.u32 %s270, 1
        %s3725 = scalar_lea.sflag [#allocation4], %s3724
        %s3726 = sand.u32 %s270, 1
        %s3727 = smul.addr %s3726, 2
        %s3728 = scalar_lea.vmem [#allocation13], %s3727
        // Predicated region
        $region85: #{tpu_custom_call.1} parent=59 // pred_check
          %p3729 = pneg %p280
        $region86: #{tpu_custom_call.1} parent=59 // pred_check_branch
          %3731 = sbr.rel (%p3729) target = $region88
        $region87: #{tpu_custom_call.1} parent=59 // pred_region
          %s3732 = smul.u32 2, %s32
          %s3734 = ssub.s32 32, 32
          %3735 = vsyncadd %s3725, %s3734
          %s3736 = smul.addr %s3732, 16
          %s3737 = scalar_lea.hbm %s10, %s3736
          %s3738 = sshll.u32 %s3728, 4
          %s3739 = int_to_ptr.vmem [resolvable:$true] %s3738
          %3744 = dma.vmem_to_hbm [thread:$0]  %s3739, 32, %s3737, %s3725, 16, 16, 1
        $region88: #{tpu_custom_call.1} parent=59 // pred_fallthru
          _
      $region60: #{tpu_custom_call.1} parent=5 // pred_fallthru
        _
      %p3745 = scmp.le.s32.totalorder 2, %s27
      // Predicated region
      $region89: #{tpu_custom_call.1} parent=5 // pred_check
        %p3746 = pneg %p3745
      $region90: #{tpu_custom_call.1} parent=5 // pred_check_branch
        %3748 = sbr.rel (%p3746) target = $region92
      $region91: #{tpu_custom_call.1} parent=5 // pred_region
        %s3749 = ssub.s32 %s27, 2
        // Predicated region
        $region93: #{tpu_custom_call.1} parent=91 // pred_check
          %p3750 = pneg %p286
        $region94: #{tpu_custom_call.1} parent=91 // pred_check_branch
          %3752 = sbr.rel (%p3750) target = $region96
        $region95: #{tpu_custom_call.1} parent=91 // pred_region
          %s3753 = sand.u32 %s271, 1
          %s3754 = scalar_lea.sflag [#allocation4], %s3753
          %s3755 = sand.u32 %s271, 1
          %s3756 = smul.addr %s3755, 2
          %s3757 = scalar_lea.vmem [#allocation13], %s3756
          %3758 = dma.done %s3754, 32
        $region96: #{tpu_custom_call.1} parent=91 // pred_fallthru
          _
      $region92: #{tpu_custom_call.1} parent=5 // pred_fallthru
        _
    $region6: #{tpu_custom_call.1} parent=1 // loop_footer
      %s31 = sadd.s32 1, %s27
    $region7: #{tpu_custom_call.1} parent=1 // loop_footer_branch
      %26 = sbr.rel target = $region3
    $region8: #{tpu_custom_call.1} parent=1 // loop_exit
      _
    %3759 = vsyncpa [#allocation3], 1
    %s3760 = scalar_lea.sflag [#allocation3], 1
    %3761 = vsyncpa %s3760, 1
    %3762 = vsyncpa [#allocation6], 1
    %s3763 = scalar_lea.sflag [#allocation6], 1
    %3764 = vsyncpa %s3763, 1
    %3765 = vsyncpa [#allocation9], 1
    %3766 = vsyncpa [#allocation12], 1
    %3767 = vsyncpa [#allocation4], 1
    %s3768 = scalar_lea.sflag [#allocation4], 1
    %3769 = vsyncpa %s3768, 1

</llo_original>
